<compile_context>
chip_gen: v7x
topology: tpu7x:2x2x1
jax: 0.10.0
libtpu: 0.0.40
codegen_flags: <defaults>
</compile_context>

<pallas_src>
import jax
import jax.numpy as jnp
from jax import lax
from jax.experimental import pallas as pl
from jax.experimental.pallas import tpu as pltpu

_BT_MAX = 128  # batch-tile size (images per grid step); multiples of 8 only.


# ----------------------------------------------------------------------------
# Fused encoder kernel: one grid step == one batch tile of Bt images.
# Activation layout everywhere: (row, batch, w*C) -- batch on sublanes,
# (w, channel) packed into lanes.
# ----------------------------------------------------------------------------
def _encoder_kernel(xe_ref, xo_ref,
                    m1_ref, b1_ref, m2_ref, b2_ref, m3_ref, b3_ref,
                    wfc_ref, bfc_ref,
                    out_ref,
                    e2_ref, o2_ref, e3_ref, o3_ref):
    bt = xe_ref.shape[1]

    def conv_layer(tap0, tap1, tap2, m_ref, b_ref):
        # tap_kh: (OH, bt, WCin) f32 -- rows 2*oh + kh - 1 of the input image.
        oh = tap0.shape[0]
        wcin = tap0.shape[2]

        def mm(tap, kh):
            t = tap.reshape(oh * bt, wcin).astype(jnp.bfloat16)
            return jnp.dot(t, m_ref[kh], preferred_element_type=jnp.float32)

        acc = mm(tap0, 0) + mm(tap1, 1) + mm(tap2, 2)          # (oh*bt, OW*Co)
        y = jnp.maximum(acc + b_ref[...], 0.0)                 # bias + ReLU, f32
        return y.reshape(oh, bt, y.shape[-1])

    # ---- conv1: (1, 32, 32) -> (32, 16, 16) --------------------------------
    y1 = conv_layer(xo_ref[pl.ds(0, 16)],   # kh=0 taps: rows 2*oh-1 (zero-padded)
                    xe_ref[...],            # kh=1 taps: rows 2*oh
                    xo_ref[pl.ds(1, 16)],   # kh=2 taps: rows 2*oh+1
                    m1_ref, b1_ref)                            # (16, bt, 512)

    # Deinterleave conv1 output rows into conv2's even / padded-odd buffers.
    o2_ref[0] = jnp.zeros((bt, 512), jnp.float32)
    for r in range(8):
        e2_ref[r] = y1[2 * r]
        o2_ref[r + 1] = y1[2 * r + 1]

    # ---- conv2: (32, 16, 16) -> (64, 8, 8) ---------------------------------
    y2 = conv_layer(o2_ref[pl.ds(0, 8)], e2_ref[...], o2_ref[pl.ds(1, 8)],
                    m2_ref, b2_ref)                            # (8, bt, 512)

    o3_ref[0] = jnp.zeros((bt, 512), jnp.float32)
    for r in range(4):
        e3_ref[r] = y2[2 * r]
        o3_ref[r + 1] = y2[2 * r + 1]

    # ---- conv3: (64, 8, 8) -> (128, 4, 4) ----------------------------------
    y3 = conv_layer(o3_ref[pl.ds(0, 4)], e3_ref[...], o3_ref[pl.ds(1, 4)],
                    m3_ref, b3_ref)                            # (4, bt, 512)

    # ---- fc1: 2048 -> 2 (weight pre-packed to the (oh, ow*128+c) layout) ----
    acc = jnp.broadcast_to(bfc_ref[...], (bt, 2))              # hoisted bias
    for oh in range(4):
        acc = acc + jnp.dot(y3[oh].astype(jnp.bfloat16), wfc_ref[oh],
                            preferred_element_type=jnp.float32)
    out_ref[...] = acc


# ----------------------------------------------------------------------------
# Weight packing (runs ONCE, outside the jitted forward)
# ----------------------------------------------------------------------------
def _pack_conv(w, b, H, W):
    """Fold a stride-2 / pad-1 / 3x3 conv into per-kh matrices M_kh and a
    lane-tiled bias, for activations laid out as (row, batch, w*C)."""
    Co, C, _, _ = w.shape
    OW = W // 2

    # M[kh, w*C+c, ow*Co+co] = weight[co, c, kh, kw] with kw = w - 2*ow + 1.
    wt = jnp.transpose(w, (2, 3, 1, 0)).astype(jnp.float32)        # (3,3,C,Co)
    w_grid = jnp.arange(W)[:, None]
    ow_grid = jnp.arange(OW)[None, :]
    kw_idx = w_grid - 2 * ow_grid + 1                              # (W, OW)
    valid = (kw_idx >= 0) & (kw_idx <= 2)
    kw_safe = jnp.clip(kw_idx, 0, 2)
    gathered = wt[:, kw_safe, :, :]                                # (3,W,OW,C,Co)
    gathered = jnp.where(valid[None, :, :, None, None], gathered, 0.0)
    M = jnp.transpose(gathered, (0, 1, 3, 2, 4)).reshape(3, W * C, OW * Co)

    bias_tiled = jnp.tile(b.astype(jnp.float32), (OW,)).reshape(1, OW * Co)
    return M.astype(jnp.bfloat16), bias_tiled


def pack_params(params):
    m1, bt1 = _pack_conv(params["w1"], params["b1"], 32, 32)
    m2, bt2 = _pack_conv(params["w2"], params["b2"], 16, 16)
    m3, bt3 = _pack_conv(params["w3"], params["b3"], 8, 8)

    # fc1: PyTorch flatten order is f = c*16 + oh*4 + ow (NCHW);
    # repack to wfc[oh, ow*128 + c, j] to match the kernel's lane layout.
    wfc = params["w_fc"].astype(jnp.float32).reshape(2, 128, 4, 4)  # (j,c,oh,ow)
    wfc = jnp.transpose(wfc, (2, 3, 1, 0)).reshape(4, 4 * 128, 2)   # (oh,ow*128+c,j)
    bfc = params["b_fc"].astype(jnp.float32).reshape(1, 2)

    return {"m1": m1, "bt1": bt1, "m2": m2, "bt2": bt2, "m3": m3, "bt3": bt3,
            "wfc": wfc.astype(jnp.bfloat16), "bfc": bfc}


# ----------------------------------------------------------------------------
# Forward pass: single fused, batch-blocked pallas_call
# ----------------------------------------------------------------------------
def _round_up(x, m):
    return (x + m - 1) // m * m


@jax.jit
def encoder_forward(packed, x_nchw):
    n = x_nchw.shape[0]
    bt = min(_BT_MAX, _round_up(n, 8))
    n_pad = _round_up(n, bt)

    # Layout plumbing (pure XLA, outside the kernel): NCHW -> (h, b, w),
    # pre-split into even rows and zero-prepended odd rows.
    x = x_nchw.astype(jnp.float32)[:, 0]                       # (n, 32, 32)
    if n_pad != n:
        x = jnp.pad(x, ((0, n_pad - n), (0, 0), (0, 0)))
    xt = jnp.transpose(x, (1, 0, 2))                           # (32, n_pad, 32)
    x_even = xt[0::2]                                          # (16, n_pad, 32)
    x_oddp = jnp.concatenate(
        [jnp.zeros((1, n_pad, 32), jnp.float32), xt[1::2]], axis=0)  # (17, n_pad, 32)

    weight_order = ("m1", "bt1", "m2", "bt2", "m3", "bt3", "wfc", "bfc")
    wargs = [packed[k] for k in weight_order]

    def _const_spec(shape):
        zeros = (0,) * len(shape)
        return pl.BlockSpec(shape, lambda i, _z=zeros: _z)

    in_specs = [
        pl.BlockSpec((16, bt, 32), lambda i: (0, i, 0)),
        pl.BlockSpec((17, bt, 32), lambda i: (0, i, 0)),
    ] + [_const_spec(tuple(w.shape)) for w in wargs]

    out = pl.pallas_call(
        _encoder_kernel,
        out_shape=jax.ShapeDtypeStruct((n_pad, 2), jnp.float32),
        grid=(n_pad // bt,),
        in_specs=in_specs,
        out_specs=pl.BlockSpec((bt, 2), lambda i: (i, 0)),
        scratch_shapes=[
            pltpu.VMEM((8, bt, 512), jnp.float32),   # conv2 even-row taps
            pltpu.VMEM((9, bt, 512), jnp.float32),   # conv2 odd-row taps (+ zero pad)
            pltpu.VMEM((4, bt, 512), jnp.float32),   # conv3 even-row taps
            pltpu.VMEM((5, bt, 512), jnp.float32),   # conv3 odd-row taps (+ zero pad)
        ],
        compiler_params=pltpu.CompilerParams(
            dimension_semantics=("parallel",),
            vmem_limit_bytes=48 * 1024 * 1024,
        ),
    )(x_even, x_oddp, *wargs)
    return out[:n]                                             # (N, 2)


# ----------------------------------------------------------------------------
# Parameter init (deterministic, synthetic) and pure-JAX reference
# ----------------------------------------------------------------------------
def init_params(key):
    keys = jax.random.split(key, 8)

    def conv_w(k, cout, cin):
        fan_in = cin * 9
        return jax.random.normal(k, (cout, cin, 3, 3), jnp.float32) * (fan_in ** -0.5)

    return {
        "w1": conv_w(keys[0], 32, 1),
        "b1": jax.random.normal(keys[1], (32,), jnp.float32) * 0.01,
        "w2": conv_w(keys[2], 64, 32),
        "b2": jax.random.normal(keys[3], (64,), jnp.float32) * 0.01,
        "w3": conv_w(keys[4], 128, 64),
        "b3": jax.random.normal(keys[5], (128,), jnp.float32) * 0.01,
        # PyTorch Linear weight shape: (out_features, in_features) = (2, 2048)
        "w_fc": jax.random.normal(keys[6], (2, 2048), jnp.float32) * (2048 ** -0.5),
        "b_fc": jax.random.normal(keys[7], (2,), jnp.float32) * 0.01,
    }


def encoder_reference(params, x):
    def conv(x, w, b):
        y = lax.conv_general_dilated(
            x, w, window_strides=(2, 2), padding=((1, 1), (1, 1)),
            dimension_numbers=("NCHW", "OIHW", "NCHW"),
            precision=lax.Precision.HIGHEST)
        return jnp.maximum(y + b.reshape(1, -1, 1, 1), 0.0)

    y = conv(x, params["w1"], params["b1"])
    y = conv(y, params["w2"], params["b2"])
    y = conv(y, params["w3"], params["b3"])
    flat = y.reshape(y.shape[0], -1)
    return jnp.dot(flat, params["w_fc"].T,
                   precision=lax.Precision.HIGHEST) + params["b_fc"]


if __name__ == "__main__":
    key = jax.random.PRNGKey(0)
    pkey, xkey = jax.random.split(key)
    params = init_params(pkey)
    packed = pack_params(params)          # weight packing hoisted out of forward

    # fc1 expects 2048 = 128*4*4 features => 32x32 single-channel input (NCHW).
    x = jax.random.normal(xkey, (2, 1, 32, 32), jnp.float32)

    out = encoder_forward(packed, x)
    jax.block_until_ready(out)
    assert out.shape == (2, 2)

    ref = encoder_reference(params, x)
    max_err = float(jnp.max(jnp.abs(out - ref)))
    if not jnp.allclose(out, ref, atol=3e-2, rtol=3e-2):
        raise AssertionError(f"Pallas encoder mismatch vs reference, max abs err={max_err}")

    print("KERNEL_OK")
</pallas_src>

<mosaic_0001>
module attributes {stable_mosaic.version = 11 : i64} {
  func.func @_encoder_kernel(%arg0: i32, %arg1: memref<16x8x32xf32, #tpu.memory_space<vmem>>, %arg2: memref<17x8x32xf32, #tpu.memory_space<vmem>>, %arg3: memref<3x32x512xbf16, #tpu.memory_space<vmem>>, %arg4: memref<1x512xf32, #tpu.memory_space<vmem>>, %arg5: memref<3x512x512xbf16, #tpu.memory_space<vmem>>, %arg6: memref<1x512xf32, #tpu.memory_space<vmem>>, %arg7: memref<3x512x512xbf16, #tpu.memory_space<vmem>>, %arg8: memref<1x512xf32, #tpu.memory_space<vmem>>, %arg9: memref<4x512x2xbf16, #tpu.memory_space<vmem>>, %arg10: memref<1x2xf32, #tpu.memory_space<vmem>>, %arg11: memref<8x2xf32, #tpu.memory_space<vmem>>, %arg12: memref<8x8x512xf32, #tpu.memory_space<vmem>>, %arg13: memref<9x8x512xf32, #tpu.memory_space<vmem>>, %arg14: memref<4x8x512xf32, #tpu.memory_space<vmem>>, %arg15: memref<5x8x512xf32, #tpu.memory_space<vmem>>) attributes {dimension_semantics = [#tpu.dimension_semantics<parallel>], iteration_bounds = array<i64: 1>, scalar_prefetch = 0 : i64, scratch_operands = 4 : i64, tpu.core_type = #tpu.core_type<tc>, window_params = [{transform_indices = @transform_0, window_bounds = array<i64: 16, 8, 32>}, {transform_indices = @transform_1, window_bounds = array<i64: 17, 8, 32>}, {pipeline_mode = #tpu.pipeline_mode<synchronous>, transform_indices = @transform_2, window_bounds = array<i64: 3, 32, 512>}, {pipeline_mode = #tpu.pipeline_mode<synchronous>, transform_indices = @transform_3, window_bounds = array<i64: 1, 512>}, {pipeline_mode = #tpu.pipeline_mode<synchronous>, transform_indices = @transform_4, window_bounds = array<i64: 3, 512, 512>}, {pipeline_mode = #tpu.pipeline_mode<synchronous>, transform_indices = @transform_5, window_bounds = array<i64: 1, 512>}, {pipeline_mode = #tpu.pipeline_mode<synchronous>, transform_indices = @transform_6, window_bounds = array<i64: 3, 512, 512>}, {pipeline_mode = #tpu.pipeline_mode<synchronous>, transform_indices = @transform_7, window_bounds = array<i64: 1, 512>}, {pipeline_mode = #tpu.pipeline_mode<synchronous>, transform_indices = @transform_8, window_bounds = array<i64: 4, 512, 2>}, {pipeline_mode = #tpu.pipeline_mode<synchronous>, transform_indices = @transform_9, window_bounds = array<i64: 1, 2>}, {transform_indices = @transform_10, window_bounds = array<i64: 8, 2>}]} {
    %c0 = arith.constant 0 : index
    %c0_0 = arith.constant 0 : index
    %c0_1 = arith.constant 0 : index
    %0 = vector.load %arg2[%c0, %c0_0, %c0_1] : memref<17x8x32xf32, #tpu.memory_space<vmem>>, vector<16x8x32xf32>
    %c0_2 = arith.constant 0 : index
    %c0_3 = arith.constant 0 : index
    %c0_4 = arith.constant 0 : index
    %1 = vector.load %arg1[%c0_2, %c0_3, %c0_4] : memref<16x8x32xf32, #tpu.memory_space<vmem>>, vector<16x8x32xf32>
    %c1 = arith.constant 1 : index
    %c0_5 = arith.constant 0 : index
    %c0_6 = arith.constant 0 : index
    %2 = vector.load %arg2[%c1, %c0_5, %c0_6] : memref<17x8x32xf32, #tpu.memory_space<vmem>>, vector<16x8x32xf32>
    %3 = vector.shape_cast %0 : vector<16x8x32xf32> to vector<128x32xf32>
    %4 = arith.truncf %3 : vector<128x32xf32> to vector<128x32xbf16>
    %c0_7 = arith.constant 0 : index
    %c0_8 = arith.constant 0 : index
    %c0_9 = arith.constant 0 : index
    %5 = vector.load %arg3[%c0_7, %c0_8, %c0_9] : memref<3x32x512xbf16, #tpu.memory_space<vmem>>, vector<1x32x512xbf16>
    %6 = vector.shape_cast %5 : vector<1x32x512xbf16> to vector<32x512xbf16>
    %cst = arith.constant dense<0.000000e+00> : vector<128x512xf32>
    %7 = tpu.matmul %4, %6, %cst {dimension_numbers = #tpu.dot_dimension_numbers<[1], [0], [0], [1], [0, 0, 1, 1], [], []>} : vector<128x32xbf16>, vector<32x512xbf16>, vector<128x512xf32> -> vector<128x512xf32>
    %8 = vector.shape_cast %1 : vector<16x8x32xf32> to vector<128x32xf32>
    %9 = arith.truncf %8 : vector<128x32xf32> to vector<128x32xbf16>
    %c1_10 = arith.constant 1 : index
    %c0_11 = arith.constant 0 : index
    %c0_12 = arith.constant 0 : index
    %10 = vector.load %arg3[%c1_10, %c0_11, %c0_12] : memref<3x32x512xbf16, #tpu.memory_space<vmem>>, vector<1x32x512xbf16>
    %11 = vector.shape_cast %10 : vector<1x32x512xbf16> to vector<32x512xbf16>
    %cst_13 = arith.constant dense<0.000000e+00> : vector<128x512xf32>
    %12 = tpu.matmul %9, %11, %cst_13 {dimension_numbers = #tpu.dot_dimension_numbers<[1], [0], [0], [1], [0, 0, 1, 1], [], []>} : vector<128x32xbf16>, vector<32x512xbf16>, vector<128x512xf32> -> vector<128x512xf32>
    %13 = arith.addf %7, %12 : vector<128x512xf32>
    %14 = vector.shape_cast %2 : vector<16x8x32xf32> to vector<128x32xf32>
    %15 = arith.truncf %14 : vector<128x32xf32> to vector<128x32xbf16>
    %c2 = arith.constant 2 : index
    %c0_14 = arith.constant 0 : index
    %c0_15 = arith.constant 0 : index
    %16 = vector.load %arg3[%c2, %c0_14, %c0_15] : memref<3x32x512xbf16, #tpu.memory_space<vmem>>, vector<1x32x512xbf16>
    %17 = vector.shape_cast %16 : vector<1x32x512xbf16> to vector<32x512xbf16>
    %cst_16 = arith.constant dense<0.000000e+00> : vector<128x512xf32>
    %18 = tpu.matmul %15, %17, %cst_16 {dimension_numbers = #tpu.dot_dimension_numbers<[1], [0], [0], [1], [0, 0, 1, 1], [], []>} : vector<128x32xbf16>, vector<32x512xbf16>, vector<128x512xf32> -> vector<128x512xf32>
    %19 = arith.addf %13, %18 : vector<128x512xf32>
    %c0_17 = arith.constant 0 : index
    %c0_18 = arith.constant 0 : index
    %20 = vector.load %arg4[%c0_17, %c0_18] : memref<1x512xf32, #tpu.memory_space<vmem>>, vector<1x512xf32>
    %21 = vector.broadcast %20 : vector<1x512xf32> to vector<128x512xf32>
    %22 = arith.addf %19, %21 : vector<128x512xf32>
    %cst_19 = arith.constant 0.000000e+00 : f32
    %23 = vector.broadcast %cst_19 : f32 to vector<128x512xf32>
    %24 = arith.maximumf %22, %23 : vector<128x512xf32>
    %25 = vector.shape_cast %24 : vector<128x512xf32> to vector<16x8x512xf32>
    %cst_20 = arith.constant 0.000000e+00 : f32
    %26 = vector.broadcast %cst_20 : f32 to vector<8x512xf32>
    %c0_21 = arith.constant 0 : index
    %c0_22 = arith.constant 0 : index
    %c0_23 = arith.constant 0 : index
    %27 = vector.load %arg13[%c0_21, %c0_22, %c0_23] : memref<9x8x512xf32, #tpu.memory_space<vmem>>, vector<1x8x512xf32>
    %28 = vector.shape_cast %27 : vector<1x8x512xf32> to vector<8x512xf32>
    %29 = vector.shape_cast %26 : vector<8x512xf32> to vector<1x8x512xf32>
    tpu.vector_store %arg13[%c0_21, %c0_22, %c0_23], %29 {strides = array<i32>} : memref<9x8x512xf32, #tpu.memory_space<vmem>>, vector<1x8x512xf32>,
    %30 = vector.extract_strided_slice %25 {offsets = [0, 0, 0], sizes = [1, 8, 512], strides = [1, 1, 1]} : vector<16x8x512xf32> to vector<1x8x512xf32>
    %31 = vector.shape_cast %30 : vector<1x8x512xf32> to vector<8x512xf32>
    %c0_24 = arith.constant 0 : index
    %c0_25 = arith.constant 0 : index
    %c0_26 = arith.constant 0 : index
    %32 = vector.load %arg12[%c0_24, %c0_25, %c0_26] : memref<8x8x512xf32, #tpu.memory_space<vmem>>, vector<1x8x512xf32>
    %33 = vector.shape_cast %32 : vector<1x8x512xf32> to vector<8x512xf32>
    %34 = vector.shape_cast %31 : vector<8x512xf32> to vector<1x8x512xf32>
    tpu.vector_store %arg12[%c0_24, %c0_25, %c0_26], %34 {strides = array<i32>} : memref<8x8x512xf32, #tpu.memory_space<vmem>>, vector<1x8x512xf32>,
    %35 = vector.extract_strided_slice %25 {offsets = [1, 0, 0], sizes = [1, 8, 512], strides = [1, 1, 1]} : vector<16x8x512xf32> to vector<1x8x512xf32>
    %36 = vector.shape_cast %35 : vector<1x8x512xf32> to vector<8x512xf32>
    %c1_27 = arith.constant 1 : index
    %c0_28 = arith.constant 0 : index
    %c0_29 = arith.constant 0 : index
    %37 = vector.load %arg13[%c1_27, %c0_28, %c0_29] : memref<9x8x512xf32, #tpu.memory_space<vmem>>, vector<1x8x512xf32>
    %38 = vector.shape_cast %37 : vector<1x8x512xf32> to vector<8x512xf32>
    %39 = vector.shape_cast %36 : vector<8x512xf32> to vector<1x8x512xf32>
    tpu.vector_store %arg13[%c1_27, %c0_28, %c0_29], %39 {strides = array<i32>} : memref<9x8x512xf32, #tpu.memory_space<vmem>>, vector<1x8x512xf32>,
    %40 = vector.extract_strided_slice %25 {offsets = [2, 0, 0], sizes = [1, 8, 512], strides = [1, 1, 1]} : vector<16x8x512xf32> to vector<1x8x512xf32>
    %41 = vector.shape_cast %40 : vector<1x8x512xf32> to vector<8x512xf32>
    %c1_30 = arith.constant 1 : index
    %c0_31 = arith.constant 0 : index
    %c0_32 = arith.constant 0 : index
    %42 = vector.load %arg12[%c1_30, %c0_31, %c0_32] : memref<8x8x512xf32, #tpu.memory_space<vmem>>, vector<1x8x512xf32>
    %43 = vector.shape_cast %42 : vector<1x8x512xf32> to vector<8x512xf32>
    %44 = vector.shape_cast %41 : vector<8x512xf32> to vector<1x8x512xf32>
    tpu.vector_store %arg12[%c1_30, %c0_31, %c0_32], %44 {strides = array<i32>} : memref<8x8x512xf32, #tpu.memory_space<vmem>>, vector<1x8x512xf32>,
    %45 = vector.extract_strided_slice %25 {offsets = [3, 0, 0], sizes = [1, 8, 512], strides = [1, 1, 1]} : vector<16x8x512xf32> to vector<1x8x512xf32>
    %46 = vector.shape_cast %45 : vector<1x8x512xf32> to vector<8x512xf32>
    %c2_33 = arith.constant 2 : index
    %c0_34 = arith.constant 0 : index
    %c0_35 = arith.constant 0 : index
    %47 = vector.load %arg13[%c2_33, %c0_34, %c0_35] : memref<9x8x512xf32, #tpu.memory_space<vmem>>, vector<1x8x512xf32>
    %48 = vector.shape_cast %47 : vector<1x8x512xf32> to vector<8x512xf32>
    %49 = vector.shape_cast %46 : vector<8x512xf32> to vector<1x8x512xf32>
    tpu.vector_store %arg13[%c2_33, %c0_34, %c0_35], %49 {strides = array<i32>} : memref<9x8x512xf32, #tpu.memory_space<vmem>>, vector<1x8x512xf32>,
    %50 = vector.extract_strided_slice %25 {offsets = [4, 0, 0], sizes = [1, 8, 512], strides = [1, 1, 1]} : vector<16x8x512xf32> to vector<1x8x512xf32>
    %51 = vector.shape_cast %50 : vector<1x8x512xf32> to vector<8x512xf32>
    %c2_36 = arith.constant 2 : index
    %c0_37 = arith.constant 0 : index
    %c0_38 = arith.constant 0 : index
    %52 = vector.load %arg12[%c2_36, %c0_37, %c0_38] : memref<8x8x512xf32, #tpu.memory_space<vmem>>, vector<1x8x512xf32>
    %53 = vector.shape_cast %52 : vector<1x8x512xf32> to vector<8x512xf32>
    %54 = vector.shape_cast %51 : vector<8x512xf32> to vector<1x8x512xf32>
    tpu.vector_store %arg12[%c2_36, %c0_37, %c0_38], %54 {strides = array<i32>} : memref<8x8x512xf32, #tpu.memory_space<vmem>>, vector<1x8x512xf32>,
    %55 = vector.extract_strided_slice %25 {offsets = [5, 0, 0], sizes = [1, 8, 512], strides = [1, 1, 1]} : vector<16x8x512xf32> to vector<1x8x512xf32>
    %56 = vector.shape_cast %55 : vector<1x8x512xf32> to vector<8x512xf32>
    %c3 = arith.constant 3 : index
    %c0_39 = arith.constant 0 : index
    %c0_40 = arith.constant 0 : index
    %57 = vector.load %arg13[%c3, %c0_39, %c0_40] : memref<9x8x512xf32, #tpu.memory_space<vmem>>, vector<1x8x512xf32>
    %58 = vector.shape_cast %57 : vector<1x8x512xf32> to vector<8x512xf32>
    %59 = vector.shape_cast %56 : vector<8x512xf32> to vector<1x8x512xf32>
    tpu.vector_store %arg13[%c3, %c0_39, %c0_40], %59 {strides = array<i32>} : memref<9x8x512xf32, #tpu.memory_space<vmem>>, vector<1x8x512xf32>,
    %60 = vector.extract_strided_slice %25 {offsets = [6, 0, 0], sizes = [1, 8, 512], strides = [1, 1, 1]} : vector<16x8x512xf32> to vector<1x8x512xf32>
    %61 = vector.shape_cast %60 : vector<1x8x512xf32> to vector<8x512xf32>
    %c3_41 = arith.constant 3 : index
    %c0_42 = arith.constant 0 : index
    %c0_43 = arith.constant 0 : index
    %62 = vector.load %arg12[%c3_41, %c0_42, %c0_43] : memref<8x8x512xf32, #tpu.memory_space<vmem>>, vector<1x8x512xf32>
    %63 = vector.shape_cast %62 : vector<1x8x512xf32> to vector<8x512xf32>
    %64 = vector.shape_cast %61 : vector<8x512xf32> to vector<1x8x512xf32>
    tpu.vector_store %arg12[%c3_41, %c0_42, %c0_43], %64 {strides = array<i32>} : memref<8x8x512xf32, #tpu.memory_space<vmem>>, vector<1x8x512xf32>,
    %65 = vector.extract_strided_slice %25 {offsets = [7, 0, 0], sizes = [1, 8, 512], strides = [1, 1, 1]} : vector<16x8x512xf32> to vector<1x8x512xf32>
    %66 = vector.shape_cast %65 : vector<1x8x512xf32> to vector<8x512xf32>
    %c4 = arith.constant 4 : index
    %c0_44 = arith.constant 0 : index
    %c0_45 = arith.constant 0 : index
    %67 = vector.load %arg13[%c4, %c0_44, %c0_45] : memref<9x8x512xf32, #tpu.memory_space<vmem>>, vector<1x8x512xf32>
    %68 = vector.shape_cast %67 : vector<1x8x512xf32> to vector<8x512xf32>
    %69 = vector.shape_cast %66 : vector<8x512xf32> to vector<1x8x512xf32>
    tpu.vector_store %arg13[%c4, %c0_44, %c0_45], %69 {strides = array<i32>} : memref<9x8x512xf32, #tpu.memory_space<vmem>>, vector<1x8x512xf32>,
    %70 = vector.extract_strided_slice %25 {offsets = [8, 0, 0], sizes = [1, 8, 512], strides = [1, 1, 1]} : vector<16x8x512xf32> to vector<1x8x512xf32>
    %71 = vector.shape_cast %70 : vector<1x8x512xf32> to vector<8x512xf32>
    %c4_46 = arith.constant 4 : index
    %c0_47 = arith.constant 0 : index
    %c0_48 = arith.constant 0 : index
    %72 = vector.load %arg12[%c4_46, %c0_47, %c0_48] : memref<8x8x512xf32, #tpu.memory_space<vmem>>, vector<1x8x512xf32>
    %73 = vector.shape_cast %72 : vector<1x8x512xf32> to vector<8x512xf32>
    %74 = vector.shape_cast %71 : vector<8x512xf32> to vector<1x8x512xf32>
    tpu.vector_store %arg12[%c4_46, %c0_47, %c0_48], %74 {strides = array<i32>} : memref<8x8x512xf32, #tpu.memory_space<vmem>>, vector<1x8x512xf32>,
    %75 = vector.extract_strided_slice %25 {offsets = [9, 0, 0], sizes = [1, 8, 512], strides = [1, 1, 1]} : vector<16x8x512xf32> to vector<1x8x512xf32>
    %76 = vector.shape_cast %75 : vector<1x8x512xf32> to vector<8x512xf32>
    %c5 = arith.constant 5 : index
    %c0_49 = arith.constant 0 : index
    %c0_50 = arith.constant 0 : index
    %77 = vector.load %arg13[%c5, %c0_49, %c0_50] : memref<9x8x512xf32, #tpu.memory_space<vmem>>, vector<1x8x512xf32>
    %78 = vector.shape_cast %77 : vector<1x8x512xf32> to vector<8x512xf32>
    %79 = vector.shape_cast %76 : vector<8x512xf32> to vector<1x8x512xf32>
    tpu.vector_store %arg13[%c5, %c0_49, %c0_50], %79 {strides = array<i32>} : memref<9x8x512xf32, #tpu.memory_space<vmem>>, vector<1x8x512xf32>,
    %80 = vector.extract_strided_slice %25 {offsets = [10, 0, 0], sizes = [1, 8, 512], strides = [1, 1, 1]} : vector<16x8x512xf32> to vector<1x8x512xf32>
    %81 = vector.shape_cast %80 : vector<1x8x512xf32> to vector<8x512xf32>
    %c5_51 = arith.constant 5 : index
    %c0_52 = arith.constant 0 : index
    %c0_53 = arith.constant 0 : index
    %82 = vector.load %arg12[%c5_51, %c0_52, %c0_53] : memref<8x8x512xf32, #tpu.memory_space<vmem>>, vector<1x8x512xf32>
    %83 = vector.shape_cast %82 : vector<1x8x512xf32> to vector<8x512xf32>
    %84 = vector.shape_cast %81 : vector<8x512xf32> to vector<1x8x512xf32>
    tpu.vector_store %arg12[%c5_51, %c0_52, %c0_53], %84 {strides = array<i32>} : memref<8x8x512xf32, #tpu.memory_space<vmem>>, vector<1x8x512xf32>,
    %85 = vector.extract_strided_slice %25 {offsets = [11, 0, 0], sizes = [1, 8, 512], strides = [1, 1, 1]} : vector<16x8x512xf32> to vector<1x8x512xf32>
    %86 = vector.shape_cast %85 : vector<1x8x512xf32> to vector<8x512xf32>
    %c6 = arith.constant 6 : index
    %c0_54 = arith.constant 0 : index
    %c0_55 = arith.constant 0 : index
    %87 = vector.load %arg13[%c6, %c0_54, %c0_55] : memref<9x8x512xf32, #tpu.memory_space<vmem>>, vector<1x8x512xf32>
    %88 = vector.shape_cast %87 : vector<1x8x512xf32> to vector<8x512xf32>
    %89 = vector.shape_cast %86 : vector<8x512xf32> to vector<1x8x512xf32>
    tpu.vector_store %arg13[%c6, %c0_54, %c0_55], %89 {strides = array<i32>} : memref<9x8x512xf32, #tpu.memory_space<vmem>>, vector<1x8x512xf32>,
    %90 = vector.extract_strided_slice %25 {offsets = [12, 0, 0], sizes = [1, 8, 512], strides = [1, 1, 1]} : vector<16x8x512xf32> to vector<1x8x512xf32>
    %91 = vector.shape_cast %90 : vector<1x8x512xf32> to vector<8x512xf32>
    %c6_56 = arith.constant 6 : index
    %c0_57 = arith.constant 0 : index
    %c0_58 = arith.constant 0 : index
    %92 = vector.load %arg12[%c6_56, %c0_57, %c0_58] : memref<8x8x512xf32, #tpu.memory_space<vmem>>, vector<1x8x512xf32>
    %93 = vector.shape_cast %92 : vector<1x8x512xf32> to vector<8x512xf32>
    %94 = vector.shape_cast %91 : vector<8x512xf32> to vector<1x8x512xf32>
    tpu.vector_store %arg12[%c6_56, %c0_57, %c0_58], %94 {strides = array<i32>} : memref<8x8x512xf32, #tpu.memory_space<vmem>>, vector<1x8x512xf32>,
    %95 = vector.extract_strided_slice %25 {offsets = [13, 0, 0], sizes = [1, 8, 512], strides = [1, 1, 1]} : vector<16x8x512xf32> to vector<1x8x512xf32>
    %96 = vector.shape_cast %95 : vector<1x8x512xf32> to vector<8x512xf32>
    %c7 = arith.constant 7 : index
    %c0_59 = arith.constant 0 : index
    %c0_60 = arith.constant 0 : index
    %97 = vector.load %arg13[%c7, %c0_59, %c0_60] : memref<9x8x512xf32, #tpu.memory_space<vmem>>, vector<1x8x512xf32>
    %98 = vector.shape_cast %97 : vector<1x8x512xf32> to vector<8x512xf32>
    %99 = vector.shape_cast %96 : vector<8x512xf32> to vector<1x8x512xf32>
    tpu.vector_store %arg13[%c7, %c0_59, %c0_60], %99 {strides = array<i32>} : memref<9x8x512xf32, #tpu.memory_space<vmem>>, vector<1x8x512xf32>,
    %100 = vector.extract_strided_slice %25 {offsets = [14, 0, 0], sizes = [1, 8, 512], strides = [1, 1, 1]} : vector<16x8x512xf32> to vector<1x8x512xf32>
    %101 = vector.shape_cast %100 : vector<1x8x512xf32> to vector<8x512xf32>
    %c7_61 = arith.constant 7 : index
    %c0_62 = arith.constant 0 : index
    %c0_63 = arith.constant 0 : index
    %102 = vector.load %arg12[%c7_61, %c0_62, %c0_63] : memref<8x8x512xf32, #tpu.memory_space<vmem>>, vector<1x8x512xf32>
    %103 = vector.shape_cast %102 : vector<1x8x512xf32> to vector<8x512xf32>
    %104 = vector.shape_cast %101 : vector<8x512xf32> to vector<1x8x512xf32>
    tpu.vector_store %arg12[%c7_61, %c0_62, %c0_63], %104 {strides = array<i32>} : memref<8x8x512xf32, #tpu.memory_space<vmem>>, vector<1x8x512xf32>,
    %105 = vector.extract_strided_slice %25 {offsets = [15, 0, 0], sizes = [1, 8, 512], strides = [1, 1, 1]} : vector<16x8x512xf32> to vector<1x8x512xf32>
    %106 = vector.shape_cast %105 : vector<1x8x512xf32> to vector<8x512xf32>
    %c8 = arith.constant 8 : index
    %c0_64 = arith.constant 0 : index
    %c0_65 = arith.constant 0 : index
    %107 = vector.load %arg13[%c8, %c0_64, %c0_65] : memref<9x8x512xf32, #tpu.memory_space<vmem>>, vector<1x8x512xf32>
    %108 = vector.shape_cast %107 : vector<1x8x512xf32> to vector<8x512xf32>
    %109 = vector.shape_cast %106 : vector<8x512xf32> to vector<1x8x512xf32>
    tpu.vector_store %arg13[%c8, %c0_64, %c0_65], %109 {strides = array<i32>} : memref<9x8x512xf32, #tpu.memory_space<vmem>>, vector<1x8x512xf32>,
    %c0_66 = arith.constant 0 : index
    %c0_67 = arith.constant 0 : index
    %c0_68 = arith.constant 0 : index
    %110 = vector.load %arg13[%c0_66, %c0_67, %c0_68] : memref<9x8x512xf32, #tpu.memory_space<vmem>>, vector<8x8x512xf32>
    %c0_69 = arith.constant 0 : index
    %c0_70 = arith.constant 0 : index
    %c0_71 = arith.constant 0 : index
    %111 = vector.load %arg12[%c0_69, %c0_70, %c0_71] : memref<8x8x512xf32, #tpu.memory_space<vmem>>, vector<8x8x512xf32>
    %c1_72 = arith.constant 1 : index
    %c0_73 = arith.constant 0 : index
    %c0_74 = arith.constant 0 : index
    %112 = vector.load %arg13[%c1_72, %c0_73, %c0_74] : memref<9x8x512xf32, #tpu.memory_space<vmem>>, vector<8x8x512xf32>
    %113 = vector.shape_cast %110 : vector<8x8x512xf32> to vector<64x512xf32>
    %114 = arith.truncf %113 : vector<64x512xf32> to vector<64x512xbf16>
    %c0_75 = arith.constant 0 : index
    %c0_76 = arith.constant 0 : index
    %c0_77 = arith.constant 0 : index
    %115 = vector.load %arg5[%c0_75, %c0_76, %c0_77] : memref<3x512x512xbf16, #tpu.memory_space<vmem>>, vector<1x512x512xbf16>
    %116 = vector.shape_cast %115 : vector<1x512x512xbf16> to vector<512x512xbf16>
    %cst_78 = arith.constant dense<0.000000e+00> : vector<64x512xf32>
    %117 = tpu.matmul %114, %116, %cst_78 {dimension_numbers = #tpu.dot_dimension_numbers<[1], [0], [0], [1], [0, 0, 1, 1], [], []>} : vector<64x512xbf16>, vector<512x512xbf16>, vector<64x512xf32> -> vector<64x512xf32>
    %118 = vector.shape_cast %111 : vector<8x8x512xf32> to vector<64x512xf32>
    %119 = arith.truncf %118 : vector<64x512xf32> to vector<64x512xbf16>
    %c1_79 = arith.constant 1 : index
    %c0_80 = arith.constant 0 : index
    %c0_81 = arith.constant 0 : index
    %120 = vector.load %arg5[%c1_79, %c0_80, %c0_81] : memref<3x512x512xbf16, #tpu.memory_space<vmem>>, vector<1x512x512xbf16>
    %121 = vector.shape_cast %120 : vector<1x512x512xbf16> to vector<512x512xbf16>
    %cst_82 = arith.constant dense<0.000000e+00> : vector<64x512xf32>
    %122 = tpu.matmul %119, %121, %cst_82 {dimension_numbers = #tpu.dot_dimension_numbers<[1], [0], [0], [1], [0, 0, 1, 1], [], []>} : vector<64x512xbf16>, vector<512x512xbf16>, vector<64x512xf32> -> vector<64x512xf32>
    %123 = arith.addf %117, %122 : vector<64x512xf32>
    %124 = vector.shape_cast %112 : vector<8x8x512xf32> to vector<64x512xf32>
    %125 = arith.truncf %124 : vector<64x512xf32> to vector<64x512xbf16>
    %c2_83 = arith.constant 2 : index
    %c0_84 = arith.constant 0 : index
    %c0_85 = arith.constant 0 : index
    %126 = vector.load %arg5[%c2_83, %c0_84, %c0_85] : memref<3x512x512xbf16, #tpu.memory_space<vmem>>, vector<1x512x512xbf16>
    %127 = vector.shape_cast %126 : vector<1x512x512xbf16> to vector<512x512xbf16>
    %cst_86 = arith.constant dense<0.000000e+00> : vector<64x512xf32>
    %128 = tpu.matmul %125, %127, %cst_86 {dimension_numbers = #tpu.dot_dimension_numbers<[1], [0], [0], [1], [0, 0, 1, 1], [], []>} : vector<64x512xbf16>, vector<512x512xbf16>, vector<64x512xf32> -> vector<64x512xf32>
    %129 = arith.addf %123, %128 : vector<64x512xf32>
    %c0_87 = arith.constant 0 : index
    %c0_88 = arith.constant 0 : index
    %130 = vector.load %arg6[%c0_87, %c0_88] : memref<1x512xf32, #tpu.memory_space<vmem>>, vector<1x512xf32>
    %131 = vector.broadcast %130 : vector<1x512xf32> to vector<64x512xf32>
    %132 = arith.addf %129, %131 : vector<64x512xf32>
    %cst_89 = arith.constant 0.000000e+00 : f32
    %133 = vector.broadcast %cst_89 : f32 to vector<64x512xf32>
    %134 = arith.maximumf %132, %133 : vector<64x512xf32>
    %135 = vector.shape_cast %134 : vector<64x512xf32> to vector<8x8x512xf32>
    %cst_90 = arith.constant 0.000000e+00 : f32
    %136 = vector.broadcast %cst_90 : f32 to vector<8x512xf32>
    %c0_91 = arith.constant 0 : index
    %c0_92 = arith.constant 0 : index
    %c0_93 = arith.constant 0 : index
    %137 = vector.load %arg15[%c0_91, %c0_92, %c0_93] : memref<5x8x512xf32, #tpu.memory_space<vmem>>, vector<1x8x512xf32>
    %138 = vector.shape_cast %137 : vector<1x8x512xf32> to vector<8x512xf32>
    %139 = vector.shape_cast %136 : vector<8x512xf32> to vector<1x8x512xf32>
    tpu.vector_store %arg15[%c0_91, %c0_92, %c0_93], %139 {strides = array<i32>} : memref<5x8x512xf32, #tpu.memory_space<vmem>>, vector<1x8x512xf32>,
    %140 = vector.extract_strided_slice %135 {offsets = [0, 0, 0], sizes = [1, 8, 512], strides = [1, 1, 1]} : vector<8x8x512xf32> to vector<1x8x512xf32>
    %141 = vector.shape_cast %140 : vector<1x8x512xf32> to vector<8x512xf32>
    %c0_94 = arith.constant 0 : index
    %c0_95 = arith.constant 0 : index
    %c0_96 = arith.constant 0 : index
    %142 = vector.load %arg14[%c0_94, %c0_95, %c0_96] : memref<4x8x512xf32, #tpu.memory_space<vmem>>, vector<1x8x512xf32>
    %143 = vector.shape_cast %142 : vector<1x8x512xf32> to vector<8x512xf32>
    %144 = vector.shape_cast %141 : vector<8x512xf32> to vector<1x8x512xf32>
    tpu.vector_store %arg14[%c0_94, %c0_95, %c0_96], %144 {strides = array<i32>} : memref<4x8x512xf32, #tpu.memory_space<vmem>>, vector<1x8x512xf32>,
    %145 = vector.extract_strided_slice %135 {offsets = [1, 0, 0], sizes = [1, 8, 512], strides = [1, 1, 1]} : vector<8x8x512xf32> to vector<1x8x512xf32>
    %146 = vector.shape_cast %145 : vector<1x8x512xf32> to vector<8x512xf32>
    %c1_97 = arith.constant 1 : index
    %c0_98 = arith.constant 0 : index
    %c0_99 = arith.constant 0 : index
    %147 = vector.load %arg15[%c1_97, %c0_98, %c0_99] : memref<5x8x512xf32, #tpu.memory_space<vmem>>, vector<1x8x512xf32>
    %148 = vector.shape_cast %147 : vector<1x8x512xf32> to vector<8x512xf32>
    %149 = vector.shape_cast %146 : vector<8x512xf32> to vector<1x8x512xf32>
    tpu.vector_store %arg15[%c1_97, %c0_98, %c0_99], %149 {strides = array<i32>} : memref<5x8x512xf32, #tpu.memory_space<vmem>>, vector<1x8x512xf32>,
    %150 = vector.extract_strided_slice %135 {offsets = [2, 0, 0], sizes = [1, 8, 512], strides = [1, 1, 1]} : vector<8x8x512xf32> to vector<1x8x512xf32>
    %151 = vector.shape_cast %150 : vector<1x8x512xf32> to vector<8x512xf32>
    %c1_100 = arith.constant 1 : index
    %c0_101 = arith.constant 0 : index
    %c0_102 = arith.constant 0 : index
    %152 = vector.load %arg14[%c1_100, %c0_101, %c0_102] : memref<4x8x512xf32, #tpu.memory_space<vmem>>, vector<1x8x512xf32>
    %153 = vector.shape_cast %152 : vector<1x8x512xf32> to vector<8x512xf32>
    %154 = vector.shape_cast %151 : vector<8x512xf32> to vector<1x8x512xf32>
    tpu.vector_store %arg14[%c1_100, %c0_101, %c0_102], %154 {strides = array<i32>} : memref<4x8x512xf32, #tpu.memory_space<vmem>>, vector<1x8x512xf32>,
    %155 = vector.extract_strided_slice %135 {offsets = [3, 0, 0], sizes = [1, 8, 512], strides = [1, 1, 1]} : vector<8x8x512xf32> to vector<1x8x512xf32>
    %156 = vector.shape_cast %155 : vector<1x8x512xf32> to vector<8x512xf32>
    %c2_103 = arith.constant 2 : index
    %c0_104 = arith.constant 0 : index
    %c0_105 = arith.constant 0 : index
    %157 = vector.load %arg15[%c2_103, %c0_104, %c0_105] : memref<5x8x512xf32, #tpu.memory_space<vmem>>, vector<1x8x512xf32>
    %158 = vector.shape_cast %157 : vector<1x8x512xf32> to vector<8x512xf32>
    %159 = vector.shape_cast %156 : vector<8x512xf32> to vector<1x8x512xf32>
    tpu.vector_store %arg15[%c2_103, %c0_104, %c0_105], %159 {strides = array<i32>} : memref<5x8x512xf32, #tpu.memory_space<vmem>>, vector<1x8x512xf32>,
    %160 = vector.extract_strided_slice %135 {offsets = [4, 0, 0], sizes = [1, 8, 512], strides = [1, 1, 1]} : vector<8x8x512xf32> to vector<1x8x512xf32>
    %161 = vector.shape_cast %160 : vector<1x8x512xf32> to vector<8x512xf32>
    %c2_106 = arith.constant 2 : index
    %c0_107 = arith.constant 0 : index
    %c0_108 = arith.constant 0 : index
    %162 = vector.load %arg14[%c2_106, %c0_107, %c0_108] : memref<4x8x512xf32, #tpu.memory_space<vmem>>, vector<1x8x512xf32>
    %163 = vector.shape_cast %162 : vector<1x8x512xf32> to vector<8x512xf32>
    %164 = vector.shape_cast %161 : vector<8x512xf32> to vector<1x8x512xf32>
    tpu.vector_store %arg14[%c2_106, %c0_107, %c0_108], %164 {strides = array<i32>} : memref<4x8x512xf32, #tpu.memory_space<vmem>>, vector<1x8x512xf32>,
    %165 = vector.extract_strided_slice %135 {offsets = [5, 0, 0], sizes = [1, 8, 512], strides = [1, 1, 1]} : vector<8x8x512xf32> to vector<1x8x512xf32>
    %166 = vector.shape_cast %165 : vector<1x8x512xf32> to vector<8x512xf32>
    %c3_109 = arith.constant 3 : index
    %c0_110 = arith.constant 0 : index
    %c0_111 = arith.constant 0 : index
    %167 = vector.load %arg15[%c3_109, %c0_110, %c0_111] : memref<5x8x512xf32, #tpu.memory_space<vmem>>, vector<1x8x512xf32>
    %168 = vector.shape_cast %167 : vector<1x8x512xf32> to vector<8x512xf32>
    %169 = vector.shape_cast %166 : vector<8x512xf32> to vector<1x8x512xf32>
    tpu.vector_store %arg15[%c3_109, %c0_110, %c0_111], %169 {strides = array<i32>} : memref<5x8x512xf32, #tpu.memory_space<vmem>>, vector<1x8x512xf32>,
    %170 = vector.extract_strided_slice %135 {offsets = [6, 0, 0], sizes = [1, 8, 512], strides = [1, 1, 1]} : vector<8x8x512xf32> to vector<1x8x512xf32>
    %171 = vector.shape_cast %170 : vector<1x8x512xf32> to vector<8x512xf32>
    %c3_112 = arith.constant 3 : index
    %c0_113 = arith.constant 0 : index
    %c0_114 = arith.constant 0 : index
    %172 = vector.load %arg14[%c3_112, %c0_113, %c0_114] : memref<4x8x512xf32, #tpu.memory_space<vmem>>, vector<1x8x512xf32>
    %173 = vector.shape_cast %172 : vector<1x8x512xf32> to vector<8x512xf32>
    %174 = vector.shape_cast %171 : vector<8x512xf32> to vector<1x8x512xf32>
    tpu.vector_store %arg14[%c3_112, %c0_113, %c0_114], %174 {strides = array<i32>} : memref<4x8x512xf32, #tpu.memory_space<vmem>>, vector<1x8x512xf32>,
    %175 = vector.extract_strided_slice %135 {offsets = [7, 0, 0], sizes = [1, 8, 512], strides = [1, 1, 1]} : vector<8x8x512xf32> to vector<1x8x512xf32>
    %176 = vector.shape_cast %175 : vector<1x8x512xf32> to vector<8x512xf32>
    %c4_115 = arith.constant 4 : index
    %c0_116 = arith.constant 0 : index
    %c0_117 = arith.constant 0 : index
    %177 = vector.load %arg15[%c4_115, %c0_116, %c0_117] : memref<5x8x512xf32, #tpu.memory_space<vmem>>, vector<1x8x512xf32>
    %178 = vector.shape_cast %177 : vector<1x8x512xf32> to vector<8x512xf32>
    %179 = vector.shape_cast %176 : vector<8x512xf32> to vector<1x8x512xf32>
    tpu.vector_store %arg15[%c4_115, %c0_116, %c0_117], %179 {strides = array<i32>} : memref<5x8x512xf32, #tpu.memory_space<vmem>>, vector<1x8x512xf32>,
    %c0_118 = arith.constant 0 : index
    %c0_119 = arith.constant 0 : index
    %c0_120 = arith.constant 0 : index
    %180 = vector.load %arg15[%c0_118, %c0_119, %c0_120] : memref<5x8x512xf32, #tpu.memory_space<vmem>>, vector<4x8x512xf32>
    %c0_121 = arith.constant 0 : index
    %c0_122 = arith.constant 0 : index
    %c0_123 = arith.constant 0 : index
    %181 = vector.load %arg14[%c0_121, %c0_122, %c0_123] : memref<4x8x512xf32, #tpu.memory_space<vmem>>, vector<4x8x512xf32>
    %c1_124 = arith.constant 1 : index
    %c0_125 = arith.constant 0 : index
    %c0_126 = arith.constant 0 : index
    %182 = vector.load %arg15[%c1_124, %c0_125, %c0_126] : memref<5x8x512xf32, #tpu.memory_space<vmem>>, vector<4x8x512xf32>
    %183 = vector.shape_cast %180 : vector<4x8x512xf32> to vector<32x512xf32>
    %184 = arith.truncf %183 : vector<32x512xf32> to vector<32x512xbf16>
    %c0_127 = arith.constant 0 : index
    %c0_128 = arith.constant 0 : index
    %c0_129 = arith.constant 0 : index
    %185 = vector.load %arg7[%c0_127, %c0_128, %c0_129] : memref<3x512x512xbf16, #tpu.memory_space<vmem>>, vector<1x512x512xbf16>
    %186 = vector.shape_cast %185 : vector<1x512x512xbf16> to vector<512x512xbf16>
    %cst_130 = arith.constant dense<0.000000e+00> : vector<32x512xf32>
    %187 = tpu.matmul %184, %186, %cst_130 {dimension_numbers = #tpu.dot_dimension_numbers<[1], [0], [0], [1], [0, 0, 1, 1], [], []>} : vector<32x512xbf16>, vector<512x512xbf16>, vector<32x512xf32> -> vector<32x512xf32>
    %188 = vector.shape_cast %181 : vector<4x8x512xf32> to vector<32x512xf32>
    %189 = arith.truncf %188 : vector<32x512xf32> to vector<32x512xbf16>
    %c1_131 = arith.constant 1 : index
    %c0_132 = arith.constant 0 : index
    %c0_133 = arith.constant 0 : index
    %190 = vector.load %arg7[%c1_131, %c0_132, %c0_133] : memref<3x512x512xbf16, #tpu.memory_space<vmem>>, vector<1x512x512xbf16>
    %191 = vector.shape_cast %190 : vector<1x512x512xbf16> to vector<512x512xbf16>
    %cst_134 = arith.constant dense<0.000000e+00> : vector<32x512xf32>
    %192 = tpu.matmul %189, %191, %cst_134 {dimension_numbers = #tpu.dot_dimension_numbers<[1], [0], [0], [1], [0, 0, 1, 1], [], []>} : vector<32x512xbf16>, vector<512x512xbf16>, vector<32x512xf32> -> vector<32x512xf32>
    %193 = arith.addf %187, %192 : vector<32x512xf32>
    %194 = vector.shape_cast %182 : vector<4x8x512xf32> to vector<32x512xf32>
    %195 = arith.truncf %194 : vector<32x512xf32> to vector<32x512xbf16>
    %c2_135 = arith.constant 2 : index
    %c0_136 = arith.constant 0 : index
    %c0_137 = arith.constant 0 : index
    %196 = vector.load %arg7[%c2_135, %c0_136, %c0_137] : memref<3x512x512xbf16, #tpu.memory_space<vmem>>, vector<1x512x512xbf16>
    %197 = vector.shape_cast %196 : vector<1x512x512xbf16> to vector<512x512xbf16>
    %cst_138 = arith.constant dense<0.000000e+00> : vector<32x512xf32>
    %198 = tpu.matmul %195, %197, %cst_138 {dimension_numbers = #tpu.dot_dimension_numbers<[1], [0], [0], [1], [0, 0, 1, 1], [], []>} : vector<32x512xbf16>, vector<512x512xbf16>, vector<32x512xf32> -> vector<32x512xf32>
    %199 = arith.addf %193, %198 : vector<32x512xf32>
    %c0_139 = arith.constant 0 : index
    %c0_140 = arith.constant 0 : index
    %200 = vector.load %arg8[%c0_139, %c0_140] : memref<1x512xf32, #tpu.memory_space<vmem>>, vector<1x512xf32>
    %201 = vector.broadcast %200 : vector<1x512xf32> to vector<32x512xf32>
    %202 = arith.addf %199, %201 : vector<32x512xf32>
    %cst_141 = arith.constant 0.000000e+00 : f32
    %203 = vector.broadcast %cst_141 : f32 to vector<32x512xf32>
    %204 = arith.maximumf %202, %203 : vector<32x512xf32>
    %205 = vector.shape_cast %204 : vector<32x512xf32> to vector<4x8x512xf32>
    %c0_142 = arith.constant 0 : index
    %c0_143 = arith.constant 0 : index
    %206 = vector.load %arg10[%c0_142, %c0_143] : memref<1x2xf32, #tpu.memory_space<vmem>>, vector<1x2xf32>
    %207 = vector.shape_cast %206 : vector<1x2xf32> to vector<1x2xf32>
    %208 = vector.broadcast %207 : vector<1x2xf32> to vector<8x2xf32>
    %209 = vector.extract_strided_slice %205 {offsets = [0, 0, 0], sizes = [1, 8, 512], strides = [1, 1, 1]} : vector<4x8x512xf32> to vector<1x8x512xf32>
    %210 = vector.shape_cast %209 : vector<1x8x512xf32> to vector<8x512xf32>
    %211 = arith.truncf %210 : vector<8x512xf32> to vector<8x512xbf16>
    %c0_144 = arith.constant 0 : index
    %c0_145 = arith.constant 0 : index
    %c0_146 = arith.constant 0 : index
    %212 = vector.load %arg9[%c0_144, %c0_145, %c0_146] : memref<4x512x2xbf16, #tpu.memory_space<vmem>>, vector<1x512x2xbf16>
    %213 = vector.shape_cast %212 : vector<1x512x2xbf16> to vector<512x2xbf16>
    %cst_147 = arith.constant dense<0.000000e+00> : vector<8x2xf32>
    %214 = tpu.matmul %211, %213, %cst_147 {dimension_numbers = #tpu.dot_dimension_numbers<[1], [0], [0], [1], [0, 0, 1, 1], [], []>} : vector<8x512xbf16>, vector<512x2xbf16>, vector<8x2xf32> -> vector<8x2xf32>
    %215 = arith.addf %208, %214 : vector<8x2xf32>
    %216 = vector.extract_strided_slice %205 {offsets = [1, 0, 0], sizes = [1, 8, 512], strides = [1, 1, 1]} : vector<4x8x512xf32> to vector<1x8x512xf32>
    %217 = vector.shape_cast %216 : vector<1x8x512xf32> to vector<8x512xf32>
    %218 = arith.truncf %217 : vector<8x512xf32> to vector<8x512xbf16>
    %c1_148 = arith.constant 1 : index
    %c0_149 = arith.constant 0 : index
    %c0_150 = arith.constant 0 : index
    %219 = vector.load %arg9[%c1_148, %c0_149, %c0_150] : memref<4x512x2xbf16, #tpu.memory_space<vmem>>, vector<1x512x2xbf16>
    %220 = vector.shape_cast %219 : vector<1x512x2xbf16> to vector<512x2xbf16>
    %cst_151 = arith.constant dense<0.000000e+00> : vector<8x2xf32>
    %221 = tpu.matmul %218, %220, %cst_151 {dimension_numbers = #tpu.dot_dimension_numbers<[1], [0], [0], [1], [0, 0, 1, 1], [], []>} : vector<8x512xbf16>, vector<512x2xbf16>, vector<8x2xf32> -> vector<8x2xf32>
    %222 = arith.addf %215, %221 : vector<8x2xf32>
    %223 = vector.extract_strided_slice %205 {offsets = [2, 0, 0], sizes = [1, 8, 512], strides = [1, 1, 1]} : vector<4x8x512xf32> to vector<1x8x512xf32>
    %224 = vector.shape_cast %223 : vector<1x8x512xf32> to vector<8x512xf32>
    %225 = arith.truncf %224 : vector<8x512xf32> to vector<8x512xbf16>
    %c2_152 = arith.constant 2 : index
    %c0_153 = arith.constant 0 : index
    %c0_154 = arith.constant 0 : index
    %226 = vector.load %arg9[%c2_152, %c0_153, %c0_154] : memref<4x512x2xbf16, #tpu.memory_space<vmem>>, vector<1x512x2xbf16>
    %227 = vector.shape_cast %226 : vector<1x512x2xbf16> to vector<512x2xbf16>
    %cst_155 = arith.constant dense<0.000000e+00> : vector<8x2xf32>
    %228 = tpu.matmul %225, %227, %cst_155 {dimension_numbers = #tpu.dot_dimension_numbers<[1], [0], [0], [1], [0, 0, 1, 1], [], []>} : vector<8x512xbf16>, vector<512x2xbf16>, vector<8x2xf32> -> vector<8x2xf32>
    %229 = arith.addf %222, %228 : vector<8x2xf32>
    %230 = vector.extract_strided_slice %205 {offsets = [3, 0, 0], sizes = [1, 8, 512], strides = [1, 1, 1]} : vector<4x8x512xf32> to vector<1x8x512xf32>
    %231 = vector.shape_cast %230 : vector<1x8x512xf32> to vector<8x512xf32>
    %232 = arith.truncf %231 : vector<8x512xf32> to vector<8x512xbf16>
    %c3_156 = arith.constant 3 : index
    %c0_157 = arith.constant 0 : index
    %c0_158 = arith.constant 0 : index
    %233 = vector.load %arg9[%c3_156, %c0_157, %c0_158] : memref<4x512x2xbf16, #tpu.memory_space<vmem>>, vector<1x512x2xbf16>
    %234 = vector.shape_cast %233 : vector<1x512x2xbf16> to vector<512x2xbf16>
    %cst_159 = arith.constant dense<0.000000e+00> : vector<8x2xf32>
    %235 = tpu.matmul %232, %234, %cst_159 {dimension_numbers = #tpu.dot_dimension_numbers<[1], [0], [0], [1], [0, 0, 1, 1], [], []>} : vector<8x512xbf16>, vector<512x2xbf16>, vector<8x2xf32> -> vector<8x2xf32>
    %236 = arith.addf %229, %235 : vector<8x2xf32>
    %c0_160 = arith.constant 0 : index
    %c0_161 = arith.constant 0 : index
    %237 = vector.load %arg11[%c0_160, %c0_161] : memref<8x2xf32, #tpu.memory_space<vmem>>, vector<8x2xf32>
    tpu.vector_store %arg11[%c0_160, %c0_161], %236 {strides = array<i32>} : memref<8x2xf32, #tpu.memory_space<vmem>>, vector<8x2xf32>,
    return
  }
  func.func @transform_0(%arg0: i32) -> (i32, i32, i32) {
    %c0_i32 = arith.constant 0 : i32
    %c0_i32_0 = arith.constant 0 : i32
    %c0_i32_1 = arith.constant 0 : i32
    return %c0_i32, %arg0, %c0_i32_0 : i32, i32, i32
  }
  func.func @transform_1(%arg0: i32) -> (i32, i32, i32) {
    %c0_i32 = arith.constant 0 : i32
    %c0_i32_0 = arith.constant 0 : i32
    %c0_i32_1 = arith.constant 0 : i32
    return %c0_i32, %arg0, %c0_i32_0 : i32, i32, i32
  }
  func.func @transform_2(%arg0: i32) -> (i32, i32, i32) {
    %c0_i32 = arith.constant 0 : i32
    %c0_i32_0 = arith.constant 0 : i32
    %c0_i32_1 = arith.constant 0 : i32
    %c0_i32_2 = arith.constant 0 : i32
    return %c0_i32, %c0_i32_0, %c0_i32_1 : i32, i32, i32
  }
  func.func @transform_3(%arg0: i32) -> (i32, i32) {
    %c0_i32 = arith.constant 0 : i32
    %c0_i32_0 = arith.constant 0 : i32
    %c0_i32_1 = arith.constant 0 : i32
    return %c0_i32, %c0_i32_0 : i32, i32
  }
  func.func @transform_4(%arg0: i32) -> (i32, i32, i32) {
    %c0_i32 = arith.constant 0 : i32
    %c0_i32_0 = arith.constant 0 : i32
    %c0_i32_1 = arith.constant 0 : i32
    %c0_i32_2 = arith.constant 0 : i32
    return %c0_i32, %c0_i32_0, %c0_i32_1 : i32, i32, i32
  }
  func.func @transform_5(%arg0: i32) -> (i32, i32) {
    %c0_i32 = arith.constant 0 : i32
    %c0_i32_0 = arith.constant 0 : i32
    %c0_i32_1 = arith.constant 0 : i32
    return %c0_i32, %c0_i32_0 : i32, i32
  }
  func.func @transform_6(%arg0: i32) -> (i32, i32, i32) {
    %c0_i32 = arith.constant 0 : i32
    %c0_i32_0 = arith.constant 0 : i32
    %c0_i32_1 = arith.constant 0 : i32
    %c0_i32_2 = arith.constant 0 : i32
    return %c0_i32, %c0_i32_0, %c0_i32_1 : i32, i32, i32
  }
  func.func @transform_7(%arg0: i32) -> (i32, i32) {
    %c0_i32 = arith.constant 0 : i32
    %c0_i32_0 = arith.constant 0 : i32
    %c0_i32_1 = arith.constant 0 : i32
    return %c0_i32, %c0_i32_0 : i32, i32
  }
  func.func @transform_8(%arg0: i32) -> (i32, i32, i32) {
    %c0_i32 = arith.constant 0 : i32
    %c0_i32_0 = arith.constant 0 : i32
    %c0_i32_1 = arith.constant 0 : i32
    %c0_i32_2 = arith.constant 0 : i32
    return %c0_i32, %c0_i32_0, %c0_i32_1 : i32, i32, i32
  }
  func.func @transform_9(%arg0: i32) -> (i32, i32) {
    %c0_i32 = arith.constant 0 : i32
    %c0_i32_0 = arith.constant 0 : i32
    %c0_i32_1 = arith.constant 0 : i32
    return %c0_i32, %c0_i32_0 : i32, i32
  }
  func.func @transform_10(%arg0: i32) -> (i32, i32) {
    %c0_i32 = arith.constant 0 : i32
    %c0_i32_0 = arith.constant 0 : i32
    return %arg0, %c0_i32 : i32, i32
  }
}

</mosaic_0001>

<llo_original>
// kernel: encoder_forward.1
$region0: #{encoder_forward.1}
  #allocation0 [shape = 'u32[]', space=smem, size = 0x4, offset = 0x4, fixed_abs, tag = 'smem constant byte address 0x4 - core index']
  #allocation1 [shape = 'u32[144,128]{1,0:T(1,128)}', space=vmem, size = 0x12000, scoped, tag = 'internal scratch']
  #allocation2 [shape = 'f32[8,8,512]{2,1,0:T(8,128)}', space=vmem, size = 0x20000, scoped, tag = 'scratch operand']
  #allocation3 [shape = 'f32[9,8,512]{2,1,0:T(8,128)}', space=vmem, size = 0x24000, scoped, tag = 'scratch operand']
  #allocation4 [shape = 'f32[4,8,512]{2,1,0:T(8,128)}', space=vmem, size = 0x10000, scoped, tag = 'scratch operand']
  #allocation5 [shape = 'f32[5,8,512]{2,1,0:T(8,128)}', space=vmem, size = 0x14000, scoped, tag = 'scratch operand']
  %s0 = inlined_call_operand.vmem [shape: f32[16,8,32], index: 0, kind: input, shape index: {}]
  %s1 = inlined_call_operand.vmem [shape: f32[17,8,32], index: 1, kind: input, shape index: {}]
  %s2 = inlined_call_operand.hbm [shape: bf16[3,32,512], index: 2, kind: input, shape index: {}]
  %s3 = inlined_call_operand.hbm [shape: f32[1,512], index: 3, kind: input, shape index: {}]
  %s4 = inlined_call_operand.hbm [shape: bf16[3,512,512], index: 4, kind: input, shape index: {}]
  %s5 = inlined_call_operand.hbm [shape: f32[1,512], index: 5, kind: input, shape index: {}]
  %s6 = inlined_call_operand.hbm [shape: bf16[3,512,512], index: 6, kind: input, shape index: {}]
  %s7 = inlined_call_operand.hbm [shape: f32[1,512], index: 7, kind: input, shape index: {}]
  %s8 = inlined_call_operand.vmem [shape: bf16[4,512,2], index: 8, kind: input, shape index: {}]
  %s9 = inlined_call_operand.hbm [shape: f32[1,2], index: 9, kind: input, shape index: {}]
  %s10 = inlined_call_operand.vmem [shape: f32[8,2], index: 10, kind: output, shape index: {}]
  %s11 = sld [smem:[#allocation0]]
  $region78: #{encoder_forward.1} parent=0
    _
  %s13 = ssub.s32 1, %s11
  %s14 = scalar_select 0, %s13, %s11
  $region1: #{encoder_forward.1} parent=0
    #allocation6 [shape = 'u8[98304]{0}', space=vmem, size = 0x18000, scoped, tag = 'input window, operand 2, single buffered']
    #allocation7 [shape = 's32[1]{0}', space=sflag, size = 0x4, scoped, tag = 'scoped memory for encoder_forward.1']
    #allocation8 [shape = 'u8[2048]{0}', space=vmem, size = 0x800, scoped, tag = 'input window, operand 3, single buffered']
    #allocation9 [shape = 's32[1]{0}', space=sflag, size = 0x4, scoped, tag = 'scoped memory for encoder_forward.1']
    #allocation10 [shape = 'u8[1572864]{0}', space=vmem, size = 0x180000, scoped, tag = 'input window, operand 4, single buffered']
    #allocation11 [shape = 'u8[2048]{0}', space=vmem, size = 0x800, scoped, tag = 'input window, operand 5, single buffered']
    #allocation12 [shape = 's32[1]{0}', space=sflag, size = 0x4, scoped, tag = 'scoped memory for encoder_forward.1']
    #allocation13 [shape = 'u8[1572864]{0}', space=vmem, size = 0x180000, scoped, tag = 'input window, operand 6, single buffered']
    #allocation14 [shape = 'u8[2048]{0}', space=vmem, size = 0x800, scoped, tag = 'input window, operand 7, single buffered']
    #allocation15 [shape = 's32[1]{0}', space=sflag, size = 0x4, scoped, tag = 'scoped memory for encoder_forward.1']
    #allocation16 [shape = 'u8[512]{0}', space=vmem, size = 0x400, scoped, tag = 'input window, operand 9, single buffered']
    %15 = vsyncpa [#allocation7], 0
    %16 = vsyncpa [#allocation9], 0
    %17 = vsyncpa [#allocation12], 0
    %18 = vsyncpa [#allocation15], 0
    // Predicated region
    $region2: #{encoder_forward.1} parent=1 // pred_check
      _
    $region3: #{encoder_forward.1} parent=1 // pred_check_branch
      %20 = sbr.rel (0) target = $region5
    $region4: #{encoder_forward.1} parent=1 // pred_region
      _
    $region5: #{encoder_forward.1} parent=1 // pred_fallthru
      _
    // Predicated region
    $region6: #{encoder_forward.1} parent=1 // pred_check
      _
    $region7: #{encoder_forward.1} parent=1 // pred_check_branch
      %22 = sbr.rel (0) target = $region9
    $region8: #{encoder_forward.1} parent=1 // pred_region
      _
    $region9: #{encoder_forward.1} parent=1 // pred_fallthru
      _
    // Predicated region
    $region10: #{encoder_forward.1} parent=1 // pred_check
      _
    $region11: #{encoder_forward.1} parent=1 // pred_check_branch
      %24 = sbr.rel (0) target = $region13
    $region12: #{encoder_forward.1} parent=1 // pred_region
      %s26 = ssub.s32 3072, 3072
      %27 = vsyncadd [#allocation7], %s26
      %s28 = sshll.u32 [#allocation6], 4
      %s29 = int_to_ptr.vmem [resolvable:$true] %s28
      %34 = dma.hbm_to_vmem [thread:$0]  %s2, 3072, %s29, [#allocation7], 256, 256, 16
    $region13: #{encoder_forward.1} parent=1 // pred_fallthru
      _
    // Predicated region
    $region14: #{encoder_forward.1} parent=1 // pred_check
      _
    $region15: #{encoder_forward.1} parent=1 // pred_check_branch
      %36 = sbr.rel (0) target = $region17
    $region16: #{encoder_forward.1} parent=1 // pred_region
      %s38 = ssub.s32 64, 64
      %39 = vsyncadd [#allocation9], %s38
      %s41 = sshll.u32 [#allocation8], 4
      %s42 = int_to_ptr.vmem [resolvable:$true] %s41
      %44 = dma.hbm_to_vmem [thread:$0]  %s3, 64, %s42, [#allocation9]
    $region17: #{encoder_forward.1} parent=1 // pred_fallthru
      _
    // Predicated region
    $region18: #{encoder_forward.1} parent=1 // pred_check
      _
    $region19: #{encoder_forward.1} parent=1 // pred_check_branch
      %46 = sbr.rel (0) target = $region21
    $region20: #{encoder_forward.1} parent=1 // pred_region
      %s48 = ssub.s32 49152, 49152
      %49 = vsyncadd [#allocation9], %s48
      %s50 = sshll.u32 [#allocation10], 4
      %s51 = int_to_ptr.vmem [resolvable:$true] %s50
      %56 = dma.hbm_to_vmem [thread:$0]  %s4, 49152, %s51, [#allocation9], 256, 256, 16
    $region21: #{encoder_forward.1} parent=1 // pred_fallthru
      _
    // Predicated region
    $region22: #{encoder_forward.1} parent=1 // pred_check
      _
    $region23: #{encoder_forward.1} parent=1 // pred_check_branch
      %58 = sbr.rel (0) target = $region25
    $region24: #{encoder_forward.1} parent=1 // pred_region
      %s60 = ssub.s32 64, 64
      %61 = vsyncadd [#allocation12], %s60
      %s63 = sshll.u32 [#allocation11], 4
      %s64 = int_to_ptr.vmem [resolvable:$true] %s63
      %66 = dma.hbm_to_vmem [thread:$0]  %s5, 64, %s64, [#allocation12]
    $region25: #{encoder_forward.1} parent=1 // pred_fallthru
      _
    // Predicated region
    $region26: #{encoder_forward.1} parent=1 // pred_check
      _
    $region27: #{encoder_forward.1} parent=1 // pred_check_branch
      %68 = sbr.rel (0) target = $region29
    $region28: #{encoder_forward.1} parent=1 // pred_region
      %s70 = ssub.s32 49152, 49152
      %71 = vsyncadd [#allocation12], %s70
      %s72 = sshll.u32 [#allocation13], 4
      %s73 = int_to_ptr.vmem [resolvable:$true] %s72
      %78 = dma.hbm_to_vmem [thread:$0]  %s6, 49152, %s73, [#allocation12], 256, 256, 16
    $region29: #{encoder_forward.1} parent=1 // pred_fallthru
      _
    // Predicated region
    $region30: #{encoder_forward.1} parent=1 // pred_check
      _
    $region31: #{encoder_forward.1} parent=1 // pred_check_branch
      %80 = sbr.rel (0) target = $region33
    $region32: #{encoder_forward.1} parent=1 // pred_region
      %s82 = ssub.s32 64, 64
      %83 = vsyncadd [#allocation15], %s82
      %s85 = sshll.u32 [#allocation14], 4
      %s86 = int_to_ptr.vmem [resolvable:$true] %s85
      %88 = dma.hbm_to_vmem [thread:$0]  %s7, 64, %s86, [#allocation15]
    $region33: #{encoder_forward.1} parent=1 // pred_fallthru
      _
    // Predicated region
    $region34: #{encoder_forward.1} parent=1 // pred_check
      _
    $region35: #{encoder_forward.1} parent=1 // pred_check_branch
      %90 = sbr.rel (0) target = $region37
    $region36: #{encoder_forward.1} parent=1 // pred_region
      _
    $region37: #{encoder_forward.1} parent=1 // pred_fallthru
      _
    // Predicated region
    $region38: #{encoder_forward.1} parent=1 // pred_check
      _
    $region39: #{encoder_forward.1} parent=1 // pred_check_branch
      %92 = sbr.rel (0) target = $region41
    $region40: #{encoder_forward.1} parent=1 // pred_region
      %s94 = ssub.s32 16, 16
      %95 = vsyncadd [#allocation15], %s94
      %s97 = sshll.u32 [#allocation16], 4
      %s98 = int_to_ptr.vmem [resolvable:$true] %s97
      %100 = dma.hbm_to_vmem [thread:$0]  %s9, 16, %s98, [#allocation15]
    $region41: #{encoder_forward.1} parent=1 // pred_fallthru
      _
    // Predicated region
    $region42: #{encoder_forward.1} parent=1 // pred_check
      _
    $region43: #{encoder_forward.1} parent=1 // pred_check_branch
      %102 = sbr.rel (0) target = $region45
    $region44: #{encoder_forward.1} parent=1 // pred_region
      %103 = dma.done [#allocation7], 3072
    $region45: #{encoder_forward.1} parent=1 // pred_fallthru
      _
    // Predicated region
    $region46: #{encoder_forward.1} parent=1 // pred_check
      _
    $region47: #{encoder_forward.1} parent=1 // pred_check_branch
      %105 = sbr.rel (0) target = $region49
    $region48: #{encoder_forward.1} parent=1 // pred_region
      %106 = dma.done [#allocation9], 64
    $region49: #{encoder_forward.1} parent=1 // pred_fallthru
      _
    // Predicated region
    $region50: #{encoder_forward.1} parent=1 // pred_check
      _
    $region51: #{encoder_forward.1} parent=1 // pred_check_branch
      %108 = sbr.rel (0) target = $region53
    $region52: #{encoder_forward.1} parent=1 // pred_region
      %109 = dma.done [#allocation9], 49152
    $region53: #{encoder_forward.1} parent=1 // pred_fallthru
      _
    // Predicated region
    $region54: #{encoder_forward.1} parent=1 // pred_check
      _
    $region55: #{encoder_forward.1} parent=1 // pred_check_branch
      %111 = sbr.rel (0) target = $region57
    $region56: #{encoder_forward.1} parent=1 // pred_region
      %112 = dma.done [#allocation12], 64
    $region57: #{encoder_forward.1} parent=1 // pred_fallthru
      _
    // Predicated region
    $region58: #{encoder_forward.1} parent=1 // pred_check
      _
    $region59: #{encoder_forward.1} parent=1 // pred_check_branch
      %114 = sbr.rel (0) target = $region61
    $region60: #{encoder_forward.1} parent=1 // pred_region
      %115 = dma.done [#allocation12], 49152
    $region61: #{encoder_forward.1} parent=1 // pred_fallthru
      _
    // Predicated region
    $region62: #{encoder_forward.1} parent=1 // pred_check
      _
    $region63: #{encoder_forward.1} parent=1 // pred_check_branch
      %117 = sbr.rel (0) target = $region65
    $region64: #{encoder_forward.1} parent=1 // pred_region
      %118 = dma.done [#allocation15], 64
    $region65: #{encoder_forward.1} parent=1 // pred_fallthru
      _
    // Predicated region
    $region66: #{encoder_forward.1} parent=1 // pred_check
      _
    $region67: #{encoder_forward.1} parent=1 // pred_check_branch
      %120 = sbr.rel (0) target = $region69
    $region68: #{encoder_forward.1} parent=1 // pred_region
      %121 = dma.done [#allocation15], 16
    $region69: #{encoder_forward.1} parent=1 // pred_fallthru
      _
    %v123 = vld [vmem:[%s1] sm:$0xff]
    %v124 = vld [vmem:[%s1 + $0x8] sm:$0xff]
    %v125 = vld [vmem:[%s1 + $0x10] sm:$0xff]
    %v126 = vld [vmem:[%s1 + $0x18] sm:$0xff]
    %v127 = vld [vmem:[%s1 + $0x20] sm:$0xff]
    %v128 = vld [vmem:[%s1 + $0x28] sm:$0xff]
    %v129 = vld [vmem:[%s1 + $0x30] sm:$0xff]
    %v130 = vld [vmem:[%s1 + $0x38] sm:$0xff]
    %v131 = vld [vmem:[%s1 + $0x40] sm:$0xff]
    %v132 = vld [vmem:[%s1 + $0x48] sm:$0xff]
    %v133 = vld [vmem:[%s1 + $0x50] sm:$0xff]
    %v134 = vld [vmem:[%s1 + $0x58] sm:$0xff]
    %v135 = vld [vmem:[%s1 + $0x60] sm:$0xff]
    %v136 = vld [vmem:[%s1 + $0x68] sm:$0xff]
    %v137 = vld [vmem:[%s1 + $0x70] sm:$0xff]
    %v138 = vld [vmem:[%s1 + $0x78] sm:$0xff]
    %v139 = vld [vmem:[%s0] sm:$0xff]
    %v140 = vld [vmem:[%s0 + $0x8] sm:$0xff]
    %v141 = vld [vmem:[%s0 + $0x10] sm:$0xff]
    %v142 = vld [vmem:[%s0 + $0x18] sm:$0xff]
    %v143 = vld [vmem:[%s0 + $0x20] sm:$0xff]
    %v144 = vld [vmem:[%s0 + $0x28] sm:$0xff]
    %v145 = vld [vmem:[%s0 + $0x30] sm:$0xff]
    %v146 = vld [vmem:[%s0 + $0x38] sm:$0xff]
    %v147 = vld [vmem:[%s0 + $0x40] sm:$0xff]
    %v148 = vld [vmem:[%s0 + $0x48] sm:$0xff]
    %v149 = vld [vmem:[%s0 + $0x50] sm:$0xff]
    %v150 = vld [vmem:[%s0 + $0x58] sm:$0xff]
    %v151 = vld [vmem:[%s0 + $0x60] sm:$0xff]
    %v152 = vld [vmem:[%s0 + $0x68] sm:$0xff]
    %v153 = vld [vmem:[%s0 + $0x70] sm:$0xff]
    %v154 = vld [vmem:[%s0 + $0x78] sm:$0xff]
    %s155 = scalar_lea.vmem %s1, 8
    %v156 = vld [vmem:[%s155] sm:$0xff]
    %v157 = vld [vmem:[%s155 + $0x8] sm:$0xff]
    %v158 = vld [vmem:[%s155 + $0x10] sm:$0xff]
    %v159 = vld [vmem:[%s155 + $0x18] sm:$0xff]
    %v160 = vld [vmem:[%s155 + $0x20] sm:$0xff]
    %v161 = vld [vmem:[%s155 + $0x28] sm:$0xff]
    %v162 = vld [vmem:[%s155 + $0x30] sm:$0xff]
    %v163 = vld [vmem:[%s155 + $0x38] sm:$0xff]
    %v164 = vld [vmem:[%s155 + $0x40] sm:$0xff]
    %v165 = vld [vmem:[%s155 + $0x48] sm:$0xff]
    %v166 = vld [vmem:[%s155 + $0x50] sm:$0xff]
    %v167 = vld [vmem:[%s155 + $0x58] sm:$0xff]
    %v168 = vld [vmem:[%s155 + $0x60] sm:$0xff]
    %v169 = vld [vmem:[%s155 + $0x68] sm:$0xff]
    %v170 = vld [vmem:[%s155 + $0x70] sm:$0xff]
    %v171 = vld [vmem:[%s155 + $0x78] sm:$0xff]
    %v172 = vpack.c.bf16 %v124, %v123
    %v173 = vpack.c.bf16 %v126, %v125
    %v174 = vpack.c.bf16 %v128, %v127
    %v175 = vpack.c.bf16 %v130, %v129
    %v176 = vpack.c.bf16 %v132, %v131
    %v177 = vpack.c.bf16 %v134, %v133
    %v178 = vpack.c.bf16 %v136, %v135
    %v179 = vpack.c.bf16 %v138, %v137
    %v180 = vld [vmem:[#allocation6] sm:$0xff]
    %v181 = vld [vmem:[#allocation6 + $0x8] sm:$0xff]
    %v182 = vld [vmem:[#allocation6 + $0x10] sm:$0xff]
    %v183 = vld [vmem:[#allocation6 + $0x18] sm:$0xff]
    %v184 = vld [vmem:[#allocation6 + $0x20] sm:$0xff]
    %v185 = vld [vmem:[#allocation6 + $0x28] sm:$0xff]
    %v186 = vld [vmem:[#allocation6 + $0x30] sm:$0xff]
    %v187 = vld [vmem:[#allocation6 + $0x38] sm:$0xff]
    %v188 = vpack.c.bf16 %v140, %v139
    %v189 = vpack.c.bf16 %v142, %v141
    %v190 = vpack.c.bf16 %v144, %v143
    %v191 = vpack.c.bf16 %v146, %v145
    %v192 = vpack.c.bf16 %v148, %v147
    %v193 = vpack.c.bf16 %v150, %v149
    %v194 = vpack.c.bf16 %v152, %v151
    %v195 = vpack.c.bf16 %v154, %v153
    %s196 = scalar_lea.vmem [#allocation6], 64
    %v197 = vld [vmem:[%s196] sm:$0xff]
    %v198 = vld [vmem:[%s196 + $0x8] sm:$0xff]
    %v199 = vld [vmem:[%s196 + $0x10] sm:$0xff]
    %v200 = vld [vmem:[%s196 + $0x18] sm:$0xff]
    %v201 = vld [vmem:[%s196 + $0x20] sm:$0xff]
    %v202 = vld [vmem:[%s196 + $0x28] sm:$0xff]
    %v203 = vld [vmem:[%s196 + $0x30] sm:$0xff]
    %v204 = vld [vmem:[%s196 + $0x38] sm:$0xff]
    %v213 = vunpack.c.l.b16 %v197
    %v214 = vunpack.c.h.b16 %v197
    %v215 = vunpack.c.l.b16 %v198
    %v216 = vunpack.c.h.b16 %v198
    %v217 = vunpack.c.l.b16 %v199
    %v218 = vunpack.c.h.b16 %v199
    %v219 = vunpack.c.l.b16 %v200
    %v220 = vunpack.c.h.b16 %v200
    %v221 = vunpack.c.l.b16 %v201
    %v222 = vunpack.c.h.b16 %v201
    %v223 = vunpack.c.l.b16 %v202
    %v224 = vunpack.c.h.b16 %v202
    %v225 = vunpack.c.l.b16 %v203
    %v226 = vunpack.c.h.b16 %v203
    %v227 = vunpack.c.l.b16 %v204
    %v228 = vunpack.c.h.b16 %v204
    %v229 = vpack.c.b16 %v217, %v213
    %v230 = vpack.c.b16 %v218, %v214
    %v231 = vpack.c.b16 %v219, %v215
    %v232 = vpack.c.b16 %v220, %v216
    %v233 = vpack.c.b16 %v225, %v221
    %v234 = vpack.c.b16 %v226, %v222
    %v235 = vpack.c.b16 %v227, %v223
    %v236 = vpack.c.b16 %v228, %v224
    %vm245 = vcmask 261120
    %v247 = vsel %vm245, %v188, 0
    %v250 = vsel %vm245, %v189, 0
    %v253 = vsel %vm245, %v190, 0
    %v256 = vsel %vm245, %v191, 0
    %v259 = vsel %vm245, %v192, 0
    %v262 = vsel %vm245, %v193, 0
    %v265 = vsel %vm245, %v194, 0
    %v268 = vsel %vm245, %v195, 0
    %270 = vmatprep.subr.bf16.mxu0 %v230
    %271 = vmatpush1.bf16.msra.mxu0 %v229
    %272 = vmatprep.subr.bf16.mxu0 %v234
    %273 = vmatpush1.bf16.msra.mxu0 %v233
    %274 = vmatprep.subr.bf16.mxu0 0
    %275 = vmatpush1.bf16.msra.mxu0 0
    %276 = vmatprep.subr.bf16.mxu0 0
    %277 = vmatpush1.bf16.msra.mxu0 0
    %278 = vmatprep.subr.bf16.mxu0 0
    %279 = vmatpush1.bf16.msra.mxu0 0
    %280 = vmatprep.subr.bf16.mxu0 0
    %281 = vmatpush1.bf16.msra.mxu0 0
    %282 = vmatprep.subr.bf16.mxu0 0
    %283 = vmatpush1.bf16.msra.mxu0 0
    %284 = vmatprep.subr.bf16.mxu0 0
    %285 = vmatpush1.bf16.msra.mxu0 0
    %286 = vmatprep.subr.bf16.mxu0 0
    %287 = vmatpush1.bf16.msra.mxu0 0
    %288 = vmatprep.subr.bf16.mxu0 0
    %289 = vmatpush1.bf16.msra.mxu0 0
    %290 = vmatprep.subr.bf16.mxu0 0
    %291 = vmatpush1.bf16.msra.mxu0 0
    %292 = vmatprep.subr.bf16.mxu0 0
    %293 = vmatpush1.bf16.msra.mxu0 0
    %294 = vmatprep.subr.bf16.mxu0 0
    %295 = vmatpush1.bf16.msra.mxu0 0
    %296 = vmatprep.subr.bf16.mxu0 0
    %297 = vmatpush1.bf16.msra.mxu0 0
    %298 = vmatprep.subr.bf16.mxu0 0
    %299 = vmatpush1.bf16.msra.mxu0 0
    %300 = vmatprep.subr.bf16.mxu0 0
    %301 = vmatpush1.bf16.msra.mxu0 0
    %302 = vmatprep.mubr.bf16.mxu0 0
    %303 = vmatmul.mubr.bf16.gmra.mrb[0].mxu0 %v247
    %v304 = vpop.f32.mrb[0].mxu0
    %v305 = vadd.f32 0.0, %v304
    %v306 = vpop.f32.mrb[0].mxu0
    %v307 = vadd.f32 0.0, %v306
    %v308 = vpop.f32.mrb[0].mxu0
    %v309 = vadd.f32 0.0, %v308
    %v310 = vpop.f32.mrb[0].mxu0
    %v311 = vadd.f32 0.0, %v310
    %312 = vmatprep.mubr.bf16.mxu0 0
    %313 = vmatmul.mubr.bf16.gmra.mrb[0].mxu0 %v250
    %v314 = vpop.f32.mrb[0].mxu0
    %v315 = vadd.f32 0.0, %v314
    %v316 = vpop.f32.mrb[0].mxu0
    %v317 = vadd.f32 0.0, %v316
    %v318 = vpop.f32.mrb[0].mxu0
    %v319 = vadd.f32 0.0, %v318
    %v320 = vpop.f32.mrb[0].mxu0
    %v321 = vadd.f32 0.0, %v320
    %322 = vmatprep.mubr.bf16.mxu0 0
    %323 = vmatmul.mubr.bf16.gmra.mrb[0].mxu0 %v253
    %v324 = vpop.f32.mrb[0].mxu0
    %v325 = vadd.f32 0.0, %v324
    %v326 = vpop.f32.mrb[0].mxu0
    %v327 = vadd.f32 0.0, %v326
    %v328 = vpop.f32.mrb[0].mxu0
    %v329 = vadd.f32 0.0, %v328
    %v330 = vpop.f32.mrb[0].mxu0
    %v331 = vadd.f32 0.0, %v330
    %332 = vmatprep.mubr.bf16.mxu0 0
    %333 = vmatmul.mubr.bf16.gmra.mrb[0].mxu0 %v256
    %v334 = vpop.f32.mrb[0].mxu0
    %v335 = vadd.f32 0.0, %v334
    %v336 = vpop.f32.mrb[0].mxu0
    %v337 = vadd.f32 0.0, %v336
    %v338 = vpop.f32.mrb[0].mxu0
    %v339 = vadd.f32 0.0, %v338
    %v340 = vpop.f32.mrb[0].mxu0
    %v341 = vadd.f32 0.0, %v340
    %342 = vmatprep.mubr.bf16.mxu0 0
    %343 = vmatmul.mubr.bf16.gmra.mrb[0].mxu0 %v259
    %v344 = vpop.f32.mrb[0].mxu0
    %v345 = vadd.f32 0.0, %v344
    %v346 = vpop.f32.mrb[0].mxu0
    %v347 = vadd.f32 0.0, %v346
    %v348 = vpop.f32.mrb[0].mxu0
    %v349 = vadd.f32 0.0, %v348
    %v350 = vpop.f32.mrb[0].mxu0
    %v351 = vadd.f32 0.0, %v350
    %352 = vmatprep.mubr.bf16.mxu0 0
    %353 = vmatmul.mubr.bf16.gmra.mrb[0].mxu0 %v262
    %v354 = vpop.f32.mrb[0].mxu0
    %v355 = vadd.f32 0.0, %v354
    %v356 = vpop.f32.mrb[0].mxu0
    %v357 = vadd.f32 0.0, %v356
    %v358 = vpop.f32.mrb[0].mxu0
    %v359 = vadd.f32 0.0, %v358
    %v360 = vpop.f32.mrb[0].mxu0
    %v361 = vadd.f32 0.0, %v360
    %362 = vmatprep.mubr.bf16.mxu0 0
    %363 = vmatmul.mubr.bf16.gmra.mrb[0].mxu0 %v265
    %v364 = vpop.f32.mrb[0].mxu0
    %v365 = vadd.f32 0.0, %v364
    %v366 = vpop.f32.mrb[0].mxu0
    %v367 = vadd.f32 0.0, %v366
    %v368 = vpop.f32.mrb[0].mxu0
    %v369 = vadd.f32 0.0, %v368
    %v370 = vpop.f32.mrb[0].mxu0
    %v371 = vadd.f32 0.0, %v370
    %372 = vmatprep.mubr.bf16.mxu0 0
    %373 = vmatmul.mubr.bf16.gmra.mrb[0].mxu0 %v268
    %v374 = vpop.f32.mrb[0].mxu0
    %v375 = vadd.f32 0.0, %v374
    %v376 = vpop.f32.mrb[0].mxu0
    %v377 = vadd.f32 0.0, %v376
    %v378 = vpop.f32.mrb[0].mxu0
    %v379 = vadd.f32 0.0, %v378
    %v380 = vpop.f32.mrb[0].mxu0
    %v381 = vadd.f32 0.0, %v380
    %382 = vdwg.mxu0
    %383 = vmatprep.subr.bf16.mxu0 %v232
    %384 = vmatpush1.bf16.msra.mxu0 %v231
    %385 = vmatprep.subr.bf16.mxu0 %v236
    %386 = vmatpush1.bf16.msra.mxu0 %v235
    %387 = vmatprep.subr.bf16.mxu0 0
    %388 = vmatpush1.bf16.msra.mxu0 0
    %389 = vmatprep.subr.bf16.mxu0 0
    %390 = vmatpush1.bf16.msra.mxu0 0
    %391 = vmatprep.subr.bf16.mxu0 0
    %392 = vmatpush1.bf16.msra.mxu0 0
    %393 = vmatprep.subr.bf16.mxu0 0
    %394 = vmatpush1.bf16.msra.mxu0 0
    %395 = vmatprep.subr.bf16.mxu0 0
    %396 = vmatpush1.bf16.msra.mxu0 0
    %397 = vmatprep.subr.bf16.mxu0 0
    %398 = vmatpush1.bf16.msra.mxu0 0
    %399 = vmatprep.subr.bf16.mxu0 0
    %400 = vmatpush1.bf16.msra.mxu0 0
    %401 = vmatprep.subr.bf16.mxu0 0
    %402 = vmatpush1.bf16.msra.mxu0 0
    %403 = vmatprep.subr.bf16.mxu0 0
    %404 = vmatpush1.bf16.msra.mxu0 0
    %405 = vmatprep.subr.bf16.mxu0 0
    %406 = vmatpush1.bf16.msra.mxu0 0
    %407 = vmatprep.subr.bf16.mxu0 0
    %408 = vmatpush1.bf16.msra.mxu0 0
    %409 = vmatprep.subr.bf16.mxu0 0
    %410 = vmatpush1.bf16.msra.mxu0 0
    %411 = vmatprep.subr.bf16.mxu0 0
    %412 = vmatpush1.bf16.msra.mxu0 0
    %413 = vmatprep.subr.bf16.mxu0 0
    %414 = vmatpush1.bf16.msra.mxu0 0
    %415 = vmatprep.mubr.bf16.mxu0 0
    %416 = vmatmul.mubr.bf16.gmra.mrb[0].mxu0 %v247
    %v417 = vpop.f32.mrb[0].mxu0
    %v418 = vadd.f32 0.0, %v417
    %v419 = vpop.f32.mrb[0].mxu0
    %v420 = vadd.f32 0.0, %v419
    %v421 = vpop.f32.mrb[0].mxu0
    %v422 = vadd.f32 0.0, %v421
    %v423 = vpop.f32.mrb[0].mxu0
    %v424 = vadd.f32 0.0, %v423
    %425 = vmatprep.mubr.bf16.mxu0 0
    %426 = vmatmul.mubr.bf16.gmra.mrb[0].mxu0 %v250
    %v427 = vpop.f32.mrb[0].mxu0
    %v428 = vadd.f32 0.0, %v427
    %v429 = vpop.f32.mrb[0].mxu0
    %v430 = vadd.f32 0.0, %v429
    %v431 = vpop.f32.mrb[0].mxu0
    %v432 = vadd.f32 0.0, %v431
    %v433 = vpop.f32.mrb[0].mxu0
    %v434 = vadd.f32 0.0, %v433
    %435 = vmatprep.mubr.bf16.mxu0 0
    %436 = vmatmul.mubr.bf16.gmra.mrb[0].mxu0 %v253
    %v437 = vpop.f32.mrb[0].mxu0
    %v438 = vadd.f32 0.0, %v437
    %v439 = vpop.f32.mrb[0].mxu0
    %v440 = vadd.f32 0.0, %v439
    %v441 = vpop.f32.mrb[0].mxu0
    %v442 = vadd.f32 0.0, %v441
    %v443 = vpop.f32.mrb[0].mxu0
    %v444 = vadd.f32 0.0, %v443
    %445 = vmatprep.mubr.bf16.mxu0 0
    %446 = vmatmul.mubr.bf16.gmra.mrb[0].mxu0 %v256
    %v447 = vpop.f32.mrb[0].mxu0
    %v448 = vadd.f32 0.0, %v447
    %v449 = vpop.f32.mrb[0].mxu0
    %v450 = vadd.f32 0.0, %v449
    %v451 = vpop.f32.mrb[0].mxu0
    %v452 = vadd.f32 0.0, %v451
    %v453 = vpop.f32.mrb[0].mxu0
    %v454 = vadd.f32 0.0, %v453
    %455 = vmatprep.mubr.bf16.mxu0 0
    %456 = vmatmul.mubr.bf16.gmra.mrb[0].mxu0 %v259
    %v457 = vpop.f32.mrb[0].mxu0
    %v458 = vadd.f32 0.0, %v457
    %v459 = vpop.f32.mrb[0].mxu0
    %v460 = vadd.f32 0.0, %v459
    %v461 = vpop.f32.mrb[0].mxu0
    %v462 = vadd.f32 0.0, %v461
    %v463 = vpop.f32.mrb[0].mxu0
    %v464 = vadd.f32 0.0, %v463
    %465 = vmatprep.mubr.bf16.mxu0 0
    %466 = vmatmul.mubr.bf16.gmra.mrb[0].mxu0 %v262
    %v467 = vpop.f32.mrb[0].mxu0
    %v468 = vadd.f32 0.0, %v467
    %v469 = vpop.f32.mrb[0].mxu0
    %v470 = vadd.f32 0.0, %v469
    %v471 = vpop.f32.mrb[0].mxu0
    %v472 = vadd.f32 0.0, %v471
    %v473 = vpop.f32.mrb[0].mxu0
    %v474 = vadd.f32 0.0, %v473
    %475 = vmatprep.mubr.bf16.mxu0 0
    %476 = vmatmul.mubr.bf16.gmra.mrb[0].mxu0 %v265
    %v477 = vpop.f32.mrb[0].mxu0
    %v478 = vadd.f32 0.0, %v477
    %v479 = vpop.f32.mrb[0].mxu0
    %v480 = vadd.f32 0.0, %v479
    %v481 = vpop.f32.mrb[0].mxu0
    %v482 = vadd.f32 0.0, %v481
    %v483 = vpop.f32.mrb[0].mxu0
    %v484 = vadd.f32 0.0, %v483
    %485 = vmatprep.mubr.bf16.mxu0 0
    %486 = vmatmul.mubr.bf16.gmra.mrb[0].mxu0 %v268
    %v487 = vpop.f32.mrb[0].mxu0
    %v488 = vadd.f32 0.0, %v487
    %v489 = vpop.f32.mrb[0].mxu0
    %v490 = vadd.f32 0.0, %v489
    %v491 = vpop.f32.mrb[0].mxu0
    %v492 = vadd.f32 0.0, %v491
    %v493 = vpop.f32.mrb[0].mxu0
    %v494 = vadd.f32 0.0, %v493
    %495 = vdwg.mxu0
    %v504 = vunpack.c.l.b16 %v180
    %v505 = vunpack.c.h.b16 %v180
    %v506 = vunpack.c.l.b16 %v181
    %v507 = vunpack.c.h.b16 %v181
    %v508 = vunpack.c.l.b16 %v182
    %v509 = vunpack.c.h.b16 %v182
    %v510 = vunpack.c.l.b16 %v183
    %v511 = vunpack.c.h.b16 %v183
    %v512 = vunpack.c.l.b16 %v184
    %v513 = vunpack.c.h.b16 %v184
    %v514 = vunpack.c.l.b16 %v185
    %v515 = vunpack.c.h.b16 %v185
    %v516 = vunpack.c.l.b16 %v186
    %v517 = vunpack.c.h.b16 %v186
    %v518 = vunpack.c.l.b16 %v187
    %v519 = vunpack.c.h.b16 %v187
    %v520 = vpack.c.b16 %v508, %v504
    %v521 = vpack.c.b16 %v509, %v505
    %v522 = vpack.c.b16 %v510, %v506
    %v523 = vpack.c.b16 %v511, %v507
    %v524 = vpack.c.b16 %v516, %v512
    %v525 = vpack.c.b16 %v517, %v513
    %v526 = vpack.c.b16 %v518, %v514
    %v527 = vpack.c.b16 %v519, %v515
    %v537 = vsel %vm245, %v172, 0
    %v540 = vsel %vm245, %v173, 0
    %v543 = vsel %vm245, %v174, 0
    %v546 = vsel %vm245, %v175, 0
    %v549 = vsel %vm245, %v176, 0
    %v552 = vsel %vm245, %v177, 0
    %v555 = vsel %vm245, %v178, 0
    %v558 = vsel %vm245, %v179, 0
    %560 = vmatprep.subr.bf16.mxu0 %v521
    %561 = vmatpush1.bf16.msra.mxu0 %v520
    %562 = vmatprep.subr.bf16.mxu0 %v525
    %563 = vmatpush1.bf16.msra.mxu0 %v524
    %564 = vmatprep.subr.bf16.mxu0 0
    %565 = vmatpush1.bf16.msra.mxu0 0
    %566 = vmatprep.subr.bf16.mxu0 0
    %567 = vmatpush1.bf16.msra.mxu0 0
    %568 = vmatprep.subr.bf16.mxu0 0
    %569 = vmatpush1.bf16.msra.mxu0 0
    %570 = vmatprep.subr.bf16.mxu0 0
    %571 = vmatpush1.bf16.msra.mxu0 0
    %572 = vmatprep.subr.bf16.mxu0 0
    %573 = vmatpush1.bf16.msra.mxu0 0
    %574 = vmatprep.subr.bf16.mxu0 0
    %575 = vmatpush1.bf16.msra.mxu0 0
    %576 = vmatprep.subr.bf16.mxu0 0
    %577 = vmatpush1.bf16.msra.mxu0 0
    %578 = vmatprep.subr.bf16.mxu0 0
    %579 = vmatpush1.bf16.msra.mxu0 0
    %580 = vmatprep.subr.bf16.mxu0 0
    %581 = vmatpush1.bf16.msra.mxu0 0
    %582 = vmatprep.subr.bf16.mxu0 0
    %583 = vmatpush1.bf16.msra.mxu0 0
    %584 = vmatprep.subr.bf16.mxu0 0
    %585 = vmatpush1.bf16.msra.mxu0 0
    %586 = vmatprep.subr.bf16.mxu0 0
    %587 = vmatpush1.bf16.msra.mxu0 0
    %588 = vmatprep.subr.bf16.mxu0 0
    %589 = vmatpush1.bf16.msra.mxu0 0
    %590 = vmatprep.subr.bf16.mxu0 0
    %591 = vmatpush1.bf16.msra.mxu0 0
    %592 = vmatprep.mubr.bf16.mxu0 0
    %593 = vmatmul.mubr.bf16.gmra.mrb[0].mxu0 %v537
    %v594 = vpop.f32.mrb[0].mxu0
    %v595 = vadd.f32 %v305, %v594
    %v596 = vpop.f32.mrb[0].mxu0
    %v597 = vadd.f32 %v307, %v596
    %v598 = vpop.f32.mrb[0].mxu0
    %v599 = vadd.f32 %v309, %v598
    %v600 = vpop.f32.mrb[0].mxu0
    %v601 = vadd.f32 %v311, %v600
    %602 = vmatprep.mubr.bf16.mxu0 0
    %603 = vmatmul.mubr.bf16.gmra.mrb[0].mxu0 %v540
    %v604 = vpop.f32.mrb[0].mxu0
    %v605 = vadd.f32 %v315, %v604
    %v606 = vpop.f32.mrb[0].mxu0
    %v607 = vadd.f32 %v317, %v606
    %v608 = vpop.f32.mrb[0].mxu0
    %v609 = vadd.f32 %v319, %v608
    %v610 = vpop.f32.mrb[0].mxu0
    %v611 = vadd.f32 %v321, %v610
    %612 = vmatprep.mubr.bf16.mxu0 0
    %613 = vmatmul.mubr.bf16.gmra.mrb[0].mxu0 %v543
    %v614 = vpop.f32.mrb[0].mxu0
    %v615 = vadd.f32 %v325, %v614
    %v616 = vpop.f32.mrb[0].mxu0
    %v617 = vadd.f32 %v327, %v616
    %v618 = vpop.f32.mrb[0].mxu0
    %v619 = vadd.f32 %v329, %v618
    %v620 = vpop.f32.mrb[0].mxu0
    %v621 = vadd.f32 %v331, %v620
    %622 = vmatprep.mubr.bf16.mxu0 0
    %623 = vmatmul.mubr.bf16.gmra.mrb[0].mxu0 %v546
    %v624 = vpop.f32.mrb[0].mxu0
    %v625 = vadd.f32 %v335, %v624
    %v626 = vpop.f32.mrb[0].mxu0
    %v627 = vadd.f32 %v337, %v626
    %v628 = vpop.f32.mrb[0].mxu0
    %v629 = vadd.f32 %v339, %v628
    %v630 = vpop.f32.mrb[0].mxu0
    %v631 = vadd.f32 %v341, %v630
    %632 = vmatprep.mubr.bf16.mxu0 0
    %633 = vmatmul.mubr.bf16.gmra.mrb[0].mxu0 %v549
    %v634 = vpop.f32.mrb[0].mxu0
    %v635 = vadd.f32 %v345, %v634
    %v636 = vpop.f32.mrb[0].mxu0
    %v637 = vadd.f32 %v347, %v636
    %v638 = vpop.f32.mrb[0].mxu0
    %v639 = vadd.f32 %v349, %v638
    %v640 = vpop.f32.mrb[0].mxu0
    %v641 = vadd.f32 %v351, %v640
    %642 = vmatprep.mubr.bf16.mxu0 0
    %643 = vmatmul.mubr.bf16.gmra.mrb[0].mxu0 %v552
    %v644 = vpop.f32.mrb[0].mxu0
    %v645 = vadd.f32 %v355, %v644
    %v646 = vpop.f32.mrb[0].mxu0
    %v647 = vadd.f32 %v357, %v646
    %v648 = vpop.f32.mrb[0].mxu0
    %v649 = vadd.f32 %v359, %v648
    %v650 = vpop.f32.mrb[0].mxu0
    %v651 = vadd.f32 %v361, %v650
    %652 = vmatprep.mubr.bf16.mxu0 0
    %653 = vmatmul.mubr.bf16.gmra.mrb[0].mxu0 %v555
    %v654 = vpop.f32.mrb[0].mxu0
    %v655 = vadd.f32 %v365, %v654
    %v656 = vpop.f32.mrb[0].mxu0
    %v657 = vadd.f32 %v367, %v656
    %v658 = vpop.f32.mrb[0].mxu0
    %v659 = vadd.f32 %v369, %v658
    %v660 = vpop.f32.mrb[0].mxu0
    %v661 = vadd.f32 %v371, %v660
    %662 = vmatprep.mubr.bf16.mxu0 0
    %663 = vmatmul.mubr.bf16.gmra.mrb[0].mxu0 %v558
    %v664 = vpop.f32.mrb[0].mxu0
    %v665 = vadd.f32 %v375, %v664
    %v666 = vpop.f32.mrb[0].mxu0
    %v667 = vadd.f32 %v377, %v666
    %v668 = vpop.f32.mrb[0].mxu0
    %v669 = vadd.f32 %v379, %v668
    %v670 = vpop.f32.mrb[0].mxu0
    %v671 = vadd.f32 %v381, %v670
    %672 = vdwg.mxu0
    %673 = vmatprep.subr.bf16.mxu0 %v523
    %674 = vmatpush1.bf16.msra.mxu0 %v522
    %675 = vmatprep.subr.bf16.mxu0 %v527
    %676 = vmatpush1.bf16.msra.mxu0 %v526
    %677 = vmatprep.subr.bf16.mxu0 0
    %678 = vmatpush1.bf16.msra.mxu0 0
    %679 = vmatprep.subr.bf16.mxu0 0
    %680 = vmatpush1.bf16.msra.mxu0 0
    %681 = vmatprep.subr.bf16.mxu0 0
    %682 = vmatpush1.bf16.msra.mxu0 0
    %683 = vmatprep.subr.bf16.mxu0 0
    %684 = vmatpush1.bf16.msra.mxu0 0
    %685 = vmatprep.subr.bf16.mxu0 0
    %686 = vmatpush1.bf16.msra.mxu0 0
    %687 = vmatprep.subr.bf16.mxu0 0
    %688 = vmatpush1.bf16.msra.mxu0 0
    %689 = vmatprep.subr.bf16.mxu0 0
    %690 = vmatpush1.bf16.msra.mxu0 0
    %691 = vmatprep.subr.bf16.mxu0 0
    %692 = vmatpush1.bf16.msra.mxu0 0
    %693 = vmatprep.subr.bf16.mxu0 0
    %694 = vmatpush1.bf16.msra.mxu0 0
    %695 = vmatprep.subr.bf16.mxu0 0
    %696 = vmatpush1.bf16.msra.mxu0 0
    %697 = vmatprep.subr.bf16.mxu0 0
    %698 = vmatpush1.bf16.msra.mxu0 0
    %699 = vmatprep.subr.bf16.mxu0 0
    %700 = vmatpush1.bf16.msra.mxu0 0
    %701 = vmatprep.subr.bf16.mxu0 0
    %702 = vmatpush1.bf16.msra.mxu0 0
    %703 = vmatprep.subr.bf16.mxu0 0
    %704 = vmatpush1.bf16.msra.mxu0 0
    %705 = vmatprep.mubr.bf16.mxu0 0
    %706 = vmatmul.mubr.bf16.gmra.mrb[0].mxu0 %v537
    %v707 = vpop.f32.mrb[0].mxu0
    %v708 = vadd.f32 %v418, %v707
    %v709 = vpop.f32.mrb[0].mxu0
    %v710 = vadd.f32 %v420, %v709
    %v711 = vpop.f32.mrb[0].mxu0
    %v712 = vadd.f32 %v422, %v711
    %v713 = vpop.f32.mrb[0].mxu0
    %v714 = vadd.f32 %v424, %v713
    %715 = vmatprep.mubr.bf16.mxu0 0
    %716 = vmatmul.mubr.bf16.gmra.mrb[0].mxu0 %v540
    %v717 = vpop.f32.mrb[0].mxu0
    %v718 = vadd.f32 %v428, %v717
    %v719 = vpop.f32.mrb[0].mxu0
    %v720 = vadd.f32 %v430, %v719
    %v721 = vpop.f32.mrb[0].mxu0
    %v722 = vadd.f32 %v432, %v721
    %v723 = vpop.f32.mrb[0].mxu0
    %v724 = vadd.f32 %v434, %v723
    %725 = vmatprep.mubr.bf16.mxu0 0
    %726 = vmatmul.mubr.bf16.gmra.mrb[0].mxu0 %v543
    %v727 = vpop.f32.mrb[0].mxu0
    %v728 = vadd.f32 %v438, %v727
    %v729 = vpop.f32.mrb[0].mxu0
    %v730 = vadd.f32 %v440, %v729
    %v731 = vpop.f32.mrb[0].mxu0
    %v732 = vadd.f32 %v442, %v731
    %v733 = vpop.f32.mrb[0].mxu0
    %v734 = vadd.f32 %v444, %v733
    %735 = vmatprep.mubr.bf16.mxu0 0
    %736 = vmatmul.mubr.bf16.gmra.mrb[0].mxu0 %v546
    %v737 = vpop.f32.mrb[0].mxu0
    %v738 = vadd.f32 %v448, %v737
    %v739 = vpop.f32.mrb[0].mxu0
    %v740 = vadd.f32 %v450, %v739
    %v741 = vpop.f32.mrb[0].mxu0
    %v742 = vadd.f32 %v452, %v741
    %v743 = vpop.f32.mrb[0].mxu0
    %v744 = vadd.f32 %v454, %v743
    %745 = vmatprep.mubr.bf16.mxu0 0
    %746 = vmatmul.mubr.bf16.gmra.mrb[0].mxu0 %v549
    %v747 = vpop.f32.mrb[0].mxu0
    %v748 = vadd.f32 %v458, %v747
    %v749 = vpop.f32.mrb[0].mxu0
    %v750 = vadd.f32 %v460, %v749
    %v751 = vpop.f32.mrb[0].mxu0
    %v752 = vadd.f32 %v462, %v751
    %v753 = vpop.f32.mrb[0].mxu0
    %v754 = vadd.f32 %v464, %v753
    %755 = vmatprep.mubr.bf16.mxu0 0
    %756 = vmatmul.mubr.bf16.gmra.mrb[0].mxu0 %v552
    %v757 = vpop.f32.mrb[0].mxu0
    %v758 = vadd.f32 %v468, %v757
    %v759 = vpop.f32.mrb[0].mxu0
    %v760 = vadd.f32 %v470, %v759
    %v761 = vpop.f32.mrb[0].mxu0
    %v762 = vadd.f32 %v472, %v761
    %v763 = vpop.f32.mrb[0].mxu0
    %v764 = vadd.f32 %v474, %v763
    %765 = vmatprep.mubr.bf16.mxu0 0
    %766 = vmatmul.mubr.bf16.gmra.mrb[0].mxu0 %v555
    %v767 = vpop.f32.mrb[0].mxu0
    %v768 = vadd.f32 %v478, %v767
    %v769 = vpop.f32.mrb[0].mxu0
    %v770 = vadd.f32 %v480, %v769
    %v771 = vpop.f32.mrb[0].mxu0
    %v772 = vadd.f32 %v482, %v771
    %v773 = vpop.f32.mrb[0].mxu0
    %v774 = vadd.f32 %v484, %v773
    %775 = vmatprep.mubr.bf16.mxu0 0
    %776 = vmatmul.mubr.bf16.gmra.mrb[0].mxu0 %v558
    %v777 = vpop.f32.mrb[0].mxu0
    %v778 = vadd.f32 %v488, %v777
    %v779 = vpop.f32.mrb[0].mxu0
    %v780 = vadd.f32 %v490, %v779
    %v781 = vpop.f32.mrb[0].mxu0
    %v782 = vadd.f32 %v492, %v781
    %v783 = vpop.f32.mrb[0].mxu0
    %v784 = vadd.f32 %v494, %v783
    %785 = vdwg.mxu0
    %v786 = vpack.c.bf16 %v157, %v156
    %v787 = vpack.c.bf16 %v159, %v158
    %v788 = vpack.c.bf16 %v161, %v160
    %v789 = vpack.c.bf16 %v163, %v162
    %v790 = vpack.c.bf16 %v165, %v164
    %v791 = vpack.c.bf16 %v167, %v166
    %v792 = vpack.c.bf16 %v169, %v168
    %v793 = vpack.c.bf16 %v171, %v170
    %s794 = scalar_lea.vmem [#allocation6], 128
    %v795 = vld [vmem:[%s794] sm:$0xff]
    %v796 = vld [vmem:[%s794 + $0x8] sm:$0xff]
    %v797 = vld [vmem:[%s794 + $0x10] sm:$0xff]
    %v798 = vld [vmem:[%s794 + $0x18] sm:$0xff]
    %v799 = vld [vmem:[%s794 + $0x20] sm:$0xff]
    %v800 = vld [vmem:[%s794 + $0x28] sm:$0xff]
    %v801 = vld [vmem:[%s794 + $0x30] sm:$0xff]
    %v802 = vld [vmem:[%s794 + $0x38] sm:$0xff]
    %v811 = vunpack.c.l.b16 %v795
    %v812 = vunpack.c.h.b16 %v795
    %v813 = vunpack.c.l.b16 %v796
    %v814 = vunpack.c.h.b16 %v796
    %v815 = vunpack.c.l.b16 %v797
    %v816 = vunpack.c.h.b16 %v797
    %v817 = vunpack.c.l.b16 %v798
    %v818 = vunpack.c.h.b16 %v798
    %v819 = vunpack.c.l.b16 %v799
    %v820 = vunpack.c.h.b16 %v799
    %v821 = vunpack.c.l.b16 %v800
    %v822 = vunpack.c.h.b16 %v800
    %v823 = vunpack.c.l.b16 %v801
    %v824 = vunpack.c.h.b16 %v801
    %v825 = vunpack.c.l.b16 %v802
    %v826 = vunpack.c.h.b16 %v802
    %v827 = vpack.c.b16 %v815, %v811
    %v828 = vpack.c.b16 %v816, %v812
    %v829 = vpack.c.b16 %v817, %v813
    %v830 = vpack.c.b16 %v818, %v814
    %v831 = vpack.c.b16 %v823, %v819
    %v832 = vpack.c.b16 %v824, %v820
    %v833 = vpack.c.b16 %v825, %v821
    %v834 = vpack.c.b16 %v826, %v822
    %v844 = vsel %vm245, %v786, 0
    %v847 = vsel %vm245, %v787, 0
    %v850 = vsel %vm245, %v788, 0
    %v853 = vsel %vm245, %v789, 0
    %v856 = vsel %vm245, %v790, 0
    %v859 = vsel %vm245, %v791, 0
    %v862 = vsel %vm245, %v792, 0
    %v865 = vsel %vm245, %v793, 0
    %867 = vmatprep.subr.bf16.mxu0 %v828
    %868 = vmatpush1.bf16.msra.mxu0 %v827
    %869 = vmatprep.subr.bf16.mxu0 %v832
    %870 = vmatpush1.bf16.msra.mxu0 %v831
    %871 = vmatprep.subr.bf16.mxu0 0
    %872 = vmatpush1.bf16.msra.mxu0 0
    %873 = vmatprep.subr.bf16.mxu0 0
    %874 = vmatpush1.bf16.msra.mxu0 0
    %875 = vmatprep.subr.bf16.mxu0 0
    %876 = vmatpush1.bf16.msra.mxu0 0
    %877 = vmatprep.subr.bf16.mxu0 0
    %878 = vmatpush1.bf16.msra.mxu0 0
    %879 = vmatprep.subr.bf16.mxu0 0
    %880 = vmatpush1.bf16.msra.mxu0 0
    %881 = vmatprep.subr.bf16.mxu0 0
    %882 = vmatpush1.bf16.msra.mxu0 0
    %883 = vmatprep.subr.bf16.mxu0 0
    %884 = vmatpush1.bf16.msra.mxu0 0
    %885 = vmatprep.subr.bf16.mxu0 0
    %886 = vmatpush1.bf16.msra.mxu0 0
    %887 = vmatprep.subr.bf16.mxu0 0
    %888 = vmatpush1.bf16.msra.mxu0 0
    %889 = vmatprep.subr.bf16.mxu0 0
    %890 = vmatpush1.bf16.msra.mxu0 0
    %891 = vmatprep.subr.bf16.mxu0 0
    %892 = vmatpush1.bf16.msra.mxu0 0
    %893 = vmatprep.subr.bf16.mxu0 0
    %894 = vmatpush1.bf16.msra.mxu0 0
    %895 = vmatprep.subr.bf16.mxu0 0
    %896 = vmatpush1.bf16.msra.mxu0 0
    %897 = vmatprep.subr.bf16.mxu0 0
    %898 = vmatpush1.bf16.msra.mxu0 0
    %899 = vmatprep.mubr.bf16.mxu0 0
    %900 = vmatmul.mubr.bf16.gmra.mrb[0].mxu0 %v844
    %v901 = vpop.f32.mrb[0].mxu0
    %v902 = vadd.f32 0.0, %v901
    %v903 = vpop.f32.mrb[0].mxu0
    %v904 = vadd.f32 0.0, %v903
    %v905 = vpop.f32.mrb[0].mxu0
    %v906 = vadd.f32 0.0, %v905
    %v907 = vpop.f32.mrb[0].mxu0
    %v908 = vadd.f32 0.0, %v907
    %909 = vmatprep.mubr.bf16.mxu0 0
    %910 = vmatmul.mubr.bf16.gmra.mrb[0].mxu0 %v847
    %v911 = vpop.f32.mrb[0].mxu0
    %v912 = vadd.f32 0.0, %v911
    %v913 = vpop.f32.mrb[0].mxu0
    %v914 = vadd.f32 0.0, %v913
    %v915 = vpop.f32.mrb[0].mxu0
    %v916 = vadd.f32 0.0, %v915
    %v917 = vpop.f32.mrb[0].mxu0
    %v918 = vadd.f32 0.0, %v917
    %919 = vmatprep.mubr.bf16.mxu0 0
    %920 = vmatmul.mubr.bf16.gmra.mrb[0].mxu0 %v850
    %v921 = vpop.f32.mrb[0].mxu0
    %v922 = vadd.f32 0.0, %v921
    %v923 = vpop.f32.mrb[0].mxu0
    %v924 = vadd.f32 0.0, %v923
    %v925 = vpop.f32.mrb[0].mxu0
    %v926 = vadd.f32 0.0, %v925
    %v927 = vpop.f32.mrb[0].mxu0
    %v928 = vadd.f32 0.0, %v927
    %929 = vmatprep.mubr.bf16.mxu0 0
    %930 = vmatmul.mubr.bf16.gmra.mrb[0].mxu0 %v853
    %v931 = vpop.f32.mrb[0].mxu0
    %v932 = vadd.f32 0.0, %v931
    %v933 = vpop.f32.mrb[0].mxu0
    %v934 = vadd.f32 0.0, %v933
    %v935 = vpop.f32.mrb[0].mxu0
    %v936 = vadd.f32 0.0, %v935
    %v937 = vpop.f32.mrb[0].mxu0
    %v938 = vadd.f32 0.0, %v937
    %939 = vmatprep.mubr.bf16.mxu0 0
    %940 = vmatmul.mubr.bf16.gmra.mrb[0].mxu0 %v856
    %v941 = vpop.f32.mrb[0].mxu0
    %v942 = vadd.f32 0.0, %v941
    %v943 = vpop.f32.mrb[0].mxu0
    %v944 = vadd.f32 0.0, %v943
    %v945 = vpop.f32.mrb[0].mxu0
    %v946 = vadd.f32 0.0, %v945
    %v947 = vpop.f32.mrb[0].mxu0
    %v948 = vadd.f32 0.0, %v947
    %949 = vmatprep.mubr.bf16.mxu0 0
    %950 = vmatmul.mubr.bf16.gmra.mrb[0].mxu0 %v859
    %v951 = vpop.f32.mrb[0].mxu0
    %v952 = vadd.f32 0.0, %v951
    %v953 = vpop.f32.mrb[0].mxu0
    %v954 = vadd.f32 0.0, %v953
    %v955 = vpop.f32.mrb[0].mxu0
    %v956 = vadd.f32 0.0, %v955
    %v957 = vpop.f32.mrb[0].mxu0
    %v958 = vadd.f32 0.0, %v957
    %959 = vmatprep.mubr.bf16.mxu0 0
    %960 = vmatmul.mubr.bf16.gmra.mrb[0].mxu0 %v862
    %v961 = vpop.f32.mrb[0].mxu0
    %v962 = vadd.f32 0.0, %v961
    %v963 = vpop.f32.mrb[0].mxu0
    %v964 = vadd.f32 0.0, %v963
    %v965 = vpop.f32.mrb[0].mxu0
    %v966 = vadd.f32 0.0, %v965
    %v967 = vpop.f32.mrb[0].mxu0
    %v968 = vadd.f32 0.0, %v967
    %969 = vmatprep.mubr.bf16.mxu0 0
    %970 = vmatmul.mubr.bf16.gmra.mrb[0].mxu0 %v865
    %v971 = vpop.f32.mrb[0].mxu0
    %v972 = vadd.f32 0.0, %v971
    %v973 = vpop.f32.mrb[0].mxu0
    %v974 = vadd.f32 0.0, %v973
    %v975 = vpop.f32.mrb[0].mxu0
    %v976 = vadd.f32 0.0, %v975
    %v977 = vpop.f32.mrb[0].mxu0
    %v978 = vadd.f32 0.0, %v977
    %979 = vdwg.mxu0
    %980 = vmatprep.subr.bf16.mxu0 %v830
    %981 = vmatpush1.bf16.msra.mxu0 %v829
    %982 = vmatprep.subr.bf16.mxu0 %v834
    %983 = vmatpush1.bf16.msra.mxu0 %v833
    %984 = vmatprep.subr.bf16.mxu0 0
    %985 = vmatpush1.bf16.msra.mxu0 0
    %986 = vmatprep.subr.bf16.mxu0 0
    %987 = vmatpush1.bf16.msra.mxu0 0
    %988 = vmatprep.subr.bf16.mxu0 0
    %989 = vmatpush1.bf16.msra.mxu0 0
    %990 = vmatprep.subr.bf16.mxu0 0
    %991 = vmatpush1.bf16.msra.mxu0 0
    %992 = vmatprep.subr.bf16.mxu0 0
    %993 = vmatpush1.bf16.msra.mxu0 0
    %994 = vmatprep.subr.bf16.mxu0 0
    %995 = vmatpush1.bf16.msra.mxu0 0
    %996 = vmatprep.subr.bf16.mxu0 0
    %997 = vmatpush1.bf16.msra.mxu0 0
    %998 = vmatprep.subr.bf16.mxu0 0
    %999 = vmatpush1.bf16.msra.mxu0 0
    %1000 = vmatprep.subr.bf16.mxu0 0
    %1001 = vmatpush1.bf16.msra.mxu0 0
    %1002 = vmatprep.subr.bf16.mxu0 0
    %1003 = vmatpush1.bf16.msra.mxu0 0
    %1004 = vmatprep.subr.bf16.mxu0 0
    %1005 = vmatpush1.bf16.msra.mxu0 0
    %1006 = vmatprep.subr.bf16.mxu0 0
    %1007 = vmatpush1.bf16.msra.mxu0 0
    %1008 = vmatprep.subr.bf16.mxu0 0
    %1009 = vmatpush1.bf16.msra.mxu0 0
    %1010 = vmatprep.subr.bf16.mxu0 0
    %1011 = vmatpush1.bf16.msra.mxu0 0
    %1012 = vmatprep.mubr.bf16.mxu0 0
    %1013 = vmatmul.mubr.bf16.gmra.mrb[0].mxu0 %v844
    %v1014 = vpop.f32.mrb[0].mxu0
    %v1015 = vadd.f32 0.0, %v1014
    %v1016 = vpop.f32.mrb[0].mxu0
    %v1017 = vadd.f32 0.0, %v1016
    %v1018 = vpop.f32.mrb[0].mxu0
    %v1019 = vadd.f32 0.0, %v1018
    %v1020 = vpop.f32.mrb[0].mxu0
    %v1021 = vadd.f32 0.0, %v1020
    %1022 = vmatprep.mubr.bf16.mxu0 0
    %1023 = vmatmul.mubr.bf16.gmra.mrb[0].mxu0 %v847
    %v1024 = vpop.f32.mrb[0].mxu0
    %v1025 = vadd.f32 0.0, %v1024
    %v1026 = vpop.f32.mrb[0].mxu0
    %v1027 = vadd.f32 0.0, %v1026
    %v1028 = vpop.f32.mrb[0].mxu0
    %v1029 = vadd.f32 0.0, %v1028
    %v1030 = vpop.f32.mrb[0].mxu0
    %v1031 = vadd.f32 0.0, %v1030
    %1032 = vmatprep.mubr.bf16.mxu0 0
    %1033 = vmatmul.mubr.bf16.gmra.mrb[0].mxu0 %v850
    %v1034 = vpop.f32.mrb[0].mxu0
    %v1035 = vadd.f32 0.0, %v1034
    %v1036 = vpop.f32.mrb[0].mxu0
    %v1037 = vadd.f32 0.0, %v1036
    %v1038 = vpop.f32.mrb[0].mxu0
    %v1039 = vadd.f32 0.0, %v1038
    %v1040 = vpop.f32.mrb[0].mxu0
    %v1041 = vadd.f32 0.0, %v1040
    %1042 = vmatprep.mubr.bf16.mxu0 0
    %1043 = vmatmul.mubr.bf16.gmra.mrb[0].mxu0 %v853
    %v1044 = vpop.f32.mrb[0].mxu0
    %v1045 = vadd.f32 0.0, %v1044
    %v1046 = vpop.f32.mrb[0].mxu0
    %v1047 = vadd.f32 0.0, %v1046
    %v1048 = vpop.f32.mrb[0].mxu0
    %v1049 = vadd.f32 0.0, %v1048
    %v1050 = vpop.f32.mrb[0].mxu0
    %v1051 = vadd.f32 0.0, %v1050
    %1052 = vmatprep.mubr.bf16.mxu0 0
    %1053 = vmatmul.mubr.bf16.gmra.mrb[0].mxu0 %v856
    %v1054 = vpop.f32.mrb[0].mxu0
    %v1055 = vadd.f32 0.0, %v1054
    %v1056 = vpop.f32.mrb[0].mxu0
    %v1057 = vadd.f32 0.0, %v1056
    %v1058 = vpop.f32.mrb[0].mxu0
    %v1059 = vadd.f32 0.0, %v1058
    %v1060 = vpop.f32.mrb[0].mxu0
    %v1061 = vadd.f32 0.0, %v1060
    %1062 = vmatprep.mubr.bf16.mxu0 0
    %1063 = vmatmul.mubr.bf16.gmra.mrb[0].mxu0 %v859
    %v1064 = vpop.f32.mrb[0].mxu0
    %v1065 = vadd.f32 0.0, %v1064
    %v1066 = vpop.f32.mrb[0].mxu0
    %v1067 = vadd.f32 0.0, %v1066
    %v1068 = vpop.f32.mrb[0].mxu0
    %v1069 = vadd.f32 0.0, %v1068
    %v1070 = vpop.f32.mrb[0].mxu0
    %v1071 = vadd.f32 0.0, %v1070
    %1072 = vmatprep.mubr.bf16.mxu0 0
    %1073 = vmatmul.mubr.bf16.gmra.mrb[0].mxu0 %v862
    %v1074 = vpop.f32.mrb[0].mxu0
    %v1075 = vadd.f32 0.0, %v1074
    %v1076 = vpop.f32.mrb[0].mxu0
    %v1077 = vadd.f32 0.0, %v1076
    %v1078 = vpop.f32.mrb[0].mxu0
    %v1079 = vadd.f32 0.0, %v1078
    %v1080 = vpop.f32.mrb[0].mxu0
    %v1081 = vadd.f32 0.0, %v1080
    %1082 = vmatprep.mubr.bf16.mxu0 0
    %1083 = vmatmul.mubr.bf16.gmra.mrb[0].mxu0 %v865
    %v1084 = vpop.f32.mrb[0].mxu0
    %v1085 = vadd.f32 0.0, %v1084
    %v1086 = vpop.f32.mrb[0].mxu0
    %v1087 = vadd.f32 0.0, %v1086
    %v1088 = vpop.f32.mrb[0].mxu0
    %v1089 = vadd.f32 0.0, %v1088
    %v1090 = vpop.f32.mrb[0].mxu0
    %v1091 = vadd.f32 0.0, %v1090
    %1092 = vdwg.mxu0
    %v1093 = vadd.f32 %v595, %v902
    %v1094 = vadd.f32 %v597, %v904
    %v1095 = vadd.f32 %v708, %v1015
    %v1096 = vadd.f32 %v710, %v1017
    %v1097 = vadd.f32 %v599, %v906
    %v1098 = vadd.f32 %v601, %v908
    %v1099 = vadd.f32 %v712, %v1019
    %v1100 = vadd.f32 %v714, %v1021
    %v1101 = vadd.f32 %v605, %v912
    %v1102 = vadd.f32 %v607, %v914
    %v1103 = vadd.f32 %v718, %v1025
    %v1104 = vadd.f32 %v720, %v1027
    %v1105 = vadd.f32 %v609, %v916
    %v1106 = vadd.f32 %v611, %v918
    %v1107 = vadd.f32 %v722, %v1029
    %v1108 = vadd.f32 %v724, %v1031
    %v1109 = vadd.f32 %v615, %v922
    %v1110 = vadd.f32 %v617, %v924
    %v1111 = vadd.f32 %v728, %v1035
    %v1112 = vadd.f32 %v730, %v1037
    %v1113 = vadd.f32 %v619, %v926
    %v1114 = vadd.f32 %v621, %v928
    %v1115 = vadd.f32 %v732, %v1039
    %v1116 = vadd.f32 %v734, %v1041
    %v1117 = vadd.f32 %v625, %v932
    %v1118 = vadd.f32 %v627, %v934
    %v1119 = vadd.f32 %v738, %v1045
    %v1120 = vadd.f32 %v740, %v1047
    %v1121 = vadd.f32 %v629, %v936
    %v1122 = vadd.f32 %v631, %v938
    %v1123 = vadd.f32 %v742, %v1049
    %v1124 = vadd.f32 %v744, %v1051
    %v1125 = vadd.f32 %v635, %v942
    %v1126 = vadd.f32 %v637, %v944
    %v1127 = vadd.f32 %v748, %v1055
    %v1128 = vadd.f32 %v750, %v1057
    %v1129 = vadd.f32 %v639, %v946
    %v1130 = vadd.f32 %v641, %v948
    %v1131 = vadd.f32 %v752, %v1059
    %v1132 = vadd.f32 %v754, %v1061
    %v1133 = vadd.f32 %v645, %v952
    %v1134 = vadd.f32 %v647, %v954
    %v1135 = vadd.f32 %v758, %v1065
    %v1136 = vadd.f32 %v760, %v1067
    %v1137 = vadd.f32 %v649, %v956
    %v1138 = vadd.f32 %v651, %v958
    %v1139 = vadd.f32 %v762, %v1069
    %v1140 = vadd.f32 %v764, %v1071
    %v1141 = vadd.f32 %v655, %v962
    %v1142 = vadd.f32 %v657, %v964
    %v1143 = vadd.f32 %v768, %v1075
    %v1144 = vadd.f32 %v770, %v1077
    %v1145 = vadd.f32 %v659, %v966
    %v1146 = vadd.f32 %v661, %v968
    %v1147 = vadd.f32 %v772, %v1079
    %v1148 = vadd.f32 %v774, %v1081
    %v1149 = vadd.f32 %v665, %v972
    %v1150 = vadd.f32 %v667, %v974
    %v1151 = vadd.f32 %v778, %v1085
    %v1152 = vadd.f32 %v780, %v1087
    %v1153 = vadd.f32 %v669, %v976
    %v1154 = vadd.f32 %v671, %v978
    %v1155 = vadd.f32 %v782, %v1089
    %v1156 = vadd.f32 %v784, %v1091
    %v1157 = vld [vmem:[#allocation8] sm:$0xf]
    %v1159 = vlaneseq
    %v1160 = vshrl.u32 %v1159, 7
    %v1161 = vsub.s32 0, %v1160
    %v1162 = vrot.slane %v1157, %v1161
    %v1163 = vlaneseq
    %v1164 = vshrl.u32 %v1163, 7
    %v1165 = vsub.s32 1, %v1164
    %v1166 = vrot.slane %v1157, %v1165
    %v1167 = vlaneseq
    %v1168 = vshrl.u32 %v1167, 7
    %v1169 = vsub.s32 2, %v1168
    %v1170 = vrot.slane %v1157, %v1169
    %v1171 = vlaneseq
    %v1172 = vshrl.u32 %v1171, 7
    %v1173 = vsub.s32 3, %v1172
    %v1174 = vrot.slane %v1157, %v1173
    %v1179 = vadd.f32 %v1093, %v1162
    %v1180 = vadd.f32 %v1094, %v1166
    %v1181 = vadd.f32 %v1095, %v1170
    %v1182 = vadd.f32 %v1096, %v1174
    %v1183 = vadd.f32 %v1097, %v1162
    %v1184 = vadd.f32 %v1098, %v1166
    %v1185 = vadd.f32 %v1099, %v1170
    %v1186 = vadd.f32 %v1100, %v1174
    %v1187 = vadd.f32 %v1101, %v1162
    %v1188 = vadd.f32 %v1102, %v1166
    %v1189 = vadd.f32 %v1103, %v1170
    %v1190 = vadd.f32 %v1104, %v1174
    %v1191 = vadd.f32 %v1105, %v1162
    %v1192 = vadd.f32 %v1106, %v1166
    %v1193 = vadd.f32 %v1107, %v1170
    %v1194 = vadd.f32 %v1108, %v1174
    %v1195 = vadd.f32 %v1109, %v1162
    %v1196 = vadd.f32 %v1110, %v1166
    %v1197 = vadd.f32 %v1111, %v1170
    %v1198 = vadd.f32 %v1112, %v1174
    %v1199 = vadd.f32 %v1113, %v1162
    %v1200 = vadd.f32 %v1114, %v1166
    %v1201 = vadd.f32 %v1115, %v1170
    %v1202 = vadd.f32 %v1116, %v1174
    %v1203 = vadd.f32 %v1117, %v1162
    %v1204 = vadd.f32 %v1118, %v1166
    %v1205 = vadd.f32 %v1119, %v1170
    %v1206 = vadd.f32 %v1120, %v1174
    %v1207 = vadd.f32 %v1121, %v1162
    %v1208 = vadd.f32 %v1122, %v1166
    %v1209 = vadd.f32 %v1123, %v1170
    %v1210 = vadd.f32 %v1124, %v1174
    %v1211 = vadd.f32 %v1125, %v1162
    %v1212 = vadd.f32 %v1126, %v1166
    %v1213 = vadd.f32 %v1127, %v1170
    %v1214 = vadd.f32 %v1128, %v1174
    %v1215 = vadd.f32 %v1129, %v1162
    %v1216 = vadd.f32 %v1130, %v1166
    %v1217 = vadd.f32 %v1131, %v1170
    %v1218 = vadd.f32 %v1132, %v1174
    %v1219 = vadd.f32 %v1133, %v1162
    %v1220 = vadd.f32 %v1134, %v1166
    %v1221 = vadd.f32 %v1135, %v1170
    %v1222 = vadd.f32 %v1136, %v1174
    %v1223 = vadd.f32 %v1137, %v1162
    %v1224 = vadd.f32 %v1138, %v1166
    %v1225 = vadd.f32 %v1139, %v1170
    %v1226 = vadd.f32 %v1140, %v1174
    %v1227 = vadd.f32 %v1141, %v1162
    %v1228 = vadd.f32 %v1142, %v1166
    %v1229 = vadd.f32 %v1143, %v1170
    %v1230 = vadd.f32 %v1144, %v1174
    %v1231 = vadd.f32 %v1145, %v1162
    %v1232 = vadd.f32 %v1146, %v1166
    %v1233 = vadd.f32 %v1147, %v1170
    %v1234 = vadd.f32 %v1148, %v1174
    %v1235 = vadd.f32 %v1149, %v1162
    %v1236 = vadd.f32 %v1150, %v1166
    %v1237 = vadd.f32 %v1151, %v1170
    %v1238 = vadd.f32 %v1152, %v1174
    %v1239 = vadd.f32 %v1153, %v1162
    %v1240 = vadd.f32 %v1154, %v1166
    %v1241 = vadd.f32 %v1155, %v1170
    %v1242 = vadd.f32 %v1156, %v1174
    %v1243 = vmax.f32 %v1179, 0.0
    %v1244 = vmax.f32 %v1180, 0.0
    %v1245 = vmax.f32 %v1181, 0.0
    %v1246 = vmax.f32 %v1182, 0.0
    %v1247 = vmax.f32 %v1183, 0.0
    %v1248 = vmax.f32 %v1184, 0.0
    %v1249 = vmax.f32 %v1185, 0.0
    %v1250 = vmax.f32 %v1186, 0.0
    %v1251 = vmax.f32 %v1187, 0.0
    %v1252 = vmax.f32 %v1188, 0.0
    %v1253 = vmax.f32 %v1189, 0.0
    %v1254 = vmax.f32 %v1190, 0.0
    %v1255 = vmax.f32 %v1191, 0.0
    %v1256 = vmax.f32 %v1192, 0.0
    %v1257 = vmax.f32 %v1193, 0.0
    %v1258 = vmax.f32 %v1194, 0.0
    %v1259 = vmax.f32 %v1195, 0.0
    %v1260 = vmax.f32 %v1196, 0.0
    %v1261 = vmax.f32 %v1197, 0.0
    %v1262 = vmax.f32 %v1198, 0.0
    %v1263 = vmax.f32 %v1199, 0.0
    %v1264 = vmax.f32 %v1200, 0.0
    %v1265 = vmax.f32 %v1201, 0.0
    %v1266 = vmax.f32 %v1202, 0.0
    %v1267 = vmax.f32 %v1203, 0.0
    %v1268 = vmax.f32 %v1204, 0.0
    %v1269 = vmax.f32 %v1205, 0.0
    %v1270 = vmax.f32 %v1206, 0.0
    %v1271 = vmax.f32 %v1207, 0.0
    %v1272 = vmax.f32 %v1208, 0.0
    %v1273 = vmax.f32 %v1209, 0.0
    %v1274 = vmax.f32 %v1210, 0.0
    %v1275 = vmax.f32 %v1211, 0.0
    %v1276 = vmax.f32 %v1212, 0.0
    %v1277 = vmax.f32 %v1213, 0.0
    %v1278 = vmax.f32 %v1214, 0.0
    %v1279 = vmax.f32 %v1215, 0.0
    %v1280 = vmax.f32 %v1216, 0.0
    %v1281 = vmax.f32 %v1217, 0.0
    %v1282 = vmax.f32 %v1218, 0.0
    %v1283 = vmax.f32 %v1219, 0.0
    %v1284 = vmax.f32 %v1220, 0.0
    %v1285 = vmax.f32 %v1221, 0.0
    %v1286 = vmax.f32 %v1222, 0.0
    %v1287 = vmax.f32 %v1223, 0.0
    %v1288 = vmax.f32 %v1224, 0.0
    %v1289 = vmax.f32 %v1225, 0.0
    %v1290 = vmax.f32 %v1226, 0.0
    %v1291 = vmax.f32 %v1227, 0.0
    %v1292 = vmax.f32 %v1228, 0.0
    %v1293 = vmax.f32 %v1229, 0.0
    %v1294 = vmax.f32 %v1230, 0.0
    %v1295 = vmax.f32 %v1231, 0.0
    %v1296 = vmax.f32 %v1232, 0.0
    %v1297 = vmax.f32 %v1233, 0.0
    %v1298 = vmax.f32 %v1234, 0.0
    %v1299 = vmax.f32 %v1235, 0.0
    %v1300 = vmax.f32 %v1236, 0.0
    %v1301 = vmax.f32 %v1237, 0.0
    %v1302 = vmax.f32 %v1238, 0.0
    %v1303 = vmax.f32 %v1239, 0.0
    %v1304 = vmax.f32 %v1240, 0.0
    %v1305 = vmax.f32 %v1241, 0.0
    %v1306 = vmax.f32 %v1242, 0.0
    %1307 = vst [vmem:[#allocation3] sm:$0xff] 0.0
    %1308 = vst [vmem:[#allocation3 + $0x8] sm:$0xff] 0.0
    %1309 = vst [vmem:[#allocation3 + $0x10] sm:$0xff] 0.0
    %1310 = vst [vmem:[#allocation3 + $0x18] sm:$0xff] 0.0
    %1311 = vst [vmem:[#allocation2] sm:$0xff] %v1243
    %1312 = vst [vmem:[#allocation2 + $0x8] sm:$0xff] %v1244
    %1313 = vst [vmem:[#allocation2 + $0x10] sm:$0xff] %v1245
    %1314 = vst [vmem:[#allocation2 + $0x18] sm:$0xff] %v1246
    %s1315 = scalar_lea.vmem [#allocation3], 32
    %1316 = vst [vmem:[%s1315] sm:$0xff] %v1247
    %1317 = vst [vmem:[%s1315 + $0x8] sm:$0xff] %v1248
    %1318 = vst [vmem:[%s1315 + $0x10] sm:$0xff] %v1249
    %1319 = vst [vmem:[%s1315 + $0x18] sm:$0xff] %v1250
    %s1320 = scalar_lea.vmem [#allocation2], 32
    %1321 = vst [vmem:[%s1320] sm:$0xff] %v1251
    %1322 = vst [vmem:[%s1320 + $0x8] sm:$0xff] %v1252
    %1323 = vst [vmem:[%s1320 + $0x10] sm:$0xff] %v1253
    %1324 = vst [vmem:[%s1320 + $0x18] sm:$0xff] %v1254
    %s1325 = scalar_lea.vmem [#allocation3], 64
    %1326 = vst [vmem:[%s1325] sm:$0xff] %v1255
    %1327 = vst [vmem:[%s1325 + $0x8] sm:$0xff] %v1256
    %1328 = vst [vmem:[%s1325 + $0x10] sm:$0xff] %v1257
    %1329 = vst [vmem:[%s1325 + $0x18] sm:$0xff] %v1258
    %s1330 = scalar_lea.vmem [#allocation2], 64
    %1331 = vst [vmem:[%s1330] sm:$0xff] %v1259
    %1332 = vst [vmem:[%s1330 + $0x8] sm:$0xff] %v1260
    %1333 = vst [vmem:[%s1330 + $0x10] sm:$0xff] %v1261
    %1334 = vst [vmem:[%s1330 + $0x18] sm:$0xff] %v1262
    %s1335 = scalar_lea.vmem [#allocation3], 96
    %1336 = vst [vmem:[%s1335] sm:$0xff] %v1263
    %1337 = vst [vmem:[%s1335 + $0x8] sm:$0xff] %v1264
    %1338 = vst [vmem:[%s1335 + $0x10] sm:$0xff] %v1265
    %1339 = vst [vmem:[%s1335 + $0x18] sm:$0xff] %v1266
    %s1340 = scalar_lea.vmem [#allocation2], 96
    %1341 = vst [vmem:[%s1340] sm:$0xff] %v1267
    %1342 = vst [vmem:[%s1340 + $0x8] sm:$0xff] %v1268
    %1343 = vst [vmem:[%s1340 + $0x10] sm:$0xff] %v1269
    %1344 = vst [vmem:[%s1340 + $0x18] sm:$0xff] %v1270
    %s1345 = scalar_lea.vmem [#allocation3], 128
    %1346 = vst [vmem:[%s1345] sm:$0xff] %v1271
    %1347 = vst [vmem:[%s1345 + $0x8] sm:$0xff] %v1272
    %1348 = vst [vmem:[%s1345 + $0x10] sm:$0xff] %v1273
    %1349 = vst [vmem:[%s1345 + $0x18] sm:$0xff] %v1274
    %s1350 = scalar_lea.vmem [#allocation2], 128
    %1351 = vst [vmem:[%s1350] sm:$0xff] %v1275
    %1352 = vst [vmem:[%s1350 + $0x8] sm:$0xff] %v1276
    %1353 = vst [vmem:[%s1350 + $0x10] sm:$0xff] %v1277
    %1354 = vst [vmem:[%s1350 + $0x18] sm:$0xff] %v1278
    %s1355 = scalar_lea.vmem [#allocation3], 160
    %1356 = vst [vmem:[%s1355] sm:$0xff] %v1279
    %1357 = vst [vmem:[%s1355 + $0x8] sm:$0xff] %v1280
    %1358 = vst [vmem:[%s1355 + $0x10] sm:$0xff] %v1281
    %1359 = vst [vmem:[%s1355 + $0x18] sm:$0xff] %v1282
    %s1360 = scalar_lea.vmem [#allocation2], 160
    %1361 = vst [vmem:[%s1360] sm:$0xff] %v1283
    %1362 = vst [vmem:[%s1360 + $0x8] sm:$0xff] %v1284
    %1363 = vst [vmem:[%s1360 + $0x10] sm:$0xff] %v1285
    %1364 = vst [vmem:[%s1360 + $0x18] sm:$0xff] %v1286
    %s1365 = scalar_lea.vmem [#allocation3], 192
    %1366 = vst [vmem:[%s1365] sm:$0xff] %v1287
    %1367 = vst [vmem:[%s1365 + $0x8] sm:$0xff] %v1288
    %1368 = vst [vmem:[%s1365 + $0x10] sm:$0xff] %v1289
    %1369 = vst [vmem:[%s1365 + $0x18] sm:$0xff] %v1290
    %s1370 = scalar_lea.vmem [#allocation2], 192
    %1371 = vst [vmem:[%s1370] sm:$0xff] %v1291
    %1372 = vst [vmem:[%s1370 + $0x8] sm:$0xff] %v1292
    %1373 = vst [vmem:[%s1370 + $0x10] sm:$0xff] %v1293
    %1374 = vst [vmem:[%s1370 + $0x18] sm:$0xff] %v1294
    %s1375 = scalar_lea.vmem [#allocation3], 224
    %1376 = vst [vmem:[%s1375] sm:$0xff] %v1295
    %1377 = vst [vmem:[%s1375 + $0x8] sm:$0xff] %v1296
    %1378 = vst [vmem:[%s1375 + $0x10] sm:$0xff] %v1297
    %1379 = vst [vmem:[%s1375 + $0x18] sm:$0xff] %v1298
    %s1380 = scalar_lea.vmem [#allocation2], 224
    %1381 = vst [vmem:[%s1380] sm:$0xff] %v1299
    %1382 = vst [vmem:[%s1380 + $0x8] sm:$0xff] %v1300
    %1383 = vst [vmem:[%s1380 + $0x10] sm:$0xff] %v1301
    %1384 = vst [vmem:[%s1380 + $0x18] sm:$0xff] %v1302
    %s1385 = scalar_lea.vmem [#allocation3], 256
    %1386 = vst [vmem:[%s1385] sm:$0xff] %v1303
    %1387 = vst [vmem:[%s1385 + $0x8] sm:$0xff] %v1304
    %1388 = vst [vmem:[%s1385 + $0x10] sm:$0xff] %v1305
    %1389 = vst [vmem:[%s1385 + $0x18] sm:$0xff] %v1306
    %v1390 = vld [vmem:[#allocation3] sm:$0xff]
    %v1391 = vld [vmem:[#allocation3 + $0x8] sm:$0xff]
    %v1392 = vld [vmem:[#allocation3 + $0x10] sm:$0xff]
    %v1393 = vld [vmem:[#allocation3 + $0x18] sm:$0xff]
    %v1394 = vld [vmem:[#allocation3 + $0x20] sm:$0xff]
    %v1395 = vld [vmem:[#allocation3 + $0x28] sm:$0xff]
    %v1396 = vld [vmem:[#allocation3 + $0x30] sm:$0xff]
    %v1397 = vld [vmem:[#allocation3 + $0x38] sm:$0xff]
    %v1398 = vld [vmem:[#allocation3 + $0x40] sm:$0xff]
    %v1399 = vld [vmem:[#allocation3 + $0x48] sm:$0xff]
    %v1400 = vld [vmem:[#allocation3 + $0x50] sm:$0xff]
    %v1401 = vld [vmem:[#allocation3 + $0x58] sm:$0xff]
    %v1402 = vld [vmem:[#allocation3 + $0x60] sm:$0xff]
    %v1403 = vld [vmem:[#allocation3 + $0x68] sm:$0xff]
    %v1404 = vld [vmem:[#allocation3 + $0x70] sm:$0xff]
    %v1405 = vld [vmem:[#allocation3 + $0x78] sm:$0xff]
    %v1406 = vld [vmem:[#allocation3 + $0x80] sm:$0xff]
    %v1407 = vld [vmem:[#allocation3 + $0x88] sm:$0xff]
    %v1408 = vld [vmem:[#allocation3 + $0x90] sm:$0xff]
    %v1409 = vld [vmem:[#allocation3 + $0x98] sm:$0xff]
    %v1410 = vld [vmem:[#allocation3 + $0xa0] sm:$0xff]
    %v1411 = vld [vmem:[#allocation3 + $0xa8] sm:$0xff]
    %v1412 = vld [vmem:[#allocation3 + $0xb0] sm:$0xff]
    %v1413 = vld [vmem:[#allocation3 + $0xb8] sm:$0xff]
    %v1414 = vld [vmem:[#allocation3 + $0xc0] sm:$0xff]
    %v1415 = vld [vmem:[#allocation3 + $0xc8] sm:$0xff]
    %v1416 = vld [vmem:[#allocation3 + $0xd0] sm:$0xff]
    %v1417 = vld [vmem:[#allocation3 + $0xd8] sm:$0xff]
    %v1418 = vld [vmem:[#allocation3 + $0xe0] sm:$0xff]
    %v1419 = vld [vmem:[#allocation3 + $0xe8] sm:$0xff]
    %v1420 = vld [vmem:[#allocation3 + $0xf0] sm:$0xff]
    %v1421 = vld [vmem:[#allocation3 + $0xf8] sm:$0xff]
    %v1422 = vld [vmem:[#allocation2] sm:$0xff]
    %v1423 = vld [vmem:[#allocation2 + $0x8] sm:$0xff]
    %v1424 = vld [vmem:[#allocation2 + $0x10] sm:$0xff]
    %v1425 = vld [vmem:[#allocation2 + $0x18] sm:$0xff]
    %v1426 = vld [vmem:[#allocation2 + $0x20] sm:$0xff]
    %v1427 = vld [vmem:[#allocation2 + $0x28] sm:$0xff]
    %v1428 = vld [vmem:[#allocation2 + $0x30] sm:$0xff]
    %v1429 = vld [vmem:[#allocation2 + $0x38] sm:$0xff]
    %v1430 = vld [vmem:[#allocation2 + $0x40] sm:$0xff]
    %v1431 = vld [vmem:[#allocation2 + $0x48] sm:$0xff]
    %v1432 = vld [vmem:[#allocation2 + $0x50] sm:$0xff]
    %v1433 = vld [vmem:[#allocation2 + $0x58] sm:$0xff]
    %v1434 = vld [vmem:[#allocation2 + $0x60] sm:$0xff]
    %v1435 = vld [vmem:[#allocation2 + $0x68] sm:$0xff]
    %v1436 = vld [vmem:[#allocation2 + $0x70] sm:$0xff]
    %v1437 = vld [vmem:[#allocation2 + $0x78] sm:$0xff]
    %v1438 = vld [vmem:[#allocation2 + $0x80] sm:$0xff]
    %v1439 = vld [vmem:[#allocation2 + $0x88] sm:$0xff]
    %v1440 = vld [vmem:[#allocation2 + $0x90] sm:$0xff]
    %v1441 = vld [vmem:[#allocation2 + $0x98] sm:$0xff]
    %v1442 = vld [vmem:[#allocation2 + $0xa0] sm:$0xff]
    %v1443 = vld [vmem:[#allocation2 + $0xa8] sm:$0xff]
    %v1444 = vld [vmem:[#allocation2 + $0xb0] sm:$0xff]
    %v1445 = vld [vmem:[#allocation2 + $0xb8] sm:$0xff]
    %v1446 = vld [vmem:[#allocation2 + $0xc0] sm:$0xff]
    %v1447 = vld [vmem:[#allocation2 + $0xc8] sm:$0xff]
    %v1448 = vld [vmem:[#allocation2 + $0xd0] sm:$0xff]
    %v1449 = vld [vmem:[#allocation2 + $0xd8] sm:$0xff]
    %v1450 = vld [vmem:[#allocation2 + $0xe0] sm:$0xff]
    %v1451 = vld [vmem:[#allocation2 + $0xe8] sm:$0xff]
    %v1452 = vld [vmem:[#allocation2 + $0xf0] sm:$0xff]
    %v1453 = vld [vmem:[#allocation2 + $0xf8] sm:$0xff]
    %v1454 = vld [vmem:[%s1315] sm:$0xff]
    %v1455 = vld [vmem:[%s1315 + $0x8] sm:$0xff]
    %v1456 = vld [vmem:[%s1315 + $0x10] sm:$0xff]
    %v1457 = vld [vmem:[%s1315 + $0x18] sm:$0xff]
    %v1458 = vld [vmem:[%s1315 + $0x20] sm:$0xff]
    %v1459 = vld [vmem:[%s1315 + $0x28] sm:$0xff]
    %v1460 = vld [vmem:[%s1315 + $0x30] sm:$0xff]
    %v1461 = vld [vmem:[%s1315 + $0x38] sm:$0xff]
    %v1462 = vld [vmem:[%s1315 + $0x40] sm:$0xff]
    %v1463 = vld [vmem:[%s1315 + $0x48] sm:$0xff]
    %v1464 = vld [vmem:[%s1315 + $0x50] sm:$0xff]
    %v1465 = vld [vmem:[%s1315 + $0x58] sm:$0xff]
    %v1466 = vld [vmem:[%s1315 + $0x60] sm:$0xff]
    %v1467 = vld [vmem:[%s1315 + $0x68] sm:$0xff]
    %v1468 = vld [vmem:[%s1315 + $0x70] sm:$0xff]
    %v1469 = vld [vmem:[%s1315 + $0x78] sm:$0xff]
    %v1470 = vld [vmem:[%s1315 + $0x80] sm:$0xff]
    %v1471 = vld [vmem:[%s1315 + $0x88] sm:$0xff]
    %v1472 = vld [vmem:[%s1315 + $0x90] sm:$0xff]
    %v1473 = vld [vmem:[%s1315 + $0x98] sm:$0xff]
    %v1474 = vld [vmem:[%s1315 + $0xa0] sm:$0xff]
    %v1475 = vld [vmem:[%s1315 + $0xa8] sm:$0xff]
    %v1476 = vld [vmem:[%s1315 + $0xb0] sm:$0xff]
    %v1477 = vld [vmem:[%s1315 + $0xb8] sm:$0xff]
    %v1478 = vld [vmem:[%s1315 + $0xc0] sm:$0xff]
    %v1479 = vld [vmem:[%s1315 + $0xc8] sm:$0xff]
    %v1480 = vld [vmem:[%s1315 + $0xd0] sm:$0xff]
    %v1481 = vld [vmem:[%s1315 + $0xd8] sm:$0xff]
    %v1482 = vld [vmem:[%s1315 + $0xe0] sm:$0xff]
    %v1483 = vld [vmem:[%s1315 + $0xe8] sm:$0xff]
    %v1484 = vld [vmem:[%s1315 + $0xf0] sm:$0xff]
    %v1485 = vld [vmem:[%s1315 + $0xf8] sm:$0xff]
    %v1486 = vpack.c.bf16 %v1394, %v1390
    %v1487 = vpack.c.bf16 %v1395, %v1391
    %v1488 = vpack.c.bf16 %v1396, %v1392
    %v1489 = vpack.c.bf16 %v1397, %v1393
    %v1490 = vpack.c.bf16 %v1402, %v1398
    %v1491 = vpack.c.bf16 %v1403, %v1399
    %v1492 = vpack.c.bf16 %v1404, %v1400
    %v1493 = vpack.c.bf16 %v1405, %v1401
    %v1494 = vpack.c.bf16 %v1410, %v1406
    %v1495 = vpack.c.bf16 %v1411, %v1407
    %v1496 = vpack.c.bf16 %v1412, %v1408
    %v1497 = vpack.c.bf16 %v1413, %v1409
    %v1498 = vpack.c.bf16 %v1418, %v1414
    %v1499 = vpack.c.bf16 %v1419, %v1415
    %v1500 = vpack.c.bf16 %v1420, %v1416
    %v1501 = vpack.c.bf16 %v1421, %v1417
    %v1502 = vld [vmem:[#allocation10] sm:$0xff]
    %v1503 = vld [vmem:[#allocation10 + $0x8] sm:$0xff]
    %v1504 = vld [vmem:[#allocation10 + $0x10] sm:$0xff]
    %v1505 = vld [vmem:[#allocation10 + $0x18] sm:$0xff]
    %v1506 = vld [vmem:[#allocation10 + $0x20] sm:$0xff]
    %v1507 = vld [vmem:[#allocation10 + $0x28] sm:$0xff]
    %v1508 = vld [vmem:[#allocation10 + $0x30] sm:$0xff]
    %v1509 = vld [vmem:[#allocation10 + $0x38] sm:$0xff]
    %v1510 = vld [vmem:[#allocation10 + $0x40] sm:$0xff]
    %v1511 = vld [vmem:[#allocation10 + $0x48] sm:$0xff]
    %v1512 = vld [vmem:[#allocation10 + $0x50] sm:$0xff]
    %v1513 = vld [vmem:[#allocation10 + $0x58] sm:$0xff]
    %v1514 = vld [vmem:[#allocation10 + $0x60] sm:$0xff]
    %v1515 = vld [vmem:[#allocation10 + $0x68] sm:$0xff]
    %v1516 = vld [vmem:[#allocation10 + $0x70] sm:$0xff]
    %v1517 = vld [vmem:[#allocation10 + $0x78] sm:$0xff]
    %v1518 = vld [vmem:[#allocation10 + $0x80] sm:$0xff]
    %v1519 = vld [vmem:[#allocation10 + $0x88] sm:$0xff]
    %v1520 = vld [vmem:[#allocation10 + $0x90] sm:$0xff]
    %v1521 = vld [vmem:[#allocation10 + $0x98] sm:$0xff]
    %v1522 = vld [vmem:[#allocation10 + $0xa0] sm:$0xff]
    %v1523 = vld [vmem:[#allocation10 + $0xa8] sm:$0xff]
    %v1524 = vld [vmem:[#allocation10 + $0xb0] sm:$0xff]
    %v1525 = vld [vmem:[#allocation10 + $0xb8] sm:$0xff]
    %v1526 = vld [vmem:[#allocation10 + $0xc0] sm:$0xff]
    %v1527 = vld [vmem:[#allocation10 + $0xc8] sm:$0xff]
    %v1528 = vld [vmem:[#allocation10 + $0xd0] sm:$0xff]
    %v1529 = vld [vmem:[#allocation10 + $0xd8] sm:$0xff]
    %v1530 = vld [vmem:[#allocation10 + $0xe0] sm:$0xff]
    %v1531 = vld [vmem:[#allocation10 + $0xe8] sm:$0xff]
    %v1532 = vld [vmem:[#allocation10 + $0xf0] sm:$0xff]
    %v1533 = vld [vmem:[#allocation10 + $0xf8] sm:$0xff]
    %v1534 = vld [vmem:[#allocation10 + $0x100] sm:$0xff]
    %v1535 = vld [vmem:[#allocation10 + $0x108] sm:$0xff]
    %v1536 = vld [vmem:[#allocation10 + $0x110] sm:$0xff]
    %v1537 = vld [vmem:[#allocation10 + $0x118] sm:$0xff]
    %v1538 = vld [vmem:[#allocation10 + $0x120] sm:$0xff]
    %v1539 = vld [vmem:[#allocation10 + $0x128] sm:$0xff]
    %v1540 = vld [vmem:[#allocation10 + $0x130] sm:$0xff]
    %v1541 = vld [vmem:[#allocation10 + $0x138] sm:$0xff]
    %v1542 = vld [vmem:[#allocation10 + $0x140] sm:$0xff]
    %v1543 = vld [vmem:[#allocation10 + $0x148] sm:$0xff]
    %v1544 = vld [vmem:[#allocation10 + $0x150] sm:$0xff]
    %v1545 = vld [vmem:[#allocation10 + $0x158] sm:$0xff]
    %v1546 = vld [vmem:[#allocation10 + $0x160] sm:$0xff]
    %v1547 = vld [vmem:[#allocation10 + $0x168] sm:$0xff]
    %v1548 = vld [vmem:[#allocation10 + $0x170] sm:$0xff]
    %v1549 = vld [vmem:[#allocation10 + $0x178] sm:$0xff]
    %v1550 = vld [vmem:[#allocation10 + $0x180] sm:$0xff]
    %v1551 = vld [vmem:[#allocation10 + $0x188] sm:$0xff]
    %v1552 = vld [vmem:[#allocation10 + $0x190] sm:$0xff]
    %v1553 = vld [vmem:[#allocation10 + $0x198] sm:$0xff]
    %v1554 = vld [vmem:[#allocation10 + $0x1a0] sm:$0xff]
    %v1555 = vld [vmem:[#allocation10 + $0x1a8] sm:$0xff]
    %v1556 = vld [vmem:[#allocation10 + $0x1b0] sm:$0xff]
    %v1557 = vld [vmem:[#allocation10 + $0x1b8] sm:$0xff]
    %v1558 = vld [vmem:[#allocation10 + $0x1c0] sm:$0xff]
    %v1559 = vld [vmem:[#allocation10 + $0x1c8] sm:$0xff]
    %v1560 = vld [vmem:[#allocation10 + $0x1d0] sm:$0xff]
    %v1561 = vld [vmem:[#allocation10 + $0x1d8] sm:$0xff]
    %v1562 = vld [vmem:[#allocation10 + $0x1e0] sm:$0xff]
    %v1563 = vld [vmem:[#allocation10 + $0x1e8] sm:$0xff]
    %v1564 = vld [vmem:[#allocation10 + $0x1f0] sm:$0xff]
    %v1565 = vld [vmem:[#allocation10 + $0x1f8] sm:$0xff]
    %v1566 = vld [vmem:[#allocation10 + $0x200] sm:$0xff]
    %v1567 = vld [vmem:[#allocation10 + $0x208] sm:$0xff]
    %v1568 = vld [vmem:[#allocation10 + $0x210] sm:$0xff]
    %v1569 = vld [vmem:[#allocation10 + $0x218] sm:$0xff]
    %v1570 = vld [vmem:[#allocation10 + $0x220] sm:$0xff]
    %v1571 = vld [vmem:[#allocation10 + $0x228] sm:$0xff]
    %v1572 = vld [vmem:[#allocation10 + $0x230] sm:$0xff]
    %v1573 = vld [vmem:[#allocation10 + $0x238] sm:$0xff]
    %v1574 = vld [vmem:[#allocation10 + $0x240] sm:$0xff]
    %v1575 = vld [vmem:[#allocation10 + $0x248] sm:$0xff]
    %v1576 = vld [vmem:[#allocation10 + $0x250] sm:$0xff]
    %v1577 = vld [vmem:[#allocation10 + $0x258] sm:$0xff]
    %v1578 = vld [vmem:[#allocation10 + $0x260] sm:$0xff]
    %v1579 = vld [vmem:[#allocation10 + $0x268] sm:$0xff]
    %v1580 = vld [vmem:[#allocation10 + $0x270] sm:$0xff]
    %v1581 = vld [vmem:[#allocation10 + $0x278] sm:$0xff]
    %v1582 = vld [vmem:[#allocation10 + $0x280] sm:$0xff]
    %v1583 = vld [vmem:[#allocation10 + $0x288] sm:$0xff]
    %v1584 = vld [vmem:[#allocation10 + $0x290] sm:$0xff]
    %v1585 = vld [vmem:[#allocation10 + $0x298] sm:$0xff]
    %v1586 = vld [vmem:[#allocation10 + $0x2a0] sm:$0xff]
    %v1587 = vld [vmem:[#allocation10 + $0x2a8] sm:$0xff]
    %v1588 = vld [vmem:[#allocation10 + $0x2b0] sm:$0xff]
    %v1589 = vld [vmem:[#allocation10 + $0x2b8] sm:$0xff]
    %v1590 = vld [vmem:[#allocation10 + $0x2c0] sm:$0xff]
    %v1591 = vld [vmem:[#allocation10 + $0x2c8] sm:$0xff]
    %v1592 = vld [vmem:[#allocation10 + $0x2d0] sm:$0xff]
    %v1593 = vld [vmem:[#allocation10 + $0x2d8] sm:$0xff]
    %v1594 = vld [vmem:[#allocation10 + $0x2e0] sm:$0xff]
    %v1595 = vld [vmem:[#allocation10 + $0x2e8] sm:$0xff]
    %v1596 = vld [vmem:[#allocation10 + $0x2f0] sm:$0xff]
    %v1597 = vld [vmem:[#allocation10 + $0x2f8] sm:$0xff]
    %v1598 = vld [vmem:[#allocation10 + $0x300] sm:$0xff]
    %v1599 = vld [vmem:[#allocation10 + $0x308] sm:$0xff]
    %v1600 = vld [vmem:[#allocation10 + $0x310] sm:$0xff]
    %v1601 = vld [vmem:[#allocation10 + $0x318] sm:$0xff]
    %v1602 = vld [vmem:[#allocation10 + $0x320] sm:$0xff]
    %v1603 = vld [vmem:[#allocation10 + $0x328] sm:$0xff]
    %v1604 = vld [vmem:[#allocation10 + $0x330] sm:$0xff]
    %v1605 = vld [vmem:[#allocation10 + $0x338] sm:$0xff]
    %v1606 = vld [vmem:[#allocation10 + $0x340] sm:$0xff]
    %v1607 = vld [vmem:[#allocation10 + $0x348] sm:$0xff]
    %v1608 = vld [vmem:[#allocation10 + $0x350] sm:$0xff]
    %v1609 = vld [vmem:[#allocation10 + $0x358] sm:$0xff]
    %v1610 = vld [vmem:[#allocation10 + $0x360] sm:$0xff]
    %v1611 = vld [vmem:[#allocation10 + $0x368] sm:$0xff]
    %v1612 = vld [vmem:[#allocation10 + $0x370] sm:$0xff]
    %v1613 = vld [vmem:[#allocation10 + $0x378] sm:$0xff]
    %v1614 = vld [vmem:[#allocation10 + $0x380] sm:$0xff]
    %v1615 = vld [vmem:[#allocation10 + $0x388] sm:$0xff]
    %v1616 = vld [vmem:[#allocation10 + $0x390] sm:$0xff]
    %v1617 = vld [vmem:[#allocation10 + $0x398] sm:$0xff]
    %v1618 = vld [vmem:[#allocation10 + $0x3a0] sm:$0xff]
    %v1619 = vld [vmem:[#allocation10 + $0x3a8] sm:$0xff]
    %v1620 = vld [vmem:[#allocation10 + $0x3b0] sm:$0xff]
    %v1621 = vld [vmem:[#allocation10 + $0x3b8] sm:$0xff]
    %v1622 = vld [vmem:[#allocation10 + $0x3c0] sm:$0xff]
    %v1623 = vld [vmem:[#allocation10 + $0x3c8] sm:$0xff]
    %v1624 = vld [vmem:[#allocation10 + $0x3d0] sm:$0xff]
    %v1625 = vld [vmem:[#allocation10 + $0x3d8] sm:$0xff]
    %v1626 = vld [vmem:[#allocation10 + $0x3e0] sm:$0xff]
    %v1627 = vld [vmem:[#allocation10 + $0x3e8] sm:$0xff]
    %v1628 = vld [vmem:[#allocation10 + $0x3f0] sm:$0xff]
    %v1629 = vld [vmem:[#allocation10 + $0x3f8] sm:$0xff]
    %v1630 = vpack.c.bf16 %v1426, %v1422
    %v1631 = vpack.c.bf16 %v1427, %v1423
    %v1632 = vpack.c.bf16 %v1428, %v1424
    %v1633 = vpack.c.bf16 %v1429, %v1425
    %v1634 = vpack.c.bf16 %v1434, %v1430
    %v1635 = vpack.c.bf16 %v1435, %v1431
    %v1636 = vpack.c.bf16 %v1436, %v1432
    %v1637 = vpack.c.bf16 %v1437, %v1433
    %v1638 = vpack.c.bf16 %v1442, %v1438
    %v1639 = vpack.c.bf16 %v1443, %v1439
    %v1640 = vpack.c.bf16 %v1444, %v1440
    %v1641 = vpack.c.bf16 %v1445, %v1441
    %v1642 = vpack.c.bf16 %v1450, %v1446
    %v1643 = vpack.c.bf16 %v1451, %v1447
    %v1644 = vpack.c.bf16 %v1452, %v1448
    %v1645 = vpack.c.bf16 %v1453, %v1449
    %s1646 = scalar_lea.vmem [#allocation10], 1024
    %v1647 = vld [vmem:[%s1646] sm:$0xff]
    %v1648 = vld [vmem:[%s1646 + $0x8] sm:$0xff]
    %v1649 = vld [vmem:[%s1646 + $0x10] sm:$0xff]
    %v1650 = vld [vmem:[%s1646 + $0x18] sm:$0xff]
    %v1651 = vld [vmem:[%s1646 + $0x20] sm:$0xff]
    %v1652 = vld [vmem:[%s1646 + $0x28] sm:$0xff]
    %v1653 = vld [vmem:[%s1646 + $0x30] sm:$0xff]
    %v1654 = vld [vmem:[%s1646 + $0x38] sm:$0xff]
    %v1655 = vld [vmem:[%s1646 + $0x40] sm:$0xff]
    %v1656 = vld [vmem:[%s1646 + $0x48] sm:$0xff]
    %v1657 = vld [vmem:[%s1646 + $0x50] sm:$0xff]
    %v1658 = vld [vmem:[%s1646 + $0x58] sm:$0xff]
    %v1659 = vld [vmem:[%s1646 + $0x60] sm:$0xff]
    %v1660 = vld [vmem:[%s1646 + $0x68] sm:$0xff]
    %v1661 = vld [vmem:[%s1646 + $0x70] sm:$0xff]
    %v1662 = vld [vmem:[%s1646 + $0x78] sm:$0xff]
    %v1663 = vld [vmem:[%s1646 + $0x80] sm:$0xff]
    %v1664 = vld [vmem:[%s1646 + $0x88] sm:$0xff]
    %v1665 = vld [vmem:[%s1646 + $0x90] sm:$0xff]
    %v1666 = vld [vmem:[%s1646 + $0x98] sm:$0xff]
    %v1667 = vld [vmem:[%s1646 + $0xa0] sm:$0xff]
    %v1668 = vld [vmem:[%s1646 + $0xa8] sm:$0xff]
    %v1669 = vld [vmem:[%s1646 + $0xb0] sm:$0xff]
    %v1670 = vld [vmem:[%s1646 + $0xb8] sm:$0xff]
    %v1671 = vld [vmem:[%s1646 + $0xc0] sm:$0xff]
    %v1672 = vld [vmem:[%s1646 + $0xc8] sm:$0xff]
    %v1673 = vld [vmem:[%s1646 + $0xd0] sm:$0xff]
    %v1674 = vld [vmem:[%s1646 + $0xd8] sm:$0xff]
    %v1675 = vld [vmem:[%s1646 + $0xe0] sm:$0xff]
    %v1676 = vld [vmem:[%s1646 + $0xe8] sm:$0xff]
    %v1677 = vld [vmem:[%s1646 + $0xf0] sm:$0xff]
    %v1678 = vld [vmem:[%s1646 + $0xf8] sm:$0xff]
    %v1679 = vld [vmem:[%s1646 + $0x100] sm:$0xff]
    %v1680 = vld [vmem:[%s1646 + $0x108] sm:$0xff]
    %v1681 = vld [vmem:[%s1646 + $0x110] sm:$0xff]
    %v1682 = vld [vmem:[%s1646 + $0x118] sm:$0xff]
    %v1683 = vld [vmem:[%s1646 + $0x120] sm:$0xff]
    %v1684 = vld [vmem:[%s1646 + $0x128] sm:$0xff]
    %v1685 = vld [vmem:[%s1646 + $0x130] sm:$0xff]
    %v1686 = vld [vmem:[%s1646 + $0x138] sm:$0xff]
    %v1687 = vld [vmem:[%s1646 + $0x140] sm:$0xff]
    %v1688 = vld [vmem:[%s1646 + $0x148] sm:$0xff]
    %v1689 = vld [vmem:[%s1646 + $0x150] sm:$0xff]
    %v1690 = vld [vmem:[%s1646 + $0x158] sm:$0xff]
    %v1691 = vld [vmem:[%s1646 + $0x160] sm:$0xff]
    %v1692 = vld [vmem:[%s1646 + $0x168] sm:$0xff]
    %v1693 = vld [vmem:[%s1646 + $0x170] sm:$0xff]
    %v1694 = vld [vmem:[%s1646 + $0x178] sm:$0xff]
    %v1695 = vld [vmem:[%s1646 + $0x180] sm:$0xff]
    %v1696 = vld [vmem:[%s1646 + $0x188] sm:$0xff]
    %v1697 = vld [vmem:[%s1646 + $0x190] sm:$0xff]
    %v1698 = vld [vmem:[%s1646 + $0x198] sm:$0xff]
    %v1699 = vld [vmem:[%s1646 + $0x1a0] sm:$0xff]
    %v1700 = vld [vmem:[%s1646 + $0x1a8] sm:$0xff]
    %v1701 = vld [vmem:[%s1646 + $0x1b0] sm:$0xff]
    %v1702 = vld [vmem:[%s1646 + $0x1b8] sm:$0xff]
    %v1703 = vld [vmem:[%s1646 + $0x1c0] sm:$0xff]
    %v1704 = vld [vmem:[%s1646 + $0x1c8] sm:$0xff]
    %v1705 = vld [vmem:[%s1646 + $0x1d0] sm:$0xff]
    %v1706 = vld [vmem:[%s1646 + $0x1d8] sm:$0xff]
    %v1707 = vld [vmem:[%s1646 + $0x1e0] sm:$0xff]
    %v1708 = vld [vmem:[%s1646 + $0x1e8] sm:$0xff]
    %v1709 = vld [vmem:[%s1646 + $0x1f0] sm:$0xff]
    %v1710 = vld [vmem:[%s1646 + $0x1f8] sm:$0xff]
    %v1711 = vld [vmem:[%s1646 + $0x200] sm:$0xff]
    %v1712 = vld [vmem:[%s1646 + $0x208] sm:$0xff]
    %v1713 = vld [vmem:[%s1646 + $0x210] sm:$0xff]
    %v1714 = vld [vmem:[%s1646 + $0x218] sm:$0xff]
    %v1715 = vld [vmem:[%s1646 + $0x220] sm:$0xff]
    %v1716 = vld [vmem:[%s1646 + $0x228] sm:$0xff]
    %v1717 = vld [vmem:[%s1646 + $0x230] sm:$0xff]
    %v1718 = vld [vmem:[%s1646 + $0x238] sm:$0xff]
    %v1719 = vld [vmem:[%s1646 + $0x240] sm:$0xff]
    %v1720 = vld [vmem:[%s1646 + $0x248] sm:$0xff]
    %v1721 = vld [vmem:[%s1646 + $0x250] sm:$0xff]
    %v1722 = vld [vmem:[%s1646 + $0x258] sm:$0xff]
    %v1723 = vld [vmem:[%s1646 + $0x260] sm:$0xff]
    %v1724 = vld [vmem:[%s1646 + $0x268] sm:$0xff]
    %v1725 = vld [vmem:[%s1646 + $0x270] sm:$0xff]
    %v1726 = vld [vmem:[%s1646 + $0x278] sm:$0xff]
    %v1727 = vld [vmem:[%s1646 + $0x280] sm:$0xff]
    %v1728 = vld [vmem:[%s1646 + $0x288] sm:$0xff]
    %v1729 = vld [vmem:[%s1646 + $0x290] sm:$0xff]
    %v1730 = vld [vmem:[%s1646 + $0x298] sm:$0xff]
    %v1731 = vld [vmem:[%s1646 + $0x2a0] sm:$0xff]
    %v1732 = vld [vmem:[%s1646 + $0x2a8] sm:$0xff]
    %v1733 = vld [vmem:[%s1646 + $0x2b0] sm:$0xff]
    %v1734 = vld [vmem:[%s1646 + $0x2b8] sm:$0xff]
    %v1735 = vld [vmem:[%s1646 + $0x2c0] sm:$0xff]
    %v1736 = vld [vmem:[%s1646 + $0x2c8] sm:$0xff]
    %v1737 = vld [vmem:[%s1646 + $0x2d0] sm:$0xff]
    %v1738 = vld [vmem:[%s1646 + $0x2d8] sm:$0xff]
    %v1739 = vld [vmem:[%s1646 + $0x2e0] sm:$0xff]
    %v1740 = vld [vmem:[%s1646 + $0x2e8] sm:$0xff]
    %v1741 = vld [vmem:[%s1646 + $0x2f0] sm:$0xff]
    %v1742 = vld [vmem:[%s1646 + $0x2f8] sm:$0xff]
    %v1743 = vld [vmem:[%s1646 + $0x300] sm:$0xff]
    %v1744 = vld [vmem:[%s1646 + $0x308] sm:$0xff]
    %v1745 = vld [vmem:[%s1646 + $0x310] sm:$0xff]
    %v1746 = vld [vmem:[%s1646 + $0x318] sm:$0xff]
    %v1747 = vld [vmem:[%s1646 + $0x320] sm:$0xff]
    %v1748 = vld [vmem:[%s1646 + $0x328] sm:$0xff]
    %v1749 = vld [vmem:[%s1646 + $0x330] sm:$0xff]
    %v1750 = vld [vmem:[%s1646 + $0x338] sm:$0xff]
    %v1751 = vld [vmem:[%s1646 + $0x340] sm:$0xff]
    %v1752 = vld [vmem:[%s1646 + $0x348] sm:$0xff]
    %v1753 = vld [vmem:[%s1646 + $0x350] sm:$0xff]
    %v1754 = vld [vmem:[%s1646 + $0x358] sm:$0xff]
    %v1755 = vld [vmem:[%s1646 + $0x360] sm:$0xff]
    %v1756 = vld [vmem:[%s1646 + $0x368] sm:$0xff]
    %v1757 = vld [vmem:[%s1646 + $0x370] sm:$0xff]
    %v1758 = vld [vmem:[%s1646 + $0x378] sm:$0xff]
    %v1759 = vld [vmem:[%s1646 + $0x380] sm:$0xff]
    %v1760 = vld [vmem:[%s1646 + $0x388] sm:$0xff]
    %v1761 = vld [vmem:[%s1646 + $0x390] sm:$0xff]
    %v1762 = vld [vmem:[%s1646 + $0x398] sm:$0xff]
    %v1763 = vld [vmem:[%s1646 + $0x3a0] sm:$0xff]
    %v1764 = vld [vmem:[%s1646 + $0x3a8] sm:$0xff]
    %v1765 = vld [vmem:[%s1646 + $0x3b0] sm:$0xff]
    %v1766 = vld [vmem:[%s1646 + $0x3b8] sm:$0xff]
    %v1767 = vld [vmem:[%s1646 + $0x3c0] sm:$0xff]
    %v1768 = vld [vmem:[%s1646 + $0x3c8] sm:$0xff]
    %v1769 = vld [vmem:[%s1646 + $0x3d0] sm:$0xff]
    %v1770 = vld [vmem:[%s1646 + $0x3d8] sm:$0xff]
    %v1771 = vld [vmem:[%s1646 + $0x3e0] sm:$0xff]
    %v1772 = vld [vmem:[%s1646 + $0x3e8] sm:$0xff]
    %v1773 = vld [vmem:[%s1646 + $0x3f0] sm:$0xff]
    %v1774 = vld [vmem:[%s1646 + $0x3f8] sm:$0xff]
    %v1903 = vunpack.c.l.b16 %v1647
    %v1904 = vunpack.c.h.b16 %v1647
    %v1905 = vunpack.c.l.b16 %v1648
    %v1906 = vunpack.c.h.b16 %v1648
    %v1907 = vunpack.c.l.b16 %v1649
    %v1908 = vunpack.c.h.b16 %v1649
    %v1909 = vunpack.c.l.b16 %v1650
    %v1910 = vunpack.c.h.b16 %v1650
    %v1911 = vunpack.c.l.b16 %v1651
    %v1912 = vunpack.c.h.b16 %v1651
    %v1913 = vunpack.c.l.b16 %v1652
    %v1914 = vunpack.c.h.b16 %v1652
    %v1915 = vunpack.c.l.b16 %v1653
    %v1916 = vunpack.c.h.b16 %v1653
    %v1917 = vunpack.c.l.b16 %v1654
    %v1918 = vunpack.c.h.b16 %v1654
    %v1919 = vunpack.c.l.b16 %v1655
    %v1920 = vunpack.c.h.b16 %v1655
    %v1921 = vunpack.c.l.b16 %v1656
    %v1922 = vunpack.c.h.b16 %v1656
    %v1923 = vunpack.c.l.b16 %v1657
    %v1924 = vunpack.c.h.b16 %v1657
    %v1925 = vunpack.c.l.b16 %v1658
    %v1926 = vunpack.c.h.b16 %v1658
    %v1927 = vunpack.c.l.b16 %v1659
    %v1928 = vunpack.c.h.b16 %v1659
    %v1929 = vunpack.c.l.b16 %v1660
    %v1930 = vunpack.c.h.b16 %v1660
    %v1931 = vunpack.c.l.b16 %v1661
    %v1932 = vunpack.c.h.b16 %v1661
    %v1933 = vunpack.c.l.b16 %v1662
    %v1934 = vunpack.c.h.b16 %v1662
    %v1935 = vunpack.c.l.b16 %v1663
    %v1936 = vunpack.c.h.b16 %v1663
    %v1937 = vunpack.c.l.b16 %v1664
    %v1938 = vunpack.c.h.b16 %v1664
    %v1939 = vunpack.c.l.b16 %v1665
    %v1940 = vunpack.c.h.b16 %v1665
    %v1941 = vunpack.c.l.b16 %v1666
    %v1942 = vunpack.c.h.b16 %v1666
    %v1943 = vunpack.c.l.b16 %v1667
    %v1944 = vunpack.c.h.b16 %v1667
    %v1945 = vunpack.c.l.b16 %v1668
    %v1946 = vunpack.c.h.b16 %v1668
    %v1947 = vunpack.c.l.b16 %v1669
    %v1948 = vunpack.c.h.b16 %v1669
    %v1949 = vunpack.c.l.b16 %v1670
    %v1950 = vunpack.c.h.b16 %v1670
    %v1951 = vunpack.c.l.b16 %v1671
    %v1952 = vunpack.c.h.b16 %v1671
    %v1953 = vunpack.c.l.b16 %v1672
    %v1954 = vunpack.c.h.b16 %v1672
    %v1955 = vunpack.c.l.b16 %v1673
    %v1956 = vunpack.c.h.b16 %v1673
    %v1957 = vunpack.c.l.b16 %v1674
    %v1958 = vunpack.c.h.b16 %v1674
    %v1959 = vunpack.c.l.b16 %v1675
    %v1960 = vunpack.c.h.b16 %v1675
    %v1961 = vunpack.c.l.b16 %v1676
    %v1962 = vunpack.c.h.b16 %v1676
    %v1963 = vunpack.c.l.b16 %v1677
    %v1964 = vunpack.c.h.b16 %v1677
    %v1965 = vunpack.c.l.b16 %v1678
    %v1966 = vunpack.c.h.b16 %v1678
    %v1967 = vunpack.c.l.b16 %v1679
    %v1968 = vunpack.c.h.b16 %v1679
    %v1969 = vunpack.c.l.b16 %v1680
    %v1970 = vunpack.c.h.b16 %v1680
    %v1971 = vunpack.c.l.b16 %v1681
    %v1972 = vunpack.c.h.b16 %v1681
    %v1973 = vunpack.c.l.b16 %v1682
    %v1974 = vunpack.c.h.b16 %v1682
    %v1975 = vunpack.c.l.b16 %v1683
    %v1976 = vunpack.c.h.b16 %v1683
    %v1977 = vunpack.c.l.b16 %v1684
    %v1978 = vunpack.c.h.b16 %v1684
    %v1979 = vunpack.c.l.b16 %v1685
    %v1980 = vunpack.c.h.b16 %v1685
    %v1981 = vunpack.c.l.b16 %v1686
    %v1982 = vunpack.c.h.b16 %v1686
    %v1983 = vunpack.c.l.b16 %v1687
    %v1984 = vunpack.c.h.b16 %v1687
    %v1985 = vunpack.c.l.b16 %v1688
    %v1986 = vunpack.c.h.b16 %v1688
    %v1987 = vunpack.c.l.b16 %v1689
    %v1988 = vunpack.c.h.b16 %v1689
    %v1989 = vunpack.c.l.b16 %v1690
    %v1990 = vunpack.c.h.b16 %v1690
    %v1991 = vunpack.c.l.b16 %v1691
    %v1992 = vunpack.c.h.b16 %v1691
    %v1993 = vunpack.c.l.b16 %v1692
    %v1994 = vunpack.c.h.b16 %v1692
    %v1995 = vunpack.c.l.b16 %v1693
    %v1996 = vunpack.c.h.b16 %v1693
    %v1997 = vunpack.c.l.b16 %v1694
    %v1998 = vunpack.c.h.b16 %v1694
    %v1999 = vunpack.c.l.b16 %v1695
    %v2000 = vunpack.c.h.b16 %v1695
    %v2001 = vunpack.c.l.b16 %v1696
    %v2002 = vunpack.c.h.b16 %v1696
    %v2003 = vunpack.c.l.b16 %v1697
    %v2004 = vunpack.c.h.b16 %v1697
    %v2005 = vunpack.c.l.b16 %v1698
    %v2006 = vunpack.c.h.b16 %v1698
    %v2007 = vunpack.c.l.b16 %v1699
    %v2008 = vunpack.c.h.b16 %v1699
    %v2009 = vunpack.c.l.b16 %v1700
    %v2010 = vunpack.c.h.b16 %v1700
    %v2011 = vunpack.c.l.b16 %v1701
    %v2012 = vunpack.c.h.b16 %v1701
    %v2013 = vunpack.c.l.b16 %v1702
    %v2014 = vunpack.c.h.b16 %v1702
    %v2015 = vunpack.c.l.b16 %v1703
    %v2016 = vunpack.c.h.b16 %v1703
    %v2017 = vunpack.c.l.b16 %v1704
    %v2018 = vunpack.c.h.b16 %v1704
    %v2019 = vunpack.c.l.b16 %v1705
    %v2020 = vunpack.c.h.b16 %v1705
    %v2021 = vunpack.c.l.b16 %v1706
    %v2022 = vunpack.c.h.b16 %v1706
    %v2023 = vunpack.c.l.b16 %v1707
    %v2024 = vunpack.c.h.b16 %v1707
    %v2025 = vunpack.c.l.b16 %v1708
    %v2026 = vunpack.c.h.b16 %v1708
    %v2027 = vunpack.c.l.b16 %v1709
    %v2028 = vunpack.c.h.b16 %v1709
    %v2029 = vunpack.c.l.b16 %v1710
    %v2030 = vunpack.c.h.b16 %v1710
    %v2031 = vunpack.c.l.b16 %v1711
    %v2032 = vunpack.c.h.b16 %v1711
    %v2033 = vunpack.c.l.b16 %v1712
    %v2034 = vunpack.c.h.b16 %v1712
    %v2035 = vunpack.c.l.b16 %v1713
    %v2036 = vunpack.c.h.b16 %v1713
    %v2037 = vunpack.c.l.b16 %v1714
    %v2038 = vunpack.c.h.b16 %v1714
    %v2039 = vunpack.c.l.b16 %v1715
    %v2040 = vunpack.c.h.b16 %v1715
    %v2041 = vunpack.c.l.b16 %v1716
    %v2042 = vunpack.c.h.b16 %v1716
    %v2043 = vunpack.c.l.b16 %v1717
    %v2044 = vunpack.c.h.b16 %v1717
    %v2045 = vunpack.c.l.b16 %v1718
    %v2046 = vunpack.c.h.b16 %v1718
    %v2047 = vunpack.c.l.b16 %v1719
    %v2048 = vunpack.c.h.b16 %v1719
    %v2049 = vunpack.c.l.b16 %v1720
    %v2050 = vunpack.c.h.b16 %v1720
    %v2051 = vunpack.c.l.b16 %v1721
    %v2052 = vunpack.c.h.b16 %v1721
    %v2053 = vunpack.c.l.b16 %v1722
    %v2054 = vunpack.c.h.b16 %v1722
    %v2055 = vunpack.c.l.b16 %v1723
    %v2056 = vunpack.c.h.b16 %v1723
    %v2057 = vunpack.c.l.b16 %v1724
    %v2058 = vunpack.c.h.b16 %v1724
    %v2059 = vunpack.c.l.b16 %v1725
    %v2060 = vunpack.c.h.b16 %v1725
    %v2061 = vunpack.c.l.b16 %v1726
    %v2062 = vunpack.c.h.b16 %v1726
    %v2063 = vunpack.c.l.b16 %v1727
    %v2064 = vunpack.c.h.b16 %v1727
    %v2065 = vunpack.c.l.b16 %v1728
    %v2066 = vunpack.c.h.b16 %v1728
    %v2067 = vunpack.c.l.b16 %v1729
    %v2068 = vunpack.c.h.b16 %v1729
    %v2069 = vunpack.c.l.b16 %v1730
    %v2070 = vunpack.c.h.b16 %v1730
    %v2071 = vunpack.c.l.b16 %v1731
    %v2072 = vunpack.c.h.b16 %v1731
    %v2073 = vunpack.c.l.b16 %v1732
    %v2074 = vunpack.c.h.b16 %v1732
    %v2075 = vunpack.c.l.b16 %v1733
    %v2076 = vunpack.c.h.b16 %v1733
    %v2077 = vunpack.c.l.b16 %v1734
    %v2078 = vunpack.c.h.b16 %v1734
    %v2079 = vunpack.c.l.b16 %v1735
    %v2080 = vunpack.c.h.b16 %v1735
    %v2081 = vunpack.c.l.b16 %v1736
    %v2082 = vunpack.c.h.b16 %v1736
    %v2083 = vunpack.c.l.b16 %v1737
    %v2084 = vunpack.c.h.b16 %v1737
    %v2085 = vunpack.c.l.b16 %v1738
    %v2086 = vunpack.c.h.b16 %v1738
    %v2087 = vunpack.c.l.b16 %v1739
    %v2088 = vunpack.c.h.b16 %v1739
    %v2089 = vunpack.c.l.b16 %v1740
    %v2090 = vunpack.c.h.b16 %v1740
    %v2091 = vunpack.c.l.b16 %v1741
    %v2092 = vunpack.c.h.b16 %v1741
    %v2093 = vunpack.c.l.b16 %v1742
    %v2094 = vunpack.c.h.b16 %v1742
    %v2095 = vunpack.c.l.b16 %v1743
    %v2096 = vunpack.c.h.b16 %v1743
    %v2097 = vunpack.c.l.b16 %v1744
    %v2098 = vunpack.c.h.b16 %v1744
    %v2099 = vunpack.c.l.b16 %v1745
    %v2100 = vunpack.c.h.b16 %v1745
    %v2101 = vunpack.c.l.b16 %v1746
    %v2102 = vunpack.c.h.b16 %v1746
    %v2103 = vunpack.c.l.b16 %v1747
    %v2104 = vunpack.c.h.b16 %v1747
    %v2105 = vunpack.c.l.b16 %v1748
    %v2106 = vunpack.c.h.b16 %v1748
    %v2107 = vunpack.c.l.b16 %v1749
    %v2108 = vunpack.c.h.b16 %v1749
    %v2109 = vunpack.c.l.b16 %v1750
    %v2110 = vunpack.c.h.b16 %v1750
    %v2111 = vunpack.c.l.b16 %v1751
    %v2112 = vunpack.c.h.b16 %v1751
    %v2113 = vunpack.c.l.b16 %v1752
    %v2114 = vunpack.c.h.b16 %v1752
    %v2115 = vunpack.c.l.b16 %v1753
    %v2116 = vunpack.c.h.b16 %v1753
    %v2117 = vunpack.c.l.b16 %v1754
    %v2118 = vunpack.c.h.b16 %v1754
    %v2119 = vunpack.c.l.b16 %v1755
    %v2120 = vunpack.c.h.b16 %v1755
    %v2121 = vunpack.c.l.b16 %v1756
    %v2122 = vunpack.c.h.b16 %v1756
    %v2123 = vunpack.c.l.b16 %v1757
    %v2124 = vunpack.c.h.b16 %v1757
    %v2125 = vunpack.c.l.b16 %v1758
    %v2126 = vunpack.c.h.b16 %v1758
    %v2127 = vunpack.c.l.b16 %v1759
    %v2128 = vunpack.c.h.b16 %v1759
    %v2129 = vunpack.c.l.b16 %v1760
    %v2130 = vunpack.c.h.b16 %v1760
    %v2131 = vunpack.c.l.b16 %v1761
    %v2132 = vunpack.c.h.b16 %v1761
    %v2133 = vunpack.c.l.b16 %v1762
    %v2134 = vunpack.c.h.b16 %v1762
    %v2135 = vunpack.c.l.b16 %v1763
    %v2136 = vunpack.c.h.b16 %v1763
    %v2137 = vunpack.c.l.b16 %v1764
    %v2138 = vunpack.c.h.b16 %v1764
    %v2139 = vunpack.c.l.b16 %v1765
    %v2140 = vunpack.c.h.b16 %v1765
    %v2141 = vunpack.c.l.b16 %v1766
    %v2142 = vunpack.c.h.b16 %v1766
    %v2143 = vunpack.c.l.b16 %v1767
    %v2144 = vunpack.c.h.b16 %v1767
    %v2145 = vunpack.c.l.b16 %v1768
    %v2146 = vunpack.c.h.b16 %v1768
    %v2147 = vunpack.c.l.b16 %v1769
    %v2148 = vunpack.c.h.b16 %v1769
    %v2149 = vunpack.c.l.b16 %v1770
    %v2150 = vunpack.c.h.b16 %v1770
    %v2151 = vunpack.c.l.b16 %v1771
    %v2152 = vunpack.c.h.b16 %v1771
    %v2153 = vunpack.c.l.b16 %v1772
    %v2154 = vunpack.c.h.b16 %v1772
    %v2155 = vunpack.c.l.b16 %v1773
    %v2156 = vunpack.c.h.b16 %v1773
    %v2157 = vunpack.c.l.b16 %v1774
    %v2158 = vunpack.c.h.b16 %v1774
    %v2159 = vpack.c.b16 %v1907, %v1903
    %v2160 = vpack.c.b16 %v1908, %v1904
    %v2161 = vpack.c.b16 %v1909, %v1905
    %v2162 = vpack.c.b16 %v1910, %v1906
    %v2163 = vpack.c.b16 %v1915, %v1911
    %v2164 = vpack.c.b16 %v1916, %v1912
    %v2165 = vpack.c.b16 %v1917, %v1913
    %v2166 = vpack.c.b16 %v1918, %v1914
    %v2167 = vpack.c.b16 %v1923, %v1919
    %v2168 = vpack.c.b16 %v1924, %v1920
    %v2169 = vpack.c.b16 %v1925, %v1921
    %v2170 = vpack.c.b16 %v1926, %v1922
    %v2171 = vpack.c.b16 %v1931, %v1927
    %v2172 = vpack.c.b16 %v1932, %v1928
    %v2173 = vpack.c.b16 %v1933, %v1929
    %v2174 = vpack.c.b16 %v1934, %v1930
    %v2175 = vpack.c.b16 %v1939, %v1935
    %v2176 = vpack.c.b16 %v1940, %v1936
    %v2177 = vpack.c.b16 %v1941, %v1937
    %v2178 = vpack.c.b16 %v1942, %v1938
    %v2179 = vpack.c.b16 %v1947, %v1943
    %v2180 = vpack.c.b16 %v1948, %v1944
    %v2181 = vpack.c.b16 %v1949, %v1945
    %v2182 = vpack.c.b16 %v1950, %v1946
    %v2183 = vpack.c.b16 %v1955, %v1951
    %v2184 = vpack.c.b16 %v1956, %v1952
    %v2185 = vpack.c.b16 %v1957, %v1953
    %v2186 = vpack.c.b16 %v1958, %v1954
    %v2187 = vpack.c.b16 %v1963, %v1959
    %v2188 = vpack.c.b16 %v1964, %v1960
    %v2189 = vpack.c.b16 %v1965, %v1961
    %v2190 = vpack.c.b16 %v1966, %v1962
    %v2191 = vpack.c.b16 %v1971, %v1967
    %v2192 = vpack.c.b16 %v1972, %v1968
    %v2193 = vpack.c.b16 %v1973, %v1969
    %v2194 = vpack.c.b16 %v1974, %v1970
    %v2195 = vpack.c.b16 %v1979, %v1975
    %v2196 = vpack.c.b16 %v1980, %v1976
    %v2197 = vpack.c.b16 %v1981, %v1977
    %v2198 = vpack.c.b16 %v1982, %v1978
    %v2199 = vpack.c.b16 %v1987, %v1983
    %v2200 = vpack.c.b16 %v1988, %v1984
    %v2201 = vpack.c.b16 %v1989, %v1985
    %v2202 = vpack.c.b16 %v1990, %v1986
    %v2203 = vpack.c.b16 %v1995, %v1991
    %v2204 = vpack.c.b16 %v1996, %v1992
    %v2205 = vpack.c.b16 %v1997, %v1993
    %v2206 = vpack.c.b16 %v1998, %v1994
    %v2207 = vpack.c.b16 %v2003, %v1999
    %v2208 = vpack.c.b16 %v2004, %v2000
    %v2209 = vpack.c.b16 %v2005, %v2001
    %v2210 = vpack.c.b16 %v2006, %v2002
    %v2211 = vpack.c.b16 %v2011, %v2007
    %v2212 = vpack.c.b16 %v2012, %v2008
    %v2213 = vpack.c.b16 %v2013, %v2009
    %v2214 = vpack.c.b16 %v2014, %v2010
    %v2215 = vpack.c.b16 %v2019, %v2015
    %v2216 = vpack.c.b16 %v2020, %v2016
    %v2217 = vpack.c.b16 %v2021, %v2017
    %v2218 = vpack.c.b16 %v2022, %v2018
    %v2219 = vpack.c.b16 %v2027, %v2023
    %v2220 = vpack.c.b16 %v2028, %v2024
    %v2221 = vpack.c.b16 %v2029, %v2025
    %v2222 = vpack.c.b16 %v2030, %v2026
    %v2223 = vpack.c.b16 %v2035, %v2031
    %v2224 = vpack.c.b16 %v2036, %v2032
    %v2225 = vpack.c.b16 %v2037, %v2033
    %v2226 = vpack.c.b16 %v2038, %v2034
    %v2227 = vpack.c.b16 %v2043, %v2039
    %v2228 = vpack.c.b16 %v2044, %v2040
    %v2229 = vpack.c.b16 %v2045, %v2041
    %v2230 = vpack.c.b16 %v2046, %v2042
    %v2231 = vpack.c.b16 %v2051, %v2047
    %v2232 = vpack.c.b16 %v2052, %v2048
    %v2233 = vpack.c.b16 %v2053, %v2049
    %v2234 = vpack.c.b16 %v2054, %v2050
    %v2235 = vpack.c.b16 %v2059, %v2055
    %v2236 = vpack.c.b16 %v2060, %v2056
    %v2237 = vpack.c.b16 %v2061, %v2057
    %v2238 = vpack.c.b16 %v2062, %v2058
    %v2239 = vpack.c.b16 %v2067, %v2063
    %v2240 = vpack.c.b16 %v2068, %v2064
    %v2241 = vpack.c.b16 %v2069, %v2065
    %v2242 = vpack.c.b16 %v2070, %v2066
    %v2243 = vpack.c.b16 %v2075, %v2071
    %v2244 = vpack.c.b16 %v2076, %v2072
    %v2245 = vpack.c.b16 %v2077, %v2073
    %v2246 = vpack.c.b16 %v2078, %v2074
    %v2247 = vpack.c.b16 %v2083, %v2079
    %v2248 = vpack.c.b16 %v2084, %v2080
    %v2249 = vpack.c.b16 %v2085, %v2081
    %v2250 = vpack.c.b16 %v2086, %v2082
    %v2251 = vpack.c.b16 %v2091, %v2087
    %v2252 = vpack.c.b16 %v2092, %v2088
    %v2253 = vpack.c.b16 %v2093, %v2089
    %v2254 = vpack.c.b16 %v2094, %v2090
    %v2255 = vpack.c.b16 %v2099, %v2095
    %v2256 = vpack.c.b16 %v2100, %v2096
    %v2257 = vpack.c.b16 %v2101, %v2097
    %v2258 = vpack.c.b16 %v2102, %v2098
    %v2259 = vpack.c.b16 %v2107, %v2103
    %v2260 = vpack.c.b16 %v2108, %v2104
    %v2261 = vpack.c.b16 %v2109, %v2105
    %v2262 = vpack.c.b16 %v2110, %v2106
    %v2263 = vpack.c.b16 %v2115, %v2111
    %v2264 = vpack.c.b16 %v2116, %v2112
    %v2265 = vpack.c.b16 %v2117, %v2113
    %v2266 = vpack.c.b16 %v2118, %v2114
    %v2267 = vpack.c.b16 %v2123, %v2119
    %v2268 = vpack.c.b16 %v2124, %v2120
    %v2269 = vpack.c.b16 %v2125, %v2121
    %v2270 = vpack.c.b16 %v2126, %v2122
    %v2271 = vpack.c.b16 %v2131, %v2127
    %v2272 = vpack.c.b16 %v2132, %v2128
    %v2273 = vpack.c.b16 %v2133, %v2129
    %v2274 = vpack.c.b16 %v2134, %v2130
    %v2275 = vpack.c.b16 %v2139, %v2135
    %v2276 = vpack.c.b16 %v2140, %v2136
    %v2277 = vpack.c.b16 %v2141, %v2137
    %v2278 = vpack.c.b16 %v2142, %v2138
    %v2279 = vpack.c.b16 %v2147, %v2143
    %v2280 = vpack.c.b16 %v2148, %v2144
    %v2281 = vpack.c.b16 %v2149, %v2145
    %v2282 = vpack.c.b16 %v2150, %v2146
    %v2283 = vpack.c.b16 %v2155, %v2151
    %v2284 = vpack.c.b16 %v2156, %v2152
    %v2285 = vpack.c.b16 %v2157, %v2153
    %v2286 = vpack.c.b16 %v2158, %v2154
    %2415 = vmatprep.subr.bf16.mxu0 %v2160
    %2416 = vmatpush1.bf16.msra.mxu0 %v2159
    %2417 = vmatprep.subr.bf16.mxu0 %v2164
    %2418 = vmatpush1.bf16.msra.mxu0 %v2163
    %2419 = vmatprep.subr.bf16.mxu0 %v2168
    %2420 = vmatpush1.bf16.msra.mxu0 %v2167
    %2421 = vmatprep.subr.bf16.mxu0 %v2172
    %2422 = vmatpush1.bf16.msra.mxu0 %v2171
    %2423 = vmatprep.subr.bf16.mxu0 %v2176
    %2424 = vmatpush1.bf16.msra.mxu0 %v2175
    %2425 = vmatprep.subr.bf16.mxu0 %v2180
    %2426 = vmatpush1.bf16.msra.mxu0 %v2179
    %2427 = vmatprep.subr.bf16.mxu0 %v2184
    %2428 = vmatpush1.bf16.msra.mxu0 %v2183
    %2429 = vmatprep.subr.bf16.mxu0 %v2188
    %2430 = vmatpush1.bf16.msra.mxu0 %v2187
    %2431 = vmatprep.subr.bf16.mxu0 %v2192
    %2432 = vmatpush1.bf16.msra.mxu0 %v2191
    %2433 = vmatprep.subr.bf16.mxu0 %v2196
    %2434 = vmatpush1.bf16.msra.mxu0 %v2195
    %2435 = vmatprep.subr.bf16.mxu0 %v2200
    %2436 = vmatpush1.bf16.msra.mxu0 %v2199
    %2437 = vmatprep.subr.bf16.mxu0 %v2204
    %2438 = vmatpush1.bf16.msra.mxu0 %v2203
    %2439 = vmatprep.subr.bf16.mxu0 %v2208
    %2440 = vmatpush1.bf16.msra.mxu0 %v2207
    %2441 = vmatprep.subr.bf16.mxu0 %v2212
    %2442 = vmatpush1.bf16.msra.mxu0 %v2211
    %2443 = vmatprep.subr.bf16.mxu0 %v2216
    %2444 = vmatpush1.bf16.msra.mxu0 %v2215
    %2445 = vmatprep.subr.bf16.mxu0 %v2220
    %2446 = vmatpush1.bf16.msra.mxu0 %v2219
    %2447 = vmatprep.mubr.bf16.mxu0 %v1631
    %2448 = vmatmul.mubr.bf16.gmra.mrb[0].mxu0 %v1630
    %v2449 = vpop.f32.mrb[0].mxu0
    %v2450 = vadd.f32 0.0, %v2449
    %v2451 = vpop.f32.mrb[0].mxu0
    %v2452 = vadd.f32 0.0, %v2451
    %v2453 = vpop.f32.mrb[0].mxu0
    %v2454 = vadd.f32 0.0, %v2453
    %v2455 = vpop.f32.mrb[0].mxu0
    %v2456 = vadd.f32 0.0, %v2455
    %2457 = vmatprep.mubr.bf16.mxu0 %v1635
    %2458 = vmatmul.mubr.bf16.gmra.mrb[0].mxu0 %v1634
    %v2459 = vpop.f32.mrb[0].mxu0
    %v2460 = vadd.f32 0.0, %v2459
    %v2461 = vpop.f32.mrb[0].mxu0
    %v2462 = vadd.f32 0.0, %v2461
    %v2463 = vpop.f32.mrb[0].mxu0
    %v2464 = vadd.f32 0.0, %v2463
    %v2465 = vpop.f32.mrb[0].mxu0
    %v2466 = vadd.f32 0.0, %v2465
    %2467 = vmatprep.mubr.bf16.mxu0 %v1639
    %2468 = vmatmul.mubr.bf16.gmra.mrb[0].mxu0 %v1638
    %v2469 = vpop.f32.mrb[0].mxu0
    %v2470 = vadd.f32 0.0, %v2469
    %v2471 = vpop.f32.mrb[0].mxu0
    %v2472 = vadd.f32 0.0, %v2471
    %v2473 = vpop.f32.mrb[0].mxu0
    %v2474 = vadd.f32 0.0, %v2473
    %v2475 = vpop.f32.mrb[0].mxu0
    %v2476 = vadd.f32 0.0, %v2475
    %2477 = vmatprep.mubr.bf16.mxu0 %v1643
    %2478 = vmatmul.mubr.bf16.gmra.mrb[0].mxu0 %v1642
    %v2479 = vpop.f32.mrb[0].mxu0
    %v2480 = vadd.f32 0.0, %v2479
    %v2481 = vpop.f32.mrb[0].mxu0
    %v2482 = vadd.f32 0.0, %v2481
    %v2483 = vpop.f32.mrb[0].mxu0
    %v2484 = vadd.f32 0.0, %v2483
    %v2485 = vpop.f32.mrb[0].mxu0
    %v2486 = vadd.f32 0.0, %v2485
    %2487 = vdwg.mxu0
    %2488 = vmatprep.subr.bf16.mxu0 %v2224
    %2489 = vmatpush1.bf16.msra.mxu0 %v2223
    %2490 = vmatprep.subr.bf16.mxu0 %v2228
    %2491 = vmatpush1.bf16.msra.mxu0 %v2227
    %2492 = vmatprep.subr.bf16.mxu0 %v2232
    %2493 = vmatpush1.bf16.msra.mxu0 %v2231
    %2494 = vmatprep.subr.bf16.mxu0 %v2236
    %2495 = vmatpush1.bf16.msra.mxu0 %v2235
    %2496 = vmatprep.subr.bf16.mxu0 %v2240
    %2497 = vmatpush1.bf16.msra.mxu0 %v2239
    %2498 = vmatprep.subr.bf16.mxu0 %v2244
    %2499 = vmatpush1.bf16.msra.mxu0 %v2243
    %2500 = vmatprep.subr.bf16.mxu0 %v2248
    %2501 = vmatpush1.bf16.msra.mxu0 %v2247
    %2502 = vmatprep.subr.bf16.mxu0 %v2252
    %2503 = vmatpush1.bf16.msra.mxu0 %v2251
    %2504 = vmatprep.subr.bf16.mxu0 %v2256
    %2505 = vmatpush1.bf16.msra.mxu0 %v2255
    %2506 = vmatprep.subr.bf16.mxu0 %v2260
    %2507 = vmatpush1.bf16.msra.mxu0 %v2259
    %2508 = vmatprep.subr.bf16.mxu0 %v2264
    %2509 = vmatpush1.bf16.msra.mxu0 %v2263
    %2510 = vmatprep.subr.bf16.mxu0 %v2268
    %2511 = vmatpush1.bf16.msra.mxu0 %v2267
    %2512 = vmatprep.subr.bf16.mxu0 %v2272
    %2513 = vmatpush1.bf16.msra.mxu0 %v2271
    %2514 = vmatprep.subr.bf16.mxu0 %v2276
    %2515 = vmatpush1.bf16.msra.mxu0 %v2275
    %2516 = vmatprep.subr.bf16.mxu0 %v2280
    %2517 = vmatpush1.bf16.msra.mxu0 %v2279
    %2518 = vmatprep.subr.bf16.mxu0 %v2284
    %2519 = vmatpush1.bf16.msra.mxu0 %v2283
    %2520 = vmatprep.mubr.bf16.mxu0 %v1633
    %2521 = vmatmul.mubr.bf16.gmra.mrb[0].mxu0 %v1632
    %v2522 = vpop.f32.mrb[0].mxu0
    %v2523 = vadd.f32 %v2450, %v2522
    %v2524 = vpop.f32.mrb[0].mxu0
    %v2525 = vadd.f32 %v2452, %v2524
    %v2526 = vpop.f32.mrb[0].mxu0
    %v2527 = vadd.f32 %v2454, %v2526
    %v2528 = vpop.f32.mrb[0].mxu0
    %v2529 = vadd.f32 %v2456, %v2528
    %2530 = vmatprep.mubr.bf16.mxu0 %v1637
    %2531 = vmatmul.mubr.bf16.gmra.mrb[0].mxu0 %v1636
    %v2532 = vpop.f32.mrb[0].mxu0
    %v2533 = vadd.f32 %v2460, %v2532
    %v2534 = vpop.f32.mrb[0].mxu0
    %v2535 = vadd.f32 %v2462, %v2534
    %v2536 = vpop.f32.mrb[0].mxu0
    %v2537 = vadd.f32 %v2464, %v2536
    %v2538 = vpop.f32.mrb[0].mxu0
    %v2539 = vadd.f32 %v2466, %v2538
    %2540 = vmatprep.mubr.bf16.mxu0 %v1641
    %2541 = vmatmul.mubr.bf16.gmra.mrb[0].mxu0 %v1640
    %v2542 = vpop.f32.mrb[0].mxu0
    %v2543 = vadd.f32 %v2470, %v2542
    %v2544 = vpop.f32.mrb[0].mxu0
    %v2545 = vadd.f32 %v2472, %v2544
    %v2546 = vpop.f32.mrb[0].mxu0
    %v2547 = vadd.f32 %v2474, %v2546
    %v2548 = vpop.f32.mrb[0].mxu0
    %v2549 = vadd.f32 %v2476, %v2548
    %2550 = vmatprep.mubr.bf16.mxu0 %v1645
    %2551 = vmatmul.mubr.bf16.gmra.mrb[0].mxu0 %v1644
    %v2552 = vpop.f32.mrb[0].mxu0
    %v2553 = vadd.f32 %v2480, %v2552
    %v2554 = vpop.f32.mrb[0].mxu0
    %v2555 = vadd.f32 %v2482, %v2554
    %v2556 = vpop.f32.mrb[0].mxu0
    %v2557 = vadd.f32 %v2484, %v2556
    %v2558 = vpop.f32.mrb[0].mxu0
    %v2559 = vadd.f32 %v2486, %v2558
    %2560 = vdwg.mxu0
    %2561 = vmatprep.subr.bf16.mxu0 %v2162
    %2562 = vmatpush1.bf16.msra.mxu0 %v2161
    %2563 = vmatprep.subr.bf16.mxu0 %v2166
    %2564 = vmatpush1.bf16.msra.mxu0 %v2165
    %2565 = vmatprep.subr.bf16.mxu0 %v2170
    %2566 = vmatpush1.bf16.msra.mxu0 %v2169
    %2567 = vmatprep.subr.bf16.mxu0 %v2174
    %2568 = vmatpush1.bf16.msra.mxu0 %v2173
    %2569 = vmatprep.subr.bf16.mxu0 %v2178
    %2570 = vmatpush1.bf16.msra.mxu0 %v2177
    %2571 = vmatprep.subr.bf16.mxu0 %v2182
    %2572 = vmatpush1.bf16.msra.mxu0 %v2181
    %2573 = vmatprep.subr.bf16.mxu0 %v2186
    %2574 = vmatpush1.bf16.msra.mxu0 %v2185
    %2575 = vmatprep.subr.bf16.mxu0 %v2190
    %2576 = vmatpush1.bf16.msra.mxu0 %v2189
    %2577 = vmatprep.subr.bf16.mxu0 %v2194
    %2578 = vmatpush1.bf16.msra.mxu0 %v2193
    %2579 = vmatprep.subr.bf16.mxu0 %v2198
    %2580 = vmatpush1.bf16.msra.mxu0 %v2197
    %2581 = vmatprep.subr.bf16.mxu0 %v2202
    %2582 = vmatpush1.bf16.msra.mxu0 %v2201
    %2583 = vmatprep.subr.bf16.mxu0 %v2206
    %2584 = vmatpush1.bf16.msra.mxu0 %v2205
    %2585 = vmatprep.subr.bf16.mxu0 %v2210
    %2586 = vmatpush1.bf16.msra.mxu0 %v2209
    %2587 = vmatprep.subr.bf16.mxu0 %v2214
    %2588 = vmatpush1.bf16.msra.mxu0 %v2213
    %2589 = vmatprep.subr.bf16.mxu0 %v2218
    %2590 = vmatpush1.bf16.msra.mxu0 %v2217
    %2591 = vmatprep.subr.bf16.mxu0 %v2222
    %2592 = vmatpush1.bf16.msra.mxu0 %v2221
    %2593 = vmatprep.mubr.bf16.mxu0 %v1631
    %2594 = vmatmul.mubr.bf16.gmra.mrb[0].mxu0 %v1630
    %v2595 = vpop.f32.mrb[0].mxu0
    %v2596 = vadd.f32 0.0, %v2595
    %v2597 = vpop.f32.mrb[0].mxu0
    %v2598 = vadd.f32 0.0, %v2597
    %v2599 = vpop.f32.mrb[0].mxu0
    %v2600 = vadd.f32 0.0, %v2599
    %v2601 = vpop.f32.mrb[0].mxu0
    %v2602 = vadd.f32 0.0, %v2601
    %2603 = vmatprep.mubr.bf16.mxu0 %v1635
    %2604 = vmatmul.mubr.bf16.gmra.mrb[0].mxu0 %v1634
    %v2605 = vpop.f32.mrb[0].mxu0
    %v2606 = vadd.f32 0.0, %v2605
    %v2607 = vpop.f32.mrb[0].mxu0
    %v2608 = vadd.f32 0.0, %v2607
    %v2609 = vpop.f32.mrb[0].mxu0
    %v2610 = vadd.f32 0.0, %v2609
    %v2611 = vpop.f32.mrb[0].mxu0
    %v2612 = vadd.f32 0.0, %v2611
    %2613 = vmatprep.mubr.bf16.mxu0 %v1639
    %2614 = vmatmul.mubr.bf16.gmra.mrb[0].mxu0 %v1638
    %v2615 = vpop.f32.mrb[0].mxu0
    %v2616 = vadd.f32 0.0, %v2615
    %v2617 = vpop.f32.mrb[0].mxu0
    %v2618 = vadd.f32 0.0, %v2617
    %v2619 = vpop.f32.mrb[0].mxu0
    %v2620 = vadd.f32 0.0, %v2619
    %v2621 = vpop.f32.mrb[0].mxu0
    %v2622 = vadd.f32 0.0, %v2621
    %2623 = vmatprep.mubr.bf16.mxu0 %v1643
    %2624 = vmatmul.mubr.bf16.gmra.mrb[0].mxu0 %v1642
    %v2625 = vpop.f32.mrb[0].mxu0
    %v2626 = vadd.f32 0.0, %v2625
    %v2627 = vpop.f32.mrb[0].mxu0
    %v2628 = vadd.f32 0.0, %v2627
    %v2629 = vpop.f32.mrb[0].mxu0
    %v2630 = vadd.f32 0.0, %v2629
    %v2631 = vpop.f32.mrb[0].mxu0
    %v2632 = vadd.f32 0.0, %v2631
    %2633 = vdwg.mxu0
    %2634 = vmatprep.subr.bf16.mxu0 %v2226
    %2635 = vmatpush1.bf16.msra.mxu0 %v2225
    %2636 = vmatprep.subr.bf16.mxu0 %v2230
    %2637 = vmatpush1.bf16.msra.mxu0 %v2229
    %2638 = vmatprep.subr.bf16.mxu0 %v2234
    %2639 = vmatpush1.bf16.msra.mxu0 %v2233
    %2640 = vmatprep.subr.bf16.mxu0 %v2238
    %2641 = vmatpush1.bf16.msra.mxu0 %v2237
    %2642 = vmatprep.subr.bf16.mxu0 %v2242
    %2643 = vmatpush1.bf16.msra.mxu0 %v2241
    %2644 = vmatprep.subr.bf16.mxu0 %v2246
    %2645 = vmatpush1.bf16.msra.mxu0 %v2245
    %2646 = vmatprep.subr.bf16.mxu0 %v2250
    %2647 = vmatpush1.bf16.msra.mxu0 %v2249
    %2648 = vmatprep.subr.bf16.mxu0 %v2254
    %2649 = vmatpush1.bf16.msra.mxu0 %v2253
    %2650 = vmatprep.subr.bf16.mxu0 %v2258
    %2651 = vmatpush1.bf16.msra.mxu0 %v2257
    %2652 = vmatprep.subr.bf16.mxu0 %v2262
    %2653 = vmatpush1.bf16.msra.mxu0 %v2261
    %2654 = vmatprep.subr.bf16.mxu0 %v2266
    %2655 = vmatpush1.bf16.msra.mxu0 %v2265
    %2656 = vmatprep.subr.bf16.mxu0 %v2270
    %2657 = vmatpush1.bf16.msra.mxu0 %v2269
    %2658 = vmatprep.subr.bf16.mxu0 %v2274
    %2659 = vmatpush1.bf16.msra.mxu0 %v2273
    %2660 = vmatprep.subr.bf16.mxu0 %v2278
    %2661 = vmatpush1.bf16.msra.mxu0 %v2277
    %2662 = vmatprep.subr.bf16.mxu0 %v2282
    %2663 = vmatpush1.bf16.msra.mxu0 %v2281
    %2664 = vmatprep.subr.bf16.mxu0 %v2286
    %2665 = vmatpush1.bf16.msra.mxu0 %v2285
    %2666 = vmatprep.mubr.bf16.mxu0 %v1633
    %2667 = vmatmul.mubr.bf16.gmra.mrb[0].mxu0 %v1632
    %v2668 = vpop.f32.mrb[0].mxu0
    %v2669 = vadd.f32 %v2596, %v2668
    %v2670 = vpop.f32.mrb[0].mxu0
    %v2671 = vadd.f32 %v2598, %v2670
    %v2672 = vpop.f32.mrb[0].mxu0
    %v2673 = vadd.f32 %v2600, %v2672
    %v2674 = vpop.f32.mrb[0].mxu0
    %v2675 = vadd.f32 %v2602, %v2674
    %2676 = vmatprep.mubr.bf16.mxu0 %v1637
    %2677 = vmatmul.mubr.bf16.gmra.mrb[0].mxu0 %v1636
    %v2678 = vpop.f32.mrb[0].mxu0
    %v2679 = vadd.f32 %v2606, %v2678
    %v2680 = vpop.f32.mrb[0].mxu0
    %v2681 = vadd.f32 %v2608, %v2680
    %v2682 = vpop.f32.mrb[0].mxu0
    %v2683 = vadd.f32 %v2610, %v2682
    %v2684 = vpop.f32.mrb[0].mxu0
    %v2685 = vadd.f32 %v2612, %v2684
    %2686 = vmatprep.mubr.bf16.mxu0 %v1641
    %2687 = vmatmul.mubr.bf16.gmra.mrb[0].mxu0 %v1640
    %v2688 = vpop.f32.mrb[0].mxu0
    %v2689 = vadd.f32 %v2616, %v2688
    %v2690 = vpop.f32.mrb[0].mxu0
    %v2691 = vadd.f32 %v2618, %v2690
    %v2692 = vpop.f32.mrb[0].mxu0
    %v2693 = vadd.f32 %v2620, %v2692
    %v2694 = vpop.f32.mrb[0].mxu0
    %v2695 = vadd.f32 %v2622, %v2694
    %2696 = vmatprep.mubr.bf16.mxu0 %v1645
    %2697 = vmatmul.mubr.bf16.gmra.mrb[0].mxu0 %v1644
    %v2698 = vpop.f32.mrb[0].mxu0
    %v2699 = vadd.f32 %v2626, %v2698
    %v2700 = vpop.f32.mrb[0].mxu0
    %v2701 = vadd.f32 %v2628, %v2700
    %v2702 = vpop.f32.mrb[0].mxu0
    %v2703 = vadd.f32 %v2630, %v2702
    %v2704 = vpop.f32.mrb[0].mxu0
    %v2705 = vadd.f32 %v2632, %v2704
    %2706 = vdwg.mxu0
    %v2835 = vunpack.c.l.b16 %v1502
    %v2836 = vunpack.c.h.b16 %v1502
    %v2837 = vunpack.c.l.b16 %v1503
    %v2838 = vunpack.c.h.b16 %v1503
    %v2839 = vunpack.c.l.b16 %v1504
    %v2840 = vunpack.c.h.b16 %v1504
    %v2841 = vunpack.c.l.b16 %v1505
    %v2842 = vunpack.c.h.b16 %v1505
    %v2843 = vunpack.c.l.b16 %v1506
    %v2844 = vunpack.c.h.b16 %v1506
    %v2845 = vunpack.c.l.b16 %v1507
    %v2846 = vunpack.c.h.b16 %v1507
    %v2847 = vunpack.c.l.b16 %v1508
    %v2848 = vunpack.c.h.b16 %v1508
    %v2849 = vunpack.c.l.b16 %v1509
    %v2850 = vunpack.c.h.b16 %v1509
    %v2851 = vunpack.c.l.b16 %v1510
    %v2852 = vunpack.c.h.b16 %v1510
    %v2853 = vunpack.c.l.b16 %v1511
    %v2854 = vunpack.c.h.b16 %v1511
    %v2855 = vunpack.c.l.b16 %v1512
    %v2856 = vunpack.c.h.b16 %v1512
    %v2857 = vunpack.c.l.b16 %v1513
    %v2858 = vunpack.c.h.b16 %v1513
    %v2859 = vunpack.c.l.b16 %v1514
    %v2860 = vunpack.c.h.b16 %v1514
    %v2861 = vunpack.c.l.b16 %v1515
    %v2862 = vunpack.c.h.b16 %v1515
    %v2863 = vunpack.c.l.b16 %v1516
    %v2864 = vunpack.c.h.b16 %v1516
    %v2865 = vunpack.c.l.b16 %v1517
    %v2866 = vunpack.c.h.b16 %v1517
    %v2867 = vunpack.c.l.b16 %v1518
    %v2868 = vunpack.c.h.b16 %v1518
    %v2869 = vunpack.c.l.b16 %v1519
    %v2870 = vunpack.c.h.b16 %v1519
    %v2871 = vunpack.c.l.b16 %v1520
    %v2872 = vunpack.c.h.b16 %v1520
    %v2873 = vunpack.c.l.b16 %v1521
    %v2874 = vunpack.c.h.b16 %v1521
    %v2875 = vunpack.c.l.b16 %v1522
    %v2876 = vunpack.c.h.b16 %v1522
    %v2877 = vunpack.c.l.b16 %v1523
    %v2878 = vunpack.c.h.b16 %v1523
    %v2879 = vunpack.c.l.b16 %v1524
    %v2880 = vunpack.c.h.b16 %v1524
    %v2881 = vunpack.c.l.b16 %v1525
    %v2882 = vunpack.c.h.b16 %v1525
    %v2883 = vunpack.c.l.b16 %v1526
    %v2884 = vunpack.c.h.b16 %v1526
    %v2885 = vunpack.c.l.b16 %v1527
    %v2886 = vunpack.c.h.b16 %v1527
    %v2887 = vunpack.c.l.b16 %v1528
    %v2888 = vunpack.c.h.b16 %v1528
    %v2889 = vunpack.c.l.b16 %v1529
    %v2890 = vunpack.c.h.b16 %v1529
    %v2891 = vunpack.c.l.b16 %v1530
    %v2892 = vunpack.c.h.b16 %v1530
    %v2893 = vunpack.c.l.b16 %v1531
    %v2894 = vunpack.c.h.b16 %v1531
    %v2895 = vunpack.c.l.b16 %v1532
    %v2896 = vunpack.c.h.b16 %v1532
    %v2897 = vunpack.c.l.b16 %v1533
    %v2898 = vunpack.c.h.b16 %v1533
    %v2899 = vunpack.c.l.b16 %v1534
    %v2900 = vunpack.c.h.b16 %v1534
    %v2901 = vunpack.c.l.b16 %v1535
    %v2902 = vunpack.c.h.b16 %v1535
    %v2903 = vunpack.c.l.b16 %v1536
    %v2904 = vunpack.c.h.b16 %v1536
    %v2905 = vunpack.c.l.b16 %v1537
    %v2906 = vunpack.c.h.b16 %v1537
    %v2907 = vunpack.c.l.b16 %v1538
    %v2908 = vunpack.c.h.b16 %v1538
    %v2909 = vunpack.c.l.b16 %v1539
    %v2910 = vunpack.c.h.b16 %v1539
    %v2911 = vunpack.c.l.b16 %v1540
    %v2912 = vunpack.c.h.b16 %v1540
    %v2913 = vunpack.c.l.b16 %v1541
    %v2914 = vunpack.c.h.b16 %v1541
    %v2915 = vunpack.c.l.b16 %v1542
    %v2916 = vunpack.c.h.b16 %v1542
    %v2917 = vunpack.c.l.b16 %v1543
    %v2918 = vunpack.c.h.b16 %v1543
    %v2919 = vunpack.c.l.b16 %v1544
    %v2920 = vunpack.c.h.b16 %v1544
    %v2921 = vunpack.c.l.b16 %v1545
    %v2922 = vunpack.c.h.b16 %v1545
    %v2923 = vunpack.c.l.b16 %v1546
    %v2924 = vunpack.c.h.b16 %v1546
    %v2925 = vunpack.c.l.b16 %v1547
    %v2926 = vunpack.c.h.b16 %v1547
    %v2927 = vunpack.c.l.b16 %v1548
    %v2928 = vunpack.c.h.b16 %v1548
    %v2929 = vunpack.c.l.b16 %v1549
    %v2930 = vunpack.c.h.b16 %v1549
    %v2931 = vunpack.c.l.b16 %v1550
    %v2932 = vunpack.c.h.b16 %v1550
    %v2933 = vunpack.c.l.b16 %v1551
    %v2934 = vunpack.c.h.b16 %v1551
    %v2935 = vunpack.c.l.b16 %v1552
    %v2936 = vunpack.c.h.b16 %v1552
    %v2937 = vunpack.c.l.b16 %v1553
    %v2938 = vunpack.c.h.b16 %v1553
    %v2939 = vunpack.c.l.b16 %v1554
    %v2940 = vunpack.c.h.b16 %v1554
    %v2941 = vunpack.c.l.b16 %v1555
    %v2942 = vunpack.c.h.b16 %v1555
    %v2943 = vunpack.c.l.b16 %v1556
    %v2944 = vunpack.c.h.b16 %v1556
    %v2945 = vunpack.c.l.b16 %v1557
    %v2946 = vunpack.c.h.b16 %v1557
    %v2947 = vunpack.c.l.b16 %v1558
    %v2948 = vunpack.c.h.b16 %v1558
    %v2949 = vunpack.c.l.b16 %v1559
    %v2950 = vunpack.c.h.b16 %v1559
    %v2951 = vunpack.c.l.b16 %v1560
    %v2952 = vunpack.c.h.b16 %v1560
    %v2953 = vunpack.c.l.b16 %v1561
    %v2954 = vunpack.c.h.b16 %v1561
    %v2955 = vunpack.c.l.b16 %v1562
    %v2956 = vunpack.c.h.b16 %v1562
    %v2957 = vunpack.c.l.b16 %v1563
    %v2958 = vunpack.c.h.b16 %v1563
    %v2959 = vunpack.c.l.b16 %v1564
    %v2960 = vunpack.c.h.b16 %v1564
    %v2961 = vunpack.c.l.b16 %v1565
    %v2962 = vunpack.c.h.b16 %v1565
    %v2963 = vunpack.c.l.b16 %v1566
    %v2964 = vunpack.c.h.b16 %v1566
    %v2965 = vunpack.c.l.b16 %v1567
    %v2966 = vunpack.c.h.b16 %v1567
    %v2967 = vunpack.c.l.b16 %v1568
    %v2968 = vunpack.c.h.b16 %v1568
    %v2969 = vunpack.c.l.b16 %v1569
    %v2970 = vunpack.c.h.b16 %v1569
    %v2971 = vunpack.c.l.b16 %v1570
    %v2972 = vunpack.c.h.b16 %v1570
    %v2973 = vunpack.c.l.b16 %v1571
    %v2974 = vunpack.c.h.b16 %v1571
    %v2975 = vunpack.c.l.b16 %v1572
    %v2976 = vunpack.c.h.b16 %v1572
    %v2977 = vunpack.c.l.b16 %v1573
    %v2978 = vunpack.c.h.b16 %v1573
    %v2979 = vunpack.c.l.b16 %v1574
    %v2980 = vunpack.c.h.b16 %v1574
    %v2981 = vunpack.c.l.b16 %v1575
    %v2982 = vunpack.c.h.b16 %v1575
    %v2983 = vunpack.c.l.b16 %v1576
    %v2984 = vunpack.c.h.b16 %v1576
    %v2985 = vunpack.c.l.b16 %v1577
    %v2986 = vunpack.c.h.b16 %v1577
    %v2987 = vunpack.c.l.b16 %v1578
    %v2988 = vunpack.c.h.b16 %v1578
    %v2989 = vunpack.c.l.b16 %v1579
    %v2990 = vunpack.c.h.b16 %v1579
    %v2991 = vunpack.c.l.b16 %v1580
    %v2992 = vunpack.c.h.b16 %v1580
    %v2993 = vunpack.c.l.b16 %v1581
    %v2994 = vunpack.c.h.b16 %v1581
    %v2995 = vunpack.c.l.b16 %v1582
    %v2996 = vunpack.c.h.b16 %v1582
    %v2997 = vunpack.c.l.b16 %v1583
    %v2998 = vunpack.c.h.b16 %v1583
    %v2999 = vunpack.c.l.b16 %v1584
    %v3000 = vunpack.c.h.b16 %v1584
    %v3001 = vunpack.c.l.b16 %v1585
    %v3002 = vunpack.c.h.b16 %v1585
    %v3003 = vunpack.c.l.b16 %v1586
    %v3004 = vunpack.c.h.b16 %v1586
    %v3005 = vunpack.c.l.b16 %v1587
    %v3006 = vunpack.c.h.b16 %v1587
    %v3007 = vunpack.c.l.b16 %v1588
    %v3008 = vunpack.c.h.b16 %v1588
    %v3009 = vunpack.c.l.b16 %v1589
    %v3010 = vunpack.c.h.b16 %v1589
    %v3011 = vunpack.c.l.b16 %v1590
    %v3012 = vunpack.c.h.b16 %v1590
    %v3013 = vunpack.c.l.b16 %v1591
    %v3014 = vunpack.c.h.b16 %v1591
    %v3015 = vunpack.c.l.b16 %v1592
    %v3016 = vunpack.c.h.b16 %v1592
    %v3017 = vunpack.c.l.b16 %v1593
    %v3018 = vunpack.c.h.b16 %v1593
    %v3019 = vunpack.c.l.b16 %v1594
    %v3020 = vunpack.c.h.b16 %v1594
    %v3021 = vunpack.c.l.b16 %v1595
    %v3022 = vunpack.c.h.b16 %v1595
    %v3023 = vunpack.c.l.b16 %v1596
    %v3024 = vunpack.c.h.b16 %v1596
    %v3025 = vunpack.c.l.b16 %v1597
    %v3026 = vunpack.c.h.b16 %v1597
    %v3027 = vunpack.c.l.b16 %v1598
    %v3028 = vunpack.c.h.b16 %v1598
    %v3029 = vunpack.c.l.b16 %v1599
    %v3030 = vunpack.c.h.b16 %v1599
    %v3031 = vunpack.c.l.b16 %v1600
    %v3032 = vunpack.c.h.b16 %v1600
    %v3033 = vunpack.c.l.b16 %v1601
    %v3034 = vunpack.c.h.b16 %v1601
    %v3035 = vunpack.c.l.b16 %v1602
    %v3036 = vunpack.c.h.b16 %v1602
    %v3037 = vunpack.c.l.b16 %v1603
    %v3038 = vunpack.c.h.b16 %v1603
    %v3039 = vunpack.c.l.b16 %v1604
    %v3040 = vunpack.c.h.b16 %v1604
    %v3041 = vunpack.c.l.b16 %v1605
    %v3042 = vunpack.c.h.b16 %v1605
    %v3043 = vunpack.c.l.b16 %v1606
    %v3044 = vunpack.c.h.b16 %v1606
    %v3045 = vunpack.c.l.b16 %v1607
    %v3046 = vunpack.c.h.b16 %v1607
    %v3047 = vunpack.c.l.b16 %v1608
    %v3048 = vunpack.c.h.b16 %v1608
    %v3049 = vunpack.c.l.b16 %v1609
    %v3050 = vunpack.c.h.b16 %v1609
    %v3051 = vunpack.c.l.b16 %v1610
    %v3052 = vunpack.c.h.b16 %v1610
    %v3053 = vunpack.c.l.b16 %v1611
    %v3054 = vunpack.c.h.b16 %v1611
    %v3055 = vunpack.c.l.b16 %v1612
    %v3056 = vunpack.c.h.b16 %v1612
    %v3057 = vunpack.c.l.b16 %v1613
    %v3058 = vunpack.c.h.b16 %v1613
    %v3059 = vunpack.c.l.b16 %v1614
    %v3060 = vunpack.c.h.b16 %v1614
    %v3061 = vunpack.c.l.b16 %v1615
    %v3062 = vunpack.c.h.b16 %v1615
    %v3063 = vunpack.c.l.b16 %v1616
    %v3064 = vunpack.c.h.b16 %v1616
    %v3065 = vunpack.c.l.b16 %v1617
    %v3066 = vunpack.c.h.b16 %v1617
    %v3067 = vunpack.c.l.b16 %v1618
    %v3068 = vunpack.c.h.b16 %v1618
    %v3069 = vunpack.c.l.b16 %v1619
    %v3070 = vunpack.c.h.b16 %v1619
    %v3071 = vunpack.c.l.b16 %v1620
    %v3072 = vunpack.c.h.b16 %v1620
    %v3073 = vunpack.c.l.b16 %v1621
    %v3074 = vunpack.c.h.b16 %v1621
    %v3075 = vunpack.c.l.b16 %v1622
    %v3076 = vunpack.c.h.b16 %v1622
    %v3077 = vunpack.c.l.b16 %v1623
    %v3078 = vunpack.c.h.b16 %v1623
    %v3079 = vunpack.c.l.b16 %v1624
    %v3080 = vunpack.c.h.b16 %v1624
    %v3081 = vunpack.c.l.b16 %v1625
    %v3082 = vunpack.c.h.b16 %v1625
    %v3083 = vunpack.c.l.b16 %v1626
    %v3084 = vunpack.c.h.b16 %v1626
    %v3085 = vunpack.c.l.b16 %v1627
    %v3086 = vunpack.c.h.b16 %v1627
    %v3087 = vunpack.c.l.b16 %v1628
    %v3088 = vunpack.c.h.b16 %v1628
    %v3089 = vunpack.c.l.b16 %v1629
    %v3090 = vunpack.c.h.b16 %v1629
    %v3091 = vpack.c.b16 %v2839, %v2835
    %v3092 = vpack.c.b16 %v2840, %v2836
    %v3093 = vpack.c.b16 %v2841, %v2837
    %v3094 = vpack.c.b16 %v2842, %v2838
    %v3095 = vpack.c.b16 %v2847, %v2843
    %v3096 = vpack.c.b16 %v2848, %v2844
    %v3097 = vpack.c.b16 %v2849, %v2845
    %v3098 = vpack.c.b16 %v2850, %v2846
    %v3099 = vpack.c.b16 %v2855, %v2851
    %v3100 = vpack.c.b16 %v2856, %v2852
    %v3101 = vpack.c.b16 %v2857, %v2853
    %v3102 = vpack.c.b16 %v2858, %v2854
    %v3103 = vpack.c.b16 %v2863, %v2859
    %v3104 = vpack.c.b16 %v2864, %v2860
    %v3105 = vpack.c.b16 %v2865, %v2861
    %v3106 = vpack.c.b16 %v2866, %v2862
    %v3107 = vpack.c.b16 %v2871, %v2867
    %v3108 = vpack.c.b16 %v2872, %v2868
    %v3109 = vpack.c.b16 %v2873, %v2869
    %v3110 = vpack.c.b16 %v2874, %v2870
    %v3111 = vpack.c.b16 %v2879, %v2875
    %v3112 = vpack.c.b16 %v2880, %v2876
    %v3113 = vpack.c.b16 %v2881, %v2877
    %v3114 = vpack.c.b16 %v2882, %v2878
    %v3115 = vpack.c.b16 %v2887, %v2883
    %v3116 = vpack.c.b16 %v2888, %v2884
    %v3117 = vpack.c.b16 %v2889, %v2885
    %v3118 = vpack.c.b16 %v2890, %v2886
    %v3119 = vpack.c.b16 %v2895, %v2891
    %v3120 = vpack.c.b16 %v2896, %v2892
    %v3121 = vpack.c.b16 %v2897, %v2893
    %v3122 = vpack.c.b16 %v2898, %v2894
    %v3123 = vpack.c.b16 %v2903, %v2899
    %v3124 = vpack.c.b16 %v2904, %v2900
    %v3125 = vpack.c.b16 %v2905, %v2901
    %v3126 = vpack.c.b16 %v2906, %v2902
    %v3127 = vpack.c.b16 %v2911, %v2907
    %v3128 = vpack.c.b16 %v2912, %v2908
    %v3129 = vpack.c.b16 %v2913, %v2909
    %v3130 = vpack.c.b16 %v2914, %v2910
    %v3131 = vpack.c.b16 %v2919, %v2915
    %v3132 = vpack.c.b16 %v2920, %v2916
    %v3133 = vpack.c.b16 %v2921, %v2917
    %v3134 = vpack.c.b16 %v2922, %v2918
    %v3135 = vpack.c.b16 %v2927, %v2923
    %v3136 = vpack.c.b16 %v2928, %v2924
    %v3137 = vpack.c.b16 %v2929, %v2925
    %v3138 = vpack.c.b16 %v2930, %v2926
    %v3139 = vpack.c.b16 %v2935, %v2931
    %v3140 = vpack.c.b16 %v2936, %v2932
    %v3141 = vpack.c.b16 %v2937, %v2933
    %v3142 = vpack.c.b16 %v2938, %v2934
    %v3143 = vpack.c.b16 %v2943, %v2939
    %v3144 = vpack.c.b16 %v2944, %v2940
    %v3145 = vpack.c.b16 %v2945, %v2941
    %v3146 = vpack.c.b16 %v2946, %v2942
    %v3147 = vpack.c.b16 %v2951, %v2947
    %v3148 = vpack.c.b16 %v2952, %v2948
    %v3149 = vpack.c.b16 %v2953, %v2949
    %v3150 = vpack.c.b16 %v2954, %v2950
    %v3151 = vpack.c.b16 %v2959, %v2955
    %v3152 = vpack.c.b16 %v2960, %v2956
    %v3153 = vpack.c.b16 %v2961, %v2957
    %v3154 = vpack.c.b16 %v2962, %v2958
    %v3155 = vpack.c.b16 %v2967, %v2963
    %v3156 = vpack.c.b16 %v2968, %v2964
    %v3157 = vpack.c.b16 %v2969, %v2965
    %v3158 = vpack.c.b16 %v2970, %v2966
    %v3159 = vpack.c.b16 %v2975, %v2971
    %v3160 = vpack.c.b16 %v2976, %v2972
    %v3161 = vpack.c.b16 %v2977, %v2973
    %v3162 = vpack.c.b16 %v2978, %v2974
    %v3163 = vpack.c.b16 %v2983, %v2979
    %v3164 = vpack.c.b16 %v2984, %v2980
    %v3165 = vpack.c.b16 %v2985, %v2981
    %v3166 = vpack.c.b16 %v2986, %v2982
    %v3167 = vpack.c.b16 %v2991, %v2987
    %v3168 = vpack.c.b16 %v2992, %v2988
    %v3169 = vpack.c.b16 %v2993, %v2989
    %v3170 = vpack.c.b16 %v2994, %v2990
    %v3171 = vpack.c.b16 %v2999, %v2995
    %v3172 = vpack.c.b16 %v3000, %v2996
    %v3173 = vpack.c.b16 %v3001, %v2997
    %v3174 = vpack.c.b16 %v3002, %v2998
    %v3175 = vpack.c.b16 %v3007, %v3003
    %v3176 = vpack.c.b16 %v3008, %v3004
    %v3177 = vpack.c.b16 %v3009, %v3005
    %v3178 = vpack.c.b16 %v3010, %v3006
    %v3179 = vpack.c.b16 %v3015, %v3011
    %v3180 = vpack.c.b16 %v3016, %v3012
    %v3181 = vpack.c.b16 %v3017, %v3013
    %v3182 = vpack.c.b16 %v3018, %v3014
    %v3183 = vpack.c.b16 %v3023, %v3019
    %v3184 = vpack.c.b16 %v3024, %v3020
    %v3185 = vpack.c.b16 %v3025, %v3021
    %v3186 = vpack.c.b16 %v3026, %v3022
    %v3187 = vpack.c.b16 %v3031, %v3027
    %v3188 = vpack.c.b16 %v3032, %v3028
    %v3189 = vpack.c.b16 %v3033, %v3029
    %v3190 = vpack.c.b16 %v3034, %v3030
    %v3191 = vpack.c.b16 %v3039, %v3035
    %v3192 = vpack.c.b16 %v3040, %v3036
    %v3193 = vpack.c.b16 %v3041, %v3037
    %v3194 = vpack.c.b16 %v3042, %v3038
    %v3195 = vpack.c.b16 %v3047, %v3043
    %v3196 = vpack.c.b16 %v3048, %v3044
    %v3197 = vpack.c.b16 %v3049, %v3045
    %v3198 = vpack.c.b16 %v3050, %v3046
    %v3199 = vpack.c.b16 %v3055, %v3051
    %v3200 = vpack.c.b16 %v3056, %v3052
    %v3201 = vpack.c.b16 %v3057, %v3053
    %v3202 = vpack.c.b16 %v3058, %v3054
    %v3203 = vpack.c.b16 %v3063, %v3059
    %v3204 = vpack.c.b16 %v3064, %v3060
    %v3205 = vpack.c.b16 %v3065, %v3061
    %v3206 = vpack.c.b16 %v3066, %v3062
    %v3207 = vpack.c.b16 %v3071, %v3067
    %v3208 = vpack.c.b16 %v3072, %v3068
    %v3209 = vpack.c.b16 %v3073, %v3069
    %v3210 = vpack.c.b16 %v3074, %v3070
    %v3211 = vpack.c.b16 %v3079, %v3075
    %v3212 = vpack.c.b16 %v3080, %v3076
    %v3213 = vpack.c.b16 %v3081, %v3077
    %v3214 = vpack.c.b16 %v3082, %v3078
    %v3215 = vpack.c.b16 %v3087, %v3083
    %v3216 = vpack.c.b16 %v3088, %v3084
    %v3217 = vpack.c.b16 %v3089, %v3085
    %v3218 = vpack.c.b16 %v3090, %v3086
    %3347 = vmatprep.subr.bf16.mxu0 %v3092
    %3348 = vmatpush1.bf16.msra.mxu0 %v3091
    %3349 = vmatprep.subr.bf16.mxu0 %v3096
    %3350 = vmatpush1.bf16.msra.mxu0 %v3095
    %3351 = vmatprep.subr.bf16.mxu0 %v3100
    %3352 = vmatpush1.bf16.msra.mxu0 %v3099
    %3353 = vmatprep.subr.bf16.mxu0 %v3104
    %3354 = vmatpush1.bf16.msra.mxu0 %v3103
    %3355 = vmatprep.subr.bf16.mxu0 %v3108
    %3356 = vmatpush1.bf16.msra.mxu0 %v3107
    %3357 = vmatprep.subr.bf16.mxu0 %v3112
    %3358 = vmatpush1.bf16.msra.mxu0 %v3111
    %3359 = vmatprep.subr.bf16.mxu0 %v3116
    %3360 = vmatpush1.bf16.msra.mxu0 %v3115
    %3361 = vmatprep.subr.bf16.mxu0 %v3120
    %3362 = vmatpush1.bf16.msra.mxu0 %v3119
    %3363 = vmatprep.subr.bf16.mxu0 %v3124
    %3364 = vmatpush1.bf16.msra.mxu0 %v3123
    %3365 = vmatprep.subr.bf16.mxu0 %v3128
    %3366 = vmatpush1.bf16.msra.mxu0 %v3127
    %3367 = vmatprep.subr.bf16.mxu0 %v3132
    %3368 = vmatpush1.bf16.msra.mxu0 %v3131
    %3369 = vmatprep.subr.bf16.mxu0 %v3136
    %3370 = vmatpush1.bf16.msra.mxu0 %v3135
    %3371 = vmatprep.subr.bf16.mxu0 %v3140
    %3372 = vmatpush1.bf16.msra.mxu0 %v3139
    %3373 = vmatprep.subr.bf16.mxu0 %v3144
    %3374 = vmatpush1.bf16.msra.mxu0 %v3143
    %3375 = vmatprep.subr.bf16.mxu0 %v3148
    %3376 = vmatpush1.bf16.msra.mxu0 %v3147
    %3377 = vmatprep.subr.bf16.mxu0 %v3152
    %3378 = vmatpush1.bf16.msra.mxu0 %v3151
    %3379 = vmatprep.mubr.bf16.mxu0 %v1487
    %3380 = vmatmul.mubr.bf16.gmra.mrb[0].mxu0 %v1486
    %v3381 = vpop.f32.mrb[0].mxu0
    %v3382 = vadd.f32 %v2523, %v3381
    %v3383 = vpop.f32.mrb[0].mxu0
    %v3384 = vadd.f32 %v2525, %v3383
    %v3385 = vpop.f32.mrb[0].mxu0
    %v3386 = vadd.f32 %v2527, %v3385
    %v3387 = vpop.f32.mrb[0].mxu0
    %v3388 = vadd.f32 %v2529, %v3387
    %3389 = vmatprep.mubr.bf16.mxu0 %v1491
    %3390 = vmatmul.mubr.bf16.gmra.mrb[0].mxu0 %v1490
    %v3391 = vpop.f32.mrb[0].mxu0
    %v3392 = vadd.f32 %v2533, %v3391
    %v3393 = vpop.f32.mrb[0].mxu0
    %v3394 = vadd.f32 %v2535, %v3393
    %v3395 = vpop.f32.mrb[0].mxu0
    %v3396 = vadd.f32 %v2537, %v3395
    %v3397 = vpop.f32.mrb[0].mxu0
    %v3398 = vadd.f32 %v2539, %v3397
    %3399 = vmatprep.mubr.bf16.mxu0 %v1495
    %3400 = vmatmul.mubr.bf16.gmra.mrb[0].mxu0 %v1494
    %v3401 = vpop.f32.mrb[0].mxu0
    %v3402 = vadd.f32 %v2543, %v3401
    %v3403 = vpop.f32.mrb[0].mxu0
    %v3404 = vadd.f32 %v2545, %v3403
    %v3405 = vpop.f32.mrb[0].mxu0
    %v3406 = vadd.f32 %v2547, %v3405
    %v3407 = vpop.f32.mrb[0].mxu0
    %v3408 = vadd.f32 %v2549, %v3407
    %3409 = vmatprep.mubr.bf16.mxu0 %v1499
    %3410 = vmatmul.mubr.bf16.gmra.mrb[0].mxu0 %v1498
    %v3411 = vpop.f32.mrb[0].mxu0
    %v3412 = vadd.f32 %v2553, %v3411
    %v3413 = vpop.f32.mrb[0].mxu0
    %v3414 = vadd.f32 %v2555, %v3413
    %v3415 = vpop.f32.mrb[0].mxu0
    %v3416 = vadd.f32 %v2557, %v3415
    %v3417 = vpop.f32.mrb[0].mxu0
    %v3418 = vadd.f32 %v2559, %v3417
    %3419 = vdwg.mxu0
    %3420 = vmatprep.subr.bf16.mxu0 %v3156
    %3421 = vmatpush1.bf16.msra.mxu0 %v3155
    %3422 = vmatprep.subr.bf16.mxu0 %v3160
    %3423 = vmatpush1.bf16.msra.mxu0 %v3159
    %3424 = vmatprep.subr.bf16.mxu0 %v3164
    %3425 = vmatpush1.bf16.msra.mxu0 %v3163
    %3426 = vmatprep.subr.bf16.mxu0 %v3168
    %3427 = vmatpush1.bf16.msra.mxu0 %v3167
    %3428 = vmatprep.subr.bf16.mxu0 %v3172
    %3429 = vmatpush1.bf16.msra.mxu0 %v3171
    %3430 = vmatprep.subr.bf16.mxu0 %v3176
    %3431 = vmatpush1.bf16.msra.mxu0 %v3175
    %3432 = vmatprep.subr.bf16.mxu0 %v3180
    %3433 = vmatpush1.bf16.msra.mxu0 %v3179
    %3434 = vmatprep.subr.bf16.mxu0 %v3184
    %3435 = vmatpush1.bf16.msra.mxu0 %v3183
    %3436 = vmatprep.subr.bf16.mxu0 %v3188
    %3437 = vmatpush1.bf16.msra.mxu0 %v3187
    %3438 = vmatprep.subr.bf16.mxu0 %v3192
    %3439 = vmatpush1.bf16.msra.mxu0 %v3191
    %3440 = vmatprep.subr.bf16.mxu0 %v3196
    %3441 = vmatpush1.bf16.msra.mxu0 %v3195
    %3442 = vmatprep.subr.bf16.mxu0 %v3200
    %3443 = vmatpush1.bf16.msra.mxu0 %v3199
    %3444 = vmatprep.subr.bf16.mxu0 %v3204
    %3445 = vmatpush1.bf16.msra.mxu0 %v3203
    %3446 = vmatprep.subr.bf16.mxu0 %v3208
    %3447 = vmatpush1.bf16.msra.mxu0 %v3207
    %3448 = vmatprep.subr.bf16.mxu0 %v3212
    %3449 = vmatpush1.bf16.msra.mxu0 %v3211
    %3450 = vmatprep.subr.bf16.mxu0 %v3216
    %3451 = vmatpush1.bf16.msra.mxu0 %v3215
    %3452 = vmatprep.mubr.bf16.mxu0 %v1489
    %3453 = vmatmul.mubr.bf16.gmra.mrb[0].mxu0 %v1488
    %v3454 = vpop.f32.mrb[0].mxu0
    %v3455 = vadd.f32 %v3382, %v3454
    %v3456 = vpop.f32.mrb[0].mxu0
    %v3457 = vadd.f32 %v3384, %v3456
    %v3458 = vpop.f32.mrb[0].mxu0
    %v3459 = vadd.f32 %v3386, %v3458
    %v3460 = vpop.f32.mrb[0].mxu0
    %v3461 = vadd.f32 %v3388, %v3460
    %3462 = vmatprep.mubr.bf16.mxu0 %v1493
    %3463 = vmatmul.mubr.bf16.gmra.mrb[0].mxu0 %v1492
    %v3464 = vpop.f32.mrb[0].mxu0
    %v3465 = vadd.f32 %v3392, %v3464
    %v3466 = vpop.f32.mrb[0].mxu0
    %v3467 = vadd.f32 %v3394, %v3466
    %v3468 = vpop.f32.mrb[0].mxu0
    %v3469 = vadd.f32 %v3396, %v3468
    %v3470 = vpop.f32.mrb[0].mxu0
    %v3471 = vadd.f32 %v3398, %v3470
    %3472 = vmatprep.mubr.bf16.mxu0 %v1497
    %3473 = vmatmul.mubr.bf16.gmra.mrb[0].mxu0 %v1496
    %v3474 = vpop.f32.mrb[0].mxu0
    %v3475 = vadd.f32 %v3402, %v3474
    %v3476 = vpop.f32.mrb[0].mxu0
    %v3477 = vadd.f32 %v3404, %v3476
    %v3478 = vpop.f32.mrb[0].mxu0
    %v3479 = vadd.f32 %v3406, %v3478
    %v3480 = vpop.f32.mrb[0].mxu0
    %v3481 = vadd.f32 %v3408, %v3480
    %3482 = vmatprep.mubr.bf16.mxu0 %v1501
    %3483 = vmatmul.mubr.bf16.gmra.mrb[0].mxu0 %v1500
    %v3484 = vpop.f32.mrb[0].mxu0
    %v3485 = vadd.f32 %v3412, %v3484
    %v3486 = vpop.f32.mrb[0].mxu0
    %v3487 = vadd.f32 %v3414, %v3486
    %v3488 = vpop.f32.mrb[0].mxu0
    %v3489 = vadd.f32 %v3416, %v3488
    %v3490 = vpop.f32.mrb[0].mxu0
    %v3491 = vadd.f32 %v3418, %v3490
    %3492 = vdwg.mxu0
    %3493 = vmatprep.subr.bf16.mxu0 %v3094
    %3494 = vmatpush1.bf16.msra.mxu0 %v3093
    %3495 = vmatprep.subr.bf16.mxu0 %v3098
    %3496 = vmatpush1.bf16.msra.mxu0 %v3097
    %3497 = vmatprep.subr.bf16.mxu0 %v3102
    %3498 = vmatpush1.bf16.msra.mxu0 %v3101
    %3499 = vmatprep.subr.bf16.mxu0 %v3106
    %3500 = vmatpush1.bf16.msra.mxu0 %v3105
    %3501 = vmatprep.subr.bf16.mxu0 %v3110
    %3502 = vmatpush1.bf16.msra.mxu0 %v3109
    %3503 = vmatprep.subr.bf16.mxu0 %v3114
    %3504 = vmatpush1.bf16.msra.mxu0 %v3113
    %3505 = vmatprep.subr.bf16.mxu0 %v3118
    %3506 = vmatpush1.bf16.msra.mxu0 %v3117
    %3507 = vmatprep.subr.bf16.mxu0 %v3122
    %3508 = vmatpush1.bf16.msra.mxu0 %v3121
    %3509 = vmatprep.subr.bf16.mxu0 %v3126
    %3510 = vmatpush1.bf16.msra.mxu0 %v3125
    %3511 = vmatprep.subr.bf16.mxu0 %v3130
    %3512 = vmatpush1.bf16.msra.mxu0 %v3129
    %3513 = vmatprep.subr.bf16.mxu0 %v3134
    %3514 = vmatpush1.bf16.msra.mxu0 %v3133
    %3515 = vmatprep.subr.bf16.mxu0 %v3138
    %3516 = vmatpush1.bf16.msra.mxu0 %v3137
    %3517 = vmatprep.subr.bf16.mxu0 %v3142
    %3518 = vmatpush1.bf16.msra.mxu0 %v3141
    %3519 = vmatprep.subr.bf16.mxu0 %v3146
    %3520 = vmatpush1.bf16.msra.mxu0 %v3145
    %3521 = vmatprep.subr.bf16.mxu0 %v3150
    %3522 = vmatpush1.bf16.msra.mxu0 %v3149
    %3523 = vmatprep.subr.bf16.mxu0 %v3154
    %3524 = vmatpush1.bf16.msra.mxu0 %v3153
    %3525 = vmatprep.mubr.bf16.mxu0 %v1487
    %3526 = vmatmul.mubr.bf16.gmra.mrb[0].mxu0 %v1486
    %v3527 = vpop.f32.mrb[0].mxu0
    %v3528 = vadd.f32 %v2669, %v3527
    %v3529 = vpop.f32.mrb[0].mxu0
    %v3530 = vadd.f32 %v2671, %v3529
    %v3531 = vpop.f32.mrb[0].mxu0
    %v3532 = vadd.f32 %v2673, %v3531
    %v3533 = vpop.f32.mrb[0].mxu0
    %v3534 = vadd.f32 %v2675, %v3533
    %3535 = vmatprep.mubr.bf16.mxu0 %v1491
    %3536 = vmatmul.mubr.bf16.gmra.mrb[0].mxu0 %v1490
    %v3537 = vpop.f32.mrb[0].mxu0
    %v3538 = vadd.f32 %v2679, %v3537
    %v3539 = vpop.f32.mrb[0].mxu0
    %v3540 = vadd.f32 %v2681, %v3539
    %v3541 = vpop.f32.mrb[0].mxu0
    %v3542 = vadd.f32 %v2683, %v3541
    %v3543 = vpop.f32.mrb[0].mxu0
    %v3544 = vadd.f32 %v2685, %v3543
    %3545 = vmatprep.mubr.bf16.mxu0 %v1495
    %3546 = vmatmul.mubr.bf16.gmra.mrb[0].mxu0 %v1494
    %v3547 = vpop.f32.mrb[0].mxu0
    %v3548 = vadd.f32 %v2689, %v3547
    %v3549 = vpop.f32.mrb[0].mxu0
    %v3550 = vadd.f32 %v2691, %v3549
    %v3551 = vpop.f32.mrb[0].mxu0
    %v3552 = vadd.f32 %v2693, %v3551
    %v3553 = vpop.f32.mrb[0].mxu0
    %v3554 = vadd.f32 %v2695, %v3553
    %3555 = vmatprep.mubr.bf16.mxu0 %v1499
    %3556 = vmatmul.mubr.bf16.gmra.mrb[0].mxu0 %v1498
    %v3557 = vpop.f32.mrb[0].mxu0
    %v3558 = vadd.f32 %v2699, %v3557
    %v3559 = vpop.f32.mrb[0].mxu0
    %v3560 = vadd.f32 %v2701, %v3559
    %v3561 = vpop.f32.mrb[0].mxu0
    %v3562 = vadd.f32 %v2703, %v3561
    %v3563 = vpop.f32.mrb[0].mxu0
    %v3564 = vadd.f32 %v2705, %v3563
    %3565 = vdwg.mxu0
    %3566 = vmatprep.subr.bf16.mxu0 %v3158
    %3567 = vmatpush1.bf16.msra.mxu0 %v3157
    %3568 = vmatprep.subr.bf16.mxu0 %v3162
    %3569 = vmatpush1.bf16.msra.mxu0 %v3161
    %3570 = vmatprep.subr.bf16.mxu0 %v3166
    %3571 = vmatpush1.bf16.msra.mxu0 %v3165
    %3572 = vmatprep.subr.bf16.mxu0 %v3170
    %3573 = vmatpush1.bf16.msra.mxu0 %v3169
    %3574 = vmatprep.subr.bf16.mxu0 %v3174
    %3575 = vmatpush1.bf16.msra.mxu0 %v3173
    %3576 = vmatprep.subr.bf16.mxu0 %v3178
    %3577 = vmatpush1.bf16.msra.mxu0 %v3177
    %3578 = vmatprep.subr.bf16.mxu0 %v3182
    %3579 = vmatpush1.bf16.msra.mxu0 %v3181
    %3580 = vmatprep.subr.bf16.mxu0 %v3186
    %3581 = vmatpush1.bf16.msra.mxu0 %v3185
    %3582 = vmatprep.subr.bf16.mxu0 %v3190
    %3583 = vmatpush1.bf16.msra.mxu0 %v3189
    %3584 = vmatprep.subr.bf16.mxu0 %v3194
    %3585 = vmatpush1.bf16.msra.mxu0 %v3193
    %3586 = vmatprep.subr.bf16.mxu0 %v3198
    %3587 = vmatpush1.bf16.msra.mxu0 %v3197
    %3588 = vmatprep.subr.bf16.mxu0 %v3202
    %3589 = vmatpush1.bf16.msra.mxu0 %v3201
    %3590 = vmatprep.subr.bf16.mxu0 %v3206
    %3591 = vmatpush1.bf16.msra.mxu0 %v3205
    %3592 = vmatprep.subr.bf16.mxu0 %v3210
    %3593 = vmatpush1.bf16.msra.mxu0 %v3209
    %3594 = vmatprep.subr.bf16.mxu0 %v3214
    %3595 = vmatpush1.bf16.msra.mxu0 %v3213
    %3596 = vmatprep.subr.bf16.mxu0 %v3218
    %3597 = vmatpush1.bf16.msra.mxu0 %v3217
    %3598 = vmatprep.mubr.bf16.mxu0 %v1489
    %3599 = vmatmul.mubr.bf16.gmra.mrb[0].mxu0 %v1488
    %v3600 = vpop.f32.mrb[0].mxu0
    %v3601 = vadd.f32 %v3528, %v3600
    %v3602 = vpop.f32.mrb[0].mxu0
    %v3603 = vadd.f32 %v3530, %v3602
    %v3604 = vpop.f32.mrb[0].mxu0
    %v3605 = vadd.f32 %v3532, %v3604
    %v3606 = vpop.f32.mrb[0].mxu0
    %v3607 = vadd.f32 %v3534, %v3606
    %3608 = vmatprep.mubr.bf16.mxu0 %v1493
    %3609 = vmatmul.mubr.bf16.gmra.mrb[0].mxu0 %v1492
    %v3610 = vpop.f32.mrb[0].mxu0
    %v3611 = vadd.f32 %v3538, %v3610
    %v3612 = vpop.f32.mrb[0].mxu0
    %v3613 = vadd.f32 %v3540, %v3612
    %v3614 = vpop.f32.mrb[0].mxu0
    %v3615 = vadd.f32 %v3542, %v3614
    %v3616 = vpop.f32.mrb[0].mxu0
    %v3617 = vadd.f32 %v3544, %v3616
    %3618 = vmatprep.mubr.bf16.mxu0 %v1497
    %3619 = vmatmul.mubr.bf16.gmra.mrb[0].mxu0 %v1496
    %v3620 = vpop.f32.mrb[0].mxu0
    %v3621 = vadd.f32 %v3548, %v3620
    %v3622 = vpop.f32.mrb[0].mxu0
    %v3623 = vadd.f32 %v3550, %v3622
    %v3624 = vpop.f32.mrb[0].mxu0
    %v3625 = vadd.f32 %v3552, %v3624
    %v3626 = vpop.f32.mrb[0].mxu0
    %v3627 = vadd.f32 %v3554, %v3626
    %3628 = vmatprep.mubr.bf16.mxu0 %v1501
    %3629 = vmatmul.mubr.bf16.gmra.mrb[0].mxu0 %v1500
    %v3630 = vpop.f32.mrb[0].mxu0
    %v3631 = vadd.f32 %v3558, %v3630
    %v3632 = vpop.f32.mrb[0].mxu0
    %v3633 = vadd.f32 %v3560, %v3632
    %v3634 = vpop.f32.mrb[0].mxu0
    %v3635 = vadd.f32 %v3562, %v3634
    %v3636 = vpop.f32.mrb[0].mxu0
    %v3637 = vadd.f32 %v3564, %v3636
    %3638 = vdwg.mxu0
    %v3639 = vpack.c.bf16 %v1458, %v1454
    %v3640 = vpack.c.bf16 %v1459, %v1455
    %v3641 = vpack.c.bf16 %v1460, %v1456
    %v3642 = vpack.c.bf16 %v1461, %v1457
    %v3643 = vpack.c.bf16 %v1466, %v1462
    %v3644 = vpack.c.bf16 %v1467, %v1463
    %v3645 = vpack.c.bf16 %v1468, %v1464
    %v3646 = vpack.c.bf16 %v1469, %v1465
    %v3647 = vpack.c.bf16 %v1474, %v1470
    %v3648 = vpack.c.bf16 %v1475, %v1471
    %v3649 = vpack.c.bf16 %v1476, %v1472
    %v3650 = vpack.c.bf16 %v1477, %v1473
    %v3651 = vpack.c.bf16 %v1482, %v1478
    %v3652 = vpack.c.bf16 %v1483, %v1479
    %v3653 = vpack.c.bf16 %v1484, %v1480
    %v3654 = vpack.c.bf16 %v1485, %v1481
    %s3655 = scalar_lea.vmem [#allocation10], 2048
    %v3656 = vld [vmem:[%s3655] sm:$0xff]
    %v3657 = vld [vmem:[%s3655 + $0x8] sm:$0xff]
    %v3658 = vld [vmem:[%s3655 + $0x10] sm:$0xff]
    %v3659 = vld [vmem:[%s3655 + $0x18] sm:$0xff]
    %v3660 = vld [vmem:[%s3655 + $0x20] sm:$0xff]
    %v3661 = vld [vmem:[%s3655 + $0x28] sm:$0xff]
    %v3662 = vld [vmem:[%s3655 + $0x30] sm:$0xff]
    %v3663 = vld [vmem:[%s3655 + $0x38] sm:$0xff]
    %v3664 = vld [vmem:[%s3655 + $0x40] sm:$0xff]
    %v3665 = vld [vmem:[%s3655 + $0x48] sm:$0xff]
    %v3666 = vld [vmem:[%s3655 + $0x50] sm:$0xff]
    %v3667 = vld [vmem:[%s3655 + $0x58] sm:$0xff]
    %v3668 = vld [vmem:[%s3655 + $0x60] sm:$0xff]
    %v3669 = vld [vmem:[%s3655 + $0x68] sm:$0xff]
    %v3670 = vld [vmem:[%s3655 + $0x70] sm:$0xff]
    %v3671 = vld [vmem:[%s3655 + $0x78] sm:$0xff]
    %v3672 = vld [vmem:[%s3655 + $0x80] sm:$0xff]
    %v3673 = vld [vmem:[%s3655 + $0x88] sm:$0xff]
    %v3674 = vld [vmem:[%s3655 + $0x90] sm:$0xff]
    %v3675 = vld [vmem:[%s3655 + $0x98] sm:$0xff]
    %v3676 = vld [vmem:[%s3655 + $0xa0] sm:$0xff]
    %v3677 = vld [vmem:[%s3655 + $0xa8] sm:$0xff]
    %v3678 = vld [vmem:[%s3655 + $0xb0] sm:$0xff]
    %v3679 = vld [vmem:[%s3655 + $0xb8] sm:$0xff]
    %v3680 = vld [vmem:[%s3655 + $0xc0] sm:$0xff]
    %v3681 = vld [vmem:[%s3655 + $0xc8] sm:$0xff]
    %v3682 = vld [vmem:[%s3655 + $0xd0] sm:$0xff]
    %v3683 = vld [vmem:[%s3655 + $0xd8] sm:$0xff]
    %v3684 = vld [vmem:[%s3655 + $0xe0] sm:$0xff]
    %v3685 = vld [vmem:[%s3655 + $0xe8] sm:$0xff]
    %v3686 = vld [vmem:[%s3655 + $0xf0] sm:$0xff]
    %v3687 = vld [vmem:[%s3655 + $0xf8] sm:$0xff]
    %v3688 = vld [vmem:[%s3655 + $0x100] sm:$0xff]
    %v3689 = vld [vmem:[%s3655 + $0x108] sm:$0xff]
    %v3690 = vld [vmem:[%s3655 + $0x110] sm:$0xff]
    %v3691 = vld [vmem:[%s3655 + $0x118] sm:$0xff]
    %v3692 = vld [vmem:[%s3655 + $0x120] sm:$0xff]
    %v3693 = vld [vmem:[%s3655 + $0x128] sm:$0xff]
    %v3694 = vld [vmem:[%s3655 + $0x130] sm:$0xff]
    %v3695 = vld [vmem:[%s3655 + $0x138] sm:$0xff]
    %v3696 = vld [vmem:[%s3655 + $0x140] sm:$0xff]
    %v3697 = vld [vmem:[%s3655 + $0x148] sm:$0xff]
    %v3698 = vld [vmem:[%s3655 + $0x150] sm:$0xff]
    %v3699 = vld [vmem:[%s3655 + $0x158] sm:$0xff]
    %v3700 = vld [vmem:[%s3655 + $0x160] sm:$0xff]
    %v3701 = vld [vmem:[%s3655 + $0x168] sm:$0xff]
    %v3702 = vld [vmem:[%s3655 + $0x170] sm:$0xff]
    %v3703 = vld [vmem:[%s3655 + $0x178] sm:$0xff]
    %v3704 = vld [vmem:[%s3655 + $0x180] sm:$0xff]
    %v3705 = vld [vmem:[%s3655 + $0x188] sm:$0xff]
    %v3706 = vld [vmem:[%s3655 + $0x190] sm:$0xff]
    %v3707 = vld [vmem:[%s3655 + $0x198] sm:$0xff]
    %v3708 = vld [vmem:[%s3655 + $0x1a0] sm:$0xff]
    %v3709 = vld [vmem:[%s3655 + $0x1a8] sm:$0xff]
    %v3710 = vld [vmem:[%s3655 + $0x1b0] sm:$0xff]
    %v3711 = vld [vmem:[%s3655 + $0x1b8] sm:$0xff]
    %v3712 = vld [vmem:[%s3655 + $0x1c0] sm:$0xff]
    %v3713 = vld [vmem:[%s3655 + $0x1c8] sm:$0xff]
    %v3714 = vld [vmem:[%s3655 + $0x1d0] sm:$0xff]
    %v3715 = vld [vmem:[%s3655 + $0x1d8] sm:$0xff]
    %v3716 = vld [vmem:[%s3655 + $0x1e0] sm:$0xff]
    %v3717 = vld [vmem:[%s3655 + $0x1e8] sm:$0xff]
    %v3718 = vld [vmem:[%s3655 + $0x1f0] sm:$0xff]
    %v3719 = vld [vmem:[%s3655 + $0x1f8] sm:$0xff]
    %v3720 = vld [vmem:[%s3655 + $0x200] sm:$0xff]
    %v3721 = vld [vmem:[%s3655 + $0x208] sm:$0xff]
    %v3722 = vld [vmem:[%s3655 + $0x210] sm:$0xff]
    %v3723 = vld [vmem:[%s3655 + $0x218] sm:$0xff]
    %v3724 = vld [vmem:[%s3655 + $0x220] sm:$0xff]
    %v3725 = vld [vmem:[%s3655 + $0x228] sm:$0xff]
    %v3726 = vld [vmem:[%s3655 + $0x230] sm:$0xff]
    %v3727 = vld [vmem:[%s3655 + $0x238] sm:$0xff]
    %v3728 = vld [vmem:[%s3655 + $0x240] sm:$0xff]
    %v3729 = vld [vmem:[%s3655 + $0x248] sm:$0xff]
    %v3730 = vld [vmem:[%s3655 + $0x250] sm:$0xff]
    %v3731 = vld [vmem:[%s3655 + $0x258] sm:$0xff]
    %v3732 = vld [vmem:[%s3655 + $0x260] sm:$0xff]
    %v3733 = vld [vmem:[%s3655 + $0x268] sm:$0xff]
    %v3734 = vld [vmem:[%s3655 + $0x270] sm:$0xff]
    %v3735 = vld [vmem:[%s3655 + $0x278] sm:$0xff]
    %v3736 = vld [vmem:[%s3655 + $0x280] sm:$0xff]
    %v3737 = vld [vmem:[%s3655 + $0x288] sm:$0xff]
    %v3738 = vld [vmem:[%s3655 + $0x290] sm:$0xff]
    %v3739 = vld [vmem:[%s3655 + $0x298] sm:$0xff]
    %v3740 = vld [vmem:[%s3655 + $0x2a0] sm:$0xff]
    %v3741 = vld [vmem:[%s3655 + $0x2a8] sm:$0xff]
    %v3742 = vld [vmem:[%s3655 + $0x2b0] sm:$0xff]
    %v3743 = vld [vmem:[%s3655 + $0x2b8] sm:$0xff]
    %v3744 = vld [vmem:[%s3655 + $0x2c0] sm:$0xff]
    %v3745 = vld [vmem:[%s3655 + $0x2c8] sm:$0xff]
    %v3746 = vld [vmem:[%s3655 + $0x2d0] sm:$0xff]
    %v3747 = vld [vmem:[%s3655 + $0x2d8] sm:$0xff]
    %v3748 = vld [vmem:[%s3655 + $0x2e0] sm:$0xff]
    %v3749 = vld [vmem:[%s3655 + $0x2e8] sm:$0xff]
    %v3750 = vld [vmem:[%s3655 + $0x2f0] sm:$0xff]
    %v3751 = vld [vmem:[%s3655 + $0x2f8] sm:$0xff]
    %v3752 = vld [vmem:[%s3655 + $0x300] sm:$0xff]
    %v3753 = vld [vmem:[%s3655 + $0x308] sm:$0xff]
    %v3754 = vld [vmem:[%s3655 + $0x310] sm:$0xff]
    %v3755 = vld [vmem:[%s3655 + $0x318] sm:$0xff]
    %v3756 = vld [vmem:[%s3655 + $0x320] sm:$0xff]
    %v3757 = vld [vmem:[%s3655 + $0x328] sm:$0xff]
    %v3758 = vld [vmem:[%s3655 + $0x330] sm:$0xff]
    %v3759 = vld [vmem:[%s3655 + $0x338] sm:$0xff]
    %v3760 = vld [vmem:[%s3655 + $0x340] sm:$0xff]
    %v3761 = vld [vmem:[%s3655 + $0x348] sm:$0xff]
    %v3762 = vld [vmem:[%s3655 + $0x350] sm:$0xff]
    %v3763 = vld [vmem:[%s3655 + $0x358] sm:$0xff]
    %v3764 = vld [vmem:[%s3655 + $0x360] sm:$0xff]
    %v3765 = vld [vmem:[%s3655 + $0x368] sm:$0xff]
    %v3766 = vld [vmem:[%s3655 + $0x370] sm:$0xff]
    %v3767 = vld [vmem:[%s3655 + $0x378] sm:$0xff]
    %v3768 = vld [vmem:[%s3655 + $0x380] sm:$0xff]
    %v3769 = vld [vmem:[%s3655 + $0x388] sm:$0xff]
    %v3770 = vld [vmem:[%s3655 + $0x390] sm:$0xff]
    %v3771 = vld [vmem:[%s3655 + $0x398] sm:$0xff]
    %v3772 = vld [vmem:[%s3655 + $0x3a0] sm:$0xff]
    %v3773 = vld [vmem:[%s3655 + $0x3a8] sm:$0xff]
    %v3774 = vld [vmem:[%s3655 + $0x3b0] sm:$0xff]
    %v3775 = vld [vmem:[%s3655 + $0x3b8] sm:$0xff]
    %v3776 = vld [vmem:[%s3655 + $0x3c0] sm:$0xff]
    %v3777 = vld [vmem:[%s3655 + $0x3c8] sm:$0xff]
    %v3778 = vld [vmem:[%s3655 + $0x3d0] sm:$0xff]
    %v3779 = vld [vmem:[%s3655 + $0x3d8] sm:$0xff]
    %v3780 = vld [vmem:[%s3655 + $0x3e0] sm:$0xff]
    %v3781 = vld [vmem:[%s3655 + $0x3e8] sm:$0xff]
    %v3782 = vld [vmem:[%s3655 + $0x3f0] sm:$0xff]
    %v3783 = vld [vmem:[%s3655 + $0x3f8] sm:$0xff]
    %v3912 = vunpack.c.l.b16 %v3656
    %v3913 = vunpack.c.h.b16 %v3656
    %v3914 = vunpack.c.l.b16 %v3657
    %v3915 = vunpack.c.h.b16 %v3657
    %v3916 = vunpack.c.l.b16 %v3658
    %v3917 = vunpack.c.h.b16 %v3658
    %v3918 = vunpack.c.l.b16 %v3659
    %v3919 = vunpack.c.h.b16 %v3659
    %v3920 = vunpack.c.l.b16 %v3660
    %v3921 = vunpack.c.h.b16 %v3660
    %v3922 = vunpack.c.l.b16 %v3661
    %v3923 = vunpack.c.h.b16 %v3661
    %v3924 = vunpack.c.l.b16 %v3662
    %v3925 = vunpack.c.h.b16 %v3662
    %v3926 = vunpack.c.l.b16 %v3663
    %v3927 = vunpack.c.h.b16 %v3663
    %v3928 = vunpack.c.l.b16 %v3664
    %v3929 = vunpack.c.h.b16 %v3664
    %v3930 = vunpack.c.l.b16 %v3665
    %v3931 = vunpack.c.h.b16 %v3665
    %v3932 = vunpack.c.l.b16 %v3666
    %v3933 = vunpack.c.h.b16 %v3666
    %v3934 = vunpack.c.l.b16 %v3667
    %v3935 = vunpack.c.h.b16 %v3667
    %v3936 = vunpack.c.l.b16 %v3668
    %v3937 = vunpack.c.h.b16 %v3668
    %v3938 = vunpack.c.l.b16 %v3669
    %v3939 = vunpack.c.h.b16 %v3669
    %v3940 = vunpack.c.l.b16 %v3670
    %v3941 = vunpack.c.h.b16 %v3670
    %v3942 = vunpack.c.l.b16 %v3671
    %v3943 = vunpack.c.h.b16 %v3671
    %v3944 = vunpack.c.l.b16 %v3672
    %v3945 = vunpack.c.h.b16 %v3672
    %v3946 = vunpack.c.l.b16 %v3673
    %v3947 = vunpack.c.h.b16 %v3673
    %v3948 = vunpack.c.l.b16 %v3674
    %v3949 = vunpack.c.h.b16 %v3674
    %v3950 = vunpack.c.l.b16 %v3675
    %v3951 = vunpack.c.h.b16 %v3675
    %v3952 = vunpack.c.l.b16 %v3676
    %v3953 = vunpack.c.h.b16 %v3676
    %v3954 = vunpack.c.l.b16 %v3677
    %v3955 = vunpack.c.h.b16 %v3677
    %v3956 = vunpack.c.l.b16 %v3678
    %v3957 = vunpack.c.h.b16 %v3678
    %v3958 = vunpack.c.l.b16 %v3679
    %v3959 = vunpack.c.h.b16 %v3679
    %v3960 = vunpack.c.l.b16 %v3680
    %v3961 = vunpack.c.h.b16 %v3680
    %v3962 = vunpack.c.l.b16 %v3681
    %v3963 = vunpack.c.h.b16 %v3681
    %v3964 = vunpack.c.l.b16 %v3682
    %v3965 = vunpack.c.h.b16 %v3682
    %v3966 = vunpack.c.l.b16 %v3683
    %v3967 = vunpack.c.h.b16 %v3683
    %v3968 = vunpack.c.l.b16 %v3684
    %v3969 = vunpack.c.h.b16 %v3684
    %v3970 = vunpack.c.l.b16 %v3685
    %v3971 = vunpack.c.h.b16 %v3685
    %v3972 = vunpack.c.l.b16 %v3686
    %v3973 = vunpack.c.h.b16 %v3686
    %v3974 = vunpack.c.l.b16 %v3687
    %v3975 = vunpack.c.h.b16 %v3687
    %v3976 = vunpack.c.l.b16 %v3688
    %v3977 = vunpack.c.h.b16 %v3688
    %v3978 = vunpack.c.l.b16 %v3689
    %v3979 = vunpack.c.h.b16 %v3689
    %v3980 = vunpack.c.l.b16 %v3690
    %v3981 = vunpack.c.h.b16 %v3690
    %v3982 = vunpack.c.l.b16 %v3691
    %v3983 = vunpack.c.h.b16 %v3691
    %v3984 = vunpack.c.l.b16 %v3692
    %v3985 = vunpack.c.h.b16 %v3692
    %v3986 = vunpack.c.l.b16 %v3693
    %v3987 = vunpack.c.h.b16 %v3693
    %v3988 = vunpack.c.l.b16 %v3694
    %v3989 = vunpack.c.h.b16 %v3694
    %v3990 = vunpack.c.l.b16 %v3695
    %v3991 = vunpack.c.h.b16 %v3695
    %v3992 = vunpack.c.l.b16 %v3696
    %v3993 = vunpack.c.h.b16 %v3696
    %v3994 = vunpack.c.l.b16 %v3697
    %v3995 = vunpack.c.h.b16 %v3697
    %v3996 = vunpack.c.l.b16 %v3698
    %v3997 = vunpack.c.h.b16 %v3698
    %v3998 = vunpack.c.l.b16 %v3699
    %v3999 = vunpack.c.h.b16 %v3699
    %v4000 = vunpack.c.l.b16 %v3700
    %v4001 = vunpack.c.h.b16 %v3700
    %v4002 = vunpack.c.l.b16 %v3701
    %v4003 = vunpack.c.h.b16 %v3701
    %v4004 = vunpack.c.l.b16 %v3702
    %v4005 = vunpack.c.h.b16 %v3702
    %v4006 = vunpack.c.l.b16 %v3703
    %v4007 = vunpack.c.h.b16 %v3703
    %v4008 = vunpack.c.l.b16 %v3704
    %v4009 = vunpack.c.h.b16 %v3704
    %v4010 = vunpack.c.l.b16 %v3705
    %v4011 = vunpack.c.h.b16 %v3705
    %v4012 = vunpack.c.l.b16 %v3706
    %v4013 = vunpack.c.h.b16 %v3706
    %v4014 = vunpack.c.l.b16 %v3707
    %v4015 = vunpack.c.h.b16 %v3707
    %v4016 = vunpack.c.l.b16 %v3708
    %v4017 = vunpack.c.h.b16 %v3708
    %v4018 = vunpack.c.l.b16 %v3709
    %v4019 = vunpack.c.h.b16 %v3709
    %v4020 = vunpack.c.l.b16 %v3710
    %v4021 = vunpack.c.h.b16 %v3710
    %v4022 = vunpack.c.l.b16 %v3711
    %v4023 = vunpack.c.h.b16 %v3711
    %v4024 = vunpack.c.l.b16 %v3712
    %v4025 = vunpack.c.h.b16 %v3712
    %v4026 = vunpack.c.l.b16 %v3713
    %v4027 = vunpack.c.h.b16 %v3713
    %v4028 = vunpack.c.l.b16 %v3714
    %v4029 = vunpack.c.h.b16 %v3714
    %v4030 = vunpack.c.l.b16 %v3715
    %v4031 = vunpack.c.h.b16 %v3715
    %v4032 = vunpack.c.l.b16 %v3716
    %v4033 = vunpack.c.h.b16 %v3716
    %v4034 = vunpack.c.l.b16 %v3717
    %v4035 = vunpack.c.h.b16 %v3717
    %v4036 = vunpack.c.l.b16 %v3718
    %v4037 = vunpack.c.h.b16 %v3718
    %v4038 = vunpack.c.l.b16 %v3719
    %v4039 = vunpack.c.h.b16 %v3719
    %v4040 = vunpack.c.l.b16 %v3720
    %v4041 = vunpack.c.h.b16 %v3720
    %v4042 = vunpack.c.l.b16 %v3721
    %v4043 = vunpack.c.h.b16 %v3721
    %v4044 = vunpack.c.l.b16 %v3722
    %v4045 = vunpack.c.h.b16 %v3722
    %v4046 = vunpack.c.l.b16 %v3723
    %v4047 = vunpack.c.h.b16 %v3723
    %v4048 = vunpack.c.l.b16 %v3724
    %v4049 = vunpack.c.h.b16 %v3724
    %v4050 = vunpack.c.l.b16 %v3725
    %v4051 = vunpack.c.h.b16 %v3725
    %v4052 = vunpack.c.l.b16 %v3726
    %v4053 = vunpack.c.h.b16 %v3726
    %v4054 = vunpack.c.l.b16 %v3727
    %v4055 = vunpack.c.h.b16 %v3727
    %v4056 = vunpack.c.l.b16 %v3728
    %v4057 = vunpack.c.h.b16 %v3728
    %v4058 = vunpack.c.l.b16 %v3729
    %v4059 = vunpack.c.h.b16 %v3729
    %v4060 = vunpack.c.l.b16 %v3730
    %v4061 = vunpack.c.h.b16 %v3730
    %v4062 = vunpack.c.l.b16 %v3731
    %v4063 = vunpack.c.h.b16 %v3731
    %v4064 = vunpack.c.l.b16 %v3732
    %v4065 = vunpack.c.h.b16 %v3732
    %v4066 = vunpack.c.l.b16 %v3733
    %v4067 = vunpack.c.h.b16 %v3733
    %v4068 = vunpack.c.l.b16 %v3734
    %v4069 = vunpack.c.h.b16 %v3734
    %v4070 = vunpack.c.l.b16 %v3735
    %v4071 = vunpack.c.h.b16 %v3735
    %v4072 = vunpack.c.l.b16 %v3736
    %v4073 = vunpack.c.h.b16 %v3736
    %v4074 = vunpack.c.l.b16 %v3737
    %v4075 = vunpack.c.h.b16 %v3737
    %v4076 = vunpack.c.l.b16 %v3738
    %v4077 = vunpack.c.h.b16 %v3738
    %v4078 = vunpack.c.l.b16 %v3739
    %v4079 = vunpack.c.h.b16 %v3739
    %v4080 = vunpack.c.l.b16 %v3740
    %v4081 = vunpack.c.h.b16 %v3740
    %v4082 = vunpack.c.l.b16 %v3741
    %v4083 = vunpack.c.h.b16 %v3741
    %v4084 = vunpack.c.l.b16 %v3742
    %v4085 = vunpack.c.h.b16 %v3742
    %v4086 = vunpack.c.l.b16 %v3743
    %v4087 = vunpack.c.h.b16 %v3743
    %v4088 = vunpack.c.l.b16 %v3744
    %v4089 = vunpack.c.h.b16 %v3744
    %v4090 = vunpack.c.l.b16 %v3745
    %v4091 = vunpack.c.h.b16 %v3745
    %v4092 = vunpack.c.l.b16 %v3746
    %v4093 = vunpack.c.h.b16 %v3746
    %v4094 = vunpack.c.l.b16 %v3747
    %v4095 = vunpack.c.h.b16 %v3747
    %v4096 = vunpack.c.l.b16 %v3748
    %v4097 = vunpack.c.h.b16 %v3748
    %v4098 = vunpack.c.l.b16 %v3749
    %v4099 = vunpack.c.h.b16 %v3749
    %v4100 = vunpack.c.l.b16 %v3750
    %v4101 = vunpack.c.h.b16 %v3750
    %v4102 = vunpack.c.l.b16 %v3751
    %v4103 = vunpack.c.h.b16 %v3751
    %v4104 = vunpack.c.l.b16 %v3752
    %v4105 = vunpack.c.h.b16 %v3752
    %v4106 = vunpack.c.l.b16 %v3753
    %v4107 = vunpack.c.h.b16 %v3753
    %v4108 = vunpack.c.l.b16 %v3754
    %v4109 = vunpack.c.h.b16 %v3754
    %v4110 = vunpack.c.l.b16 %v3755
    %v4111 = vunpack.c.h.b16 %v3755
    %v4112 = vunpack.c.l.b16 %v3756
    %v4113 = vunpack.c.h.b16 %v3756
    %v4114 = vunpack.c.l.b16 %v3757
    %v4115 = vunpack.c.h.b16 %v3757
    %v4116 = vunpack.c.l.b16 %v3758
    %v4117 = vunpack.c.h.b16 %v3758
    %v4118 = vunpack.c.l.b16 %v3759
    %v4119 = vunpack.c.h.b16 %v3759
    %v4120 = vunpack.c.l.b16 %v3760
    %v4121 = vunpack.c.h.b16 %v3760
    %v4122 = vunpack.c.l.b16 %v3761
    %v4123 = vunpack.c.h.b16 %v3761
    %v4124 = vunpack.c.l.b16 %v3762
    %v4125 = vunpack.c.h.b16 %v3762
    %v4126 = vunpack.c.l.b16 %v3763
    %v4127 = vunpack.c.h.b16 %v3763
    %v4128 = vunpack.c.l.b16 %v3764
    %v4129 = vunpack.c.h.b16 %v3764
    %v4130 = vunpack.c.l.b16 %v3765
    %v4131 = vunpack.c.h.b16 %v3765
    %v4132 = vunpack.c.l.b16 %v3766
    %v4133 = vunpack.c.h.b16 %v3766
    %v4134 = vunpack.c.l.b16 %v3767
    %v4135 = vunpack.c.h.b16 %v3767
    %v4136 = vunpack.c.l.b16 %v3768
    %v4137 = vunpack.c.h.b16 %v3768
    %v4138 = vunpack.c.l.b16 %v3769
    %v4139 = vunpack.c.h.b16 %v3769
    %v4140 = vunpack.c.l.b16 %v3770
    %v4141 = vunpack.c.h.b16 %v3770
    %v4142 = vunpack.c.l.b16 %v3771
    %v4143 = vunpack.c.h.b16 %v3771
    %v4144 = vunpack.c.l.b16 %v3772
    %v4145 = vunpack.c.h.b16 %v3772
    %v4146 = vunpack.c.l.b16 %v3773
    %v4147 = vunpack.c.h.b16 %v3773
    %v4148 = vunpack.c.l.b16 %v3774
    %v4149 = vunpack.c.h.b16 %v3774
    %v4150 = vunpack.c.l.b16 %v3775
    %v4151 = vunpack.c.h.b16 %v3775
    %v4152 = vunpack.c.l.b16 %v3776
    %v4153 = vunpack.c.h.b16 %v3776
    %v4154 = vunpack.c.l.b16 %v3777
    %v4155 = vunpack.c.h.b16 %v3777
    %v4156 = vunpack.c.l.b16 %v3778
    %v4157 = vunpack.c.h.b16 %v3778
    %v4158 = vunpack.c.l.b16 %v3779
    %v4159 = vunpack.c.h.b16 %v3779
    %v4160 = vunpack.c.l.b16 %v3780
    %v4161 = vunpack.c.h.b16 %v3780
    %v4162 = vunpack.c.l.b16 %v3781
    %v4163 = vunpack.c.h.b16 %v3781
    %v4164 = vunpack.c.l.b16 %v3782
    %v4165 = vunpack.c.h.b16 %v3782
    %v4166 = vunpack.c.l.b16 %v3783
    %v4167 = vunpack.c.h.b16 %v3783
    %v4168 = vpack.c.b16 %v3916, %v3912
    %v4169 = vpack.c.b16 %v3917, %v3913
    %v4170 = vpack.c.b16 %v3918, %v3914
    %v4171 = vpack.c.b16 %v3919, %v3915
    %v4172 = vpack.c.b16 %v3924, %v3920
    %v4173 = vpack.c.b16 %v3925, %v3921
    %v4174 = vpack.c.b16 %v3926, %v3922
    %v4175 = vpack.c.b16 %v3927, %v3923
    %v4176 = vpack.c.b16 %v3932, %v3928
    %v4177 = vpack.c.b16 %v3933, %v3929
    %v4178 = vpack.c.b16 %v3934, %v3930
    %v4179 = vpack.c.b16 %v3935, %v3931
    %v4180 = vpack.c.b16 %v3940, %v3936
    %v4181 = vpack.c.b16 %v3941, %v3937
    %v4182 = vpack.c.b16 %v3942, %v3938
    %v4183 = vpack.c.b16 %v3943, %v3939
    %v4184 = vpack.c.b16 %v3948, %v3944
    %v4185 = vpack.c.b16 %v3949, %v3945
    %v4186 = vpack.c.b16 %v3950, %v3946
    %v4187 = vpack.c.b16 %v3951, %v3947
    %v4188 = vpack.c.b16 %v3956, %v3952
    %v4189 = vpack.c.b16 %v3957, %v3953
    %v4190 = vpack.c.b16 %v3958, %v3954
    %v4191 = vpack.c.b16 %v3959, %v3955
    %v4192 = vpack.c.b16 %v3964, %v3960
    %v4193 = vpack.c.b16 %v3965, %v3961
    %v4194 = vpack.c.b16 %v3966, %v3962
    %v4195 = vpack.c.b16 %v3967, %v3963
    %v4196 = vpack.c.b16 %v3972, %v3968
    %v4197 = vpack.c.b16 %v3973, %v3969
    %v4198 = vpack.c.b16 %v3974, %v3970
    %v4199 = vpack.c.b16 %v3975, %v3971
    %v4200 = vpack.c.b16 %v3980, %v3976
    %v4201 = vpack.c.b16 %v3981, %v3977
    %v4202 = vpack.c.b16 %v3982, %v3978
    %v4203 = vpack.c.b16 %v3983, %v3979
    %v4204 = vpack.c.b16 %v3988, %v3984
    %v4205 = vpack.c.b16 %v3989, %v3985
    %v4206 = vpack.c.b16 %v3990, %v3986
    %v4207 = vpack.c.b16 %v3991, %v3987
    %v4208 = vpack.c.b16 %v3996, %v3992
    %v4209 = vpack.c.b16 %v3997, %v3993
    %v4210 = vpack.c.b16 %v3998, %v3994
    %v4211 = vpack.c.b16 %v3999, %v3995
    %v4212 = vpack.c.b16 %v4004, %v4000
    %v4213 = vpack.c.b16 %v4005, %v4001
    %v4214 = vpack.c.b16 %v4006, %v4002
    %v4215 = vpack.c.b16 %v4007, %v4003
    %v4216 = vpack.c.b16 %v4012, %v4008
    %v4217 = vpack.c.b16 %v4013, %v4009
    %v4218 = vpack.c.b16 %v4014, %v4010
    %v4219 = vpack.c.b16 %v4015, %v4011
    %v4220 = vpack.c.b16 %v4020, %v4016
    %v4221 = vpack.c.b16 %v4021, %v4017
    %v4222 = vpack.c.b16 %v4022, %v4018
    %v4223 = vpack.c.b16 %v4023, %v4019
    %v4224 = vpack.c.b16 %v4028, %v4024
    %v4225 = vpack.c.b16 %v4029, %v4025
    %v4226 = vpack.c.b16 %v4030, %v4026
    %v4227 = vpack.c.b16 %v4031, %v4027
    %v4228 = vpack.c.b16 %v4036, %v4032
    %v4229 = vpack.c.b16 %v4037, %v4033
    %v4230 = vpack.c.b16 %v4038, %v4034
    %v4231 = vpack.c.b16 %v4039, %v4035
    %v4232 = vpack.c.b16 %v4044, %v4040
    %v4233 = vpack.c.b16 %v4045, %v4041
    %v4234 = vpack.c.b16 %v4046, %v4042
    %v4235 = vpack.c.b16 %v4047, %v4043
    %v4236 = vpack.c.b16 %v4052, %v4048
    %v4237 = vpack.c.b16 %v4053, %v4049
    %v4238 = vpack.c.b16 %v4054, %v4050
    %v4239 = vpack.c.b16 %v4055, %v4051
    %v4240 = vpack.c.b16 %v4060, %v4056
    %v4241 = vpack.c.b16 %v4061, %v4057
    %v4242 = vpack.c.b16 %v4062, %v4058
    %v4243 = vpack.c.b16 %v4063, %v4059
    %v4244 = vpack.c.b16 %v4068, %v4064
    %v4245 = vpack.c.b16 %v4069, %v4065
    %v4246 = vpack.c.b16 %v4070, %v4066
    %v4247 = vpack.c.b16 %v4071, %v4067
    %v4248 = vpack.c.b16 %v4076, %v4072
    %v4249 = vpack.c.b16 %v4077, %v4073
    %v4250 = vpack.c.b16 %v4078, %v4074
    %v4251 = vpack.c.b16 %v4079, %v4075
    %v4252 = vpack.c.b16 %v4084, %v4080
    %v4253 = vpack.c.b16 %v4085, %v4081
    %v4254 = vpack.c.b16 %v4086, %v4082
    %v4255 = vpack.c.b16 %v4087, %v4083
    %v4256 = vpack.c.b16 %v4092, %v4088
    %v4257 = vpack.c.b16 %v4093, %v4089
    %v4258 = vpack.c.b16 %v4094, %v4090
    %v4259 = vpack.c.b16 %v4095, %v4091
    %v4260 = vpack.c.b16 %v4100, %v4096
    %v4261 = vpack.c.b16 %v4101, %v4097
    %v4262 = vpack.c.b16 %v4102, %v4098
    %v4263 = vpack.c.b16 %v4103, %v4099
    %v4264 = vpack.c.b16 %v4108, %v4104
    %v4265 = vpack.c.b16 %v4109, %v4105
    %v4266 = vpack.c.b16 %v4110, %v4106
    %v4267 = vpack.c.b16 %v4111, %v4107
    %v4268 = vpack.c.b16 %v4116, %v4112
    %v4269 = vpack.c.b16 %v4117, %v4113
    %v4270 = vpack.c.b16 %v4118, %v4114
    %v4271 = vpack.c.b16 %v4119, %v4115
    %v4272 = vpack.c.b16 %v4124, %v4120
    %v4273 = vpack.c.b16 %v4125, %v4121
    %v4274 = vpack.c.b16 %v4126, %v4122
    %v4275 = vpack.c.b16 %v4127, %v4123
    %v4276 = vpack.c.b16 %v4132, %v4128
    %v4277 = vpack.c.b16 %v4133, %v4129
    %v4278 = vpack.c.b16 %v4134, %v4130
    %v4279 = vpack.c.b16 %v4135, %v4131
    %v4280 = vpack.c.b16 %v4140, %v4136
    %v4281 = vpack.c.b16 %v4141, %v4137
    %v4282 = vpack.c.b16 %v4142, %v4138
    %v4283 = vpack.c.b16 %v4143, %v4139
    %v4284 = vpack.c.b16 %v4148, %v4144
    %v4285 = vpack.c.b16 %v4149, %v4145
    %v4286 = vpack.c.b16 %v4150, %v4146
    %v4287 = vpack.c.b16 %v4151, %v4147
    %v4288 = vpack.c.b16 %v4156, %v4152
    %v4289 = vpack.c.b16 %v4157, %v4153
    %v4290 = vpack.c.b16 %v4158, %v4154
    %v4291 = vpack.c.b16 %v4159, %v4155
    %v4292 = vpack.c.b16 %v4164, %v4160
    %v4293 = vpack.c.b16 %v4165, %v4161
    %v4294 = vpack.c.b16 %v4166, %v4162
    %v4295 = vpack.c.b16 %v4167, %v4163
    %4424 = vmatprep.subr.bf16.mxu0 %v4169
    %4425 = vmatpush1.bf16.msra.mxu0 %v4168
    %4426 = vmatprep.subr.bf16.mxu0 %v4173
    %4427 = vmatpush1.bf16.msra.mxu0 %v4172
    %4428 = vmatprep.subr.bf16.mxu0 %v4177
    %4429 = vmatpush1.bf16.msra.mxu0 %v4176
    %4430 = vmatprep.subr.bf16.mxu0 %v4181
    %4431 = vmatpush1.bf16.msra.mxu0 %v4180
    %4432 = vmatprep.subr.bf16.mxu0 %v4185
    %4433 = vmatpush1.bf16.msra.mxu0 %v4184
    %4434 = vmatprep.subr.bf16.mxu0 %v4189
    %4435 = vmatpush1.bf16.msra.mxu0 %v4188
    %4436 = vmatprep.subr.bf16.mxu0 %v4193
    %4437 = vmatpush1.bf16.msra.mxu0 %v4192
    %4438 = vmatprep.subr.bf16.mxu0 %v4197
    %4439 = vmatpush1.bf16.msra.mxu0 %v4196
    %4440 = vmatprep.subr.bf16.mxu0 %v4201
    %4441 = vmatpush1.bf16.msra.mxu0 %v4200
    %4442 = vmatprep.subr.bf16.mxu0 %v4205
    %4443 = vmatpush1.bf16.msra.mxu0 %v4204
    %4444 = vmatprep.subr.bf16.mxu0 %v4209
    %4445 = vmatpush1.bf16.msra.mxu0 %v4208
    %4446 = vmatprep.subr.bf16.mxu0 %v4213
    %4447 = vmatpush1.bf16.msra.mxu0 %v4212
    %4448 = vmatprep.subr.bf16.mxu0 %v4217
    %4449 = vmatpush1.bf16.msra.mxu0 %v4216
    %4450 = vmatprep.subr.bf16.mxu0 %v4221
    %4451 = vmatpush1.bf16.msra.mxu0 %v4220
    %4452 = vmatprep.subr.bf16.mxu0 %v4225
    %4453 = vmatpush1.bf16.msra.mxu0 %v4224
    %4454 = vmatprep.subr.bf16.mxu0 %v4229
    %4455 = vmatpush1.bf16.msra.mxu0 %v4228
    %4456 = vmatprep.mubr.bf16.mxu0 %v3640
    %4457 = vmatmul.mubr.bf16.gmra.mrb[0].mxu0 %v3639
    %v4458 = vpop.f32.mrb[0].mxu0
    %v4459 = vadd.f32 0.0, %v4458
    %v4460 = vpop.f32.mrb[0].mxu0
    %v4461 = vadd.f32 0.0, %v4460
    %v4462 = vpop.f32.mrb[0].mxu0
    %v4463 = vadd.f32 0.0, %v4462
    %v4464 = vpop.f32.mrb[0].mxu0
    %v4465 = vadd.f32 0.0, %v4464
    %4466 = vmatprep.mubr.bf16.mxu0 %v3644
    %4467 = vmatmul.mubr.bf16.gmra.mrb[0].mxu0 %v3643
    %v4468 = vpop.f32.mrb[0].mxu0
    %v4469 = vadd.f32 0.0, %v4468
    %v4470 = vpop.f32.mrb[0].mxu0
    %v4471 = vadd.f32 0.0, %v4470
    %v4472 = vpop.f32.mrb[0].mxu0
    %v4473 = vadd.f32 0.0, %v4472
    %v4474 = vpop.f32.mrb[0].mxu0
    %v4475 = vadd.f32 0.0, %v4474
    %4476 = vmatprep.mubr.bf16.mxu0 %v3648
    %4477 = vmatmul.mubr.bf16.gmra.mrb[0].mxu0 %v3647
    %v4478 = vpop.f32.mrb[0].mxu0
    %v4479 = vadd.f32 0.0, %v4478
    %v4480 = vpop.f32.mrb[0].mxu0
    %v4481 = vadd.f32 0.0, %v4480
    %v4482 = vpop.f32.mrb[0].mxu0
    %v4483 = vadd.f32 0.0, %v4482
    %v4484 = vpop.f32.mrb[0].mxu0
    %v4485 = vadd.f32 0.0, %v4484
    %4486 = vmatprep.mubr.bf16.mxu0 %v3652
    %4487 = vmatmul.mubr.bf16.gmra.mrb[0].mxu0 %v3651
    %v4488 = vpop.f32.mrb[0].mxu0
    %v4489 = vadd.f32 0.0, %v4488
    %v4490 = vpop.f32.mrb[0].mxu0
    %v4491 = vadd.f32 0.0, %v4490
    %v4492 = vpop.f32.mrb[0].mxu0
    %v4493 = vadd.f32 0.0, %v4492
    %v4494 = vpop.f32.mrb[0].mxu0
    %v4495 = vadd.f32 0.0, %v4494
    %4496 = vdwg.mxu0
    %4497 = vmatprep.subr.bf16.mxu0 %v4233
    %4498 = vmatpush1.bf16.msra.mxu0 %v4232
    %4499 = vmatprep.subr.bf16.mxu0 %v4237
    %4500 = vmatpush1.bf16.msra.mxu0 %v4236
    %4501 = vmatprep.subr.bf16.mxu0 %v4241
    %4502 = vmatpush1.bf16.msra.mxu0 %v4240
    %4503 = vmatprep.subr.bf16.mxu0 %v4245
    %4504 = vmatpush1.bf16.msra.mxu0 %v4244
    %4505 = vmatprep.subr.bf16.mxu0 %v4249
    %4506 = vmatpush1.bf16.msra.mxu0 %v4248
    %4507 = vmatprep.subr.bf16.mxu0 %v4253
    %4508 = vmatpush1.bf16.msra.mxu0 %v4252
    %4509 = vmatprep.subr.bf16.mxu0 %v4257
    %4510 = vmatpush1.bf16.msra.mxu0 %v4256
    %4511 = vmatprep.subr.bf16.mxu0 %v4261
    %4512 = vmatpush1.bf16.msra.mxu0 %v4260
    %4513 = vmatprep.subr.bf16.mxu0 %v4265
    %4514 = vmatpush1.bf16.msra.mxu0 %v4264
    %4515 = vmatprep.subr.bf16.mxu0 %v4269
    %4516 = vmatpush1.bf16.msra.mxu0 %v4268
    %4517 = vmatprep.subr.bf16.mxu0 %v4273
    %4518 = vmatpush1.bf16.msra.mxu0 %v4272
    %4519 = vmatprep.subr.bf16.mxu0 %v4277
    %4520 = vmatpush1.bf16.msra.mxu0 %v4276
    %4521 = vmatprep.subr.bf16.mxu0 %v4281
    %4522 = vmatpush1.bf16.msra.mxu0 %v4280
    %4523 = vmatprep.subr.bf16.mxu0 %v4285
    %4524 = vmatpush1.bf16.msra.mxu0 %v4284
    %4525 = vmatprep.subr.bf16.mxu0 %v4289
    %4526 = vmatpush1.bf16.msra.mxu0 %v4288
    %4527 = vmatprep.subr.bf16.mxu0 %v4293
    %4528 = vmatpush1.bf16.msra.mxu0 %v4292
    %4529 = vmatprep.mubr.bf16.mxu0 %v3642
    %4530 = vmatmul.mubr.bf16.gmra.mrb[0].mxu0 %v3641
    %v4531 = vpop.f32.mrb[0].mxu0
    %v4532 = vadd.f32 %v4459, %v4531
    %v4533 = vpop.f32.mrb[0].mxu0
    %v4534 = vadd.f32 %v4461, %v4533
    %v4535 = vpop.f32.mrb[0].mxu0
    %v4536 = vadd.f32 %v4463, %v4535
    %v4537 = vpop.f32.mrb[0].mxu0
    %v4538 = vadd.f32 %v4465, %v4537
    %4539 = vmatprep.mubr.bf16.mxu0 %v3646
    %4540 = vmatmul.mubr.bf16.gmra.mrb[0].mxu0 %v3645
    %v4541 = vpop.f32.mrb[0].mxu0
    %v4542 = vadd.f32 %v4469, %v4541
    %v4543 = vpop.f32.mrb[0].mxu0
    %v4544 = vadd.f32 %v4471, %v4543
    %v4545 = vpop.f32.mrb[0].mxu0
    %v4546 = vadd.f32 %v4473, %v4545
    %v4547 = vpop.f32.mrb[0].mxu0
    %v4548 = vadd.f32 %v4475, %v4547
    %4549 = vmatprep.mubr.bf16.mxu0 %v3650
    %4550 = vmatmul.mubr.bf16.gmra.mrb[0].mxu0 %v3649
    %v4551 = vpop.f32.mrb[0].mxu0
    %v4552 = vadd.f32 %v4479, %v4551
    %v4553 = vpop.f32.mrb[0].mxu0
    %v4554 = vadd.f32 %v4481, %v4553
    %v4555 = vpop.f32.mrb[0].mxu0
    %v4556 = vadd.f32 %v4483, %v4555
    %v4557 = vpop.f32.mrb[0].mxu0
    %v4558 = vadd.f32 %v4485, %v4557
    %4559 = vmatprep.mubr.bf16.mxu0 %v3654
    %4560 = vmatmul.mubr.bf16.gmra.mrb[0].mxu0 %v3653
    %v4561 = vpop.f32.mrb[0].mxu0
    %v4562 = vadd.f32 %v4489, %v4561
    %v4563 = vpop.f32.mrb[0].mxu0
    %v4564 = vadd.f32 %v4491, %v4563
    %v4565 = vpop.f32.mrb[0].mxu0
    %v4566 = vadd.f32 %v4493, %v4565
    %v4567 = vpop.f32.mrb[0].mxu0
    %v4568 = vadd.f32 %v4495, %v4567
    %4569 = vdwg.mxu0
    %4570 = vmatprep.subr.bf16.mxu0 %v4171
    %4571 = vmatpush1.bf16.msra.mxu0 %v4170
    %4572 = vmatprep.subr.bf16.mxu0 %v4175
    %4573 = vmatpush1.bf16.msra.mxu0 %v4174
    %4574 = vmatprep.subr.bf16.mxu0 %v4179
    %4575 = vmatpush1.bf16.msra.mxu0 %v4178
    %4576 = vmatprep.subr.bf16.mxu0 %v4183
    %4577 = vmatpush1.bf16.msra.mxu0 %v4182
    %4578 = vmatprep.subr.bf16.mxu0 %v4187
    %4579 = vmatpush1.bf16.msra.mxu0 %v4186
    %4580 = vmatprep.subr.bf16.mxu0 %v4191
    %4581 = vmatpush1.bf16.msra.mxu0 %v4190
    %4582 = vmatprep.subr.bf16.mxu0 %v4195
    %4583 = vmatpush1.bf16.msra.mxu0 %v4194
    %4584 = vmatprep.subr.bf16.mxu0 %v4199
    %4585 = vmatpush1.bf16.msra.mxu0 %v4198
    %4586 = vmatprep.subr.bf16.mxu0 %v4203
    %4587 = vmatpush1.bf16.msra.mxu0 %v4202
    %4588 = vmatprep.subr.bf16.mxu0 %v4207
    %4589 = vmatpush1.bf16.msra.mxu0 %v4206
    %4590 = vmatprep.subr.bf16.mxu0 %v4211
    %4591 = vmatpush1.bf16.msra.mxu0 %v4210
    %4592 = vmatprep.subr.bf16.mxu0 %v4215
    %4593 = vmatpush1.bf16.msra.mxu0 %v4214
    %4594 = vmatprep.subr.bf16.mxu0 %v4219
    %4595 = vmatpush1.bf16.msra.mxu0 %v4218
    %4596 = vmatprep.subr.bf16.mxu0 %v4223
    %4597 = vmatpush1.bf16.msra.mxu0 %v4222
    %4598 = vmatprep.subr.bf16.mxu0 %v4227
    %4599 = vmatpush1.bf16.msra.mxu0 %v4226
    %4600 = vmatprep.subr.bf16.mxu0 %v4231
    %4601 = vmatpush1.bf16.msra.mxu0 %v4230
    %4602 = vmatprep.mubr.bf16.mxu0 %v3640
    %4603 = vmatmul.mubr.bf16.gmra.mrb[0].mxu0 %v3639
    %v4604 = vpop.f32.mrb[0].mxu0
    %v4605 = vadd.f32 0.0, %v4604
    %v4606 = vpop.f32.mrb[0].mxu0
    %v4607 = vadd.f32 0.0, %v4606
    %v4608 = vpop.f32.mrb[0].mxu0
    %v4609 = vadd.f32 0.0, %v4608
    %v4610 = vpop.f32.mrb[0].mxu0
    %v4611 = vadd.f32 0.0, %v4610
    %4612 = vmatprep.mubr.bf16.mxu0 %v3644
    %4613 = vmatmul.mubr.bf16.gmra.mrb[0].mxu0 %v3643
    %v4614 = vpop.f32.mrb[0].mxu0
    %v4615 = vadd.f32 0.0, %v4614
    %v4616 = vpop.f32.mrb[0].mxu0
    %v4617 = vadd.f32 0.0, %v4616
    %v4618 = vpop.f32.mrb[0].mxu0
    %v4619 = vadd.f32 0.0, %v4618
    %v4620 = vpop.f32.mrb[0].mxu0
    %v4621 = vadd.f32 0.0, %v4620
    %4622 = vmatprep.mubr.bf16.mxu0 %v3648
    %4623 = vmatmul.mubr.bf16.gmra.mrb[0].mxu0 %v3647
    %v4624 = vpop.f32.mrb[0].mxu0
    %v4625 = vadd.f32 0.0, %v4624
    %v4626 = vpop.f32.mrb[0].mxu0
    %v4627 = vadd.f32 0.0, %v4626
    %v4628 = vpop.f32.mrb[0].mxu0
    %v4629 = vadd.f32 0.0, %v4628
    %v4630 = vpop.f32.mrb[0].mxu0
    %v4631 = vadd.f32 0.0, %v4630
    %4632 = vmatprep.mubr.bf16.mxu0 %v3652
    %4633 = vmatmul.mubr.bf16.gmra.mrb[0].mxu0 %v3651
    %v4634 = vpop.f32.mrb[0].mxu0
    %v4635 = vadd.f32 0.0, %v4634
    %v4636 = vpop.f32.mrb[0].mxu0
    %v4637 = vadd.f32 0.0, %v4636
    %v4638 = vpop.f32.mrb[0].mxu0
    %v4639 = vadd.f32 0.0, %v4638
    %v4640 = vpop.f32.mrb[0].mxu0
    %v4641 = vadd.f32 0.0, %v4640
    %4642 = vdwg.mxu0
    %4643 = vmatprep.subr.bf16.mxu0 %v4235
    %4644 = vmatpush1.bf16.msra.mxu0 %v4234
    %4645 = vmatprep.subr.bf16.mxu0 %v4239
    %4646 = vmatpush1.bf16.msra.mxu0 %v4238
    %4647 = vmatprep.subr.bf16.mxu0 %v4243
    %4648 = vmatpush1.bf16.msra.mxu0 %v4242
    %4649 = vmatprep.subr.bf16.mxu0 %v4247
    %4650 = vmatpush1.bf16.msra.mxu0 %v4246
    %4651 = vmatprep.subr.bf16.mxu0 %v4251
    %4652 = vmatpush1.bf16.msra.mxu0 %v4250
    %4653 = vmatprep.subr.bf16.mxu0 %v4255
    %4654 = vmatpush1.bf16.msra.mxu0 %v4254
    %4655 = vmatprep.subr.bf16.mxu0 %v4259
    %4656 = vmatpush1.bf16.msra.mxu0 %v4258
    %4657 = vmatprep.subr.bf16.mxu0 %v4263
    %4658 = vmatpush1.bf16.msra.mxu0 %v4262
    %4659 = vmatprep.subr.bf16.mxu0 %v4267
    %4660 = vmatpush1.bf16.msra.mxu0 %v4266
    %4661 = vmatprep.subr.bf16.mxu0 %v4271
    %4662 = vmatpush1.bf16.msra.mxu0 %v4270
    %4663 = vmatprep.subr.bf16.mxu0 %v4275
    %4664 = vmatpush1.bf16.msra.mxu0 %v4274
    %4665 = vmatprep.subr.bf16.mxu0 %v4279
    %4666 = vmatpush1.bf16.msra.mxu0 %v4278
    %4667 = vmatprep.subr.bf16.mxu0 %v4283
    %4668 = vmatpush1.bf16.msra.mxu0 %v4282
    %4669 = vmatprep.subr.bf16.mxu0 %v4287
    %4670 = vmatpush1.bf16.msra.mxu0 %v4286
    %4671 = vmatprep.subr.bf16.mxu0 %v4291
    %4672 = vmatpush1.bf16.msra.mxu0 %v4290
    %4673 = vmatprep.subr.bf16.mxu0 %v4295
    %4674 = vmatpush1.bf16.msra.mxu0 %v4294
    %4675 = vmatprep.mubr.bf16.mxu0 %v3642
    %4676 = vmatmul.mubr.bf16.gmra.mrb[0].mxu0 %v3641
    %v4677 = vpop.f32.mrb[0].mxu0
    %v4678 = vadd.f32 %v4605, %v4677
    %v4679 = vpop.f32.mrb[0].mxu0
    %v4680 = vadd.f32 %v4607, %v4679
    %v4681 = vpop.f32.mrb[0].mxu0
    %v4682 = vadd.f32 %v4609, %v4681
    %v4683 = vpop.f32.mrb[0].mxu0
    %v4684 = vadd.f32 %v4611, %v4683
    %4685 = vmatprep.mubr.bf16.mxu0 %v3646
    %4686 = vmatmul.mubr.bf16.gmra.mrb[0].mxu0 %v3645
    %v4687 = vpop.f32.mrb[0].mxu0
    %v4688 = vadd.f32 %v4615, %v4687
    %v4689 = vpop.f32.mrb[0].mxu0
    %v4690 = vadd.f32 %v4617, %v4689
    %v4691 = vpop.f32.mrb[0].mxu0
    %v4692 = vadd.f32 %v4619, %v4691
    %v4693 = vpop.f32.mrb[0].mxu0
    %v4694 = vadd.f32 %v4621, %v4693
    %4695 = vmatprep.mubr.bf16.mxu0 %v3650
    %4696 = vmatmul.mubr.bf16.gmra.mrb[0].mxu0 %v3649
    %v4697 = vpop.f32.mrb[0].mxu0
    %v4698 = vadd.f32 %v4625, %v4697
    %v4699 = vpop.f32.mrb[0].mxu0
    %v4700 = vadd.f32 %v4627, %v4699
    %v4701 = vpop.f32.mrb[0].mxu0
    %v4702 = vadd.f32 %v4629, %v4701
    %v4703 = vpop.f32.mrb[0].mxu0
    %v4704 = vadd.f32 %v4631, %v4703
    %4705 = vmatprep.mubr.bf16.mxu0 %v3654
    %4706 = vmatmul.mubr.bf16.gmra.mrb[0].mxu0 %v3653
    %v4707 = vpop.f32.mrb[0].mxu0
    %v4708 = vadd.f32 %v4635, %v4707
    %v4709 = vpop.f32.mrb[0].mxu0
    %v4710 = vadd.f32 %v4637, %v4709
    %v4711 = vpop.f32.mrb[0].mxu0
    %v4712 = vadd.f32 %v4639, %v4711
    %v4713 = vpop.f32.mrb[0].mxu0
    %v4714 = vadd.f32 %v4641, %v4713
    %4715 = vdwg.mxu0
    %v4716 = vadd.f32 %v3455, %v4532
    %v4717 = vadd.f32 %v3457, %v4534
    %v4718 = vadd.f32 %v3601, %v4678
    %v4719 = vadd.f32 %v3603, %v4680
    %v4720 = vadd.f32 %v3459, %v4536
    %v4721 = vadd.f32 %v3461, %v4538
    %v4722 = vadd.f32 %v3605, %v4682
    %v4723 = vadd.f32 %v3607, %v4684
    %v4724 = vadd.f32 %v3465, %v4542
    %v4725 = vadd.f32 %v3467, %v4544
    %v4726 = vadd.f32 %v3611, %v4688
    %v4727 = vadd.f32 %v3613, %v4690
    %v4728 = vadd.f32 %v3469, %v4546
    %v4729 = vadd.f32 %v3471, %v4548
    %v4730 = vadd.f32 %v3615, %v4692
    %v4731 = vadd.f32 %v3617, %v4694
    %v4732 = vadd.f32 %v3475, %v4552
    %v4733 = vadd.f32 %v3477, %v4554
    %v4734 = vadd.f32 %v3621, %v4698
    %v4735 = vadd.f32 %v3623, %v4700
    %v4736 = vadd.f32 %v3479, %v4556
    %v4737 = vadd.f32 %v3481, %v4558
    %v4738 = vadd.f32 %v3625, %v4702
    %v4739 = vadd.f32 %v3627, %v4704
    %v4740 = vadd.f32 %v3485, %v4562
    %v4741 = vadd.f32 %v3487, %v4564
    %v4742 = vadd.f32 %v3631, %v4708
    %v4743 = vadd.f32 %v3633, %v4710
    %v4744 = vadd.f32 %v3489, %v4566
    %v4745 = vadd.f32 %v3491, %v4568
    %v4746 = vadd.f32 %v3635, %v4712
    %v4747 = vadd.f32 %v3637, %v4714
    %v4748 = vld [vmem:[#allocation11] sm:$0xf]
    %v4750 = vlaneseq
    %v4751 = vshrl.u32 %v4750, 7
    %v4752 = vsub.s32 0, %v4751
    %v4753 = vrot.slane %v4748, %v4752
    %v4754 = vlaneseq
    %v4755 = vshrl.u32 %v4754, 7
    %v4756 = vsub.s32 1, %v4755
    %v4757 = vrot.slane %v4748, %v4756
    %v4758 = vlaneseq
    %v4759 = vshrl.u32 %v4758, 7
    %v4760 = vsub.s32 2, %v4759
    %v4761 = vrot.slane %v4748, %v4760
    %v4762 = vlaneseq
    %v4763 = vshrl.u32 %v4762, 7
    %v4764 = vsub.s32 3, %v4763
    %v4765 = vrot.slane %v4748, %v4764
    %v4770 = vadd.f32 %v4716, %v4753
    %v4771 = vadd.f32 %v4717, %v4757
    %v4772 = vadd.f32 %v4718, %v4761
    %v4773 = vadd.f32 %v4719, %v4765
    %v4774 = vadd.f32 %v4720, %v4753
    %v4775 = vadd.f32 %v4721, %v4757
    %v4776 = vadd.f32 %v4722, %v4761
    %v4777 = vadd.f32 %v4723, %v4765
    %v4778 = vadd.f32 %v4724, %v4753
    %v4779 = vadd.f32 %v4725, %v4757
    %v4780 = vadd.f32 %v4726, %v4761
    %v4781 = vadd.f32 %v4727, %v4765
    %v4782 = vadd.f32 %v4728, %v4753
    %v4783 = vadd.f32 %v4729, %v4757
    %v4784 = vadd.f32 %v4730, %v4761
    %v4785 = vadd.f32 %v4731, %v4765
    %v4786 = vadd.f32 %v4732, %v4753
    %v4787 = vadd.f32 %v4733, %v4757
    %v4788 = vadd.f32 %v4734, %v4761
    %v4789 = vadd.f32 %v4735, %v4765
    %v4790 = vadd.f32 %v4736, %v4753
    %v4791 = vadd.f32 %v4737, %v4757
    %v4792 = vadd.f32 %v4738, %v4761
    %v4793 = vadd.f32 %v4739, %v4765
    %v4794 = vadd.f32 %v4740, %v4753
    %v4795 = vadd.f32 %v4741, %v4757
    %v4796 = vadd.f32 %v4742, %v4761
    %v4797 = vadd.f32 %v4743, %v4765
    %v4798 = vadd.f32 %v4744, %v4753
    %v4799 = vadd.f32 %v4745, %v4757
    %v4800 = vadd.f32 %v4746, %v4761
    %v4801 = vadd.f32 %v4747, %v4765
    %v4802 = vmax.f32 %v4770, 0.0
    %v4803 = vmax.f32 %v4771, 0.0
    %v4804 = vmax.f32 %v4772, 0.0
    %v4805 = vmax.f32 %v4773, 0.0
    %v4806 = vmax.f32 %v4774, 0.0
    %v4807 = vmax.f32 %v4775, 0.0
    %v4808 = vmax.f32 %v4776, 0.0
    %v4809 = vmax.f32 %v4777, 0.0
    %v4810 = vmax.f32 %v4778, 0.0
    %v4811 = vmax.f32 %v4779, 0.0
    %v4812 = vmax.f32 %v4780, 0.0
    %v4813 = vmax.f32 %v4781, 0.0
    %v4814 = vmax.f32 %v4782, 0.0
    %v4815 = vmax.f32 %v4783, 0.0
    %v4816 = vmax.f32 %v4784, 0.0
    %v4817 = vmax.f32 %v4785, 0.0
    %v4818 = vmax.f32 %v4786, 0.0
    %v4819 = vmax.f32 %v4787, 0.0
    %v4820 = vmax.f32 %v4788, 0.0
    %v4821 = vmax.f32 %v4789, 0.0
    %v4822 = vmax.f32 %v4790, 0.0
    %v4823 = vmax.f32 %v4791, 0.0
    %v4824 = vmax.f32 %v4792, 0.0
    %v4825 = vmax.f32 %v4793, 0.0
    %v4826 = vmax.f32 %v4794, 0.0
    %v4827 = vmax.f32 %v4795, 0.0
    %v4828 = vmax.f32 %v4796, 0.0
    %v4829 = vmax.f32 %v4797, 0.0
    %v4830 = vmax.f32 %v4798, 0.0
    %v4831 = vmax.f32 %v4799, 0.0
    %v4832 = vmax.f32 %v4800, 0.0
    %v4833 = vmax.f32 %v4801, 0.0
    %4834 = vst [vmem:[#allocation5] sm:$0xff] 0.0
    %4835 = vst [vmem:[#allocation5 + $0x8] sm:$0xff] 0.0
    %4836 = vst [vmem:[#allocation5 + $0x10] sm:$0xff] 0.0
    %4837 = vst [vmem:[#allocation5 + $0x18] sm:$0xff] 0.0
    %4838 = vst [vmem:[#allocation4] sm:$0xff] %v4802
    %4839 = vst [vmem:[#allocation4 + $0x8] sm:$0xff] %v4803
    %4840 = vst [vmem:[#allocation4 + $0x10] sm:$0xff] %v4804
    %4841 = vst [vmem:[#allocation4 + $0x18] sm:$0xff] %v4805
    %s4842 = scalar_lea.vmem [#allocation5], 32
    %4843 = vst [vmem:[%s4842] sm:$0xff] %v4806
    %4844 = vst [vmem:[%s4842 + $0x8] sm:$0xff] %v4807
    %4845 = vst [vmem:[%s4842 + $0x10] sm:$0xff] %v4808
    %4846 = vst [vmem:[%s4842 + $0x18] sm:$0xff] %v4809
    %s4847 = scalar_lea.vmem [#allocation4], 32
    %4848 = vst [vmem:[%s4847] sm:$0xff] %v4810
    %4849 = vst [vmem:[%s4847 + $0x8] sm:$0xff] %v4811
    %4850 = vst [vmem:[%s4847 + $0x10] sm:$0xff] %v4812
    %4851 = vst [vmem:[%s4847 + $0x18] sm:$0xff] %v4813
    %s4852 = scalar_lea.vmem [#allocation5], 64
    %4853 = vst [vmem:[%s4852] sm:$0xff] %v4814
    %4854 = vst [vmem:[%s4852 + $0x8] sm:$0xff] %v4815
    %4855 = vst [vmem:[%s4852 + $0x10] sm:$0xff] %v4816
    %4856 = vst [vmem:[%s4852 + $0x18] sm:$0xff] %v4817
    %s4857 = scalar_lea.vmem [#allocation4], 64
    %4858 = vst [vmem:[%s4857] sm:$0xff] %v4818
    %4859 = vst [vmem:[%s4857 + $0x8] sm:$0xff] %v4819
    %4860 = vst [vmem:[%s4857 + $0x10] sm:$0xff] %v4820
    %4861 = vst [vmem:[%s4857 + $0x18] sm:$0xff] %v4821
    %s4862 = scalar_lea.vmem [#allocation5], 96
    %4863 = vst [vmem:[%s4862] sm:$0xff] %v4822
    %4864 = vst [vmem:[%s4862 + $0x8] sm:$0xff] %v4823
    %4865 = vst [vmem:[%s4862 + $0x10] sm:$0xff] %v4824
    %4866 = vst [vmem:[%s4862 + $0x18] sm:$0xff] %v4825
    %s4867 = scalar_lea.vmem [#allocation4], 96
    %4868 = vst [vmem:[%s4867] sm:$0xff] %v4826
    %4869 = vst [vmem:[%s4867 + $0x8] sm:$0xff] %v4827
    %4870 = vst [vmem:[%s4867 + $0x10] sm:$0xff] %v4828
    %4871 = vst [vmem:[%s4867 + $0x18] sm:$0xff] %v4829
    %s4872 = scalar_lea.vmem [#allocation5], 128
    %4873 = vst [vmem:[%s4872] sm:$0xff] %v4830
    %4874 = vst [vmem:[%s4872 + $0x8] sm:$0xff] %v4831
    %4875 = vst [vmem:[%s4872 + $0x10] sm:$0xff] %v4832
    %4876 = vst [vmem:[%s4872 + $0x18] sm:$0xff] %v4833
    %v4877 = vld [vmem:[#allocation5] sm:$0xff]
    %v4878 = vld [vmem:[#allocation5 + $0x8] sm:$0xff]
    %v4879 = vld [vmem:[#allocation5 + $0x10] sm:$0xff]
    %v4880 = vld [vmem:[#allocation5 + $0x18] sm:$0xff]
    %v4881 = vld [vmem:[#allocation5 + $0x20] sm:$0xff]
    %v4882 = vld [vmem:[#allocation5 + $0x28] sm:$0xff]
    %v4883 = vld [vmem:[#allocation5 + $0x30] sm:$0xff]
    %v4884 = vld [vmem:[#allocation5 + $0x38] sm:$0xff]
    %v4885 = vld [vmem:[#allocation5 + $0x40] sm:$0xff]
    %v4886 = vld [vmem:[#allocation5 + $0x48] sm:$0xff]
    %v4887 = vld [vmem:[#allocation5 + $0x50] sm:$0xff]
    %v4888 = vld [vmem:[#allocation5 + $0x58] sm:$0xff]
    %v4889 = vld [vmem:[#allocation5 + $0x60] sm:$0xff]
    %v4890 = vld [vmem:[#allocation5 + $0x68] sm:$0xff]
    %v4891 = vld [vmem:[#allocation5 + $0x70] sm:$0xff]
    %v4892 = vld [vmem:[#allocation5 + $0x78] sm:$0xff]
    %v4893 = vld [vmem:[#allocation4] sm:$0xff]
    %v4894 = vld [vmem:[#allocation4 + $0x8] sm:$0xff]
    %v4895 = vld [vmem:[#allocation4 + $0x10] sm:$0xff]
    %v4896 = vld [vmem:[#allocation4 + $0x18] sm:$0xff]
    %v4897 = vld [vmem:[#allocation4 + $0x20] sm:$0xff]
    %v4898 = vld [vmem:[#allocation4 + $0x28] sm:$0xff]
    %v4899 = vld [vmem:[#allocation4 + $0x30] sm:$0xff]
    %v4900 = vld [vmem:[#allocation4 + $0x38] sm:$0xff]
    %v4901 = vld [vmem:[#allocation4 + $0x40] sm:$0xff]
    %v4902 = vld [vmem:[#allocation4 + $0x48] sm:$0xff]
    %v4903 = vld [vmem:[#allocation4 + $0x50] sm:$0xff]
    %v4904 = vld [vmem:[#allocation4 + $0x58] sm:$0xff]
    %v4905 = vld [vmem:[#allocation4 + $0x60] sm:$0xff]
    %v4906 = vld [vmem:[#allocation4 + $0x68] sm:$0xff]
    %v4907 = vld [vmem:[#allocation4 + $0x70] sm:$0xff]
    %v4908 = vld [vmem:[#allocation4 + $0x78] sm:$0xff]
    %v4909 = vld [vmem:[%s4842] sm:$0xff]
    %v4910 = vld [vmem:[%s4842 + $0x8] sm:$0xff]
    %v4911 = vld [vmem:[%s4842 + $0x10] sm:$0xff]
    %v4912 = vld [vmem:[%s4842 + $0x18] sm:$0xff]
    %v4913 = vld [vmem:[%s4842 + $0x20] sm:$0xff]
    %v4914 = vld [vmem:[%s4842 + $0x28] sm:$0xff]
    %v4915 = vld [vmem:[%s4842 + $0x30] sm:$0xff]
    %v4916 = vld [vmem:[%s4842 + $0x38] sm:$0xff]
    %v4917 = vld [vmem:[%s4842 + $0x40] sm:$0xff]
    %v4918 = vld [vmem:[%s4842 + $0x48] sm:$0xff]
    %v4919 = vld [vmem:[%s4842 + $0x50] sm:$0xff]
    %v4920 = vld [vmem:[%s4842 + $0x58] sm:$0xff]
    %v4921 = vld [vmem:[%s4842 + $0x60] sm:$0xff]
    %v4922 = vld [vmem:[%s4842 + $0x68] sm:$0xff]
    %v4923 = vld [vmem:[%s4842 + $0x70] sm:$0xff]
    %v4924 = vld [vmem:[%s4842 + $0x78] sm:$0xff]
    %v4925 = vpack.c.bf16 %v4881, %v4877
    %v4926 = vpack.c.bf16 %v4882, %v4878
    %v4927 = vpack.c.bf16 %v4883, %v4879
    %v4928 = vpack.c.bf16 %v4884, %v4880
    %v4929 = vpack.c.bf16 %v4889, %v4885
    %v4930 = vpack.c.bf16 %v4890, %v4886
    %v4931 = vpack.c.bf16 %v4891, %v4887
    %v4932 = vpack.c.bf16 %v4892, %v4888
    %v4933 = vld [vmem:[#allocation13] sm:$0xff]
    %v4934 = vld [vmem:[#allocation13 + $0x8] sm:$0xff]
    %v4935 = vld [vmem:[#allocation13 + $0x10] sm:$0xff]
    %v4936 = vld [vmem:[#allocation13 + $0x18] sm:$0xff]
    %v4937 = vld [vmem:[#allocation13 + $0x20] sm:$0xff]
    %v4938 = vld [vmem:[#allocation13 + $0x28] sm:$0xff]
    %v4939 = vld [vmem:[#allocation13 + $0x30] sm:$0xff]
    %v4940 = vld [vmem:[#allocation13 + $0x38] sm:$0xff]
    %v4941 = vld [vmem:[#allocation13 + $0x40] sm:$0xff]
    %v4942 = vld [vmem:[#allocation13 + $0x48] sm:$0xff]
    %v4943 = vld [vmem:[#allocation13 + $0x50] sm:$0xff]
    %v4944 = vld [vmem:[#allocation13 + $0x58] sm:$0xff]
    %v4945 = vld [vmem:[#allocation13 + $0x60] sm:$0xff]
    %v4946 = vld [vmem:[#allocation13 + $0x68] sm:$0xff]
    %v4947 = vld [vmem:[#allocation13 + $0x70] sm:$0xff]
    %v4948 = vld [vmem:[#allocation13 + $0x78] sm:$0xff]
    %v4949 = vld [vmem:[#allocation13 + $0x80] sm:$0xff]
    %v4950 = vld [vmem:[#allocation13 + $0x88] sm:$0xff]
    %v4951 = vld [vmem:[#allocation13 + $0x90] sm:$0xff]
    %v4952 = vld [vmem:[#allocation13 + $0x98] sm:$0xff]
    %v4953 = vld [vmem:[#allocation13 + $0xa0] sm:$0xff]
    %v4954 = vld [vmem:[#allocation13 + $0xa8] sm:$0xff]
    %v4955 = vld [vmem:[#allocation13 + $0xb0] sm:$0xff]
    %v4956 = vld [vmem:[#allocation13 + $0xb8] sm:$0xff]
    %v4957 = vld [vmem:[#allocation13 + $0xc0] sm:$0xff]
    %v4958 = vld [vmem:[#allocation13 + $0xc8] sm:$0xff]
    %v4959 = vld [vmem:[#allocation13 + $0xd0] sm:$0xff]
    %v4960 = vld [vmem:[#allocation13 + $0xd8] sm:$0xff]
    %v4961 = vld [vmem:[#allocation13 + $0xe0] sm:$0xff]
    %v4962 = vld [vmem:[#allocation13 + $0xe8] sm:$0xff]
    %v4963 = vld [vmem:[#allocation13 + $0xf0] sm:$0xff]
    %v4964 = vld [vmem:[#allocation13 + $0xf8] sm:$0xff]
    %v4965 = vld [vmem:[#allocation13 + $0x100] sm:$0xff]
    %v4966 = vld [vmem:[#allocation13 + $0x108] sm:$0xff]
    %v4967 = vld [vmem:[#allocation13 + $0x110] sm:$0xff]
    %v4968 = vld [vmem:[#allocation13 + $0x118] sm:$0xff]
    %v4969 = vld [vmem:[#allocation13 + $0x120] sm:$0xff]
    %v4970 = vld [vmem:[#allocation13 + $0x128] sm:$0xff]
    %v4971 = vld [vmem:[#allocation13 + $0x130] sm:$0xff]
    %v4972 = vld [vmem:[#allocation13 + $0x138] sm:$0xff]
    %v4973 = vld [vmem:[#allocation13 + $0x140] sm:$0xff]
    %v4974 = vld [vmem:[#allocation13 + $0x148] sm:$0xff]
    %v4975 = vld [vmem:[#allocation13 + $0x150] sm:$0xff]
    %v4976 = vld [vmem:[#allocation13 + $0x158] sm:$0xff]
    %v4977 = vld [vmem:[#allocation13 + $0x160] sm:$0xff]
    %v4978 = vld [vmem:[#allocation13 + $0x168] sm:$0xff]
    %v4979 = vld [vmem:[#allocation13 + $0x170] sm:$0xff]
    %v4980 = vld [vmem:[#allocation13 + $0x178] sm:$0xff]
    %v4981 = vld [vmem:[#allocation13 + $0x180] sm:$0xff]
    %v4982 = vld [vmem:[#allocation13 + $0x188] sm:$0xff]
    %v4983 = vld [vmem:[#allocation13 + $0x190] sm:$0xff]
    %v4984 = vld [vmem:[#allocation13 + $0x198] sm:$0xff]
    %v4985 = vld [vmem:[#allocation13 + $0x1a0] sm:$0xff]
    %v4986 = vld [vmem:[#allocation13 + $0x1a8] sm:$0xff]
    %v4987 = vld [vmem:[#allocation13 + $0x1b0] sm:$0xff]
    %v4988 = vld [vmem:[#allocation13 + $0x1b8] sm:$0xff]
    %v4989 = vld [vmem:[#allocation13 + $0x1c0] sm:$0xff]
    %v4990 = vld [vmem:[#allocation13 + $0x1c8] sm:$0xff]
    %v4991 = vld [vmem:[#allocation13 + $0x1d0] sm:$0xff]
    %v4992 = vld [vmem:[#allocation13 + $0x1d8] sm:$0xff]
    %v4993 = vld [vmem:[#allocation13 + $0x1e0] sm:$0xff]
    %v4994 = vld [vmem:[#allocation13 + $0x1e8] sm:$0xff]
    %v4995 = vld [vmem:[#allocation13 + $0x1f0] sm:$0xff]
    %v4996 = vld [vmem:[#allocation13 + $0x1f8] sm:$0xff]
    %v4997 = vld [vmem:[#allocation13 + $0x200] sm:$0xff]
    %v4998 = vld [vmem:[#allocation13 + $0x208] sm:$0xff]
    %v4999 = vld [vmem:[#allocation13 + $0x210] sm:$0xff]
    %v5000 = vld [vmem:[#allocation13 + $0x218] sm:$0xff]
    %v5001 = vld [vmem:[#allocation13 + $0x220] sm:$0xff]
    %v5002 = vld [vmem:[#allocation13 + $0x228] sm:$0xff]
    %v5003 = vld [vmem:[#allocation13 + $0x230] sm:$0xff]
    %v5004 = vld [vmem:[#allocation13 + $0x238] sm:$0xff]
    %v5005 = vld [vmem:[#allocation13 + $0x240] sm:$0xff]
    %v5006 = vld [vmem:[#allocation13 + $0x248] sm:$0xff]
    %v5007 = vld [vmem:[#allocation13 + $0x250] sm:$0xff]
    %v5008 = vld [vmem:[#allocation13 + $0x258] sm:$0xff]
    %v5009 = vld [vmem:[#allocation13 + $0x260] sm:$0xff]
    %v5010 = vld [vmem:[#allocation13 + $0x268] sm:$0xff]
    %v5011 = vld [vmem:[#allocation13 + $0x270] sm:$0xff]
    %v5012 = vld [vmem:[#allocation13 + $0x278] sm:$0xff]
    %v5013 = vld [vmem:[#allocation13 + $0x280] sm:$0xff]
    %v5014 = vld [vmem:[#allocation13 + $0x288] sm:$0xff]
    %v5015 = vld [vmem:[#allocation13 + $0x290] sm:$0xff]
    %v5016 = vld [vmem:[#allocation13 + $0x298] sm:$0xff]
    %v5017 = vld [vmem:[#allocation13 + $0x2a0] sm:$0xff]
    %v5018 = vld [vmem:[#allocation13 + $0x2a8] sm:$0xff]
    %v5019 = vld [vmem:[#allocation13 + $0x2b0] sm:$0xff]
    %v5020 = vld [vmem:[#allocation13 + $0x2b8] sm:$0xff]
    %v5021 = vld [vmem:[#allocation13 + $0x2c0] sm:$0xff]
    %v5022 = vld [vmem:[#allocation13 + $0x2c8] sm:$0xff]
    %v5023 = vld [vmem:[#allocation13 + $0x2d0] sm:$0xff]
    %v5024 = vld [vmem:[#allocation13 + $0x2d8] sm:$0xff]
    %v5025 = vld [vmem:[#allocation13 + $0x2e0] sm:$0xff]
    %v5026 = vld [vmem:[#allocation13 + $0x2e8] sm:$0xff]
    %v5027 = vld [vmem:[#allocation13 + $0x2f0] sm:$0xff]
    %v5028 = vld [vmem:[#allocation13 + $0x2f8] sm:$0xff]
    %v5029 = vld [vmem:[#allocation13 + $0x300] sm:$0xff]
    %v5030 = vld [vmem:[#allocation13 + $0x308] sm:$0xff]
    %v5031 = vld [vmem:[#allocation13 + $0x310] sm:$0xff]
    %v5032 = vld [vmem:[#allocation13 + $0x318] sm:$0xff]
    %v5033 = vld [vmem:[#allocation13 + $0x320] sm:$0xff]
    %v5034 = vld [vmem:[#allocation13 + $0x328] sm:$0xff]
    %v5035 = vld [vmem:[#allocation13 + $0x330] sm:$0xff]
    %v5036 = vld [vmem:[#allocation13 + $0x338] sm:$0xff]
    %v5037 = vld [vmem:[#allocation13 + $0x340] sm:$0xff]
    %v5038 = vld [vmem:[#allocation13 + $0x348] sm:$0xff]
    %v5039 = vld [vmem:[#allocation13 + $0x350] sm:$0xff]
    %v5040 = vld [vmem:[#allocation13 + $0x358] sm:$0xff]
    %v5041 = vld [vmem:[#allocation13 + $0x360] sm:$0xff]
    %v5042 = vld [vmem:[#allocation13 + $0x368] sm:$0xff]
    %v5043 = vld [vmem:[#allocation13 + $0x370] sm:$0xff]
    %v5044 = vld [vmem:[#allocation13 + $0x378] sm:$0xff]
    %v5045 = vld [vmem:[#allocation13 + $0x380] sm:$0xff]
    %v5046 = vld [vmem:[#allocation13 + $0x388] sm:$0xff]
    %v5047 = vld [vmem:[#allocation13 + $0x390] sm:$0xff]
    %v5048 = vld [vmem:[#allocation13 + $0x398] sm:$0xff]
    %v5049 = vld [vmem:[#allocation13 + $0x3a0] sm:$0xff]
    %v5050 = vld [vmem:[#allocation13 + $0x3a8] sm:$0xff]
    %v5051 = vld [vmem:[#allocation13 + $0x3b0] sm:$0xff]
    %v5052 = vld [vmem:[#allocation13 + $0x3b8] sm:$0xff]
    %v5053 = vld [vmem:[#allocation13 + $0x3c0] sm:$0xff]
    %v5054 = vld [vmem:[#allocation13 + $0x3c8] sm:$0xff]
    %v5055 = vld [vmem:[#allocation13 + $0x3d0] sm:$0xff]
    %v5056 = vld [vmem:[#allocation13 + $0x3d8] sm:$0xff]
    %v5057 = vld [vmem:[#allocation13 + $0x3e0] sm:$0xff]
    %v5058 = vld [vmem:[#allocation13 + $0x3e8] sm:$0xff]
    %v5059 = vld [vmem:[#allocation13 + $0x3f0] sm:$0xff]
    %v5060 = vld [vmem:[#allocation13 + $0x3f8] sm:$0xff]
    %v5061 = vpack.c.bf16 %v4897, %v4893
    %v5062 = vpack.c.bf16 %v4898, %v4894
    %v5063 = vpack.c.bf16 %v4899, %v4895
    %v5064 = vpack.c.bf16 %v4900, %v4896
    %v5065 = vpack.c.bf16 %v4905, %v4901
    %v5066 = vpack.c.bf16 %v4906, %v4902
    %v5067 = vpack.c.bf16 %v4907, %v4903
    %v5068 = vpack.c.bf16 %v4908, %v4904
    %s5069 = scalar_lea.vmem [#allocation13], 1024
    %v5070 = vld [vmem:[%s5069] sm:$0xff]
    %v5071 = vld [vmem:[%s5069 + $0x8] sm:$0xff]
    %v5072 = vld [vmem:[%s5069 + $0x10] sm:$0xff]
    %v5073 = vld [vmem:[%s5069 + $0x18] sm:$0xff]
    %v5074 = vld [vmem:[%s5069 + $0x20] sm:$0xff]
    %v5075 = vld [vmem:[%s5069 + $0x28] sm:$0xff]
    %v5076 = vld [vmem:[%s5069 + $0x30] sm:$0xff]
    %v5077 = vld [vmem:[%s5069 + $0x38] sm:$0xff]
    %v5078 = vld [vmem:[%s5069 + $0x40] sm:$0xff]
    %v5079 = vld [vmem:[%s5069 + $0x48] sm:$0xff]
    %v5080 = vld [vmem:[%s5069 + $0x50] sm:$0xff]
    %v5081 = vld [vmem:[%s5069 + $0x58] sm:$0xff]
    %v5082 = vld [vmem:[%s5069 + $0x60] sm:$0xff]
    %v5083 = vld [vmem:[%s5069 + $0x68] sm:$0xff]
    %v5084 = vld [vmem:[%s5069 + $0x70] sm:$0xff]
    %v5085 = vld [vmem:[%s5069 + $0x78] sm:$0xff]
    %v5086 = vld [vmem:[%s5069 + $0x80] sm:$0xff]
    %v5087 = vld [vmem:[%s5069 + $0x88] sm:$0xff]
    %v5088 = vld [vmem:[%s5069 + $0x90] sm:$0xff]
    %v5089 = vld [vmem:[%s5069 + $0x98] sm:$0xff]
    %v5090 = vld [vmem:[%s5069 + $0xa0] sm:$0xff]
    %v5091 = vld [vmem:[%s5069 + $0xa8] sm:$0xff]
    %v5092 = vld [vmem:[%s5069 + $0xb0] sm:$0xff]
    %v5093 = vld [vmem:[%s5069 + $0xb8] sm:$0xff]
    %v5094 = vld [vmem:[%s5069 + $0xc0] sm:$0xff]
    %v5095 = vld [vmem:[%s5069 + $0xc8] sm:$0xff]
    %v5096 = vld [vmem:[%s5069 + $0xd0] sm:$0xff]
    %v5097 = vld [vmem:[%s5069 + $0xd8] sm:$0xff]
    %v5098 = vld [vmem:[%s5069 + $0xe0] sm:$0xff]
    %v5099 = vld [vmem:[%s5069 + $0xe8] sm:$0xff]
    %v5100 = vld [vmem:[%s5069 + $0xf0] sm:$0xff]
    %v5101 = vld [vmem:[%s5069 + $0xf8] sm:$0xff]
    %v5102 = vld [vmem:[%s5069 + $0x100] sm:$0xff]
    %v5103 = vld [vmem:[%s5069 + $0x108] sm:$0xff]
    %v5104 = vld [vmem:[%s5069 + $0x110] sm:$0xff]
    %v5105 = vld [vmem:[%s5069 + $0x118] sm:$0xff]
    %v5106 = vld [vmem:[%s5069 + $0x120] sm:$0xff]
    %v5107 = vld [vmem:[%s5069 + $0x128] sm:$0xff]
    %v5108 = vld [vmem:[%s5069 + $0x130] sm:$0xff]
    %v5109 = vld [vmem:[%s5069 + $0x138] sm:$0xff]
    %v5110 = vld [vmem:[%s5069 + $0x140] sm:$0xff]
    %v5111 = vld [vmem:[%s5069 + $0x148] sm:$0xff]
    %v5112 = vld [vmem:[%s5069 + $0x150] sm:$0xff]
    %v5113 = vld [vmem:[%s5069 + $0x158] sm:$0xff]
    %v5114 = vld [vmem:[%s5069 + $0x160] sm:$0xff]
    %v5115 = vld [vmem:[%s5069 + $0x168] sm:$0xff]
    %v5116 = vld [vmem:[%s5069 + $0x170] sm:$0xff]
    %v5117 = vld [vmem:[%s5069 + $0x178] sm:$0xff]
    %v5118 = vld [vmem:[%s5069 + $0x180] sm:$0xff]
    %v5119 = vld [vmem:[%s5069 + $0x188] sm:$0xff]
    %v5120 = vld [vmem:[%s5069 + $0x190] sm:$0xff]
    %v5121 = vld [vmem:[%s5069 + $0x198] sm:$0xff]
    %v5122 = vld [vmem:[%s5069 + $0x1a0] sm:$0xff]
    %v5123 = vld [vmem:[%s5069 + $0x1a8] sm:$0xff]
    %v5124 = vld [vmem:[%s5069 + $0x1b0] sm:$0xff]
    %v5125 = vld [vmem:[%s5069 + $0x1b8] sm:$0xff]
    %v5126 = vld [vmem:[%s5069 + $0x1c0] sm:$0xff]
    %v5127 = vld [vmem:[%s5069 + $0x1c8] sm:$0xff]
    %v5128 = vld [vmem:[%s5069 + $0x1d0] sm:$0xff]
    %v5129 = vld [vmem:[%s5069 + $0x1d8] sm:$0xff]
    %v5130 = vld [vmem:[%s5069 + $0x1e0] sm:$0xff]
    %v5131 = vld [vmem:[%s5069 + $0x1e8] sm:$0xff]
    %v5132 = vld [vmem:[%s5069 + $0x1f0] sm:$0xff]
    %v5133 = vld [vmem:[%s5069 + $0x1f8] sm:$0xff]
    %v5134 = vld [vmem:[%s5069 + $0x200] sm:$0xff]
    %v5135 = vld [vmem:[%s5069 + $0x208] sm:$0xff]
    %v5136 = vld [vmem:[%s5069 + $0x210] sm:$0xff]
    %v5137 = vld [vmem:[%s5069 + $0x218] sm:$0xff]
    %v5138 = vld [vmem:[%s5069 + $0x220] sm:$0xff]
    %v5139 = vld [vmem:[%s5069 + $0x228] sm:$0xff]
    %v5140 = vld [vmem:[%s5069 + $0x230] sm:$0xff]
    %v5141 = vld [vmem:[%s5069 + $0x238] sm:$0xff]
    %v5142 = vld [vmem:[%s5069 + $0x240] sm:$0xff]
    %v5143 = vld [vmem:[%s5069 + $0x248] sm:$0xff]
    %v5144 = vld [vmem:[%s5069 + $0x250] sm:$0xff]
    %v5145 = vld [vmem:[%s5069 + $0x258] sm:$0xff]
    %v5146 = vld [vmem:[%s5069 + $0x260] sm:$0xff]
    %v5147 = vld [vmem:[%s5069 + $0x268] sm:$0xff]
    %v5148 = vld [vmem:[%s5069 + $0x270] sm:$0xff]
    %v5149 = vld [vmem:[%s5069 + $0x278] sm:$0xff]
    %v5150 = vld [vmem:[%s5069 + $0x280] sm:$0xff]
    %v5151 = vld [vmem:[%s5069 + $0x288] sm:$0xff]
    %v5152 = vld [vmem:[%s5069 + $0x290] sm:$0xff]
    %v5153 = vld [vmem:[%s5069 + $0x298] sm:$0xff]
    %v5154 = vld [vmem:[%s5069 + $0x2a0] sm:$0xff]
    %v5155 = vld [vmem:[%s5069 + $0x2a8] sm:$0xff]
    %v5156 = vld [vmem:[%s5069 + $0x2b0] sm:$0xff]
    %v5157 = vld [vmem:[%s5069 + $0x2b8] sm:$0xff]
    %v5158 = vld [vmem:[%s5069 + $0x2c0] sm:$0xff]
    %v5159 = vld [vmem:[%s5069 + $0x2c8] sm:$0xff]
    %v5160 = vld [vmem:[%s5069 + $0x2d0] sm:$0xff]
    %v5161 = vld [vmem:[%s5069 + $0x2d8] sm:$0xff]
    %v5162 = vld [vmem:[%s5069 + $0x2e0] sm:$0xff]
    %v5163 = vld [vmem:[%s5069 + $0x2e8] sm:$0xff]
    %v5164 = vld [vmem:[%s5069 + $0x2f0] sm:$0xff]
    %v5165 = vld [vmem:[%s5069 + $0x2f8] sm:$0xff]
    %v5166 = vld [vmem:[%s5069 + $0x300] sm:$0xff]
    %v5167 = vld [vmem:[%s5069 + $0x308] sm:$0xff]
    %v5168 = vld [vmem:[%s5069 + $0x310] sm:$0xff]
    %v5169 = vld [vmem:[%s5069 + $0x318] sm:$0xff]
    %v5170 = vld [vmem:[%s5069 + $0x320] sm:$0xff]
    %v5171 = vld [vmem:[%s5069 + $0x328] sm:$0xff]
    %v5172 = vld [vmem:[%s5069 + $0x330] sm:$0xff]
    %v5173 = vld [vmem:[%s5069 + $0x338] sm:$0xff]
    %v5174 = vld [vmem:[%s5069 + $0x340] sm:$0xff]
    %v5175 = vld [vmem:[%s5069 + $0x348] sm:$0xff]
    %v5176 = vld [vmem:[%s5069 + $0x350] sm:$0xff]
    %v5177 = vld [vmem:[%s5069 + $0x358] sm:$0xff]
    %v5178 = vld [vmem:[%s5069 + $0x360] sm:$0xff]
    %v5179 = vld [vmem:[%s5069 + $0x368] sm:$0xff]
    %v5180 = vld [vmem:[%s5069 + $0x370] sm:$0xff]
    %v5181 = vld [vmem:[%s5069 + $0x378] sm:$0xff]
    %v5182 = vld [vmem:[%s5069 + $0x380] sm:$0xff]
    %v5183 = vld [vmem:[%s5069 + $0x388] sm:$0xff]
    %v5184 = vld [vmem:[%s5069 + $0x390] sm:$0xff]
    %v5185 = vld [vmem:[%s5069 + $0x398] sm:$0xff]
    %v5186 = vld [vmem:[%s5069 + $0x3a0] sm:$0xff]
    %v5187 = vld [vmem:[%s5069 + $0x3a8] sm:$0xff]
    %v5188 = vld [vmem:[%s5069 + $0x3b0] sm:$0xff]
    %v5189 = vld [vmem:[%s5069 + $0x3b8] sm:$0xff]
    %v5190 = vld [vmem:[%s5069 + $0x3c0] sm:$0xff]
    %v5191 = vld [vmem:[%s5069 + $0x3c8] sm:$0xff]
    %v5192 = vld [vmem:[%s5069 + $0x3d0] sm:$0xff]
    %v5193 = vld [vmem:[%s5069 + $0x3d8] sm:$0xff]
    %v5194 = vld [vmem:[%s5069 + $0x3e0] sm:$0xff]
    %v5195 = vld [vmem:[%s5069 + $0x3e8] sm:$0xff]
    %v5196 = vld [vmem:[%s5069 + $0x3f0] sm:$0xff]
    %v5197 = vld [vmem:[%s5069 + $0x3f8] sm:$0xff]
    %v5326 = vunpack.c.l.b16 %v5070
    %v5327 = vunpack.c.h.b16 %v5070
    %v5328 = vunpack.c.l.b16 %v5071
    %v5329 = vunpack.c.h.b16 %v5071
    %v5330 = vunpack.c.l.b16 %v5072
    %v5331 = vunpack.c.h.b16 %v5072
    %v5332 = vunpack.c.l.b16 %v5073
    %v5333 = vunpack.c.h.b16 %v5073
    %v5334 = vunpack.c.l.b16 %v5074
    %v5335 = vunpack.c.h.b16 %v5074
    %v5336 = vunpack.c.l.b16 %v5075
    %v5337 = vunpack.c.h.b16 %v5075
    %v5338 = vunpack.c.l.b16 %v5076
    %v5339 = vunpack.c.h.b16 %v5076
    %v5340 = vunpack.c.l.b16 %v5077
    %v5341 = vunpack.c.h.b16 %v5077
    %v5342 = vunpack.c.l.b16 %v5078
    %v5343 = vunpack.c.h.b16 %v5078
    %v5344 = vunpack.c.l.b16 %v5079
    %v5345 = vunpack.c.h.b16 %v5079
    %v5346 = vunpack.c.l.b16 %v5080
    %v5347 = vunpack.c.h.b16 %v5080
    %v5348 = vunpack.c.l.b16 %v5081
    %v5349 = vunpack.c.h.b16 %v5081
    %v5350 = vunpack.c.l.b16 %v5082
    %v5351 = vunpack.c.h.b16 %v5082
    %v5352 = vunpack.c.l.b16 %v5083
    %v5353 = vunpack.c.h.b16 %v5083
    %v5354 = vunpack.c.l.b16 %v5084
    %v5355 = vunpack.c.h.b16 %v5084
    %v5356 = vunpack.c.l.b16 %v5085
    %v5357 = vunpack.c.h.b16 %v5085
    %v5358 = vunpack.c.l.b16 %v5086
    %v5359 = vunpack.c.h.b16 %v5086
    %v5360 = vunpack.c.l.b16 %v5087
    %v5361 = vunpack.c.h.b16 %v5087
    %v5362 = vunpack.c.l.b16 %v5088
    %v5363 = vunpack.c.h.b16 %v5088
    %v5364 = vunpack.c.l.b16 %v5089
    %v5365 = vunpack.c.h.b16 %v5089
    %v5366 = vunpack.c.l.b16 %v5090
    %v5367 = vunpack.c.h.b16 %v5090
    %v5368 = vunpack.c.l.b16 %v5091
    %v5369 = vunpack.c.h.b16 %v5091
    %v5370 = vunpack.c.l.b16 %v5092
    %v5371 = vunpack.c.h.b16 %v5092
    %v5372 = vunpack.c.l.b16 %v5093
    %v5373 = vunpack.c.h.b16 %v5093
    %v5374 = vunpack.c.l.b16 %v5094
    %v5375 = vunpack.c.h.b16 %v5094
    %v5376 = vunpack.c.l.b16 %v5095
    %v5377 = vunpack.c.h.b16 %v5095
    %v5378 = vunpack.c.l.b16 %v5096
    %v5379 = vunpack.c.h.b16 %v5096
    %v5380 = vunpack.c.l.b16 %v5097
    %v5381 = vunpack.c.h.b16 %v5097
    %v5382 = vunpack.c.l.b16 %v5098
    %v5383 = vunpack.c.h.b16 %v5098
    %v5384 = vunpack.c.l.b16 %v5099
    %v5385 = vunpack.c.h.b16 %v5099
    %v5386 = vunpack.c.l.b16 %v5100
    %v5387 = vunpack.c.h.b16 %v5100
    %v5388 = vunpack.c.l.b16 %v5101
    %v5389 = vunpack.c.h.b16 %v5101
    %v5390 = vunpack.c.l.b16 %v5102
    %v5391 = vunpack.c.h.b16 %v5102
    %v5392 = vunpack.c.l.b16 %v5103
    %v5393 = vunpack.c.h.b16 %v5103
    %v5394 = vunpack.c.l.b16 %v5104
    %v5395 = vunpack.c.h.b16 %v5104
    %v5396 = vunpack.c.l.b16 %v5105
    %v5397 = vunpack.c.h.b16 %v5105
    %v5398 = vunpack.c.l.b16 %v5106
    %v5399 = vunpack.c.h.b16 %v5106
    %v5400 = vunpack.c.l.b16 %v5107
    %v5401 = vunpack.c.h.b16 %v5107
    %v5402 = vunpack.c.l.b16 %v5108
    %v5403 = vunpack.c.h.b16 %v5108
    %v5404 = vunpack.c.l.b16 %v5109
    %v5405 = vunpack.c.h.b16 %v5109
    %v5406 = vunpack.c.l.b16 %v5110
    %v5407 = vunpack.c.h.b16 %v5110
    %v5408 = vunpack.c.l.b16 %v5111
    %v5409 = vunpack.c.h.b16 %v5111
    %v5410 = vunpack.c.l.b16 %v5112
    %v5411 = vunpack.c.h.b16 %v5112
    %v5412 = vunpack.c.l.b16 %v5113
    %v5413 = vunpack.c.h.b16 %v5113
    %v5414 = vunpack.c.l.b16 %v5114
    %v5415 = vunpack.c.h.b16 %v5114
    %v5416 = vunpack.c.l.b16 %v5115
    %v5417 = vunpack.c.h.b16 %v5115
    %v5418 = vunpack.c.l.b16 %v5116
    %v5419 = vunpack.c.h.b16 %v5116
    %v5420 = vunpack.c.l.b16 %v5117
    %v5421 = vunpack.c.h.b16 %v5117
    %v5422 = vunpack.c.l.b16 %v5118
    %v5423 = vunpack.c.h.b16 %v5118
    %v5424 = vunpack.c.l.b16 %v5119
    %v5425 = vunpack.c.h.b16 %v5119
    %v5426 = vunpack.c.l.b16 %v5120
    %v5427 = vunpack.c.h.b16 %v5120
    %v5428 = vunpack.c.l.b16 %v5121
    %v5429 = vunpack.c.h.b16 %v5121
    %v5430 = vunpack.c.l.b16 %v5122
    %v5431 = vunpack.c.h.b16 %v5122
    %v5432 = vunpack.c.l.b16 %v5123
    %v5433 = vunpack.c.h.b16 %v5123
    %v5434 = vunpack.c.l.b16 %v5124
    %v5435 = vunpack.c.h.b16 %v5124
    %v5436 = vunpack.c.l.b16 %v5125
    %v5437 = vunpack.c.h.b16 %v5125
    %v5438 = vunpack.c.l.b16 %v5126
    %v5439 = vunpack.c.h.b16 %v5126
    %v5440 = vunpack.c.l.b16 %v5127
    %v5441 = vunpack.c.h.b16 %v5127
    %v5442 = vunpack.c.l.b16 %v5128
    %v5443 = vunpack.c.h.b16 %v5128
    %v5444 = vunpack.c.l.b16 %v5129
    %v5445 = vunpack.c.h.b16 %v5129
    %v5446 = vunpack.c.l.b16 %v5130
    %v5447 = vunpack.c.h.b16 %v5130
    %v5448 = vunpack.c.l.b16 %v5131
    %v5449 = vunpack.c.h.b16 %v5131
    %v5450 = vunpack.c.l.b16 %v5132
    %v5451 = vunpack.c.h.b16 %v5132
    %v5452 = vunpack.c.l.b16 %v5133
    %v5453 = vunpack.c.h.b16 %v5133
    %v5454 = vunpack.c.l.b16 %v5134
    %v5455 = vunpack.c.h.b16 %v5134
    %v5456 = vunpack.c.l.b16 %v5135
    %v5457 = vunpack.c.h.b16 %v5135
    %v5458 = vunpack.c.l.b16 %v5136
    %v5459 = vunpack.c.h.b16 %v5136
    %v5460 = vunpack.c.l.b16 %v5137
    %v5461 = vunpack.c.h.b16 %v5137
    %v5462 = vunpack.c.l.b16 %v5138
    %v5463 = vunpack.c.h.b16 %v5138
    %v5464 = vunpack.c.l.b16 %v5139
    %v5465 = vunpack.c.h.b16 %v5139
    %v5466 = vunpack.c.l.b16 %v5140
    %v5467 = vunpack.c.h.b16 %v5140
    %v5468 = vunpack.c.l.b16 %v5141
    %v5469 = vunpack.c.h.b16 %v5141
    %v5470 = vunpack.c.l.b16 %v5142
    %v5471 = vunpack.c.h.b16 %v5142
    %v5472 = vunpack.c.l.b16 %v5143
    %v5473 = vunpack.c.h.b16 %v5143
    %v5474 = vunpack.c.l.b16 %v5144
    %v5475 = vunpack.c.h.b16 %v5144
    %v5476 = vunpack.c.l.b16 %v5145
    %v5477 = vunpack.c.h.b16 %v5145
    %v5478 = vunpack.c.l.b16 %v5146
    %v5479 = vunpack.c.h.b16 %v5146
    %v5480 = vunpack.c.l.b16 %v5147
    %v5481 = vunpack.c.h.b16 %v5147
    %v5482 = vunpack.c.l.b16 %v5148
    %v5483 = vunpack.c.h.b16 %v5148
    %v5484 = vunpack.c.l.b16 %v5149
    %v5485 = vunpack.c.h.b16 %v5149
    %v5486 = vunpack.c.l.b16 %v5150
    %v5487 = vunpack.c.h.b16 %v5150
    %v5488 = vunpack.c.l.b16 %v5151
    %v5489 = vunpack.c.h.b16 %v5151
    %v5490 = vunpack.c.l.b16 %v5152
    %v5491 = vunpack.c.h.b16 %v5152
    %v5492 = vunpack.c.l.b16 %v5153
    %v5493 = vunpack.c.h.b16 %v5153
    %v5494 = vunpack.c.l.b16 %v5154
    %v5495 = vunpack.c.h.b16 %v5154
    %v5496 = vunpack.c.l.b16 %v5155
    %v5497 = vunpack.c.h.b16 %v5155
    %v5498 = vunpack.c.l.b16 %v5156
    %v5499 = vunpack.c.h.b16 %v5156
    %v5500 = vunpack.c.l.b16 %v5157
    %v5501 = vunpack.c.h.b16 %v5157
    %v5502 = vunpack.c.l.b16 %v5158
    %v5503 = vunpack.c.h.b16 %v5158
    %v5504 = vunpack.c.l.b16 %v5159
    %v5505 = vunpack.c.h.b16 %v5159
    %v5506 = vunpack.c.l.b16 %v5160
    %v5507 = vunpack.c.h.b16 %v5160
    %v5508 = vunpack.c.l.b16 %v5161
    %v5509 = vunpack.c.h.b16 %v5161
    %v5510 = vunpack.c.l.b16 %v5162
    %v5511 = vunpack.c.h.b16 %v5162
    %v5512 = vunpack.c.l.b16 %v5163
    %v5513 = vunpack.c.h.b16 %v5163
    %v5514 = vunpack.c.l.b16 %v5164
    %v5515 = vunpack.c.h.b16 %v5164
    %v5516 = vunpack.c.l.b16 %v5165
    %v5517 = vunpack.c.h.b16 %v5165
    %v5518 = vunpack.c.l.b16 %v5166
    %v5519 = vunpack.c.h.b16 %v5166
    %v5520 = vunpack.c.l.b16 %v5167
    %v5521 = vunpack.c.h.b16 %v5167
    %v5522 = vunpack.c.l.b16 %v5168
    %v5523 = vunpack.c.h.b16 %v5168
    %v5524 = vunpack.c.l.b16 %v5169
    %v5525 = vunpack.c.h.b16 %v5169
    %v5526 = vunpack.c.l.b16 %v5170
    %v5527 = vunpack.c.h.b16 %v5170
    %v5528 = vunpack.c.l.b16 %v5171
    %v5529 = vunpack.c.h.b16 %v5171
    %v5530 = vunpack.c.l.b16 %v5172
    %v5531 = vunpack.c.h.b16 %v5172
    %v5532 = vunpack.c.l.b16 %v5173
    %v5533 = vunpack.c.h.b16 %v5173
    %v5534 = vunpack.c.l.b16 %v5174
    %v5535 = vunpack.c.h.b16 %v5174
    %v5536 = vunpack.c.l.b16 %v5175
    %v5537 = vunpack.c.h.b16 %v5175
    %v5538 = vunpack.c.l.b16 %v5176
    %v5539 = vunpack.c.h.b16 %v5176
    %v5540 = vunpack.c.l.b16 %v5177
    %v5541 = vunpack.c.h.b16 %v5177
    %v5542 = vunpack.c.l.b16 %v5178
    %v5543 = vunpack.c.h.b16 %v5178
    %v5544 = vunpack.c.l.b16 %v5179
    %v5545 = vunpack.c.h.b16 %v5179
    %v5546 = vunpack.c.l.b16 %v5180
    %v5547 = vunpack.c.h.b16 %v5180
    %v5548 = vunpack.c.l.b16 %v5181
    %v5549 = vunpack.c.h.b16 %v5181
    %v5550 = vunpack.c.l.b16 %v5182
    %v5551 = vunpack.c.h.b16 %v5182
    %v5552 = vunpack.c.l.b16 %v5183
    %v5553 = vunpack.c.h.b16 %v5183
    %v5554 = vunpack.c.l.b16 %v5184
    %v5555 = vunpack.c.h.b16 %v5184
    %v5556 = vunpack.c.l.b16 %v5185
    %v5557 = vunpack.c.h.b16 %v5185
    %v5558 = vunpack.c.l.b16 %v5186
    %v5559 = vunpack.c.h.b16 %v5186
    %v5560 = vunpack.c.l.b16 %v5187
    %v5561 = vunpack.c.h.b16 %v5187
    %v5562 = vunpack.c.l.b16 %v5188
    %v5563 = vunpack.c.h.b16 %v5188
    %v5564 = vunpack.c.l.b16 %v5189
    %v5565 = vunpack.c.h.b16 %v5189
    %v5566 = vunpack.c.l.b16 %v5190
    %v5567 = vunpack.c.h.b16 %v5190
    %v5568 = vunpack.c.l.b16 %v5191
    %v5569 = vunpack.c.h.b16 %v5191
    %v5570 = vunpack.c.l.b16 %v5192
    %v5571 = vunpack.c.h.b16 %v5192
    %v5572 = vunpack.c.l.b16 %v5193
    %v5573 = vunpack.c.h.b16 %v5193
    %v5574 = vunpack.c.l.b16 %v5194
    %v5575 = vunpack.c.h.b16 %v5194
    %v5576 = vunpack.c.l.b16 %v5195
    %v5577 = vunpack.c.h.b16 %v5195
    %v5578 = vunpack.c.l.b16 %v5196
    %v5579 = vunpack.c.h.b16 %v5196
    %v5580 = vunpack.c.l.b16 %v5197
    %v5581 = vunpack.c.h.b16 %v5197
    %v5582 = vpack.c.b16 %v5330, %v5326
    %v5583 = vpack.c.b16 %v5331, %v5327
    %v5584 = vpack.c.b16 %v5332, %v5328
    %v5585 = vpack.c.b16 %v5333, %v5329
    %v5586 = vpack.c.b16 %v5338, %v5334
    %v5587 = vpack.c.b16 %v5339, %v5335
    %v5588 = vpack.c.b16 %v5340, %v5336
    %v5589 = vpack.c.b16 %v5341, %v5337
    %v5590 = vpack.c.b16 %v5346, %v5342
    %v5591 = vpack.c.b16 %v5347, %v5343
    %v5592 = vpack.c.b16 %v5348, %v5344
    %v5593 = vpack.c.b16 %v5349, %v5345
    %v5594 = vpack.c.b16 %v5354, %v5350
    %v5595 = vpack.c.b16 %v5355, %v5351
    %v5596 = vpack.c.b16 %v5356, %v5352
    %v5597 = vpack.c.b16 %v5357, %v5353
    %v5598 = vpack.c.b16 %v5362, %v5358
    %v5599 = vpack.c.b16 %v5363, %v5359
    %v5600 = vpack.c.b16 %v5364, %v5360
    %v5601 = vpack.c.b16 %v5365, %v5361
    %v5602 = vpack.c.b16 %v5370, %v5366
    %v5603 = vpack.c.b16 %v5371, %v5367
    %v5604 = vpack.c.b16 %v5372, %v5368
    %v5605 = vpack.c.b16 %v5373, %v5369
    %v5606 = vpack.c.b16 %v5378, %v5374
    %v5607 = vpack.c.b16 %v5379, %v5375
    %v5608 = vpack.c.b16 %v5380, %v5376
    %v5609 = vpack.c.b16 %v5381, %v5377
    %v5610 = vpack.c.b16 %v5386, %v5382
    %v5611 = vpack.c.b16 %v5387, %v5383
    %v5612 = vpack.c.b16 %v5388, %v5384
    %v5613 = vpack.c.b16 %v5389, %v5385
    %v5614 = vpack.c.b16 %v5394, %v5390
    %v5615 = vpack.c.b16 %v5395, %v5391
    %v5616 = vpack.c.b16 %v5396, %v5392
    %v5617 = vpack.c.b16 %v5397, %v5393
    %v5618 = vpack.c.b16 %v5402, %v5398
    %v5619 = vpack.c.b16 %v5403, %v5399
    %v5620 = vpack.c.b16 %v5404, %v5400
    %v5621 = vpack.c.b16 %v5405, %v5401
    %v5622 = vpack.c.b16 %v5410, %v5406
    %v5623 = vpack.c.b16 %v5411, %v5407
    %v5624 = vpack.c.b16 %v5412, %v5408
    %v5625 = vpack.c.b16 %v5413, %v5409
    %v5626 = vpack.c.b16 %v5418, %v5414
    %v5627 = vpack.c.b16 %v5419, %v5415
    %v5628 = vpack.c.b16 %v5420, %v5416
    %v5629 = vpack.c.b16 %v5421, %v5417
    %v5630 = vpack.c.b16 %v5426, %v5422
    %v5631 = vpack.c.b16 %v5427, %v5423
    %v5632 = vpack.c.b16 %v5428, %v5424
    %v5633 = vpack.c.b16 %v5429, %v5425
    %v5634 = vpack.c.b16 %v5434, %v5430
    %v5635 = vpack.c.b16 %v5435, %v5431
    %v5636 = vpack.c.b16 %v5436, %v5432
    %v5637 = vpack.c.b16 %v5437, %v5433
    %v5638 = vpack.c.b16 %v5442, %v5438
    %v5639 = vpack.c.b16 %v5443, %v5439
    %v5640 = vpack.c.b16 %v5444, %v5440
    %v5641 = vpack.c.b16 %v5445, %v5441
    %v5642 = vpack.c.b16 %v5450, %v5446
    %v5643 = vpack.c.b16 %v5451, %v5447
    %v5644 = vpack.c.b16 %v5452, %v5448
    %v5645 = vpack.c.b16 %v5453, %v5449
    %v5646 = vpack.c.b16 %v5458, %v5454
    %v5647 = vpack.c.b16 %v5459, %v5455
    %v5648 = vpack.c.b16 %v5460, %v5456
    %v5649 = vpack.c.b16 %v5461, %v5457
    %v5650 = vpack.c.b16 %v5466, %v5462
    %v5651 = vpack.c.b16 %v5467, %v5463
    %v5652 = vpack.c.b16 %v5468, %v5464
    %v5653 = vpack.c.b16 %v5469, %v5465
    %v5654 = vpack.c.b16 %v5474, %v5470
    %v5655 = vpack.c.b16 %v5475, %v5471
    %v5656 = vpack.c.b16 %v5476, %v5472
    %v5657 = vpack.c.b16 %v5477, %v5473
    %v5658 = vpack.c.b16 %v5482, %v5478
    %v5659 = vpack.c.b16 %v5483, %v5479
    %v5660 = vpack.c.b16 %v5484, %v5480
    %v5661 = vpack.c.b16 %v5485, %v5481
    %v5662 = vpack.c.b16 %v5490, %v5486
    %v5663 = vpack.c.b16 %v5491, %v5487
    %v5664 = vpack.c.b16 %v5492, %v5488
    %v5665 = vpack.c.b16 %v5493, %v5489
    %v5666 = vpack.c.b16 %v5498, %v5494
    %v5667 = vpack.c.b16 %v5499, %v5495
    %v5668 = vpack.c.b16 %v5500, %v5496
    %v5669 = vpack.c.b16 %v5501, %v5497
    %v5670 = vpack.c.b16 %v5506, %v5502
    %v5671 = vpack.c.b16 %v5507, %v5503
    %v5672 = vpack.c.b16 %v5508, %v5504
    %v5673 = vpack.c.b16 %v5509, %v5505
    %v5674 = vpack.c.b16 %v5514, %v5510
    %v5675 = vpack.c.b16 %v5515, %v5511
    %v5676 = vpack.c.b16 %v5516, %v5512
    %v5677 = vpack.c.b16 %v5517, %v5513
    %v5678 = vpack.c.b16 %v5522, %v5518
    %v5679 = vpack.c.b16 %v5523, %v5519
    %v5680 = vpack.c.b16 %v5524, %v5520
    %v5681 = vpack.c.b16 %v5525, %v5521
    %v5682 = vpack.c.b16 %v5530, %v5526
    %v5683 = vpack.c.b16 %v5531, %v5527
    %v5684 = vpack.c.b16 %v5532, %v5528
    %v5685 = vpack.c.b16 %v5533, %v5529
    %v5686 = vpack.c.b16 %v5538, %v5534
    %v5687 = vpack.c.b16 %v5539, %v5535
    %v5688 = vpack.c.b16 %v5540, %v5536
    %v5689 = vpack.c.b16 %v5541, %v5537
    %v5690 = vpack.c.b16 %v5546, %v5542
    %v5691 = vpack.c.b16 %v5547, %v5543
    %v5692 = vpack.c.b16 %v5548, %v5544
    %v5693 = vpack.c.b16 %v5549, %v5545
    %v5694 = vpack.c.b16 %v5554, %v5550
    %v5695 = vpack.c.b16 %v5555, %v5551
    %v5696 = vpack.c.b16 %v5556, %v5552
    %v5697 = vpack.c.b16 %v5557, %v5553
    %v5698 = vpack.c.b16 %v5562, %v5558
    %v5699 = vpack.c.b16 %v5563, %v5559
    %v5700 = vpack.c.b16 %v5564, %v5560
    %v5701 = vpack.c.b16 %v5565, %v5561
    %v5702 = vpack.c.b16 %v5570, %v5566
    %v5703 = vpack.c.b16 %v5571, %v5567
    %v5704 = vpack.c.b16 %v5572, %v5568
    %v5705 = vpack.c.b16 %v5573, %v5569
    %v5706 = vpack.c.b16 %v5578, %v5574
    %v5707 = vpack.c.b16 %v5579, %v5575
    %v5708 = vpack.c.b16 %v5580, %v5576
    %v5709 = vpack.c.b16 %v5581, %v5577
    %5838 = vmatprep.subr.bf16.mxu0 %v5583
    %5839 = vmatpush1.bf16.msra.mxu0 %v5582
    %5840 = vmatprep.subr.bf16.mxu0 %v5587
    %5841 = vmatpush1.bf16.msra.mxu0 %v5586
    %5842 = vmatprep.subr.bf16.mxu0 %v5591
    %5843 = vmatpush1.bf16.msra.mxu0 %v5590
    %5844 = vmatprep.subr.bf16.mxu0 %v5595
    %5845 = vmatpush1.bf16.msra.mxu0 %v5594
    %5846 = vmatprep.subr.bf16.mxu0 %v5599
    %5847 = vmatpush1.bf16.msra.mxu0 %v5598
    %5848 = vmatprep.subr.bf16.mxu0 %v5603
    %5849 = vmatpush1.bf16.msra.mxu0 %v5602
    %5850 = vmatprep.subr.bf16.mxu0 %v5607
    %5851 = vmatpush1.bf16.msra.mxu0 %v5606
    %5852 = vmatprep.subr.bf16.mxu0 %v5611
    %5853 = vmatpush1.bf16.msra.mxu0 %v5610
    %5854 = vmatprep.subr.bf16.mxu0 %v5615
    %5855 = vmatpush1.bf16.msra.mxu0 %v5614
    %5856 = vmatprep.subr.bf16.mxu0 %v5619
    %5857 = vmatpush1.bf16.msra.mxu0 %v5618
    %5858 = vmatprep.subr.bf16.mxu0 %v5623
    %5859 = vmatpush1.bf16.msra.mxu0 %v5622
    %5860 = vmatprep.subr.bf16.mxu0 %v5627
    %5861 = vmatpush1.bf16.msra.mxu0 %v5626
    %5862 = vmatprep.subr.bf16.mxu0 %v5631
    %5863 = vmatpush1.bf16.msra.mxu0 %v5630
    %5864 = vmatprep.subr.bf16.mxu0 %v5635
    %5865 = vmatpush1.bf16.msra.mxu0 %v5634
    %5866 = vmatprep.subr.bf16.mxu0 %v5639
    %5867 = vmatpush1.bf16.msra.mxu0 %v5638
    %5868 = vmatprep.subr.bf16.mxu0 %v5643
    %5869 = vmatpush1.bf16.msra.mxu0 %v5642
    %5870 = vmatprep.mubr.bf16.mxu0 %v5062
    %5871 = vmatmul.mubr.bf16.gmra.mrb[0].mxu0 %v5061
    %v5872 = vpop.f32.mrb[0].mxu0
    %v5873 = vadd.f32 0.0, %v5872
    %v5874 = vpop.f32.mrb[0].mxu0
    %v5875 = vadd.f32 0.0, %v5874
    %v5876 = vpop.f32.mrb[0].mxu0
    %v5877 = vadd.f32 0.0, %v5876
    %v5878 = vpop.f32.mrb[0].mxu0
    %v5879 = vadd.f32 0.0, %v5878
    %5880 = vmatprep.mubr.bf16.mxu0 %v5066
    %5881 = vmatmul.mubr.bf16.gmra.mrb[0].mxu0 %v5065
    %v5882 = vpop.f32.mrb[0].mxu0
    %v5883 = vadd.f32 0.0, %v5882
    %v5884 = vpop.f32.mrb[0].mxu0
    %v5885 = vadd.f32 0.0, %v5884
    %v5886 = vpop.f32.mrb[0].mxu0
    %v5887 = vadd.f32 0.0, %v5886
    %v5888 = vpop.f32.mrb[0].mxu0
    %v5889 = vadd.f32 0.0, %v5888
    %5890 = vdwg.mxu0
    %5891 = vmatprep.subr.bf16.mxu0 %v5647
    %5892 = vmatpush1.bf16.msra.mxu0 %v5646
    %5893 = vmatprep.subr.bf16.mxu0 %v5651
    %5894 = vmatpush1.bf16.msra.mxu0 %v5650
    %5895 = vmatprep.subr.bf16.mxu0 %v5655
    %5896 = vmatpush1.bf16.msra.mxu0 %v5654
    %5897 = vmatprep.subr.bf16.mxu0 %v5659
    %5898 = vmatpush1.bf16.msra.mxu0 %v5658
    %5899 = vmatprep.subr.bf16.mxu0 %v5663
    %5900 = vmatpush1.bf16.msra.mxu0 %v5662
    %5901 = vmatprep.subr.bf16.mxu0 %v5667
    %5902 = vmatpush1.bf16.msra.mxu0 %v5666
    %5903 = vmatprep.subr.bf16.mxu0 %v5671
    %5904 = vmatpush1.bf16.msra.mxu0 %v5670
    %5905 = vmatprep.subr.bf16.mxu0 %v5675
    %5906 = vmatpush1.bf16.msra.mxu0 %v5674
    %5907 = vmatprep.subr.bf16.mxu0 %v5679
    %5908 = vmatpush1.bf16.msra.mxu0 %v5678
    %5909 = vmatprep.subr.bf16.mxu0 %v5683
    %5910 = vmatpush1.bf16.msra.mxu0 %v5682
    %5911 = vmatprep.subr.bf16.mxu0 %v5687
    %5912 = vmatpush1.bf16.msra.mxu0 %v5686
    %5913 = vmatprep.subr.bf16.mxu0 %v5691
    %5914 = vmatpush1.bf16.msra.mxu0 %v5690
    %5915 = vmatprep.subr.bf16.mxu0 %v5695
    %5916 = vmatpush1.bf16.msra.mxu0 %v5694
    %5917 = vmatprep.subr.bf16.mxu0 %v5699
    %5918 = vmatpush1.bf16.msra.mxu0 %v5698
    %5919 = vmatprep.subr.bf16.mxu0 %v5703
    %5920 = vmatpush1.bf16.msra.mxu0 %v5702
    %5921 = vmatprep.subr.bf16.mxu0 %v5707
    %5922 = vmatpush1.bf16.msra.mxu0 %v5706
    %5923 = vmatprep.mubr.bf16.mxu0 %v5064
    %5924 = vmatmul.mubr.bf16.gmra.mrb[0].mxu0 %v5063
    %v5925 = vpop.f32.mrb[0].mxu0
    %v5926 = vadd.f32 %v5873, %v5925
    %v5927 = vpop.f32.mrb[0].mxu0
    %v5928 = vadd.f32 %v5875, %v5927
    %v5929 = vpop.f32.mrb[0].mxu0
    %v5930 = vadd.f32 %v5877, %v5929
    %v5931 = vpop.f32.mrb[0].mxu0
    %v5932 = vadd.f32 %v5879, %v5931
    %5933 = vmatprep.mubr.bf16.mxu0 %v5068
    %5934 = vmatmul.mubr.bf16.gmra.mrb[0].mxu0 %v5067
    %v5935 = vpop.f32.mrb[0].mxu0
    %v5936 = vadd.f32 %v5883, %v5935
    %v5937 = vpop.f32.mrb[0].mxu0
    %v5938 = vadd.f32 %v5885, %v5937
    %v5939 = vpop.f32.mrb[0].mxu0
    %v5940 = vadd.f32 %v5887, %v5939
    %v5941 = vpop.f32.mrb[0].mxu0
    %v5942 = vadd.f32 %v5889, %v5941
    %5943 = vdwg.mxu0
    %5944 = vmatprep.subr.bf16.mxu0 %v5585
    %5945 = vmatpush1.bf16.msra.mxu0 %v5584
    %5946 = vmatprep.subr.bf16.mxu0 %v5589
    %5947 = vmatpush1.bf16.msra.mxu0 %v5588
    %5948 = vmatprep.subr.bf16.mxu0 %v5593
    %5949 = vmatpush1.bf16.msra.mxu0 %v5592
    %5950 = vmatprep.subr.bf16.mxu0 %v5597
    %5951 = vmatpush1.bf16.msra.mxu0 %v5596
    %5952 = vmatprep.subr.bf16.mxu0 %v5601
    %5953 = vmatpush1.bf16.msra.mxu0 %v5600
    %5954 = vmatprep.subr.bf16.mxu0 %v5605
    %5955 = vmatpush1.bf16.msra.mxu0 %v5604
    %5956 = vmatprep.subr.bf16.mxu0 %v5609
    %5957 = vmatpush1.bf16.msra.mxu0 %v5608
    %5958 = vmatprep.subr.bf16.mxu0 %v5613
    %5959 = vmatpush1.bf16.msra.mxu0 %v5612
    %5960 = vmatprep.subr.bf16.mxu0 %v5617
    %5961 = vmatpush1.bf16.msra.mxu0 %v5616
    %5962 = vmatprep.subr.bf16.mxu0 %v5621
    %5963 = vmatpush1.bf16.msra.mxu0 %v5620
    %5964 = vmatprep.subr.bf16.mxu0 %v5625
    %5965 = vmatpush1.bf16.msra.mxu0 %v5624
    %5966 = vmatprep.subr.bf16.mxu0 %v5629
    %5967 = vmatpush1.bf16.msra.mxu0 %v5628
    %5968 = vmatprep.subr.bf16.mxu0 %v5633
    %5969 = vmatpush1.bf16.msra.mxu0 %v5632
    %5970 = vmatprep.subr.bf16.mxu0 %v5637
    %5971 = vmatpush1.bf16.msra.mxu0 %v5636
    %5972 = vmatprep.subr.bf16.mxu0 %v5641
    %5973 = vmatpush1.bf16.msra.mxu0 %v5640
    %5974 = vmatprep.subr.bf16.mxu0 %v5645
    %5975 = vmatpush1.bf16.msra.mxu0 %v5644
    %5976 = vmatprep.mubr.bf16.mxu0 %v5062
    %5977 = vmatmul.mubr.bf16.gmra.mrb[0].mxu0 %v5061
    %v5978 = vpop.f32.mrb[0].mxu0
    %v5979 = vadd.f32 0.0, %v5978
    %v5980 = vpop.f32.mrb[0].mxu0
    %v5981 = vadd.f32 0.0, %v5980
    %v5982 = vpop.f32.mrb[0].mxu0
    %v5983 = vadd.f32 0.0, %v5982
    %v5984 = vpop.f32.mrb[0].mxu0
    %v5985 = vadd.f32 0.0, %v5984
    %5986 = vmatprep.mubr.bf16.mxu0 %v5066
    %5987 = vmatmul.mubr.bf16.gmra.mrb[0].mxu0 %v5065
    %v5988 = vpop.f32.mrb[0].mxu0
    %v5989 = vadd.f32 0.0, %v5988
    %v5990 = vpop.f32.mrb[0].mxu0
    %v5991 = vadd.f32 0.0, %v5990
    %v5992 = vpop.f32.mrb[0].mxu0
    %v5993 = vadd.f32 0.0, %v5992
    %v5994 = vpop.f32.mrb[0].mxu0
    %v5995 = vadd.f32 0.0, %v5994
    %5996 = vdwg.mxu0
    %5997 = vmatprep.subr.bf16.mxu0 %v5649
    %5998 = vmatpush1.bf16.msra.mxu0 %v5648
    %5999 = vmatprep.subr.bf16.mxu0 %v5653
    %6000 = vmatpush1.bf16.msra.mxu0 %v5652
    %6001 = vmatprep.subr.bf16.mxu0 %v5657
    %6002 = vmatpush1.bf16.msra.mxu0 %v5656
    %6003 = vmatprep.subr.bf16.mxu0 %v5661
    %6004 = vmatpush1.bf16.msra.mxu0 %v5660
    %6005 = vmatprep.subr.bf16.mxu0 %v5665
    %6006 = vmatpush1.bf16.msra.mxu0 %v5664
    %6007 = vmatprep.subr.bf16.mxu0 %v5669
    %6008 = vmatpush1.bf16.msra.mxu0 %v5668
    %6009 = vmatprep.subr.bf16.mxu0 %v5673
    %6010 = vmatpush1.bf16.msra.mxu0 %v5672
    %6011 = vmatprep.subr.bf16.mxu0 %v5677
    %6012 = vmatpush1.bf16.msra.mxu0 %v5676
    %6013 = vmatprep.subr.bf16.mxu0 %v5681
    %6014 = vmatpush1.bf16.msra.mxu0 %v5680
    %6015 = vmatprep.subr.bf16.mxu0 %v5685
    %6016 = vmatpush1.bf16.msra.mxu0 %v5684
    %6017 = vmatprep.subr.bf16.mxu0 %v5689
    %6018 = vmatpush1.bf16.msra.mxu0 %v5688
    %6019 = vmatprep.subr.bf16.mxu0 %v5693
    %6020 = vmatpush1.bf16.msra.mxu0 %v5692
    %6021 = vmatprep.subr.bf16.mxu0 %v5697
    %6022 = vmatpush1.bf16.msra.mxu0 %v5696
    %6023 = vmatprep.subr.bf16.mxu0 %v5701
    %6024 = vmatpush1.bf16.msra.mxu0 %v5700
    %6025 = vmatprep.subr.bf16.mxu0 %v5705
    %6026 = vmatpush1.bf16.msra.mxu0 %v5704
    %6027 = vmatprep.subr.bf16.mxu0 %v5709
    %6028 = vmatpush1.bf16.msra.mxu0 %v5708
    %6029 = vmatprep.mubr.bf16.mxu0 %v5064
    %6030 = vmatmul.mubr.bf16.gmra.mrb[0].mxu0 %v5063
    %v6031 = vpop.f32.mrb[0].mxu0
    %v6032 = vadd.f32 %v5979, %v6031
    %v6033 = vpop.f32.mrb[0].mxu0
    %v6034 = vadd.f32 %v5981, %v6033
    %v6035 = vpop.f32.mrb[0].mxu0
    %v6036 = vadd.f32 %v5983, %v6035
    %v6037 = vpop.f32.mrb[0].mxu0
    %v6038 = vadd.f32 %v5985, %v6037
    %6039 = vmatprep.mubr.bf16.mxu0 %v5068
    %6040 = vmatmul.mubr.bf16.gmra.mrb[0].mxu0 %v5067
    %v6041 = vpop.f32.mrb[0].mxu0
    %v6042 = vadd.f32 %v5989, %v6041
    %v6043 = vpop.f32.mrb[0].mxu0
    %v6044 = vadd.f32 %v5991, %v6043
    %v6045 = vpop.f32.mrb[0].mxu0
    %v6046 = vadd.f32 %v5993, %v6045
    %v6047 = vpop.f32.mrb[0].mxu0
    %v6048 = vadd.f32 %v5995, %v6047
    %6049 = vdwg.mxu0
    %v6178 = vunpack.c.l.b16 %v4933
    %v6179 = vunpack.c.h.b16 %v4933
    %v6180 = vunpack.c.l.b16 %v4934
    %v6181 = vunpack.c.h.b16 %v4934
    %v6182 = vunpack.c.l.b16 %v4935
    %v6183 = vunpack.c.h.b16 %v4935
    %v6184 = vunpack.c.l.b16 %v4936
    %v6185 = vunpack.c.h.b16 %v4936
    %v6186 = vunpack.c.l.b16 %v4937
    %v6187 = vunpack.c.h.b16 %v4937
    %v6188 = vunpack.c.l.b16 %v4938
    %v6189 = vunpack.c.h.b16 %v4938
    %v6190 = vunpack.c.l.b16 %v4939
    %v6191 = vunpack.c.h.b16 %v4939
    %v6192 = vunpack.c.l.b16 %v4940
    %v6193 = vunpack.c.h.b16 %v4940
    %v6194 = vunpack.c.l.b16 %v4941
    %v6195 = vunpack.c.h.b16 %v4941
    %v6196 = vunpack.c.l.b16 %v4942
    %v6197 = vunpack.c.h.b16 %v4942
    %v6198 = vunpack.c.l.b16 %v4943
    %v6199 = vunpack.c.h.b16 %v4943
    %v6200 = vunpack.c.l.b16 %v4944
    %v6201 = vunpack.c.h.b16 %v4944
    %v6202 = vunpack.c.l.b16 %v4945
    %v6203 = vunpack.c.h.b16 %v4945
    %v6204 = vunpack.c.l.b16 %v4946
    %v6205 = vunpack.c.h.b16 %v4946
    %v6206 = vunpack.c.l.b16 %v4947
    %v6207 = vunpack.c.h.b16 %v4947
    %v6208 = vunpack.c.l.b16 %v4948
    %v6209 = vunpack.c.h.b16 %v4948
    %v6210 = vunpack.c.l.b16 %v4949
    %v6211 = vunpack.c.h.b16 %v4949
    %v6212 = vunpack.c.l.b16 %v4950
    %v6213 = vunpack.c.h.b16 %v4950
    %v6214 = vunpack.c.l.b16 %v4951
    %v6215 = vunpack.c.h.b16 %v4951
    %v6216 = vunpack.c.l.b16 %v4952
    %v6217 = vunpack.c.h.b16 %v4952
    %v6218 = vunpack.c.l.b16 %v4953
    %v6219 = vunpack.c.h.b16 %v4953
    %v6220 = vunpack.c.l.b16 %v4954
    %v6221 = vunpack.c.h.b16 %v4954
    %v6222 = vunpack.c.l.b16 %v4955
    %v6223 = vunpack.c.h.b16 %v4955
    %v6224 = vunpack.c.l.b16 %v4956
    %v6225 = vunpack.c.h.b16 %v4956
    %v6226 = vunpack.c.l.b16 %v4957
    %v6227 = vunpack.c.h.b16 %v4957
    %v6228 = vunpack.c.l.b16 %v4958
    %v6229 = vunpack.c.h.b16 %v4958
    %v6230 = vunpack.c.l.b16 %v4959
    %v6231 = vunpack.c.h.b16 %v4959
    %v6232 = vunpack.c.l.b16 %v4960
    %v6233 = vunpack.c.h.b16 %v4960
    %v6234 = vunpack.c.l.b16 %v4961
    %v6235 = vunpack.c.h.b16 %v4961
    %v6236 = vunpack.c.l.b16 %v4962
    %v6237 = vunpack.c.h.b16 %v4962
    %v6238 = vunpack.c.l.b16 %v4963
    %v6239 = vunpack.c.h.b16 %v4963
    %v6240 = vunpack.c.l.b16 %v4964
    %v6241 = vunpack.c.h.b16 %v4964
    %v6242 = vunpack.c.l.b16 %v4965
    %v6243 = vunpack.c.h.b16 %v4965
    %v6244 = vunpack.c.l.b16 %v4966
    %v6245 = vunpack.c.h.b16 %v4966
    %v6246 = vunpack.c.l.b16 %v4967
    %v6247 = vunpack.c.h.b16 %v4967
    %v6248 = vunpack.c.l.b16 %v4968
    %v6249 = vunpack.c.h.b16 %v4968
    %v6250 = vunpack.c.l.b16 %v4969
    %v6251 = vunpack.c.h.b16 %v4969
    %v6252 = vunpack.c.l.b16 %v4970
    %v6253 = vunpack.c.h.b16 %v4970
    %v6254 = vunpack.c.l.b16 %v4971
    %v6255 = vunpack.c.h.b16 %v4971
    %v6256 = vunpack.c.l.b16 %v4972
    %v6257 = vunpack.c.h.b16 %v4972
    %v6258 = vunpack.c.l.b16 %v4973
    %v6259 = vunpack.c.h.b16 %v4973
    %v6260 = vunpack.c.l.b16 %v4974
    %v6261 = vunpack.c.h.b16 %v4974
    %v6262 = vunpack.c.l.b16 %v4975
    %v6263 = vunpack.c.h.b16 %v4975
    %v6264 = vunpack.c.l.b16 %v4976
    %v6265 = vunpack.c.h.b16 %v4976
    %v6266 = vunpack.c.l.b16 %v4977
    %v6267 = vunpack.c.h.b16 %v4977
    %v6268 = vunpack.c.l.b16 %v4978
    %v6269 = vunpack.c.h.b16 %v4978
    %v6270 = vunpack.c.l.b16 %v4979
    %v6271 = vunpack.c.h.b16 %v4979
    %v6272 = vunpack.c.l.b16 %v4980
    %v6273 = vunpack.c.h.b16 %v4980
    %v6274 = vunpack.c.l.b16 %v4981
    %v6275 = vunpack.c.h.b16 %v4981
    %v6276 = vunpack.c.l.b16 %v4982
    %v6277 = vunpack.c.h.b16 %v4982
    %v6278 = vunpack.c.l.b16 %v4983
    %v6279 = vunpack.c.h.b16 %v4983
    %v6280 = vunpack.c.l.b16 %v4984
    %v6281 = vunpack.c.h.b16 %v4984
    %v6282 = vunpack.c.l.b16 %v4985
    %v6283 = vunpack.c.h.b16 %v4985
    %v6284 = vunpack.c.l.b16 %v4986
    %v6285 = vunpack.c.h.b16 %v4986
    %v6286 = vunpack.c.l.b16 %v4987
    %v6287 = vunpack.c.h.b16 %v4987
    %v6288 = vunpack.c.l.b16 %v4988
    %v6289 = vunpack.c.h.b16 %v4988
    %v6290 = vunpack.c.l.b16 %v4989
    %v6291 = vunpack.c.h.b16 %v4989
    %v6292 = vunpack.c.l.b16 %v4990
    %v6293 = vunpack.c.h.b16 %v4990
    %v6294 = vunpack.c.l.b16 %v4991
    %v6295 = vunpack.c.h.b16 %v4991
    %v6296 = vunpack.c.l.b16 %v4992
    %v6297 = vunpack.c.h.b16 %v4992
    %v6298 = vunpack.c.l.b16 %v4993
    %v6299 = vunpack.c.h.b16 %v4993
    %v6300 = vunpack.c.l.b16 %v4994
    %v6301 = vunpack.c.h.b16 %v4994
    %v6302 = vunpack.c.l.b16 %v4995
    %v6303 = vunpack.c.h.b16 %v4995
    %v6304 = vunpack.c.l.b16 %v4996
    %v6305 = vunpack.c.h.b16 %v4996
    %v6306 = vunpack.c.l.b16 %v4997
    %v6307 = vunpack.c.h.b16 %v4997
    %v6308 = vunpack.c.l.b16 %v4998
    %v6309 = vunpack.c.h.b16 %v4998
    %v6310 = vunpack.c.l.b16 %v4999
    %v6311 = vunpack.c.h.b16 %v4999
    %v6312 = vunpack.c.l.b16 %v5000
    %v6313 = vunpack.c.h.b16 %v5000
    %v6314 = vunpack.c.l.b16 %v5001
    %v6315 = vunpack.c.h.b16 %v5001
    %v6316 = vunpack.c.l.b16 %v5002
    %v6317 = vunpack.c.h.b16 %v5002
    %v6318 = vunpack.c.l.b16 %v5003
    %v6319 = vunpack.c.h.b16 %v5003
    %v6320 = vunpack.c.l.b16 %v5004
    %v6321 = vunpack.c.h.b16 %v5004
    %v6322 = vunpack.c.l.b16 %v5005
    %v6323 = vunpack.c.h.b16 %v5005
    %v6324 = vunpack.c.l.b16 %v5006
    %v6325 = vunpack.c.h.b16 %v5006
    %v6326 = vunpack.c.l.b16 %v5007
    %v6327 = vunpack.c.h.b16 %v5007
    %v6328 = vunpack.c.l.b16 %v5008
    %v6329 = vunpack.c.h.b16 %v5008
    %v6330 = vunpack.c.l.b16 %v5009
    %v6331 = vunpack.c.h.b16 %v5009
    %v6332 = vunpack.c.l.b16 %v5010
    %v6333 = vunpack.c.h.b16 %v5010
    %v6334 = vunpack.c.l.b16 %v5011
    %v6335 = vunpack.c.h.b16 %v5011
    %v6336 = vunpack.c.l.b16 %v5012
    %v6337 = vunpack.c.h.b16 %v5012
    %v6338 = vunpack.c.l.b16 %v5013
    %v6339 = vunpack.c.h.b16 %v5013
    %v6340 = vunpack.c.l.b16 %v5014
    %v6341 = vunpack.c.h.b16 %v5014
    %v6342 = vunpack.c.l.b16 %v5015
    %v6343 = vunpack.c.h.b16 %v5015
    %v6344 = vunpack.c.l.b16 %v5016
    %v6345 = vunpack.c.h.b16 %v5016
    %v6346 = vunpack.c.l.b16 %v5017
    %v6347 = vunpack.c.h.b16 %v5017
    %v6348 = vunpack.c.l.b16 %v5018
    %v6349 = vunpack.c.h.b16 %v5018
    %v6350 = vunpack.c.l.b16 %v5019
    %v6351 = vunpack.c.h.b16 %v5019
    %v6352 = vunpack.c.l.b16 %v5020
    %v6353 = vunpack.c.h.b16 %v5020
    %v6354 = vunpack.c.l.b16 %v5021
    %v6355 = vunpack.c.h.b16 %v5021
    %v6356 = vunpack.c.l.b16 %v5022
    %v6357 = vunpack.c.h.b16 %v5022
    %v6358 = vunpack.c.l.b16 %v5023
    %v6359 = vunpack.c.h.b16 %v5023
    %v6360 = vunpack.c.l.b16 %v5024
    %v6361 = vunpack.c.h.b16 %v5024
    %v6362 = vunpack.c.l.b16 %v5025
    %v6363 = vunpack.c.h.b16 %v5025
    %v6364 = vunpack.c.l.b16 %v5026
    %v6365 = vunpack.c.h.b16 %v5026
    %v6366 = vunpack.c.l.b16 %v5027
    %v6367 = vunpack.c.h.b16 %v5027
    %v6368 = vunpack.c.l.b16 %v5028
    %v6369 = vunpack.c.h.b16 %v5028
    %v6370 = vunpack.c.l.b16 %v5029
    %v6371 = vunpack.c.h.b16 %v5029
    %v6372 = vunpack.c.l.b16 %v5030
    %v6373 = vunpack.c.h.b16 %v5030
    %v6374 = vunpack.c.l.b16 %v5031
    %v6375 = vunpack.c.h.b16 %v5031
    %v6376 = vunpack.c.l.b16 %v5032
    %v6377 = vunpack.c.h.b16 %v5032
    %v6378 = vunpack.c.l.b16 %v5033
    %v6379 = vunpack.c.h.b16 %v5033
    %v6380 = vunpack.c.l.b16 %v5034
    %v6381 = vunpack.c.h.b16 %v5034
    %v6382 = vunpack.c.l.b16 %v5035
    %v6383 = vunpack.c.h.b16 %v5035
    %v6384 = vunpack.c.l.b16 %v5036
    %v6385 = vunpack.c.h.b16 %v5036
    %v6386 = vunpack.c.l.b16 %v5037
    %v6387 = vunpack.c.h.b16 %v5037
    %v6388 = vunpack.c.l.b16 %v5038
    %v6389 = vunpack.c.h.b16 %v5038
    %v6390 = vunpack.c.l.b16 %v5039
    %v6391 = vunpack.c.h.b16 %v5039
    %v6392 = vunpack.c.l.b16 %v5040
    %v6393 = vunpack.c.h.b16 %v5040
    %v6394 = vunpack.c.l.b16 %v5041
    %v6395 = vunpack.c.h.b16 %v5041
    %v6396 = vunpack.c.l.b16 %v5042
    %v6397 = vunpack.c.h.b16 %v5042
    %v6398 = vunpack.c.l.b16 %v5043
    %v6399 = vunpack.c.h.b16 %v5043
    %v6400 = vunpack.c.l.b16 %v5044
    %v6401 = vunpack.c.h.b16 %v5044
    %v6402 = vunpack.c.l.b16 %v5045
    %v6403 = vunpack.c.h.b16 %v5045
    %v6404 = vunpack.c.l.b16 %v5046
    %v6405 = vunpack.c.h.b16 %v5046
    %v6406 = vunpack.c.l.b16 %v5047
    %v6407 = vunpack.c.h.b16 %v5047
    %v6408 = vunpack.c.l.b16 %v5048
    %v6409 = vunpack.c.h.b16 %v5048
    %v6410 = vunpack.c.l.b16 %v5049
    %v6411 = vunpack.c.h.b16 %v5049
    %v6412 = vunpack.c.l.b16 %v5050
    %v6413 = vunpack.c.h.b16 %v5050
    %v6414 = vunpack.c.l.b16 %v5051
    %v6415 = vunpack.c.h.b16 %v5051
    %v6416 = vunpack.c.l.b16 %v5052
    %v6417 = vunpack.c.h.b16 %v5052
    %v6418 = vunpack.c.l.b16 %v5053
    %v6419 = vunpack.c.h.b16 %v5053
    %v6420 = vunpack.c.l.b16 %v5054
    %v6421 = vunpack.c.h.b16 %v5054
    %v6422 = vunpack.c.l.b16 %v5055
    %v6423 = vunpack.c.h.b16 %v5055
    %v6424 = vunpack.c.l.b16 %v5056
    %v6425 = vunpack.c.h.b16 %v5056
    %v6426 = vunpack.c.l.b16 %v5057
    %v6427 = vunpack.c.h.b16 %v5057
    %v6428 = vunpack.c.l.b16 %v5058
    %v6429 = vunpack.c.h.b16 %v5058
    %v6430 = vunpack.c.l.b16 %v5059
    %v6431 = vunpack.c.h.b16 %v5059
    %v6432 = vunpack.c.l.b16 %v5060
    %v6433 = vunpack.c.h.b16 %v5060
    %v6434 = vpack.c.b16 %v6182, %v6178
    %v6435 = vpack.c.b16 %v6183, %v6179
    %v6436 = vpack.c.b16 %v6184, %v6180
    %v6437 = vpack.c.b16 %v6185, %v6181
    %v6438 = vpack.c.b16 %v6190, %v6186
    %v6439 = vpack.c.b16 %v6191, %v6187
    %v6440 = vpack.c.b16 %v6192, %v6188
    %v6441 = vpack.c.b16 %v6193, %v6189
    %v6442 = vpack.c.b16 %v6198, %v6194
    %v6443 = vpack.c.b16 %v6199, %v6195
    %v6444 = vpack.c.b16 %v6200, %v6196
    %v6445 = vpack.c.b16 %v6201, %v6197
    %v6446 = vpack.c.b16 %v6206, %v6202
    %v6447 = vpack.c.b16 %v6207, %v6203
    %v6448 = vpack.c.b16 %v6208, %v6204
    %v6449 = vpack.c.b16 %v6209, %v6205
    %v6450 = vpack.c.b16 %v6214, %v6210
    %v6451 = vpack.c.b16 %v6215, %v6211
    %v6452 = vpack.c.b16 %v6216, %v6212
    %v6453 = vpack.c.b16 %v6217, %v6213
    %v6454 = vpack.c.b16 %v6222, %v6218
    %v6455 = vpack.c.b16 %v6223, %v6219
    %v6456 = vpack.c.b16 %v6224, %v6220
    %v6457 = vpack.c.b16 %v6225, %v6221
    %v6458 = vpack.c.b16 %v6230, %v6226
    %v6459 = vpack.c.b16 %v6231, %v6227
    %v6460 = vpack.c.b16 %v6232, %v6228
    %v6461 = vpack.c.b16 %v6233, %v6229
    %v6462 = vpack.c.b16 %v6238, %v6234
    %v6463 = vpack.c.b16 %v6239, %v6235
    %v6464 = vpack.c.b16 %v6240, %v6236
    %v6465 = vpack.c.b16 %v6241, %v6237
    %v6466 = vpack.c.b16 %v6246, %v6242
    %v6467 = vpack.c.b16 %v6247, %v6243
    %v6468 = vpack.c.b16 %v6248, %v6244
    %v6469 = vpack.c.b16 %v6249, %v6245
    %v6470 = vpack.c.b16 %v6254, %v6250
    %v6471 = vpack.c.b16 %v6255, %v6251
    %v6472 = vpack.c.b16 %v6256, %v6252
    %v6473 = vpack.c.b16 %v6257, %v6253
    %v6474 = vpack.c.b16 %v6262, %v6258
    %v6475 = vpack.c.b16 %v6263, %v6259
    %v6476 = vpack.c.b16 %v6264, %v6260
    %v6477 = vpack.c.b16 %v6265, %v6261
    %v6478 = vpack.c.b16 %v6270, %v6266
    %v6479 = vpack.c.b16 %v6271, %v6267
    %v6480 = vpack.c.b16 %v6272, %v6268
    %v6481 = vpack.c.b16 %v6273, %v6269
    %v6482 = vpack.c.b16 %v6278, %v6274
    %v6483 = vpack.c.b16 %v6279, %v6275
    %v6484 = vpack.c.b16 %v6280, %v6276
    %v6485 = vpack.c.b16 %v6281, %v6277
    %v6486 = vpack.c.b16 %v6286, %v6282
    %v6487 = vpack.c.b16 %v6287, %v6283
    %v6488 = vpack.c.b16 %v6288, %v6284
    %v6489 = vpack.c.b16 %v6289, %v6285
    %v6490 = vpack.c.b16 %v6294, %v6290
    %v6491 = vpack.c.b16 %v6295, %v6291
    %v6492 = vpack.c.b16 %v6296, %v6292
    %v6493 = vpack.c.b16 %v6297, %v6293
    %v6494 = vpack.c.b16 %v6302, %v6298
    %v6495 = vpack.c.b16 %v6303, %v6299
    %v6496 = vpack.c.b16 %v6304, %v6300
    %v6497 = vpack.c.b16 %v6305, %v6301
    %v6498 = vpack.c.b16 %v6310, %v6306
    %v6499 = vpack.c.b16 %v6311, %v6307
    %v6500 = vpack.c.b16 %v6312, %v6308
    %v6501 = vpack.c.b16 %v6313, %v6309
    %v6502 = vpack.c.b16 %v6318, %v6314
    %v6503 = vpack.c.b16 %v6319, %v6315
    %v6504 = vpack.c.b16 %v6320, %v6316
    %v6505 = vpack.c.b16 %v6321, %v6317
    %v6506 = vpack.c.b16 %v6326, %v6322
    %v6507 = vpack.c.b16 %v6327, %v6323
    %v6508 = vpack.c.b16 %v6328, %v6324
    %v6509 = vpack.c.b16 %v6329, %v6325
    %v6510 = vpack.c.b16 %v6334, %v6330
    %v6511 = vpack.c.b16 %v6335, %v6331
    %v6512 = vpack.c.b16 %v6336, %v6332
    %v6513 = vpack.c.b16 %v6337, %v6333
    %v6514 = vpack.c.b16 %v6342, %v6338
    %v6515 = vpack.c.b16 %v6343, %v6339
    %v6516 = vpack.c.b16 %v6344, %v6340
    %v6517 = vpack.c.b16 %v6345, %v6341
    %v6518 = vpack.c.b16 %v6350, %v6346
    %v6519 = vpack.c.b16 %v6351, %v6347
    %v6520 = vpack.c.b16 %v6352, %v6348
    %v6521 = vpack.c.b16 %v6353, %v6349
    %v6522 = vpack.c.b16 %v6358, %v6354
    %v6523 = vpack.c.b16 %v6359, %v6355
    %v6524 = vpack.c.b16 %v6360, %v6356
    %v6525 = vpack.c.b16 %v6361, %v6357
    %v6526 = vpack.c.b16 %v6366, %v6362
    %v6527 = vpack.c.b16 %v6367, %v6363
    %v6528 = vpack.c.b16 %v6368, %v6364
    %v6529 = vpack.c.b16 %v6369, %v6365
    %v6530 = vpack.c.b16 %v6374, %v6370
    %v6531 = vpack.c.b16 %v6375, %v6371
    %v6532 = vpack.c.b16 %v6376, %v6372
    %v6533 = vpack.c.b16 %v6377, %v6373
    %v6534 = vpack.c.b16 %v6382, %v6378
    %v6535 = vpack.c.b16 %v6383, %v6379
    %v6536 = vpack.c.b16 %v6384, %v6380
    %v6537 = vpack.c.b16 %v6385, %v6381
    %v6538 = vpack.c.b16 %v6390, %v6386
    %v6539 = vpack.c.b16 %v6391, %v6387
    %v6540 = vpack.c.b16 %v6392, %v6388
    %v6541 = vpack.c.b16 %v6393, %v6389
    %v6542 = vpack.c.b16 %v6398, %v6394
    %v6543 = vpack.c.b16 %v6399, %v6395
    %v6544 = vpack.c.b16 %v6400, %v6396
    %v6545 = vpack.c.b16 %v6401, %v6397
    %v6546 = vpack.c.b16 %v6406, %v6402
    %v6547 = vpack.c.b16 %v6407, %v6403
    %v6548 = vpack.c.b16 %v6408, %v6404
    %v6549 = vpack.c.b16 %v6409, %v6405
    %v6550 = vpack.c.b16 %v6414, %v6410
    %v6551 = vpack.c.b16 %v6415, %v6411
    %v6552 = vpack.c.b16 %v6416, %v6412
    %v6553 = vpack.c.b16 %v6417, %v6413
    %v6554 = vpack.c.b16 %v6422, %v6418
    %v6555 = vpack.c.b16 %v6423, %v6419
    %v6556 = vpack.c.b16 %v6424, %v6420
    %v6557 = vpack.c.b16 %v6425, %v6421
    %v6558 = vpack.c.b16 %v6430, %v6426
    %v6559 = vpack.c.b16 %v6431, %v6427
    %v6560 = vpack.c.b16 %v6432, %v6428
    %v6561 = vpack.c.b16 %v6433, %v6429
    %6690 = vmatprep.subr.bf16.mxu0 %v6435
    %6691 = vmatpush1.bf16.msra.mxu0 %v6434
    %6692 = vmatprep.subr.bf16.mxu0 %v6439
    %6693 = vmatpush1.bf16.msra.mxu0 %v6438
    %6694 = vmatprep.subr.bf16.mxu0 %v6443
    %6695 = vmatpush1.bf16.msra.mxu0 %v6442
    %6696 = vmatprep.subr.bf16.mxu0 %v6447
    %6697 = vmatpush1.bf16.msra.mxu0 %v6446
    %6698 = vmatprep.subr.bf16.mxu0 %v6451
    %6699 = vmatpush1.bf16.msra.mxu0 %v6450
    %6700 = vmatprep.subr.bf16.mxu0 %v6455
    %6701 = vmatpush1.bf16.msra.mxu0 %v6454
    %6702 = vmatprep.subr.bf16.mxu0 %v6459
    %6703 = vmatpush1.bf16.msra.mxu0 %v6458
    %6704 = vmatprep.subr.bf16.mxu0 %v6463
    %6705 = vmatpush1.bf16.msra.mxu0 %v6462
    %6706 = vmatprep.subr.bf16.mxu0 %v6467
    %6707 = vmatpush1.bf16.msra.mxu0 %v6466
    %6708 = vmatprep.subr.bf16.mxu0 %v6471
    %6709 = vmatpush1.bf16.msra.mxu0 %v6470
    %6710 = vmatprep.subr.bf16.mxu0 %v6475
    %6711 = vmatpush1.bf16.msra.mxu0 %v6474
    %6712 = vmatprep.subr.bf16.mxu0 %v6479
    %6713 = vmatpush1.bf16.msra.mxu0 %v6478
    %6714 = vmatprep.subr.bf16.mxu0 %v6483
    %6715 = vmatpush1.bf16.msra.mxu0 %v6482
    %6716 = vmatprep.subr.bf16.mxu0 %v6487
    %6717 = vmatpush1.bf16.msra.mxu0 %v6486
    %6718 = vmatprep.subr.bf16.mxu0 %v6491
    %6719 = vmatpush1.bf16.msra.mxu0 %v6490
    %6720 = vmatprep.subr.bf16.mxu0 %v6495
    %6721 = vmatpush1.bf16.msra.mxu0 %v6494
    %6722 = vmatprep.mubr.bf16.mxu0 %v4926
    %6723 = vmatmul.mubr.bf16.gmra.mrb[0].mxu0 %v4925
    %v6724 = vpop.f32.mrb[0].mxu0
    %v6725 = vadd.f32 %v5926, %v6724
    %v6726 = vpop.f32.mrb[0].mxu0
    %v6727 = vadd.f32 %v5928, %v6726
    %v6728 = vpop.f32.mrb[0].mxu0
    %v6729 = vadd.f32 %v5930, %v6728
    %v6730 = vpop.f32.mrb[0].mxu0
    %v6731 = vadd.f32 %v5932, %v6730
    %6732 = vmatprep.mubr.bf16.mxu0 %v4930
    %6733 = vmatmul.mubr.bf16.gmra.mrb[0].mxu0 %v4929
    %v6734 = vpop.f32.mrb[0].mxu0
    %v6735 = vadd.f32 %v5936, %v6734
    %v6736 = vpop.f32.mrb[0].mxu0
    %v6737 = vadd.f32 %v5938, %v6736
    %v6738 = vpop.f32.mrb[0].mxu0
    %v6739 = vadd.f32 %v5940, %v6738
    %v6740 = vpop.f32.mrb[0].mxu0
    %v6741 = vadd.f32 %v5942, %v6740
    %6742 = vdwg.mxu0
    %6743 = vmatprep.subr.bf16.mxu0 %v6499
    %6744 = vmatpush1.bf16.msra.mxu0 %v6498
    %6745 = vmatprep.subr.bf16.mxu0 %v6503
    %6746 = vmatpush1.bf16.msra.mxu0 %v6502
    %6747 = vmatprep.subr.bf16.mxu0 %v6507
    %6748 = vmatpush1.bf16.msra.mxu0 %v6506
    %6749 = vmatprep.subr.bf16.mxu0 %v6511
    %6750 = vmatpush1.bf16.msra.mxu0 %v6510
    %6751 = vmatprep.subr.bf16.mxu0 %v6515
    %6752 = vmatpush1.bf16.msra.mxu0 %v6514
    %6753 = vmatprep.subr.bf16.mxu0 %v6519
    %6754 = vmatpush1.bf16.msra.mxu0 %v6518
    %6755 = vmatprep.subr.bf16.mxu0 %v6523
    %6756 = vmatpush1.bf16.msra.mxu0 %v6522
    %6757 = vmatprep.subr.bf16.mxu0 %v6527
    %6758 = vmatpush1.bf16.msra.mxu0 %v6526
    %6759 = vmatprep.subr.bf16.mxu0 %v6531
    %6760 = vmatpush1.bf16.msra.mxu0 %v6530
    %6761 = vmatprep.subr.bf16.mxu0 %v6535
    %6762 = vmatpush1.bf16.msra.mxu0 %v6534
    %6763 = vmatprep.subr.bf16.mxu0 %v6539
    %6764 = vmatpush1.bf16.msra.mxu0 %v6538
    %6765 = vmatprep.subr.bf16.mxu0 %v6543
    %6766 = vmatpush1.bf16.msra.mxu0 %v6542
    %6767 = vmatprep.subr.bf16.mxu0 %v6547
    %6768 = vmatpush1.bf16.msra.mxu0 %v6546
    %6769 = vmatprep.subr.bf16.mxu0 %v6551
    %6770 = vmatpush1.bf16.msra.mxu0 %v6550
    %6771 = vmatprep.subr.bf16.mxu0 %v6555
    %6772 = vmatpush1.bf16.msra.mxu0 %v6554
    %6773 = vmatprep.subr.bf16.mxu0 %v6559
    %6774 = vmatpush1.bf16.msra.mxu0 %v6558
    %6775 = vmatprep.mubr.bf16.mxu0 %v4928
    %6776 = vmatmul.mubr.bf16.gmra.mrb[0].mxu0 %v4927
    %v6777 = vpop.f32.mrb[0].mxu0
    %v6778 = vadd.f32 %v6725, %v6777
    %v6779 = vpop.f32.mrb[0].mxu0
    %v6780 = vadd.f32 %v6727, %v6779
    %v6781 = vpop.f32.mrb[0].mxu0
    %v6782 = vadd.f32 %v6729, %v6781
    %v6783 = vpop.f32.mrb[0].mxu0
    %v6784 = vadd.f32 %v6731, %v6783
    %6785 = vmatprep.mubr.bf16.mxu0 %v4932
    %6786 = vmatmul.mubr.bf16.gmra.mrb[0].mxu0 %v4931
    %v6787 = vpop.f32.mrb[0].mxu0
    %v6788 = vadd.f32 %v6735, %v6787
    %v6789 = vpop.f32.mrb[0].mxu0
    %v6790 = vadd.f32 %v6737, %v6789
    %v6791 = vpop.f32.mrb[0].mxu0
    %v6792 = vadd.f32 %v6739, %v6791
    %v6793 = vpop.f32.mrb[0].mxu0
    %v6794 = vadd.f32 %v6741, %v6793
    %6795 = vdwg.mxu0
    %6796 = vmatprep.subr.bf16.mxu0 %v6437
    %6797 = vmatpush1.bf16.msra.mxu0 %v6436
    %6798 = vmatprep.subr.bf16.mxu0 %v6441
    %6799 = vmatpush1.bf16.msra.mxu0 %v6440
    %6800 = vmatprep.subr.bf16.mxu0 %v6445
    %6801 = vmatpush1.bf16.msra.mxu0 %v6444
    %6802 = vmatprep.subr.bf16.mxu0 %v6449
    %6803 = vmatpush1.bf16.msra.mxu0 %v6448
    %6804 = vmatprep.subr.bf16.mxu0 %v6453
    %6805 = vmatpush1.bf16.msra.mxu0 %v6452
    %6806 = vmatprep.subr.bf16.mxu0 %v6457
    %6807 = vmatpush1.bf16.msra.mxu0 %v6456
    %6808 = vmatprep.subr.bf16.mxu0 %v6461
    %6809 = vmatpush1.bf16.msra.mxu0 %v6460
    %6810 = vmatprep.subr.bf16.mxu0 %v6465
    %6811 = vmatpush1.bf16.msra.mxu0 %v6464
    %6812 = vmatprep.subr.bf16.mxu0 %v6469
    %6813 = vmatpush1.bf16.msra.mxu0 %v6468
    %6814 = vmatprep.subr.bf16.mxu0 %v6473
    %6815 = vmatpush1.bf16.msra.mxu0 %v6472
    %6816 = vmatprep.subr.bf16.mxu0 %v6477
    %6817 = vmatpush1.bf16.msra.mxu0 %v6476
    %6818 = vmatprep.subr.bf16.mxu0 %v6481
    %6819 = vmatpush1.bf16.msra.mxu0 %v6480
    %6820 = vmatprep.subr.bf16.mxu0 %v6485
    %6821 = vmatpush1.bf16.msra.mxu0 %v6484
    %6822 = vmatprep.subr.bf16.mxu0 %v6489
    %6823 = vmatpush1.bf16.msra.mxu0 %v6488
    %6824 = vmatprep.subr.bf16.mxu0 %v6493
    %6825 = vmatpush1.bf16.msra.mxu0 %v6492
    %6826 = vmatprep.subr.bf16.mxu0 %v6497
    %6827 = vmatpush1.bf16.msra.mxu0 %v6496
    %6828 = vmatprep.mubr.bf16.mxu0 %v4926
    %6829 = vmatmul.mubr.bf16.gmra.mrb[0].mxu0 %v4925
    %v6830 = vpop.f32.mrb[0].mxu0
    %v6831 = vadd.f32 %v6032, %v6830
    %v6832 = vpop.f32.mrb[0].mxu0
    %v6833 = vadd.f32 %v6034, %v6832
    %v6834 = vpop.f32.mrb[0].mxu0
    %v6835 = vadd.f32 %v6036, %v6834
    %v6836 = vpop.f32.mrb[0].mxu0
    %v6837 = vadd.f32 %v6038, %v6836
    %6838 = vmatprep.mubr.bf16.mxu0 %v4930
    %6839 = vmatmul.mubr.bf16.gmra.mrb[0].mxu0 %v4929
    %v6840 = vpop.f32.mrb[0].mxu0
    %v6841 = vadd.f32 %v6042, %v6840
    %v6842 = vpop.f32.mrb[0].mxu0
    %v6843 = vadd.f32 %v6044, %v6842
    %v6844 = vpop.f32.mrb[0].mxu0
    %v6845 = vadd.f32 %v6046, %v6844
    %v6846 = vpop.f32.mrb[0].mxu0
    %v6847 = vadd.f32 %v6048, %v6846
    %6848 = vdwg.mxu0
    %6849 = vmatprep.subr.bf16.mxu0 %v6501
    %6850 = vmatpush1.bf16.msra.mxu0 %v6500
    %6851 = vmatprep.subr.bf16.mxu0 %v6505
    %6852 = vmatpush1.bf16.msra.mxu0 %v6504
    %6853 = vmatprep.subr.bf16.mxu0 %v6509
    %6854 = vmatpush1.bf16.msra.mxu0 %v6508
    %6855 = vmatprep.subr.bf16.mxu0 %v6513
    %6856 = vmatpush1.bf16.msra.mxu0 %v6512
    %6857 = vmatprep.subr.bf16.mxu0 %v6517
    %6858 = vmatpush1.bf16.msra.mxu0 %v6516
    %6859 = vmatprep.subr.bf16.mxu0 %v6521
    %6860 = vmatpush1.bf16.msra.mxu0 %v6520
    %6861 = vmatprep.subr.bf16.mxu0 %v6525
    %6862 = vmatpush1.bf16.msra.mxu0 %v6524
    %6863 = vmatprep.subr.bf16.mxu0 %v6529
    %6864 = vmatpush1.bf16.msra.mxu0 %v6528
    %6865 = vmatprep.subr.bf16.mxu0 %v6533
    %6866 = vmatpush1.bf16.msra.mxu0 %v6532
    %6867 = vmatprep.subr.bf16.mxu0 %v6537
    %6868 = vmatpush1.bf16.msra.mxu0 %v6536
    %6869 = vmatprep.subr.bf16.mxu0 %v6541
    %6870 = vmatpush1.bf16.msra.mxu0 %v6540
    %6871 = vmatprep.subr.bf16.mxu0 %v6545
    %6872 = vmatpush1.bf16.msra.mxu0 %v6544
    %6873 = vmatprep.subr.bf16.mxu0 %v6549
    %6874 = vmatpush1.bf16.msra.mxu0 %v6548
    %6875 = vmatprep.subr.bf16.mxu0 %v6553
    %6876 = vmatpush1.bf16.msra.mxu0 %v6552
    %6877 = vmatprep.subr.bf16.mxu0 %v6557
    %6878 = vmatpush1.bf16.msra.mxu0 %v6556
    %6879 = vmatprep.subr.bf16.mxu0 %v6561
    %6880 = vmatpush1.bf16.msra.mxu0 %v6560
    %6881 = vmatprep.mubr.bf16.mxu0 %v4928
    %6882 = vmatmul.mubr.bf16.gmra.mrb[0].mxu0 %v4927
    %v6883 = vpop.f32.mrb[0].mxu0
    %v6884 = vadd.f32 %v6831, %v6883
    %v6885 = vpop.f32.mrb[0].mxu0
    %v6886 = vadd.f32 %v6833, %v6885
    %v6887 = vpop.f32.mrb[0].mxu0
    %v6888 = vadd.f32 %v6835, %v6887
    %v6889 = vpop.f32.mrb[0].mxu0
    %v6890 = vadd.f32 %v6837, %v6889
    %6891 = vmatprep.mubr.bf16.mxu0 %v4932
    %6892 = vmatmul.mubr.bf16.gmra.mrb[0].mxu0 %v4931
    %v6893 = vpop.f32.mrb[0].mxu0
    %v6894 = vadd.f32 %v6841, %v6893
    %v6895 = vpop.f32.mrb[0].mxu0
    %v6896 = vadd.f32 %v6843, %v6895
    %v6897 = vpop.f32.mrb[0].mxu0
    %v6898 = vadd.f32 %v6845, %v6897
    %v6899 = vpop.f32.mrb[0].mxu0
    %v6900 = vadd.f32 %v6847, %v6899
    %6901 = vdwg.mxu0
    %v6902 = vpack.c.bf16 %v4913, %v4909
    %v6903 = vpack.c.bf16 %v4914, %v4910
    %v6904 = vpack.c.bf16 %v4915, %v4911
    %v6905 = vpack.c.bf16 %v4916, %v4912
    %v6906 = vpack.c.bf16 %v4921, %v4917
    %v6907 = vpack.c.bf16 %v4922, %v4918
    %v6908 = vpack.c.bf16 %v4923, %v4919
    %v6909 = vpack.c.bf16 %v4924, %v4920
    %s6910 = scalar_lea.vmem [#allocation13], 2048
    %v6911 = vld [vmem:[%s6910] sm:$0xff]
    %v6912 = vld [vmem:[%s6910 + $0x8] sm:$0xff]
    %v6913 = vld [vmem:[%s6910 + $0x10] sm:$0xff]
    %v6914 = vld [vmem:[%s6910 + $0x18] sm:$0xff]
    %v6915 = vld [vmem:[%s6910 + $0x20] sm:$0xff]
    %v6916 = vld [vmem:[%s6910 + $0x28] sm:$0xff]
    %v6917 = vld [vmem:[%s6910 + $0x30] sm:$0xff]
    %v6918 = vld [vmem:[%s6910 + $0x38] sm:$0xff]
    %v6919 = vld [vmem:[%s6910 + $0x40] sm:$0xff]
    %v6920 = vld [vmem:[%s6910 + $0x48] sm:$0xff]
    %v6921 = vld [vmem:[%s6910 + $0x50] sm:$0xff]
    %v6922 = vld [vmem:[%s6910 + $0x58] sm:$0xff]
    %v6923 = vld [vmem:[%s6910 + $0x60] sm:$0xff]
    %v6924 = vld [vmem:[%s6910 + $0x68] sm:$0xff]
    %v6925 = vld [vmem:[%s6910 + $0x70] sm:$0xff]
    %v6926 = vld [vmem:[%s6910 + $0x78] sm:$0xff]
    %v6927 = vld [vmem:[%s6910 + $0x80] sm:$0xff]
    %v6928 = vld [vmem:[%s6910 + $0x88] sm:$0xff]
    %v6929 = vld [vmem:[%s6910 + $0x90] sm:$0xff]
    %v6930 = vld [vmem:[%s6910 + $0x98] sm:$0xff]
    %v6931 = vld [vmem:[%s6910 + $0xa0] sm:$0xff]
    %v6932 = vld [vmem:[%s6910 + $0xa8] sm:$0xff]
    %v6933 = vld [vmem:[%s6910 + $0xb0] sm:$0xff]
    %v6934 = vld [vmem:[%s6910 + $0xb8] sm:$0xff]
    %v6935 = vld [vmem:[%s6910 + $0xc0] sm:$0xff]
    %v6936 = vld [vmem:[%s6910 + $0xc8] sm:$0xff]
    %v6937 = vld [vmem:[%s6910 + $0xd0] sm:$0xff]
    %v6938 = vld [vmem:[%s6910 + $0xd8] sm:$0xff]
    %v6939 = vld [vmem:[%s6910 + $0xe0] sm:$0xff]
    %v6940 = vld [vmem:[%s6910 + $0xe8] sm:$0xff]
    %v6941 = vld [vmem:[%s6910 + $0xf0] sm:$0xff]
    %v6942 = vld [vmem:[%s6910 + $0xf8] sm:$0xff]
    %v6943 = vld [vmem:[%s6910 + $0x100] sm:$0xff]
    %v6944 = vld [vmem:[%s6910 + $0x108] sm:$0xff]
    %v6945 = vld [vmem:[%s6910 + $0x110] sm:$0xff]
    %v6946 = vld [vmem:[%s6910 + $0x118] sm:$0xff]
    %v6947 = vld [vmem:[%s6910 + $0x120] sm:$0xff]
    %v6948 = vld [vmem:[%s6910 + $0x128] sm:$0xff]
    %v6949 = vld [vmem:[%s6910 + $0x130] sm:$0xff]
    %v6950 = vld [vmem:[%s6910 + $0x138] sm:$0xff]
    %v6951 = vld [vmem:[%s6910 + $0x140] sm:$0xff]
    %v6952 = vld [vmem:[%s6910 + $0x148] sm:$0xff]
    %v6953 = vld [vmem:[%s6910 + $0x150] sm:$0xff]
    %v6954 = vld [vmem:[%s6910 + $0x158] sm:$0xff]
    %v6955 = vld [vmem:[%s6910 + $0x160] sm:$0xff]
    %v6956 = vld [vmem:[%s6910 + $0x168] sm:$0xff]
    %v6957 = vld [vmem:[%s6910 + $0x170] sm:$0xff]
    %v6958 = vld [vmem:[%s6910 + $0x178] sm:$0xff]
    %v6959 = vld [vmem:[%s6910 + $0x180] sm:$0xff]
    %v6960 = vld [vmem:[%s6910 + $0x188] sm:$0xff]
    %v6961 = vld [vmem:[%s6910 + $0x190] sm:$0xff]
    %v6962 = vld [vmem:[%s6910 + $0x198] sm:$0xff]
    %v6963 = vld [vmem:[%s6910 + $0x1a0] sm:$0xff]
    %v6964 = vld [vmem:[%s6910 + $0x1a8] sm:$0xff]
    %v6965 = vld [vmem:[%s6910 + $0x1b0] sm:$0xff]
    %v6966 = vld [vmem:[%s6910 + $0x1b8] sm:$0xff]
    %v6967 = vld [vmem:[%s6910 + $0x1c0] sm:$0xff]
    %v6968 = vld [vmem:[%s6910 + $0x1c8] sm:$0xff]
    %v6969 = vld [vmem:[%s6910 + $0x1d0] sm:$0xff]
    %v6970 = vld [vmem:[%s6910 + $0x1d8] sm:$0xff]
    %v6971 = vld [vmem:[%s6910 + $0x1e0] sm:$0xff]
    %v6972 = vld [vmem:[%s6910 + $0x1e8] sm:$0xff]
    %v6973 = vld [vmem:[%s6910 + $0x1f0] sm:$0xff]
    %v6974 = vld [vmem:[%s6910 + $0x1f8] sm:$0xff]
    %v6975 = vld [vmem:[%s6910 + $0x200] sm:$0xff]
    %v6976 = vld [vmem:[%s6910 + $0x208] sm:$0xff]
    %v6977 = vld [vmem:[%s6910 + $0x210] sm:$0xff]
    %v6978 = vld [vmem:[%s6910 + $0x218] sm:$0xff]
    %v6979 = vld [vmem:[%s6910 + $0x220] sm:$0xff]
    %v6980 = vld [vmem:[%s6910 + $0x228] sm:$0xff]
    %v6981 = vld [vmem:[%s6910 + $0x230] sm:$0xff]
    %v6982 = vld [vmem:[%s6910 + $0x238] sm:$0xff]
    %v6983 = vld [vmem:[%s6910 + $0x240] sm:$0xff]
    %v6984 = vld [vmem:[%s6910 + $0x248] sm:$0xff]
    %v6985 = vld [vmem:[%s6910 + $0x250] sm:$0xff]
    %v6986 = vld [vmem:[%s6910 + $0x258] sm:$0xff]
    %v6987 = vld [vmem:[%s6910 + $0x260] sm:$0xff]
    %v6988 = vld [vmem:[%s6910 + $0x268] sm:$0xff]
    %v6989 = vld [vmem:[%s6910 + $0x270] sm:$0xff]
    %v6990 = vld [vmem:[%s6910 + $0x278] sm:$0xff]
    %v6991 = vld [vmem:[%s6910 + $0x280] sm:$0xff]
    %v6992 = vld [vmem:[%s6910 + $0x288] sm:$0xff]
    %v6993 = vld [vmem:[%s6910 + $0x290] sm:$0xff]
    %v6994 = vld [vmem:[%s6910 + $0x298] sm:$0xff]
    %v6995 = vld [vmem:[%s6910 + $0x2a0] sm:$0xff]
    %v6996 = vld [vmem:[%s6910 + $0x2a8] sm:$0xff]
    %v6997 = vld [vmem:[%s6910 + $0x2b0] sm:$0xff]
    %v6998 = vld [vmem:[%s6910 + $0x2b8] sm:$0xff]
    %v6999 = vld [vmem:[%s6910 + $0x2c0] sm:$0xff]
    %v7000 = vld [vmem:[%s6910 + $0x2c8] sm:$0xff]
    %v7001 = vld [vmem:[%s6910 + $0x2d0] sm:$0xff]
    %v7002 = vld [vmem:[%s6910 + $0x2d8] sm:$0xff]
    %v7003 = vld [vmem:[%s6910 + $0x2e0] sm:$0xff]
    %v7004 = vld [vmem:[%s6910 + $0x2e8] sm:$0xff]
    %v7005 = vld [vmem:[%s6910 + $0x2f0] sm:$0xff]
    %v7006 = vld [vmem:[%s6910 + $0x2f8] sm:$0xff]
    %v7007 = vld [vmem:[%s6910 + $0x300] sm:$0xff]
    %v7008 = vld [vmem:[%s6910 + $0x308] sm:$0xff]
    %v7009 = vld [vmem:[%s6910 + $0x310] sm:$0xff]
    %v7010 = vld [vmem:[%s6910 + $0x318] sm:$0xff]
    %v7011 = vld [vmem:[%s6910 + $0x320] sm:$0xff]
    %v7012 = vld [vmem:[%s6910 + $0x328] sm:$0xff]
    %v7013 = vld [vmem:[%s6910 + $0x330] sm:$0xff]
    %v7014 = vld [vmem:[%s6910 + $0x338] sm:$0xff]
    %v7015 = vld [vmem:[%s6910 + $0x340] sm:$0xff]
    %v7016 = vld [vmem:[%s6910 + $0x348] sm:$0xff]
    %v7017 = vld [vmem:[%s6910 + $0x350] sm:$0xff]
    %v7018 = vld [vmem:[%s6910 + $0x358] sm:$0xff]
    %v7019 = vld [vmem:[%s6910 + $0x360] sm:$0xff]
    %v7020 = vld [vmem:[%s6910 + $0x368] sm:$0xff]
    %v7021 = vld [vmem:[%s6910 + $0x370] sm:$0xff]
    %v7022 = vld [vmem:[%s6910 + $0x378] sm:$0xff]
    %v7023 = vld [vmem:[%s6910 + $0x380] sm:$0xff]
    %v7024 = vld [vmem:[%s6910 + $0x388] sm:$0xff]
    %v7025 = vld [vmem:[%s6910 + $0x390] sm:$0xff]
    %v7026 = vld [vmem:[%s6910 + $0x398] sm:$0xff]
    %v7027 = vld [vmem:[%s6910 + $0x3a0] sm:$0xff]
    %v7028 = vld [vmem:[%s6910 + $0x3a8] sm:$0xff]
    %v7029 = vld [vmem:[%s6910 + $0x3b0] sm:$0xff]
    %v7030 = vld [vmem:[%s6910 + $0x3b8] sm:$0xff]
    %v7031 = vld [vmem:[%s6910 + $0x3c0] sm:$0xff]
    %v7032 = vld [vmem:[%s6910 + $0x3c8] sm:$0xff]
    %v7033 = vld [vmem:[%s6910 + $0x3d0] sm:$0xff]
    %v7034 = vld [vmem:[%s6910 + $0x3d8] sm:$0xff]
    %v7035 = vld [vmem:[%s6910 + $0x3e0] sm:$0xff]
    %v7036 = vld [vmem:[%s6910 + $0x3e8] sm:$0xff]
    %v7037 = vld [vmem:[%s6910 + $0x3f0] sm:$0xff]
    %v7038 = vld [vmem:[%s6910 + $0x3f8] sm:$0xff]
    %v7167 = vunpack.c.l.b16 %v6911
    %v7168 = vunpack.c.h.b16 %v6911
    %v7169 = vunpack.c.l.b16 %v6912
    %v7170 = vunpack.c.h.b16 %v6912
    %v7171 = vunpack.c.l.b16 %v6913
    %v7172 = vunpack.c.h.b16 %v6913
    %v7173 = vunpack.c.l.b16 %v6914
    %v7174 = vunpack.c.h.b16 %v6914
    %v7175 = vunpack.c.l.b16 %v6915
    %v7176 = vunpack.c.h.b16 %v6915
    %v7177 = vunpack.c.l.b16 %v6916
    %v7178 = vunpack.c.h.b16 %v6916
    %v7179 = vunpack.c.l.b16 %v6917
    %v7180 = vunpack.c.h.b16 %v6917
    %v7181 = vunpack.c.l.b16 %v6918
    %v7182 = vunpack.c.h.b16 %v6918
    %v7183 = vunpack.c.l.b16 %v6919
    %v7184 = vunpack.c.h.b16 %v6919
    %v7185 = vunpack.c.l.b16 %v6920
    %v7186 = vunpack.c.h.b16 %v6920
    %v7187 = vunpack.c.l.b16 %v6921
    %v7188 = vunpack.c.h.b16 %v6921
    %v7189 = vunpack.c.l.b16 %v6922
    %v7190 = vunpack.c.h.b16 %v6922
    %v7191 = vunpack.c.l.b16 %v6923
    %v7192 = vunpack.c.h.b16 %v6923
    %v7193 = vunpack.c.l.b16 %v6924
    %v7194 = vunpack.c.h.b16 %v6924
    %v7195 = vunpack.c.l.b16 %v6925
    %v7196 = vunpack.c.h.b16 %v6925
    %v7197 = vunpack.c.l.b16 %v6926
    %v7198 = vunpack.c.h.b16 %v6926
    %v7199 = vunpack.c.l.b16 %v6927
    %v7200 = vunpack.c.h.b16 %v6927
    %v7201 = vunpack.c.l.b16 %v6928
    %v7202 = vunpack.c.h.b16 %v6928
    %v7203 = vunpack.c.l.b16 %v6929
    %v7204 = vunpack.c.h.b16 %v6929
    %v7205 = vunpack.c.l.b16 %v6930
    %v7206 = vunpack.c.h.b16 %v6930
    %v7207 = vunpack.c.l.b16 %v6931
    %v7208 = vunpack.c.h.b16 %v6931
    %v7209 = vunpack.c.l.b16 %v6932
    %v7210 = vunpack.c.h.b16 %v6932
    %v7211 = vunpack.c.l.b16 %v6933
    %v7212 = vunpack.c.h.b16 %v6933
    %v7213 = vunpack.c.l.b16 %v6934
    %v7214 = vunpack.c.h.b16 %v6934
    %v7215 = vunpack.c.l.b16 %v6935
    %v7216 = vunpack.c.h.b16 %v6935
    %v7217 = vunpack.c.l.b16 %v6936
    %v7218 = vunpack.c.h.b16 %v6936
    %v7219 = vunpack.c.l.b16 %v6937
    %v7220 = vunpack.c.h.b16 %v6937
    %v7221 = vunpack.c.l.b16 %v6938
    %v7222 = vunpack.c.h.b16 %v6938
    %v7223 = vunpack.c.l.b16 %v6939
    %v7224 = vunpack.c.h.b16 %v6939
    %v7225 = vunpack.c.l.b16 %v6940
    %v7226 = vunpack.c.h.b16 %v6940
    %v7227 = vunpack.c.l.b16 %v6941
    %v7228 = vunpack.c.h.b16 %v6941
    %v7229 = vunpack.c.l.b16 %v6942
    %v7230 = vunpack.c.h.b16 %v6942
    %v7231 = vunpack.c.l.b16 %v6943
    %v7232 = vunpack.c.h.b16 %v6943
    %v7233 = vunpack.c.l.b16 %v6944
    %v7234 = vunpack.c.h.b16 %v6944
    %v7235 = vunpack.c.l.b16 %v6945
    %v7236 = vunpack.c.h.b16 %v6945
    %v7237 = vunpack.c.l.b16 %v6946
    %v7238 = vunpack.c.h.b16 %v6946
    %v7239 = vunpack.c.l.b16 %v6947
    %v7240 = vunpack.c.h.b16 %v6947
    %v7241 = vunpack.c.l.b16 %v6948
    %v7242 = vunpack.c.h.b16 %v6948
    %v7243 = vunpack.c.l.b16 %v6949
    %v7244 = vunpack.c.h.b16 %v6949
    %v7245 = vunpack.c.l.b16 %v6950
    %v7246 = vunpack.c.h.b16 %v6950
    %v7247 = vunpack.c.l.b16 %v6951
    %v7248 = vunpack.c.h.b16 %v6951
    %v7249 = vunpack.c.l.b16 %v6952
    %v7250 = vunpack.c.h.b16 %v6952
    %v7251 = vunpack.c.l.b16 %v6953
    %v7252 = vunpack.c.h.b16 %v6953
    %v7253 = vunpack.c.l.b16 %v6954
    %v7254 = vunpack.c.h.b16 %v6954
    %v7255 = vunpack.c.l.b16 %v6955
    %v7256 = vunpack.c.h.b16 %v6955
    %v7257 = vunpack.c.l.b16 %v6956
    %v7258 = vunpack.c.h.b16 %v6956
    %v7259 = vunpack.c.l.b16 %v6957
    %v7260 = vunpack.c.h.b16 %v6957
    %v7261 = vunpack.c.l.b16 %v6958
    %v7262 = vunpack.c.h.b16 %v6958
    %v7263 = vunpack.c.l.b16 %v6959
    %v7264 = vunpack.c.h.b16 %v6959
    %v7265 = vunpack.c.l.b16 %v6960
    %v7266 = vunpack.c.h.b16 %v6960
    %v7267 = vunpack.c.l.b16 %v6961
    %v7268 = vunpack.c.h.b16 %v6961
    %v7269 = vunpack.c.l.b16 %v6962
    %v7270 = vunpack.c.h.b16 %v6962
    %v7271 = vunpack.c.l.b16 %v6963
    %v7272 = vunpack.c.h.b16 %v6963
    %v7273 = vunpack.c.l.b16 %v6964
    %v7274 = vunpack.c.h.b16 %v6964
    %v7275 = vunpack.c.l.b16 %v6965
    %v7276 = vunpack.c.h.b16 %v6965
    %v7277 = vunpack.c.l.b16 %v6966
    %v7278 = vunpack.c.h.b16 %v6966
    %v7279 = vunpack.c.l.b16 %v6967
    %v7280 = vunpack.c.h.b16 %v6967
    %v7281 = vunpack.c.l.b16 %v6968
    %v7282 = vunpack.c.h.b16 %v6968
    %v7283 = vunpack.c.l.b16 %v6969
    %v7284 = vunpack.c.h.b16 %v6969
    %v7285 = vunpack.c.l.b16 %v6970
    %v7286 = vunpack.c.h.b16 %v6970
    %v7287 = vunpack.c.l.b16 %v6971
    %v7288 = vunpack.c.h.b16 %v6971
    %v7289 = vunpack.c.l.b16 %v6972
    %v7290 = vunpack.c.h.b16 %v6972
    %v7291 = vunpack.c.l.b16 %v6973
    %v7292 = vunpack.c.h.b16 %v6973
    %v7293 = vunpack.c.l.b16 %v6974
    %v7294 = vunpack.c.h.b16 %v6974
    %v7295 = vunpack.c.l.b16 %v6975
    %v7296 = vunpack.c.h.b16 %v6975
    %v7297 = vunpack.c.l.b16 %v6976
    %v7298 = vunpack.c.h.b16 %v6976
    %v7299 = vunpack.c.l.b16 %v6977
    %v7300 = vunpack.c.h.b16 %v6977
    %v7301 = vunpack.c.l.b16 %v6978
    %v7302 = vunpack.c.h.b16 %v6978
    %v7303 = vunpack.c.l.b16 %v6979
    %v7304 = vunpack.c.h.b16 %v6979
    %v7305 = vunpack.c.l.b16 %v6980
    %v7306 = vunpack.c.h.b16 %v6980
    %v7307 = vunpack.c.l.b16 %v6981
    %v7308 = vunpack.c.h.b16 %v6981
    %v7309 = vunpack.c.l.b16 %v6982
    %v7310 = vunpack.c.h.b16 %v6982
    %v7311 = vunpack.c.l.b16 %v6983
    %v7312 = vunpack.c.h.b16 %v6983
    %v7313 = vunpack.c.l.b16 %v6984
    %v7314 = vunpack.c.h.b16 %v6984
    %v7315 = vunpack.c.l.b16 %v6985
    %v7316 = vunpack.c.h.b16 %v6985
    %v7317 = vunpack.c.l.b16 %v6986
    %v7318 = vunpack.c.h.b16 %v6986
    %v7319 = vunpack.c.l.b16 %v6987
    %v7320 = vunpack.c.h.b16 %v6987
    %v7321 = vunpack.c.l.b16 %v6988
    %v7322 = vunpack.c.h.b16 %v6988
    %v7323 = vunpack.c.l.b16 %v6989
    %v7324 = vunpack.c.h.b16 %v6989
    %v7325 = vunpack.c.l.b16 %v6990
    %v7326 = vunpack.c.h.b16 %v6990
    %v7327 = vunpack.c.l.b16 %v6991
    %v7328 = vunpack.c.h.b16 %v6991
    %v7329 = vunpack.c.l.b16 %v6992
    %v7330 = vunpack.c.h.b16 %v6992
    %v7331 = vunpack.c.l.b16 %v6993
    %v7332 = vunpack.c.h.b16 %v6993
    %v7333 = vunpack.c.l.b16 %v6994
    %v7334 = vunpack.c.h.b16 %v6994
    %v7335 = vunpack.c.l.b16 %v6995
    %v7336 = vunpack.c.h.b16 %v6995
    %v7337 = vunpack.c.l.b16 %v6996
    %v7338 = vunpack.c.h.b16 %v6996
    %v7339 = vunpack.c.l.b16 %v6997
    %v7340 = vunpack.c.h.b16 %v6997
    %v7341 = vunpack.c.l.b16 %v6998
    %v7342 = vunpack.c.h.b16 %v6998
    %v7343 = vunpack.c.l.b16 %v6999
    %v7344 = vunpack.c.h.b16 %v6999
    %v7345 = vunpack.c.l.b16 %v7000
    %v7346 = vunpack.c.h.b16 %v7000
    %v7347 = vunpack.c.l.b16 %v7001
    %v7348 = vunpack.c.h.b16 %v7001
    %v7349 = vunpack.c.l.b16 %v7002
    %v7350 = vunpack.c.h.b16 %v7002
    %v7351 = vunpack.c.l.b16 %v7003
    %v7352 = vunpack.c.h.b16 %v7003
    %v7353 = vunpack.c.l.b16 %v7004
    %v7354 = vunpack.c.h.b16 %v7004
    %v7355 = vunpack.c.l.b16 %v7005
    %v7356 = vunpack.c.h.b16 %v7005
    %v7357 = vunpack.c.l.b16 %v7006
    %v7358 = vunpack.c.h.b16 %v7006
    %v7359 = vunpack.c.l.b16 %v7007
    %v7360 = vunpack.c.h.b16 %v7007
    %v7361 = vunpack.c.l.b16 %v7008
    %v7362 = vunpack.c.h.b16 %v7008
    %v7363 = vunpack.c.l.b16 %v7009
    %v7364 = vunpack.c.h.b16 %v7009
    %v7365 = vunpack.c.l.b16 %v7010
    %v7366 = vunpack.c.h.b16 %v7010
    %v7367 = vunpack.c.l.b16 %v7011
    %v7368 = vunpack.c.h.b16 %v7011
    %v7369 = vunpack.c.l.b16 %v7012
    %v7370 = vunpack.c.h.b16 %v7012
    %v7371 = vunpack.c.l.b16 %v7013
    %v7372 = vunpack.c.h.b16 %v7013
    %v7373 = vunpack.c.l.b16 %v7014
    %v7374 = vunpack.c.h.b16 %v7014
    %v7375 = vunpack.c.l.b16 %v7015
    %v7376 = vunpack.c.h.b16 %v7015
    %v7377 = vunpack.c.l.b16 %v7016
    %v7378 = vunpack.c.h.b16 %v7016
    %v7379 = vunpack.c.l.b16 %v7017
    %v7380 = vunpack.c.h.b16 %v7017
    %v7381 = vunpack.c.l.b16 %v7018
    %v7382 = vunpack.c.h.b16 %v7018
    %v7383 = vunpack.c.l.b16 %v7019
    %v7384 = vunpack.c.h.b16 %v7019
    %v7385 = vunpack.c.l.b16 %v7020
    %v7386 = vunpack.c.h.b16 %v7020
    %v7387 = vunpack.c.l.b16 %v7021
    %v7388 = vunpack.c.h.b16 %v7021
    %v7389 = vunpack.c.l.b16 %v7022
    %v7390 = vunpack.c.h.b16 %v7022
    %v7391 = vunpack.c.l.b16 %v7023
    %v7392 = vunpack.c.h.b16 %v7023
    %v7393 = vunpack.c.l.b16 %v7024
    %v7394 = vunpack.c.h.b16 %v7024
    %v7395 = vunpack.c.l.b16 %v7025
    %v7396 = vunpack.c.h.b16 %v7025
    %v7397 = vunpack.c.l.b16 %v7026
    %v7398 = vunpack.c.h.b16 %v7026
    %v7399 = vunpack.c.l.b16 %v7027
    %v7400 = vunpack.c.h.b16 %v7027
    %v7401 = vunpack.c.l.b16 %v7028
    %v7402 = vunpack.c.h.b16 %v7028
    %v7403 = vunpack.c.l.b16 %v7029
    %v7404 = vunpack.c.h.b16 %v7029
    %v7405 = vunpack.c.l.b16 %v7030
    %v7406 = vunpack.c.h.b16 %v7030
    %v7407 = vunpack.c.l.b16 %v7031
    %v7408 = vunpack.c.h.b16 %v7031
    %v7409 = vunpack.c.l.b16 %v7032
    %v7410 = vunpack.c.h.b16 %v7032
    %v7411 = vunpack.c.l.b16 %v7033
    %v7412 = vunpack.c.h.b16 %v7033
    %v7413 = vunpack.c.l.b16 %v7034
    %v7414 = vunpack.c.h.b16 %v7034
    %v7415 = vunpack.c.l.b16 %v7035
    %v7416 = vunpack.c.h.b16 %v7035
    %v7417 = vunpack.c.l.b16 %v7036
    %v7418 = vunpack.c.h.b16 %v7036
    %v7419 = vunpack.c.l.b16 %v7037
    %v7420 = vunpack.c.h.b16 %v7037
    %v7421 = vunpack.c.l.b16 %v7038
    %v7422 = vunpack.c.h.b16 %v7038
    %v7423 = vpack.c.b16 %v7171, %v7167
    %v7424 = vpack.c.b16 %v7172, %v7168
    %v7425 = vpack.c.b16 %v7173, %v7169
    %v7426 = vpack.c.b16 %v7174, %v7170
    %v7427 = vpack.c.b16 %v7179, %v7175
    %v7428 = vpack.c.b16 %v7180, %v7176
    %v7429 = vpack.c.b16 %v7181, %v7177
    %v7430 = vpack.c.b16 %v7182, %v7178
    %v7431 = vpack.c.b16 %v7187, %v7183
    %v7432 = vpack.c.b16 %v7188, %v7184
    %v7433 = vpack.c.b16 %v7189, %v7185
    %v7434 = vpack.c.b16 %v7190, %v7186
    %v7435 = vpack.c.b16 %v7195, %v7191
    %v7436 = vpack.c.b16 %v7196, %v7192
    %v7437 = vpack.c.b16 %v7197, %v7193
    %v7438 = vpack.c.b16 %v7198, %v7194
    %v7439 = vpack.c.b16 %v7203, %v7199
    %v7440 = vpack.c.b16 %v7204, %v7200
    %v7441 = vpack.c.b16 %v7205, %v7201
    %v7442 = vpack.c.b16 %v7206, %v7202
    %v7443 = vpack.c.b16 %v7211, %v7207
    %v7444 = vpack.c.b16 %v7212, %v7208
    %v7445 = vpack.c.b16 %v7213, %v7209
    %v7446 = vpack.c.b16 %v7214, %v7210
    %v7447 = vpack.c.b16 %v7219, %v7215
    %v7448 = vpack.c.b16 %v7220, %v7216
    %v7449 = vpack.c.b16 %v7221, %v7217
    %v7450 = vpack.c.b16 %v7222, %v7218
    %v7451 = vpack.c.b16 %v7227, %v7223
    %v7452 = vpack.c.b16 %v7228, %v7224
    %v7453 = vpack.c.b16 %v7229, %v7225
    %v7454 = vpack.c.b16 %v7230, %v7226
    %v7455 = vpack.c.b16 %v7235, %v7231
    %v7456 = vpack.c.b16 %v7236, %v7232
    %v7457 = vpack.c.b16 %v7237, %v7233
    %v7458 = vpack.c.b16 %v7238, %v7234
    %v7459 = vpack.c.b16 %v7243, %v7239
    %v7460 = vpack.c.b16 %v7244, %v7240
    %v7461 = vpack.c.b16 %v7245, %v7241
    %v7462 = vpack.c.b16 %v7246, %v7242
    %v7463 = vpack.c.b16 %v7251, %v7247
    %v7464 = vpack.c.b16 %v7252, %v7248
    %v7465 = vpack.c.b16 %v7253, %v7249
    %v7466 = vpack.c.b16 %v7254, %v7250
    %v7467 = vpack.c.b16 %v7259, %v7255
    %v7468 = vpack.c.b16 %v7260, %v7256
    %v7469 = vpack.c.b16 %v7261, %v7257
    %v7470 = vpack.c.b16 %v7262, %v7258
    %v7471 = vpack.c.b16 %v7267, %v7263
    %v7472 = vpack.c.b16 %v7268, %v7264
    %v7473 = vpack.c.b16 %v7269, %v7265
    %v7474 = vpack.c.b16 %v7270, %v7266
    %v7475 = vpack.c.b16 %v7275, %v7271
    %v7476 = vpack.c.b16 %v7276, %v7272
    %v7477 = vpack.c.b16 %v7277, %v7273
    %v7478 = vpack.c.b16 %v7278, %v7274
    %v7479 = vpack.c.b16 %v7283, %v7279
    %v7480 = vpack.c.b16 %v7284, %v7280
    %v7481 = vpack.c.b16 %v7285, %v7281
    %v7482 = vpack.c.b16 %v7286, %v7282
    %v7483 = vpack.c.b16 %v7291, %v7287
    %v7484 = vpack.c.b16 %v7292, %v7288
    %v7485 = vpack.c.b16 %v7293, %v7289
    %v7486 = vpack.c.b16 %v7294, %v7290
    %v7487 = vpack.c.b16 %v7299, %v7295
    %v7488 = vpack.c.b16 %v7300, %v7296
    %v7489 = vpack.c.b16 %v7301, %v7297
    %v7490 = vpack.c.b16 %v7302, %v7298
    %v7491 = vpack.c.b16 %v7307, %v7303
    %v7492 = vpack.c.b16 %v7308, %v7304
    %v7493 = vpack.c.b16 %v7309, %v7305
    %v7494 = vpack.c.b16 %v7310, %v7306
    %v7495 = vpack.c.b16 %v7315, %v7311
    %v7496 = vpack.c.b16 %v7316, %v7312
    %v7497 = vpack.c.b16 %v7317, %v7313
    %v7498 = vpack.c.b16 %v7318, %v7314
    %v7499 = vpack.c.b16 %v7323, %v7319
    %v7500 = vpack.c.b16 %v7324, %v7320
    %v7501 = vpack.c.b16 %v7325, %v7321
    %v7502 = vpack.c.b16 %v7326, %v7322
    %v7503 = vpack.c.b16 %v7331, %v7327
    %v7504 = vpack.c.b16 %v7332, %v7328
    %v7505 = vpack.c.b16 %v7333, %v7329
    %v7506 = vpack.c.b16 %v7334, %v7330
    %v7507 = vpack.c.b16 %v7339, %v7335
    %v7508 = vpack.c.b16 %v7340, %v7336
    %v7509 = vpack.c.b16 %v7341, %v7337
    %v7510 = vpack.c.b16 %v7342, %v7338
    %v7511 = vpack.c.b16 %v7347, %v7343
    %v7512 = vpack.c.b16 %v7348, %v7344
    %v7513 = vpack.c.b16 %v7349, %v7345
    %v7514 = vpack.c.b16 %v7350, %v7346
    %v7515 = vpack.c.b16 %v7355, %v7351
    %v7516 = vpack.c.b16 %v7356, %v7352
    %v7517 = vpack.c.b16 %v7357, %v7353
    %v7518 = vpack.c.b16 %v7358, %v7354
    %v7519 = vpack.c.b16 %v7363, %v7359
    %v7520 = vpack.c.b16 %v7364, %v7360
    %v7521 = vpack.c.b16 %v7365, %v7361
    %v7522 = vpack.c.b16 %v7366, %v7362
    %v7523 = vpack.c.b16 %v7371, %v7367
    %v7524 = vpack.c.b16 %v7372, %v7368
    %v7525 = vpack.c.b16 %v7373, %v7369
    %v7526 = vpack.c.b16 %v7374, %v7370
    %v7527 = vpack.c.b16 %v7379, %v7375
    %v7528 = vpack.c.b16 %v7380, %v7376
    %v7529 = vpack.c.b16 %v7381, %v7377
    %v7530 = vpack.c.b16 %v7382, %v7378
    %v7531 = vpack.c.b16 %v7387, %v7383
    %v7532 = vpack.c.b16 %v7388, %v7384
    %v7533 = vpack.c.b16 %v7389, %v7385
    %v7534 = vpack.c.b16 %v7390, %v7386
    %v7535 = vpack.c.b16 %v7395, %v7391
    %v7536 = vpack.c.b16 %v7396, %v7392
    %v7537 = vpack.c.b16 %v7397, %v7393
    %v7538 = vpack.c.b16 %v7398, %v7394
    %v7539 = vpack.c.b16 %v7403, %v7399
    %v7540 = vpack.c.b16 %v7404, %v7400
    %v7541 = vpack.c.b16 %v7405, %v7401
    %v7542 = vpack.c.b16 %v7406, %v7402
    %v7543 = vpack.c.b16 %v7411, %v7407
    %v7544 = vpack.c.b16 %v7412, %v7408
    %v7545 = vpack.c.b16 %v7413, %v7409
    %v7546 = vpack.c.b16 %v7414, %v7410
    %v7547 = vpack.c.b16 %v7419, %v7415
    %v7548 = vpack.c.b16 %v7420, %v7416
    %v7549 = vpack.c.b16 %v7421, %v7417
    %v7550 = vpack.c.b16 %v7422, %v7418
    %7679 = vmatprep.subr.bf16.mxu0 %v7424
    %7680 = vmatpush1.bf16.msra.mxu0 %v7423
    %7681 = vmatprep.subr.bf16.mxu0 %v7428
    %7682 = vmatpush1.bf16.msra.mxu0 %v7427
    %7683 = vmatprep.subr.bf16.mxu0 %v7432
    %7684 = vmatpush1.bf16.msra.mxu0 %v7431
    %7685 = vmatprep.subr.bf16.mxu0 %v7436
    %7686 = vmatpush1.bf16.msra.mxu0 %v7435
    %7687 = vmatprep.subr.bf16.mxu0 %v7440
    %7688 = vmatpush1.bf16.msra.mxu0 %v7439
    %7689 = vmatprep.subr.bf16.mxu0 %v7444
    %7690 = vmatpush1.bf16.msra.mxu0 %v7443
    %7691 = vmatprep.subr.bf16.mxu0 %v7448
    %7692 = vmatpush1.bf16.msra.mxu0 %v7447
    %7693 = vmatprep.subr.bf16.mxu0 %v7452
    %7694 = vmatpush1.bf16.msra.mxu0 %v7451
    %7695 = vmatprep.subr.bf16.mxu0 %v7456
    %7696 = vmatpush1.bf16.msra.mxu0 %v7455
    %7697 = vmatprep.subr.bf16.mxu0 %v7460
    %7698 = vmatpush1.bf16.msra.mxu0 %v7459
    %7699 = vmatprep.subr.bf16.mxu0 %v7464
    %7700 = vmatpush1.bf16.msra.mxu0 %v7463
    %7701 = vmatprep.subr.bf16.mxu0 %v7468
    %7702 = vmatpush1.bf16.msra.mxu0 %v7467
    %7703 = vmatprep.subr.bf16.mxu0 %v7472
    %7704 = vmatpush1.bf16.msra.mxu0 %v7471
    %7705 = vmatprep.subr.bf16.mxu0 %v7476
    %7706 = vmatpush1.bf16.msra.mxu0 %v7475
    %7707 = vmatprep.subr.bf16.mxu0 %v7480
    %7708 = vmatpush1.bf16.msra.mxu0 %v7479
    %7709 = vmatprep.subr.bf16.mxu0 %v7484
    %7710 = vmatpush1.bf16.msra.mxu0 %v7483
    %7711 = vmatprep.mubr.bf16.mxu0 %v6903
    %7712 = vmatmul.mubr.bf16.gmra.mrb[0].mxu0 %v6902
    %v7713 = vpop.f32.mrb[0].mxu0
    %v7714 = vadd.f32 0.0, %v7713
    %v7715 = vpop.f32.mrb[0].mxu0
    %v7716 = vadd.f32 0.0, %v7715
    %v7717 = vpop.f32.mrb[0].mxu0
    %v7718 = vadd.f32 0.0, %v7717
    %v7719 = vpop.f32.mrb[0].mxu0
    %v7720 = vadd.f32 0.0, %v7719
    %7721 = vmatprep.mubr.bf16.mxu0 %v6907
    %7722 = vmatmul.mubr.bf16.gmra.mrb[0].mxu0 %v6906
    %v7723 = vpop.f32.mrb[0].mxu0
    %v7724 = vadd.f32 0.0, %v7723
    %v7725 = vpop.f32.mrb[0].mxu0
    %v7726 = vadd.f32 0.0, %v7725
    %v7727 = vpop.f32.mrb[0].mxu0
    %v7728 = vadd.f32 0.0, %v7727
    %v7729 = vpop.f32.mrb[0].mxu0
    %v7730 = vadd.f32 0.0, %v7729
    %7731 = vdwg.mxu0
    %7732 = vmatprep.subr.bf16.mxu0 %v7488
    %7733 = vmatpush1.bf16.msra.mxu0 %v7487
    %7734 = vmatprep.subr.bf16.mxu0 %v7492
    %7735 = vmatpush1.bf16.msra.mxu0 %v7491
    %7736 = vmatprep.subr.bf16.mxu0 %v7496
    %7737 = vmatpush1.bf16.msra.mxu0 %v7495
    %7738 = vmatprep.subr.bf16.mxu0 %v7500
    %7739 = vmatpush1.bf16.msra.mxu0 %v7499
    %7740 = vmatprep.subr.bf16.mxu0 %v7504
    %7741 = vmatpush1.bf16.msra.mxu0 %v7503
    %7742 = vmatprep.subr.bf16.mxu0 %v7508
    %7743 = vmatpush1.bf16.msra.mxu0 %v7507
    %7744 = vmatprep.subr.bf16.mxu0 %v7512
    %7745 = vmatpush1.bf16.msra.mxu0 %v7511
    %7746 = vmatprep.subr.bf16.mxu0 %v7516
    %7747 = vmatpush1.bf16.msra.mxu0 %v7515
    %7748 = vmatprep.subr.bf16.mxu0 %v7520
    %7749 = vmatpush1.bf16.msra.mxu0 %v7519
    %7750 = vmatprep.subr.bf16.mxu0 %v7524
    %7751 = vmatpush1.bf16.msra.mxu0 %v7523
    %7752 = vmatprep.subr.bf16.mxu0 %v7528
    %7753 = vmatpush1.bf16.msra.mxu0 %v7527
    %7754 = vmatprep.subr.bf16.mxu0 %v7532
    %7755 = vmatpush1.bf16.msra.mxu0 %v7531
    %7756 = vmatprep.subr.bf16.mxu0 %v7536
    %7757 = vmatpush1.bf16.msra.mxu0 %v7535
    %7758 = vmatprep.subr.bf16.mxu0 %v7540
    %7759 = vmatpush1.bf16.msra.mxu0 %v7539
    %7760 = vmatprep.subr.bf16.mxu0 %v7544
    %7761 = vmatpush1.bf16.msra.mxu0 %v7543
    %7762 = vmatprep.subr.bf16.mxu0 %v7548
    %7763 = vmatpush1.bf16.msra.mxu0 %v7547
    %7764 = vmatprep.mubr.bf16.mxu0 %v6905
    %7765 = vmatmul.mubr.bf16.gmra.mrb[0].mxu0 %v6904
    %v7766 = vpop.f32.mrb[0].mxu0
    %v7767 = vadd.f32 %v7714, %v7766
    %v7768 = vpop.f32.mrb[0].mxu0
    %v7769 = vadd.f32 %v7716, %v7768
    %v7770 = vpop.f32.mrb[0].mxu0
    %v7771 = vadd.f32 %v7718, %v7770
    %v7772 = vpop.f32.mrb[0].mxu0
    %v7773 = vadd.f32 %v7720, %v7772
    %7774 = vmatprep.mubr.bf16.mxu0 %v6909
    %7775 = vmatmul.mubr.bf16.gmra.mrb[0].mxu0 %v6908
    %v7776 = vpop.f32.mrb[0].mxu0
    %v7777 = vadd.f32 %v7724, %v7776
    %v7778 = vpop.f32.mrb[0].mxu0
    %v7779 = vadd.f32 %v7726, %v7778
    %v7780 = vpop.f32.mrb[0].mxu0
    %v7781 = vadd.f32 %v7728, %v7780
    %v7782 = vpop.f32.mrb[0].mxu0
    %v7783 = vadd.f32 %v7730, %v7782
    %7784 = vdwg.mxu0
    %7785 = vmatprep.subr.bf16.mxu0 %v7426
    %7786 = vmatpush1.bf16.msra.mxu0 %v7425
    %7787 = vmatprep.subr.bf16.mxu0 %v7430
    %7788 = vmatpush1.bf16.msra.mxu0 %v7429
    %7789 = vmatprep.subr.bf16.mxu0 %v7434
    %7790 = vmatpush1.bf16.msra.mxu0 %v7433
    %7791 = vmatprep.subr.bf16.mxu0 %v7438
    %7792 = vmatpush1.bf16.msra.mxu0 %v7437
    %7793 = vmatprep.subr.bf16.mxu0 %v7442
    %7794 = vmatpush1.bf16.msra.mxu0 %v7441
    %7795 = vmatprep.subr.bf16.mxu0 %v7446
    %7796 = vmatpush1.bf16.msra.mxu0 %v7445
    %7797 = vmatprep.subr.bf16.mxu0 %v7450
    %7798 = vmatpush1.bf16.msra.mxu0 %v7449
    %7799 = vmatprep.subr.bf16.mxu0 %v7454
    %7800 = vmatpush1.bf16.msra.mxu0 %v7453
    %7801 = vmatprep.subr.bf16.mxu0 %v7458
    %7802 = vmatpush1.bf16.msra.mxu0 %v7457
    %7803 = vmatprep.subr.bf16.mxu0 %v7462
    %7804 = vmatpush1.bf16.msra.mxu0 %v7461
    %7805 = vmatprep.subr.bf16.mxu0 %v7466
    %7806 = vmatpush1.bf16.msra.mxu0 %v7465
    %7807 = vmatprep.subr.bf16.mxu0 %v7470
    %7808 = vmatpush1.bf16.msra.mxu0 %v7469
    %7809 = vmatprep.subr.bf16.mxu0 %v7474
    %7810 = vmatpush1.bf16.msra.mxu0 %v7473
    %7811 = vmatprep.subr.bf16.mxu0 %v7478
    %7812 = vmatpush1.bf16.msra.mxu0 %v7477
    %7813 = vmatprep.subr.bf16.mxu0 %v7482
    %7814 = vmatpush1.bf16.msra.mxu0 %v7481
    %7815 = vmatprep.subr.bf16.mxu0 %v7486
    %7816 = vmatpush1.bf16.msra.mxu0 %v7485
    %7817 = vmatprep.mubr.bf16.mxu0 %v6903
    %7818 = vmatmul.mubr.bf16.gmra.mrb[0].mxu0 %v6902
    %v7819 = vpop.f32.mrb[0].mxu0
    %v7820 = vadd.f32 0.0, %v7819
    %v7821 = vpop.f32.mrb[0].mxu0
    %v7822 = vadd.f32 0.0, %v7821
    %v7823 = vpop.f32.mrb[0].mxu0
    %v7824 = vadd.f32 0.0, %v7823
    %v7825 = vpop.f32.mrb[0].mxu0
    %v7826 = vadd.f32 0.0, %v7825
    %7827 = vmatprep.mubr.bf16.mxu0 %v6907
    %7828 = vmatmul.mubr.bf16.gmra.mrb[0].mxu0 %v6906
    %v7829 = vpop.f32.mrb[0].mxu0
    %v7830 = vadd.f32 0.0, %v7829
    %v7831 = vpop.f32.mrb[0].mxu0
    %v7832 = vadd.f32 0.0, %v7831
    %v7833 = vpop.f32.mrb[0].mxu0
    %v7834 = vadd.f32 0.0, %v7833
    %v7835 = vpop.f32.mrb[0].mxu0
    %v7836 = vadd.f32 0.0, %v7835
    %7837 = vdwg.mxu0
    %7838 = vmatprep.subr.bf16.mxu0 %v7490
    %7839 = vmatpush1.bf16.msra.mxu0 %v7489
    %7840 = vmatprep.subr.bf16.mxu0 %v7494
    %7841 = vmatpush1.bf16.msra.mxu0 %v7493
    %7842 = vmatprep.subr.bf16.mxu0 %v7498
    %7843 = vmatpush1.bf16.msra.mxu0 %v7497
    %7844 = vmatprep.subr.bf16.mxu0 %v7502
    %7845 = vmatpush1.bf16.msra.mxu0 %v7501
    %7846 = vmatprep.subr.bf16.mxu0 %v7506
    %7847 = vmatpush1.bf16.msra.mxu0 %v7505
    %7848 = vmatprep.subr.bf16.mxu0 %v7510
    %7849 = vmatpush1.bf16.msra.mxu0 %v7509
    %7850 = vmatprep.subr.bf16.mxu0 %v7514
    %7851 = vmatpush1.bf16.msra.mxu0 %v7513
    %7852 = vmatprep.subr.bf16.mxu0 %v7518
    %7853 = vmatpush1.bf16.msra.mxu0 %v7517
    %7854 = vmatprep.subr.bf16.mxu0 %v7522
    %7855 = vmatpush1.bf16.msra.mxu0 %v7521
    %7856 = vmatprep.subr.bf16.mxu0 %v7526
    %7857 = vmatpush1.bf16.msra.mxu0 %v7525
    %7858 = vmatprep.subr.bf16.mxu0 %v7530
    %7859 = vmatpush1.bf16.msra.mxu0 %v7529
    %7860 = vmatprep.subr.bf16.mxu0 %v7534
    %7861 = vmatpush1.bf16.msra.mxu0 %v7533
    %7862 = vmatprep.subr.bf16.mxu0 %v7538
    %7863 = vmatpush1.bf16.msra.mxu0 %v7537
    %7864 = vmatprep.subr.bf16.mxu0 %v7542
    %7865 = vmatpush1.bf16.msra.mxu0 %v7541
    %7866 = vmatprep.subr.bf16.mxu0 %v7546
    %7867 = vmatpush1.bf16.msra.mxu0 %v7545
    %7868 = vmatprep.subr.bf16.mxu0 %v7550
    %7869 = vmatpush1.bf16.msra.mxu0 %v7549
    %7870 = vmatprep.mubr.bf16.mxu0 %v6905
    %7871 = vmatmul.mubr.bf16.gmra.mrb[0].mxu0 %v6904
    %v7872 = vpop.f32.mrb[0].mxu0
    %v7873 = vadd.f32 %v7820, %v7872
    %v7874 = vpop.f32.mrb[0].mxu0
    %v7875 = vadd.f32 %v7822, %v7874
    %v7876 = vpop.f32.mrb[0].mxu0
    %v7877 = vadd.f32 %v7824, %v7876
    %v7878 = vpop.f32.mrb[0].mxu0
    %v7879 = vadd.f32 %v7826, %v7878
    %7880 = vmatprep.mubr.bf16.mxu0 %v6909
    %7881 = vmatmul.mubr.bf16.gmra.mrb[0].mxu0 %v6908
    %v7882 = vpop.f32.mrb[0].mxu0
    %v7883 = vadd.f32 %v7830, %v7882
    %v7884 = vpop.f32.mrb[0].mxu0
    %v7885 = vadd.f32 %v7832, %v7884
    %v7886 = vpop.f32.mrb[0].mxu0
    %v7887 = vadd.f32 %v7834, %v7886
    %v7888 = vpop.f32.mrb[0].mxu0
    %v7889 = vadd.f32 %v7836, %v7888
    %7890 = vdwg.mxu0
    %v7891 = vadd.f32 %v6778, %v7767
    %v7892 = vadd.f32 %v6780, %v7769
    %v7893 = vadd.f32 %v6884, %v7873
    %v7894 = vadd.f32 %v6886, %v7875
    %v7895 = vadd.f32 %v6782, %v7771
    %v7896 = vadd.f32 %v6784, %v7773
    %v7897 = vadd.f32 %v6888, %v7877
    %v7898 = vadd.f32 %v6890, %v7879
    %v7899 = vadd.f32 %v6788, %v7777
    %v7900 = vadd.f32 %v6790, %v7779
    %v7901 = vadd.f32 %v6894, %v7883
    %v7902 = vadd.f32 %v6896, %v7885
    %v7903 = vadd.f32 %v6792, %v7781
    %v7904 = vadd.f32 %v6794, %v7783
    %v7905 = vadd.f32 %v6898, %v7887
    %v7906 = vadd.f32 %v6900, %v7889
    %v7907 = vld [vmem:[#allocation14] sm:$0xf]
    %v7909 = vlaneseq
    %v7910 = vshrl.u32 %v7909, 7
    %v7911 = vsub.s32 0, %v7910
    %v7912 = vrot.slane %v7907, %v7911
    %v7913 = vlaneseq
    %v7914 = vshrl.u32 %v7913, 7
    %v7915 = vsub.s32 1, %v7914
    %v7916 = vrot.slane %v7907, %v7915
    %v7917 = vlaneseq
    %v7918 = vshrl.u32 %v7917, 7
    %v7919 = vsub.s32 2, %v7918
    %v7920 = vrot.slane %v7907, %v7919
    %v7921 = vlaneseq
    %v7922 = vshrl.u32 %v7921, 7
    %v7923 = vsub.s32 3, %v7922
    %v7924 = vrot.slane %v7907, %v7923
    %v7929 = vadd.f32 %v7891, %v7912
    %v7930 = vadd.f32 %v7892, %v7916
    %v7931 = vadd.f32 %v7893, %v7920
    %v7932 = vadd.f32 %v7894, %v7924
    %v7933 = vadd.f32 %v7895, %v7912
    %v7934 = vadd.f32 %v7896, %v7916
    %v7935 = vadd.f32 %v7897, %v7920
    %v7936 = vadd.f32 %v7898, %v7924
    %v7937 = vadd.f32 %v7899, %v7912
    %v7938 = vadd.f32 %v7900, %v7916
    %v7939 = vadd.f32 %v7901, %v7920
    %v7940 = vadd.f32 %v7902, %v7924
    %v7941 = vadd.f32 %v7903, %v7912
    %v7942 = vadd.f32 %v7904, %v7916
    %v7943 = vadd.f32 %v7905, %v7920
    %v7944 = vadd.f32 %v7906, %v7924
    %v7945 = vmax.f32 %v7929, 0.0
    %v7946 = vmax.f32 %v7930, 0.0
    %v7947 = vmax.f32 %v7931, 0.0
    %v7948 = vmax.f32 %v7932, 0.0
    %v7949 = vmax.f32 %v7933, 0.0
    %v7950 = vmax.f32 %v7934, 0.0
    %v7951 = vmax.f32 %v7935, 0.0
    %v7952 = vmax.f32 %v7936, 0.0
    %v7953 = vmax.f32 %v7937, 0.0
    %v7954 = vmax.f32 %v7938, 0.0
    %v7955 = vmax.f32 %v7939, 0.0
    %v7956 = vmax.f32 %v7940, 0.0
    %v7957 = vmax.f32 %v7941, 0.0
    %v7958 = vmax.f32 %v7942, 0.0
    %v7959 = vmax.f32 %v7943, 0.0
    %v7960 = vmax.f32 %v7944, 0.0
    %v7961 = vld [vmem:[#allocation16] sm:$0x1]
    %v7963 = vlaneseq
    %v7964 = vshrl.u32 %v7963, 7
    %v7965 = vsub.s32 0, %v7964
    %v7966 = vrot.slane %v7961, %v7965
    %v7968 = vpack.c.bf16 %v7945, %v7945
    %v7969 = vpack.c.bf16 %v7946, %v7946
    %v7970 = vpack.c.bf16 %v7947, %v7947
    %v7971 = vpack.c.bf16 %v7948, %v7948
    %v7972 = vld [vmem:[%s8] sm:$0xf]
    %v7973 = vld [vmem:[%s8 + $0x4] sm:$0xf]
    %v7974 = vld [vmem:[%s8 + $0x8] sm:$0xf]
    %v7975 = vld [vmem:[%s8 + $0xc] sm:$0xf]
    %v7976 = vld [vmem:[%s8 + $0x10] sm:$0xf]
    %v7977 = vld [vmem:[%s8 + $0x14] sm:$0xf]
    %v7978 = vld [vmem:[%s8 + $0x18] sm:$0xf]
    %v7979 = vld [vmem:[%s8 + $0x1c] sm:$0xf]
    %v7980 = vld [vmem:[%s8 + $0x20] sm:$0xf]
    %v7981 = vld [vmem:[%s8 + $0x24] sm:$0xf]
    %v7982 = vld [vmem:[%s8 + $0x28] sm:$0xf]
    %v7983 = vld [vmem:[%s8 + $0x2c] sm:$0xf]
    %v7984 = vld [vmem:[%s8 + $0x30] sm:$0xf]
    %v7985 = vld [vmem:[%s8 + $0x34] sm:$0xf]
    %v7986 = vld [vmem:[%s8 + $0x38] sm:$0xf]
    %v7987 = vld [vmem:[%s8 + $0x3c] sm:$0xf]
    %v7988 = vld [vmem:[%s8 + $0x40] sm:$0xf]
    %v7989 = vld [vmem:[%s8 + $0x44] sm:$0xf]
    %v7990 = vld [vmem:[%s8 + $0x48] sm:$0xf]
    %v7991 = vld [vmem:[%s8 + $0x4c] sm:$0xf]
    %v7992 = vld [vmem:[%s8 + $0x50] sm:$0xf]
    %v7993 = vld [vmem:[%s8 + $0x54] sm:$0xf]
    %v7994 = vld [vmem:[%s8 + $0x58] sm:$0xf]
    %v7995 = vld [vmem:[%s8 + $0x5c] sm:$0xf]
    %v7996 = vld [vmem:[%s8 + $0x60] sm:$0xf]
    %v7997 = vld [vmem:[%s8 + $0x64] sm:$0xf]
    %v7998 = vld [vmem:[%s8 + $0x68] sm:$0xf]
    %v7999 = vld [vmem:[%s8 + $0x6c] sm:$0xf]
    %v8000 = vld [vmem:[%s8 + $0x70] sm:$0xf]
    %v8001 = vld [vmem:[%s8 + $0x74] sm:$0xf]
    %v8002 = vld [vmem:[%s8 + $0x78] sm:$0xf]
    %v8003 = vld [vmem:[%s8 + $0x7c] sm:$0xf]
    %v8004 = vld [vmem:[%s8 + $0x80] sm:$0xf]
    %v8005 = vld [vmem:[%s8 + $0x84] sm:$0xf]
    %v8006 = vld [vmem:[%s8 + $0x88] sm:$0xf]
    %v8007 = vld [vmem:[%s8 + $0x8c] sm:$0xf]
    %v8008 = vld [vmem:[%s8 + $0x90] sm:$0xf]
    %v8009 = vld [vmem:[%s8 + $0x94] sm:$0xf]
    %v8010 = vld [vmem:[%s8 + $0x98] sm:$0xf]
    %v8011 = vld [vmem:[%s8 + $0x9c] sm:$0xf]
    %v8012 = vld [vmem:[%s8 + $0xa0] sm:$0xf]
    %v8013 = vld [vmem:[%s8 + $0xa4] sm:$0xf]
    %v8014 = vld [vmem:[%s8 + $0xa8] sm:$0xf]
    %v8015 = vld [vmem:[%s8 + $0xac] sm:$0xf]
    %v8016 = vld [vmem:[%s8 + $0xb0] sm:$0xf]
    %v8017 = vld [vmem:[%s8 + $0xb4] sm:$0xf]
    %v8018 = vld [vmem:[%s8 + $0xb8] sm:$0xf]
    %v8019 = vld [vmem:[%s8 + $0xbc] sm:$0xf]
    %v8020 = vld [vmem:[%s8 + $0xc0] sm:$0xf]
    %v8021 = vld [vmem:[%s8 + $0xc4] sm:$0xf]
    %v8022 = vld [vmem:[%s8 + $0xc8] sm:$0xf]
    %v8023 = vld [vmem:[%s8 + $0xcc] sm:$0xf]
    %v8024 = vld [vmem:[%s8 + $0xd0] sm:$0xf]
    %v8025 = vld [vmem:[%s8 + $0xd4] sm:$0xf]
    %v8026 = vld [vmem:[%s8 + $0xd8] sm:$0xf]
    %v8027 = vld [vmem:[%s8 + $0xdc] sm:$0xf]
    %v8028 = vld [vmem:[%s8 + $0xe0] sm:$0xf]
    %v8029 = vld [vmem:[%s8 + $0xe4] sm:$0xf]
    %v8030 = vld [vmem:[%s8 + $0xe8] sm:$0xf]
    %v8031 = vld [vmem:[%s8 + $0xec] sm:$0xf]
    %v8032 = vld [vmem:[%s8 + $0xf0] sm:$0xf]
    %v8033 = vld [vmem:[%s8 + $0xf4] sm:$0xf]
    %v8034 = vld [vmem:[%s8 + $0xf8] sm:$0xf]
    %v8035 = vld [vmem:[%s8 + $0xfc] sm:$0xf]
    %v8100 = vunpack.c.l.b16 %v7972
    %v8101 = vunpack.c.l.b16 %v7973
    %v8102 = vunpack.c.l.b16 %v7974
    %v8103 = vunpack.c.l.b16 %v7975
    %v8104 = vunpack.c.l.b16 %v7976
    %v8105 = vunpack.c.l.b16 %v7977
    %v8106 = vunpack.c.l.b16 %v7978
    %v8107 = vunpack.c.l.b16 %v7979
    %v8108 = vunpack.c.l.b16 %v7980
    %v8109 = vunpack.c.l.b16 %v7981
    %v8110 = vunpack.c.l.b16 %v7982
    %v8111 = vunpack.c.l.b16 %v7983
    %v8112 = vunpack.c.l.b16 %v7984
    %v8113 = vunpack.c.l.b16 %v7985
    %v8114 = vunpack.c.l.b16 %v7986
    %v8115 = vunpack.c.l.b16 %v7987
    %v8116 = vunpack.c.l.b16 %v7988
    %v8117 = vunpack.c.l.b16 %v7989
    %v8118 = vunpack.c.l.b16 %v7990
    %v8119 = vunpack.c.l.b16 %v7991
    %v8120 = vunpack.c.l.b16 %v7992
    %v8121 = vunpack.c.l.b16 %v7993
    %v8122 = vunpack.c.l.b16 %v7994
    %v8123 = vunpack.c.l.b16 %v7995
    %v8124 = vunpack.c.l.b16 %v7996
    %v8125 = vunpack.c.l.b16 %v7997
    %v8126 = vunpack.c.l.b16 %v7998
    %v8127 = vunpack.c.l.b16 %v7999
    %v8128 = vunpack.c.l.b16 %v8000
    %v8129 = vunpack.c.l.b16 %v8001
    %v8130 = vunpack.c.l.b16 %v8002
    %v8131 = vunpack.c.l.b16 %v8003
    %v8132 = vunpack.c.l.b16 %v8004
    %v8133 = vunpack.c.l.b16 %v8005
    %v8134 = vunpack.c.l.b16 %v8006
    %v8135 = vunpack.c.l.b16 %v8007
    %v8136 = vunpack.c.l.b16 %v8008
    %v8137 = vunpack.c.l.b16 %v8009
    %v8138 = vunpack.c.l.b16 %v8010
    %v8139 = vunpack.c.l.b16 %v8011
    %v8140 = vunpack.c.l.b16 %v8012
    %v8141 = vunpack.c.l.b16 %v8013
    %v8142 = vunpack.c.l.b16 %v8014
    %v8143 = vunpack.c.l.b16 %v8015
    %v8144 = vunpack.c.l.b16 %v8016
    %v8145 = vunpack.c.l.b16 %v8017
    %v8146 = vunpack.c.l.b16 %v8018
    %v8147 = vunpack.c.l.b16 %v8019
    %v8148 = vunpack.c.l.b16 %v8020
    %v8149 = vunpack.c.l.b16 %v8021
    %v8150 = vunpack.c.l.b16 %v8022
    %v8151 = vunpack.c.l.b16 %v8023
    %v8152 = vunpack.c.l.b16 %v8024
    %v8153 = vunpack.c.l.b16 %v8025
    %v8154 = vunpack.c.l.b16 %v8026
    %v8155 = vunpack.c.l.b16 %v8027
    %v8156 = vunpack.c.l.b16 %v8028
    %v8157 = vunpack.c.l.b16 %v8029
    %v8158 = vunpack.c.l.b16 %v8030
    %v8159 = vunpack.c.l.b16 %v8031
    %v8160 = vunpack.c.l.b16 %v8032
    %v8161 = vunpack.c.l.b16 %v8033
    %v8162 = vunpack.c.l.b16 %v8034
    %v8163 = vunpack.c.l.b16 %v8035
    %v8164 = vpack.c.b16 %v8101, %v8100
    %v8165 = vpack.c.b16 %v8103, %v8102
    %v8166 = vpack.c.b16 %v8105, %v8104
    %v8167 = vpack.c.b16 %v8107, %v8106
    %v8168 = vpack.c.b16 %v8109, %v8108
    %v8169 = vpack.c.b16 %v8111, %v8110
    %v8170 = vpack.c.b16 %v8113, %v8112
    %v8171 = vpack.c.b16 %v8115, %v8114
    %v8172 = vpack.c.b16 %v8117, %v8116
    %v8173 = vpack.c.b16 %v8119, %v8118
    %v8174 = vpack.c.b16 %v8121, %v8120
    %v8175 = vpack.c.b16 %v8123, %v8122
    %v8176 = vpack.c.b16 %v8125, %v8124
    %v8177 = vpack.c.b16 %v8127, %v8126
    %v8178 = vpack.c.b16 %v8129, %v8128
    %v8179 = vpack.c.b16 %v8131, %v8130
    %v8180 = vpack.c.b16 %v8133, %v8132
    %v8181 = vpack.c.b16 %v8135, %v8134
    %v8182 = vpack.c.b16 %v8137, %v8136
    %v8183 = vpack.c.b16 %v8139, %v8138
    %v8184 = vpack.c.b16 %v8141, %v8140
    %v8185 = vpack.c.b16 %v8143, %v8142
    %v8186 = vpack.c.b16 %v8145, %v8144
    %v8187 = vpack.c.b16 %v8147, %v8146
    %v8188 = vpack.c.b16 %v8149, %v8148
    %v8189 = vpack.c.b16 %v8151, %v8150
    %v8190 = vpack.c.b16 %v8153, %v8152
    %v8191 = vpack.c.b16 %v8155, %v8154
    %v8192 = vpack.c.b16 %v8157, %v8156
    %v8193 = vpack.c.b16 %v8159, %v8158
    %v8194 = vpack.c.b16 %v8161, %v8160
    %v8195 = vpack.c.b16 %v8163, %v8162
    %8228 = vmatprep.subr.bf16.mxu0 0
    %8229 = vmatpush1.bf16.msra.mxu0 %v8164
    %8230 = vmatprep.subr.bf16.mxu0 0
    %8231 = vmatpush1.bf16.msra.mxu0 %v8165
    %8232 = vmatprep.subr.bf16.mxu0 0
    %8233 = vmatpush1.bf16.msra.mxu0 %v8166
    %8234 = vmatprep.subr.bf16.mxu0 0
    %8235 = vmatpush1.bf16.msra.mxu0 %v8167
    %8236 = vmatprep.subr.bf16.mxu0 0
    %8237 = vmatpush1.bf16.msra.mxu0 %v8168
    %8238 = vmatprep.subr.bf16.mxu0 0
    %8239 = vmatpush1.bf16.msra.mxu0 %v8169
    %8240 = vmatprep.subr.bf16.mxu0 0
    %8241 = vmatpush1.bf16.msra.mxu0 %v8170
    %8242 = vmatprep.subr.bf16.mxu0 0
    %8243 = vmatpush1.bf16.msra.mxu0 %v8171
    %8244 = vmatprep.subr.bf16.mxu0 0
    %8245 = vmatpush1.bf16.msra.mxu0 %v8172
    %8246 = vmatprep.subr.bf16.mxu0 0
    %8247 = vmatpush1.bf16.msra.mxu0 %v8173
    %8248 = vmatprep.subr.bf16.mxu0 0
    %8249 = vmatpush1.bf16.msra.mxu0 %v8174
    %8250 = vmatprep.subr.bf16.mxu0 0
    %8251 = vmatpush1.bf16.msra.mxu0 %v8175
    %8252 = vmatprep.subr.bf16.mxu0 0
    %8253 = vmatpush1.bf16.msra.mxu0 %v8176
    %8254 = vmatprep.subr.bf16.mxu0 0
    %8255 = vmatpush1.bf16.msra.mxu0 %v8177
    %8256 = vmatprep.subr.bf16.mxu0 0
    %8257 = vmatpush1.bf16.msra.mxu0 %v8178
    %8258 = vmatprep.subr.bf16.mxu0 0
    %8259 = vmatpush1.bf16.msra.mxu0 %v8179
    %8260 = vmatprep.mubr.bf16.mxu0 %v7969
    %8261 = vmatmul.mubr.bf16.gmra.mrb[0].mxu0 %v7968
    %v8262 = vpop.f32.mrb[0].mxu0
    %v8263 = vadd.f32 0.0, %v8262
    %v8264 = vpop.f32.mrb[0].mxu0
    %v8265 = vpop.f32.mrb[0].mxu0
    %v8266 = vpop.f32.mrb[0].mxu0
    %8267 = vdwg.mxu0
    %8268 = vmatprep.subr.bf16.mxu0 0
    %8269 = vmatpush1.bf16.msra.mxu0 %v8180
    %8270 = vmatprep.subr.bf16.mxu0 0
    %8271 = vmatpush1.bf16.msra.mxu0 %v8181
    %8272 = vmatprep.subr.bf16.mxu0 0
    %8273 = vmatpush1.bf16.msra.mxu0 %v8182
    %8274 = vmatprep.subr.bf16.mxu0 0
    %8275 = vmatpush1.bf16.msra.mxu0 %v8183
    %8276 = vmatprep.subr.bf16.mxu0 0
    %8277 = vmatpush1.bf16.msra.mxu0 %v8184
    %8278 = vmatprep.subr.bf16.mxu0 0
    %8279 = vmatpush1.bf16.msra.mxu0 %v8185
    %8280 = vmatprep.subr.bf16.mxu0 0
    %8281 = vmatpush1.bf16.msra.mxu0 %v8186
    %8282 = vmatprep.subr.bf16.mxu0 0
    %8283 = vmatpush1.bf16.msra.mxu0 %v8187
    %8284 = vmatprep.subr.bf16.mxu0 0
    %8285 = vmatpush1.bf16.msra.mxu0 %v8188
    %8286 = vmatprep.subr.bf16.mxu0 0
    %8287 = vmatpush1.bf16.msra.mxu0 %v8189
    %8288 = vmatprep.subr.bf16.mxu0 0
    %8289 = vmatpush1.bf16.msra.mxu0 %v8190
    %8290 = vmatprep.subr.bf16.mxu0 0
    %8291 = vmatpush1.bf16.msra.mxu0 %v8191
    %8292 = vmatprep.subr.bf16.mxu0 0
    %8293 = vmatpush1.bf16.msra.mxu0 %v8192
    %8294 = vmatprep.subr.bf16.mxu0 0
    %8295 = vmatpush1.bf16.msra.mxu0 %v8193
    %8296 = vmatprep.subr.bf16.mxu0 0
    %8297 = vmatpush1.bf16.msra.mxu0 %v8194
    %8298 = vmatprep.subr.bf16.mxu0 0
    %8299 = vmatpush1.bf16.msra.mxu0 %v8195
    %8300 = vmatprep.mubr.bf16.mxu0 %v7971
    %8301 = vmatmul.mubr.bf16.gmra.mrb[0].mxu0 %v7970
    %v8302 = vpop.f32.mrb[0].mxu0
    %v8303 = vadd.f32 %v8263, %v8302
    %v8304 = vpop.f32.mrb[0].mxu0
    %v8305 = vpop.f32.mrb[0].mxu0
    %v8306 = vpop.f32.mrb[0].mxu0
    %8307 = vdwg.mxu0
    %v8308 = vadd.f32 %v7966, %v8303
    %v8309 = vpack.c.bf16 %v7949, %v7949
    %v8310 = vpack.c.bf16 %v7950, %v7950
    %v8311 = vpack.c.bf16 %v7951, %v7951
    %v8312 = vpack.c.bf16 %v7952, %v7952
    %s8313 = scalar_lea.vmem %s8, 256
    %v8314 = vld [vmem:[%s8313] sm:$0xf]
    %v8315 = vld [vmem:[%s8313 + $0x4] sm:$0xf]
    %v8316 = vld [vmem:[%s8313 + $0x8] sm:$0xf]
    %v8317 = vld [vmem:[%s8313 + $0xc] sm:$0xf]
    %v8318 = vld [vmem:[%s8313 + $0x10] sm:$0xf]
    %v8319 = vld [vmem:[%s8313 + $0x14] sm:$0xf]
    %v8320 = vld [vmem:[%s8313 + $0x18] sm:$0xf]
    %v8321 = vld [vmem:[%s8313 + $0x1c] sm:$0xf]
    %v8322 = vld [vmem:[%s8313 + $0x20] sm:$0xf]
    %v8323 = vld [vmem:[%s8313 + $0x24] sm:$0xf]
    %v8324 = vld [vmem:[%s8313 + $0x28] sm:$0xf]
    %v8325 = vld [vmem:[%s8313 + $0x2c] sm:$0xf]
    %v8326 = vld [vmem:[%s8313 + $0x30] sm:$0xf]
    %v8327 = vld [vmem:[%s8313 + $0x34] sm:$0xf]
    %v8328 = vld [vmem:[%s8313 + $0x38] sm:$0xf]
    %v8329 = vld [vmem:[%s8313 + $0x3c] sm:$0xf]
    %v8330 = vld [vmem:[%s8313 + $0x40] sm:$0xf]
    %v8331 = vld [vmem:[%s8313 + $0x44] sm:$0xf]
    %v8332 = vld [vmem:[%s8313 + $0x48] sm:$0xf]
    %v8333 = vld [vmem:[%s8313 + $0x4c] sm:$0xf]
    %v8334 = vld [vmem:[%s8313 + $0x50] sm:$0xf]
    %v8335 = vld [vmem:[%s8313 + $0x54] sm:$0xf]
    %v8336 = vld [vmem:[%s8313 + $0x58] sm:$0xf]
    %v8337 = vld [vmem:[%s8313 + $0x5c] sm:$0xf]
    %v8338 = vld [vmem:[%s8313 + $0x60] sm:$0xf]
    %v8339 = vld [vmem:[%s8313 + $0x64] sm:$0xf]
    %v8340 = vld [vmem:[%s8313 + $0x68] sm:$0xf]
    %v8341 = vld [vmem:[%s8313 + $0x6c] sm:$0xf]
    %v8342 = vld [vmem:[%s8313 + $0x70] sm:$0xf]
    %v8343 = vld [vmem:[%s8313 + $0x74] sm:$0xf]
    %v8344 = vld [vmem:[%s8313 + $0x78] sm:$0xf]
    %v8345 = vld [vmem:[%s8313 + $0x7c] sm:$0xf]
    %v8346 = vld [vmem:[%s8313 + $0x80] sm:$0xf]
    %v8347 = vld [vmem:[%s8313 + $0x84] sm:$0xf]
    %v8348 = vld [vmem:[%s8313 + $0x88] sm:$0xf]
    %v8349 = vld [vmem:[%s8313 + $0x8c] sm:$0xf]
    %v8350 = vld [vmem:[%s8313 + $0x90] sm:$0xf]
    %v8351 = vld [vmem:[%s8313 + $0x94] sm:$0xf]
    %v8352 = vld [vmem:[%s8313 + $0x98] sm:$0xf]
    %v8353 = vld [vmem:[%s8313 + $0x9c] sm:$0xf]
    %v8354 = vld [vmem:[%s8313 + $0xa0] sm:$0xf]
    %v8355 = vld [vmem:[%s8313 + $0xa4] sm:$0xf]
    %v8356 = vld [vmem:[%s8313 + $0xa8] sm:$0xf]
    %v8357 = vld [vmem:[%s8313 + $0xac] sm:$0xf]
    %v8358 = vld [vmem:[%s8313 + $0xb0] sm:$0xf]
    %v8359 = vld [vmem:[%s8313 + $0xb4] sm:$0xf]
    %v8360 = vld [vmem:[%s8313 + $0xb8] sm:$0xf]
    %v8361 = vld [vmem:[%s8313 + $0xbc] sm:$0xf]
    %v8362 = vld [vmem:[%s8313 + $0xc0] sm:$0xf]
    %v8363 = vld [vmem:[%s8313 + $0xc4] sm:$0xf]
    %v8364 = vld [vmem:[%s8313 + $0xc8] sm:$0xf]
    %v8365 = vld [vmem:[%s8313 + $0xcc] sm:$0xf]
    %v8366 = vld [vmem:[%s8313 + $0xd0] sm:$0xf]
    %v8367 = vld [vmem:[%s8313 + $0xd4] sm:$0xf]
    %v8368 = vld [vmem:[%s8313 + $0xd8] sm:$0xf]
    %v8369 = vld [vmem:[%s8313 + $0xdc] sm:$0xf]
    %v8370 = vld [vmem:[%s8313 + $0xe0] sm:$0xf]
    %v8371 = vld [vmem:[%s8313 + $0xe4] sm:$0xf]
    %v8372 = vld [vmem:[%s8313 + $0xe8] sm:$0xf]
    %v8373 = vld [vmem:[%s8313 + $0xec] sm:$0xf]
    %v8374 = vld [vmem:[%s8313 + $0xf0] sm:$0xf]
    %v8375 = vld [vmem:[%s8313 + $0xf4] sm:$0xf]
    %v8376 = vld [vmem:[%s8313 + $0xf8] sm:$0xf]
    %v8377 = vld [vmem:[%s8313 + $0xfc] sm:$0xf]
    %v8442 = vunpack.c.l.b16 %v8314
    %v8443 = vunpack.c.l.b16 %v8315
    %v8444 = vunpack.c.l.b16 %v8316
    %v8445 = vunpack.c.l.b16 %v8317
    %v8446 = vunpack.c.l.b16 %v8318
    %v8447 = vunpack.c.l.b16 %v8319
    %v8448 = vunpack.c.l.b16 %v8320
    %v8449 = vunpack.c.l.b16 %v8321
    %v8450 = vunpack.c.l.b16 %v8322
    %v8451 = vunpack.c.l.b16 %v8323
    %v8452 = vunpack.c.l.b16 %v8324
    %v8453 = vunpack.c.l.b16 %v8325
    %v8454 = vunpack.c.l.b16 %v8326
    %v8455 = vunpack.c.l.b16 %v8327
    %v8456 = vunpack.c.l.b16 %v8328
    %v8457 = vunpack.c.l.b16 %v8329
    %v8458 = vunpack.c.l.b16 %v8330
    %v8459 = vunpack.c.l.b16 %v8331
    %v8460 = vunpack.c.l.b16 %v8332
    %v8461 = vunpack.c.l.b16 %v8333
    %v8462 = vunpack.c.l.b16 %v8334
    %v8463 = vunpack.c.l.b16 %v8335
    %v8464 = vunpack.c.l.b16 %v8336
    %v8465 = vunpack.c.l.b16 %v8337
    %v8466 = vunpack.c.l.b16 %v8338
    %v8467 = vunpack.c.l.b16 %v8339
    %v8468 = vunpack.c.l.b16 %v8340
    %v8469 = vunpack.c.l.b16 %v8341
    %v8470 = vunpack.c.l.b16 %v8342
    %v8471 = vunpack.c.l.b16 %v8343
    %v8472 = vunpack.c.l.b16 %v8344
    %v8473 = vunpack.c.l.b16 %v8345
    %v8474 = vunpack.c.l.b16 %v8346
    %v8475 = vunpack.c.l.b16 %v8347
    %v8476 = vunpack.c.l.b16 %v8348
    %v8477 = vunpack.c.l.b16 %v8349
    %v8478 = vunpack.c.l.b16 %v8350
    %v8479 = vunpack.c.l.b16 %v8351
    %v8480 = vunpack.c.l.b16 %v8352
    %v8481 = vunpack.c.l.b16 %v8353
    %v8482 = vunpack.c.l.b16 %v8354
    %v8483 = vunpack.c.l.b16 %v8355
    %v8484 = vunpack.c.l.b16 %v8356
    %v8485 = vunpack.c.l.b16 %v8357
    %v8486 = vunpack.c.l.b16 %v8358
    %v8487 = vunpack.c.l.b16 %v8359
    %v8488 = vunpack.c.l.b16 %v8360
    %v8489 = vunpack.c.l.b16 %v8361
    %v8490 = vunpack.c.l.b16 %v8362
    %v8491 = vunpack.c.l.b16 %v8363
    %v8492 = vunpack.c.l.b16 %v8364
    %v8493 = vunpack.c.l.b16 %v8365
    %v8494 = vunpack.c.l.b16 %v8366
    %v8495 = vunpack.c.l.b16 %v8367
    %v8496 = vunpack.c.l.b16 %v8368
    %v8497 = vunpack.c.l.b16 %v8369
    %v8498 = vunpack.c.l.b16 %v8370
    %v8499 = vunpack.c.l.b16 %v8371
    %v8500 = vunpack.c.l.b16 %v8372
    %v8501 = vunpack.c.l.b16 %v8373
    %v8502 = vunpack.c.l.b16 %v8374
    %v8503 = vunpack.c.l.b16 %v8375
    %v8504 = vunpack.c.l.b16 %v8376
    %v8505 = vunpack.c.l.b16 %v8377
    %v8506 = vpack.c.b16 %v8443, %v8442
    %v8507 = vpack.c.b16 %v8445, %v8444
    %v8508 = vpack.c.b16 %v8447, %v8446
    %v8509 = vpack.c.b16 %v8449, %v8448
    %v8510 = vpack.c.b16 %v8451, %v8450
    %v8511 = vpack.c.b16 %v8453, %v8452
    %v8512 = vpack.c.b16 %v8455, %v8454
    %v8513 = vpack.c.b16 %v8457, %v8456
    %v8514 = vpack.c.b16 %v8459, %v8458
    %v8515 = vpack.c.b16 %v8461, %v8460
    %v8516 = vpack.c.b16 %v8463, %v8462
    %v8517 = vpack.c.b16 %v8465, %v8464
    %v8518 = vpack.c.b16 %v8467, %v8466
    %v8519 = vpack.c.b16 %v8469, %v8468
    %v8520 = vpack.c.b16 %v8471, %v8470
    %v8521 = vpack.c.b16 %v8473, %v8472
    %v8522 = vpack.c.b16 %v8475, %v8474
    %v8523 = vpack.c.b16 %v8477, %v8476
    %v8524 = vpack.c.b16 %v8479, %v8478
    %v8525 = vpack.c.b16 %v8481, %v8480
    %v8526 = vpack.c.b16 %v8483, %v8482
    %v8527 = vpack.c.b16 %v8485, %v8484
    %v8528 = vpack.c.b16 %v8487, %v8486
    %v8529 = vpack.c.b16 %v8489, %v8488
    %v8530 = vpack.c.b16 %v8491, %v8490
    %v8531 = vpack.c.b16 %v8493, %v8492
    %v8532 = vpack.c.b16 %v8495, %v8494
    %v8533 = vpack.c.b16 %v8497, %v8496
    %v8534 = vpack.c.b16 %v8499, %v8498
    %v8535 = vpack.c.b16 %v8501, %v8500
    %v8536 = vpack.c.b16 %v8503, %v8502
    %v8537 = vpack.c.b16 %v8505, %v8504
    %8570 = vmatprep.subr.bf16.mxu0 0
    %8571 = vmatpush1.bf16.msra.mxu0 %v8506
    %8572 = vmatprep.subr.bf16.mxu0 0
    %8573 = vmatpush1.bf16.msra.mxu0 %v8507
    %8574 = vmatprep.subr.bf16.mxu0 0
    %8575 = vmatpush1.bf16.msra.mxu0 %v8508
    %8576 = vmatprep.subr.bf16.mxu0 0
    %8577 = vmatpush1.bf16.msra.mxu0 %v8509
    %8578 = vmatprep.subr.bf16.mxu0 0
    %8579 = vmatpush1.bf16.msra.mxu0 %v8510
    %8580 = vmatprep.subr.bf16.mxu0 0
    %8581 = vmatpush1.bf16.msra.mxu0 %v8511
    %8582 = vmatprep.subr.bf16.mxu0 0
    %8583 = vmatpush1.bf16.msra.mxu0 %v8512
    %8584 = vmatprep.subr.bf16.mxu0 0
    %8585 = vmatpush1.bf16.msra.mxu0 %v8513
    %8586 = vmatprep.subr.bf16.mxu0 0
    %8587 = vmatpush1.bf16.msra.mxu0 %v8514
    %8588 = vmatprep.subr.bf16.mxu0 0
    %8589 = vmatpush1.bf16.msra.mxu0 %v8515
    %8590 = vmatprep.subr.bf16.mxu0 0
    %8591 = vmatpush1.bf16.msra.mxu0 %v8516
    %8592 = vmatprep.subr.bf16.mxu0 0
    %8593 = vmatpush1.bf16.msra.mxu0 %v8517
    %8594 = vmatprep.subr.bf16.mxu0 0
    %8595 = vmatpush1.bf16.msra.mxu0 %v8518
    %8596 = vmatprep.subr.bf16.mxu0 0
    %8597 = vmatpush1.bf16.msra.mxu0 %v8519
    %8598 = vmatprep.subr.bf16.mxu0 0
    %8599 = vmatpush1.bf16.msra.mxu0 %v8520
    %8600 = vmatprep.subr.bf16.mxu0 0
    %8601 = vmatpush1.bf16.msra.mxu0 %v8521
    %8602 = vmatprep.mubr.bf16.mxu0 %v8310
    %8603 = vmatmul.mubr.bf16.gmra.mrb[0].mxu0 %v8309
    %v8604 = vpop.f32.mrb[0].mxu0
    %v8605 = vadd.f32 0.0, %v8604
    %v8606 = vpop.f32.mrb[0].mxu0
    %v8607 = vpop.f32.mrb[0].mxu0
    %v8608 = vpop.f32.mrb[0].mxu0
    %8609 = vdwg.mxu0
    %8610 = vmatprep.subr.bf16.mxu0 0
    %8611 = vmatpush1.bf16.msra.mxu0 %v8522
    %8612 = vmatprep.subr.bf16.mxu0 0
    %8613 = vmatpush1.bf16.msra.mxu0 %v8523
    %8614 = vmatprep.subr.bf16.mxu0 0
    %8615 = vmatpush1.bf16.msra.mxu0 %v8524
    %8616 = vmatprep.subr.bf16.mxu0 0
    %8617 = vmatpush1.bf16.msra.mxu0 %v8525
    %8618 = vmatprep.subr.bf16.mxu0 0
    %8619 = vmatpush1.bf16.msra.mxu0 %v8526
    %8620 = vmatprep.subr.bf16.mxu0 0
    %8621 = vmatpush1.bf16.msra.mxu0 %v8527
    %8622 = vmatprep.subr.bf16.mxu0 0
    %8623 = vmatpush1.bf16.msra.mxu0 %v8528
    %8624 = vmatprep.subr.bf16.mxu0 0
    %8625 = vmatpush1.bf16.msra.mxu0 %v8529
    %8626 = vmatprep.subr.bf16.mxu0 0
    %8627 = vmatpush1.bf16.msra.mxu0 %v8530
    %8628 = vmatprep.subr.bf16.mxu0 0
    %8629 = vmatpush1.bf16.msra.mxu0 %v8531
    %8630 = vmatprep.subr.bf16.mxu0 0
    %8631 = vmatpush1.bf16.msra.mxu0 %v8532
    %8632 = vmatprep.subr.bf16.mxu0 0
    %8633 = vmatpush1.bf16.msra.mxu0 %v8533
    %8634 = vmatprep.subr.bf16.mxu0 0
    %8635 = vmatpush1.bf16.msra.mxu0 %v8534
    %8636 = vmatprep.subr.bf16.mxu0 0
    %8637 = vmatpush1.bf16.msra.mxu0 %v8535
    %8638 = vmatprep.subr.bf16.mxu0 0
    %8639 = vmatpush1.bf16.msra.mxu0 %v8536
    %8640 = vmatprep.subr.bf16.mxu0 0
    %8641 = vmatpush1.bf16.msra.mxu0 %v8537
    %8642 = vmatprep.mubr.bf16.mxu0 %v8312
    %8643 = vmatmul.mubr.bf16.gmra.mrb[0].mxu0 %v8311
    %v8644 = vpop.f32.mrb[0].mxu0
    %v8645 = vadd.f32 %v8605, %v8644
    %v8646 = vpop.f32.mrb[0].mxu0
    %v8647 = vpop.f32.mrb[0].mxu0
    %v8648 = vpop.f32.mrb[0].mxu0
    %8649 = vdwg.mxu0
    %v8650 = vadd.f32 %v8308, %v8645
    %v8651 = vpack.c.bf16 %v7953, %v7953
    %v8652 = vpack.c.bf16 %v7954, %v7954
    %v8653 = vpack.c.bf16 %v7955, %v7955
    %v8654 = vpack.c.bf16 %v7956, %v7956
    %s8655 = scalar_lea.vmem %s8, 512
    %v8656 = vld [vmem:[%s8655] sm:$0xf]
    %v8657 = vld [vmem:[%s8655 + $0x4] sm:$0xf]
    %v8658 = vld [vmem:[%s8655 + $0x8] sm:$0xf]
    %v8659 = vld [vmem:[%s8655 + $0xc] sm:$0xf]
    %v8660 = vld [vmem:[%s8655 + $0x10] sm:$0xf]
    %v8661 = vld [vmem:[%s8655 + $0x14] sm:$0xf]
    %v8662 = vld [vmem:[%s8655 + $0x18] sm:$0xf]
    %v8663 = vld [vmem:[%s8655 + $0x1c] sm:$0xf]
    %v8664 = vld [vmem:[%s8655 + $0x20] sm:$0xf]
    %v8665 = vld [vmem:[%s8655 + $0x24] sm:$0xf]
    %v8666 = vld [vmem:[%s8655 + $0x28] sm:$0xf]
    %v8667 = vld [vmem:[%s8655 + $0x2c] sm:$0xf]
    %v8668 = vld [vmem:[%s8655 + $0x30] sm:$0xf]
    %v8669 = vld [vmem:[%s8655 + $0x34] sm:$0xf]
    %v8670 = vld [vmem:[%s8655 + $0x38] sm:$0xf]
    %v8671 = vld [vmem:[%s8655 + $0x3c] sm:$0xf]
    %v8672 = vld [vmem:[%s8655 + $0x40] sm:$0xf]
    %v8673 = vld [vmem:[%s8655 + $0x44] sm:$0xf]
    %v8674 = vld [vmem:[%s8655 + $0x48] sm:$0xf]
    %v8675 = vld [vmem:[%s8655 + $0x4c] sm:$0xf]
    %v8676 = vld [vmem:[%s8655 + $0x50] sm:$0xf]
    %v8677 = vld [vmem:[%s8655 + $0x54] sm:$0xf]
    %v8678 = vld [vmem:[%s8655 + $0x58] sm:$0xf]
    %v8679 = vld [vmem:[%s8655 + $0x5c] sm:$0xf]
    %v8680 = vld [vmem:[%s8655 + $0x60] sm:$0xf]
    %v8681 = vld [vmem:[%s8655 + $0x64] sm:$0xf]
    %v8682 = vld [vmem:[%s8655 + $0x68] sm:$0xf]
    %v8683 = vld [vmem:[%s8655 + $0x6c] sm:$0xf]
    %v8684 = vld [vmem:[%s8655 + $0x70] sm:$0xf]
    %v8685 = vld [vmem:[%s8655 + $0x74] sm:$0xf]
    %v8686 = vld [vmem:[%s8655 + $0x78] sm:$0xf]
    %v8687 = vld [vmem:[%s8655 + $0x7c] sm:$0xf]
    %v8688 = vld [vmem:[%s8655 + $0x80] sm:$0xf]
    %v8689 = vld [vmem:[%s8655 + $0x84] sm:$0xf]
    %v8690 = vld [vmem:[%s8655 + $0x88] sm:$0xf]
    %v8691 = vld [vmem:[%s8655 + $0x8c] sm:$0xf]
    %v8692 = vld [vmem:[%s8655 + $0x90] sm:$0xf]
    %v8693 = vld [vmem:[%s8655 + $0x94] sm:$0xf]
    %v8694 = vld [vmem:[%s8655 + $0x98] sm:$0xf]
    %v8695 = vld [vmem:[%s8655 + $0x9c] sm:$0xf]
    %v8696 = vld [vmem:[%s8655 + $0xa0] sm:$0xf]
    %v8697 = vld [vmem:[%s8655 + $0xa4] sm:$0xf]
    %v8698 = vld [vmem:[%s8655 + $0xa8] sm:$0xf]
    %v8699 = vld [vmem:[%s8655 + $0xac] sm:$0xf]
    %v8700 = vld [vmem:[%s8655 + $0xb0] sm:$0xf]
    %v8701 = vld [vmem:[%s8655 + $0xb4] sm:$0xf]
    %v8702 = vld [vmem:[%s8655 + $0xb8] sm:$0xf]
    %v8703 = vld [vmem:[%s8655 + $0xbc] sm:$0xf]
    %v8704 = vld [vmem:[%s8655 + $0xc0] sm:$0xf]
    %v8705 = vld [vmem:[%s8655 + $0xc4] sm:$0xf]
    %v8706 = vld [vmem:[%s8655 + $0xc8] sm:$0xf]
    %v8707 = vld [vmem:[%s8655 + $0xcc] sm:$0xf]
    %v8708 = vld [vmem:[%s8655 + $0xd0] sm:$0xf]
    %v8709 = vld [vmem:[%s8655 + $0xd4] sm:$0xf]
    %v8710 = vld [vmem:[%s8655 + $0xd8] sm:$0xf]
    %v8711 = vld [vmem:[%s8655 + $0xdc] sm:$0xf]
    %v8712 = vld [vmem:[%s8655 + $0xe0] sm:$0xf]
    %v8713 = vld [vmem:[%s8655 + $0xe4] sm:$0xf]
    %v8714 = vld [vmem:[%s8655 + $0xe8] sm:$0xf]
    %v8715 = vld [vmem:[%s8655 + $0xec] sm:$0xf]
    %v8716 = vld [vmem:[%s8655 + $0xf0] sm:$0xf]
    %v8717 = vld [vmem:[%s8655 + $0xf4] sm:$0xf]
    %v8718 = vld [vmem:[%s8655 + $0xf8] sm:$0xf]
    %v8719 = vld [vmem:[%s8655 + $0xfc] sm:$0xf]
    %v8784 = vunpack.c.l.b16 %v8656
    %v8785 = vunpack.c.l.b16 %v8657
    %v8786 = vunpack.c.l.b16 %v8658
    %v8787 = vunpack.c.l.b16 %v8659
    %v8788 = vunpack.c.l.b16 %v8660
    %v8789 = vunpack.c.l.b16 %v8661
    %v8790 = vunpack.c.l.b16 %v8662
    %v8791 = vunpack.c.l.b16 %v8663
    %v8792 = vunpack.c.l.b16 %v8664
    %v8793 = vunpack.c.l.b16 %v8665
    %v8794 = vunpack.c.l.b16 %v8666
    %v8795 = vunpack.c.l.b16 %v8667
    %v8796 = vunpack.c.l.b16 %v8668
    %v8797 = vunpack.c.l.b16 %v8669
    %v8798 = vunpack.c.l.b16 %v8670
    %v8799 = vunpack.c.l.b16 %v8671
    %v8800 = vunpack.c.l.b16 %v8672
    %v8801 = vunpack.c.l.b16 %v8673
    %v8802 = vunpack.c.l.b16 %v8674
    %v8803 = vunpack.c.l.b16 %v8675
    %v8804 = vunpack.c.l.b16 %v8676
    %v8805 = vunpack.c.l.b16 %v8677
    %v8806 = vunpack.c.l.b16 %v8678
    %v8807 = vunpack.c.l.b16 %v8679
    %v8808 = vunpack.c.l.b16 %v8680
    %v8809 = vunpack.c.l.b16 %v8681
    %v8810 = vunpack.c.l.b16 %v8682
    %v8811 = vunpack.c.l.b16 %v8683
    %v8812 = vunpack.c.l.b16 %v8684
    %v8813 = vunpack.c.l.b16 %v8685
    %v8814 = vunpack.c.l.b16 %v8686
    %v8815 = vunpack.c.l.b16 %v8687
    %v8816 = vunpack.c.l.b16 %v8688
    %v8817 = vunpack.c.l.b16 %v8689
    %v8818 = vunpack.c.l.b16 %v8690
    %v8819 = vunpack.c.l.b16 %v8691
    %v8820 = vunpack.c.l.b16 %v8692
    %v8821 = vunpack.c.l.b16 %v8693
    %v8822 = vunpack.c.l.b16 %v8694
    %v8823 = vunpack.c.l.b16 %v8695
    %v8824 = vunpack.c.l.b16 %v8696
    %v8825 = vunpack.c.l.b16 %v8697
    %v8826 = vunpack.c.l.b16 %v8698
    %v8827 = vunpack.c.l.b16 %v8699
    %v8828 = vunpack.c.l.b16 %v8700
    %v8829 = vunpack.c.l.b16 %v8701
    %v8830 = vunpack.c.l.b16 %v8702
    %v8831 = vunpack.c.l.b16 %v8703
    %v8832 = vunpack.c.l.b16 %v8704
    %v8833 = vunpack.c.l.b16 %v8705
    %v8834 = vunpack.c.l.b16 %v8706
    %v8835 = vunpack.c.l.b16 %v8707
    %v8836 = vunpack.c.l.b16 %v8708
    %v8837 = vunpack.c.l.b16 %v8709
    %v8838 = vunpack.c.l.b16 %v8710
    %v8839 = vunpack.c.l.b16 %v8711
    %v8840 = vunpack.c.l.b16 %v8712
    %v8841 = vunpack.c.l.b16 %v8713
    %v8842 = vunpack.c.l.b16 %v8714
    %v8843 = vunpack.c.l.b16 %v8715
    %v8844 = vunpack.c.l.b16 %v8716
    %v8845 = vunpack.c.l.b16 %v8717
    %v8846 = vunpack.c.l.b16 %v8718
    %v8847 = vunpack.c.l.b16 %v8719
    %v8848 = vpack.c.b16 %v8785, %v8784
    %v8849 = vpack.c.b16 %v8787, %v8786
    %v8850 = vpack.c.b16 %v8789, %v8788
    %v8851 = vpack.c.b16 %v8791, %v8790
    %v8852 = vpack.c.b16 %v8793, %v8792
    %v8853 = vpack.c.b16 %v8795, %v8794
    %v8854 = vpack.c.b16 %v8797, %v8796
    %v8855 = vpack.c.b16 %v8799, %v8798
    %v8856 = vpack.c.b16 %v8801, %v8800
    %v8857 = vpack.c.b16 %v8803, %v8802
    %v8858 = vpack.c.b16 %v8805, %v8804
    %v8859 = vpack.c.b16 %v8807, %v8806
    %v8860 = vpack.c.b16 %v8809, %v8808
    %v8861 = vpack.c.b16 %v8811, %v8810
    %v8862 = vpack.c.b16 %v8813, %v8812
    %v8863 = vpack.c.b16 %v8815, %v8814
    %v8864 = vpack.c.b16 %v8817, %v8816
    %v8865 = vpack.c.b16 %v8819, %v8818
    %v8866 = vpack.c.b16 %v8821, %v8820
    %v8867 = vpack.c.b16 %v8823, %v8822
    %v8868 = vpack.c.b16 %v8825, %v8824
    %v8869 = vpack.c.b16 %v8827, %v8826
    %v8870 = vpack.c.b16 %v8829, %v8828
    %v8871 = vpack.c.b16 %v8831, %v8830
    %v8872 = vpack.c.b16 %v8833, %v8832
    %v8873 = vpack.c.b16 %v8835, %v8834
    %v8874 = vpack.c.b16 %v8837, %v8836
    %v8875 = vpack.c.b16 %v8839, %v8838
    %v8876 = vpack.c.b16 %v8841, %v8840
    %v8877 = vpack.c.b16 %v8843, %v8842
    %v8878 = vpack.c.b16 %v8845, %v8844
    %v8879 = vpack.c.b16 %v8847, %v8846
    %8912 = vmatprep.subr.bf16.mxu0 0
    %8913 = vmatpush1.bf16.msra.mxu0 %v8848
    %8914 = vmatprep.subr.bf16.mxu0 0
    %8915 = vmatpush1.bf16.msra.mxu0 %v8849
    %8916 = vmatprep.subr.bf16.mxu0 0
    %8917 = vmatpush1.bf16.msra.mxu0 %v8850
    %8918 = vmatprep.subr.bf16.mxu0 0
    %8919 = vmatpush1.bf16.msra.mxu0 %v8851
    %8920 = vmatprep.subr.bf16.mxu0 0
    %8921 = vmatpush1.bf16.msra.mxu0 %v8852
    %8922 = vmatprep.subr.bf16.mxu0 0
    %8923 = vmatpush1.bf16.msra.mxu0 %v8853
    %8924 = vmatprep.subr.bf16.mxu0 0
    %8925 = vmatpush1.bf16.msra.mxu0 %v8854
    %8926 = vmatprep.subr.bf16.mxu0 0
    %8927 = vmatpush1.bf16.msra.mxu0 %v8855
    %8928 = vmatprep.subr.bf16.mxu0 0
    %8929 = vmatpush1.bf16.msra.mxu0 %v8856
    %8930 = vmatprep.subr.bf16.mxu0 0
    %8931 = vmatpush1.bf16.msra.mxu0 %v8857
    %8932 = vmatprep.subr.bf16.mxu0 0
    %8933 = vmatpush1.bf16.msra.mxu0 %v8858
    %8934 = vmatprep.subr.bf16.mxu0 0
    %8935 = vmatpush1.bf16.msra.mxu0 %v8859
    %8936 = vmatprep.subr.bf16.mxu0 0
    %8937 = vmatpush1.bf16.msra.mxu0 %v8860
    %8938 = vmatprep.subr.bf16.mxu0 0
    %8939 = vmatpush1.bf16.msra.mxu0 %v8861
    %8940 = vmatprep.subr.bf16.mxu0 0
    %8941 = vmatpush1.bf16.msra.mxu0 %v8862
    %8942 = vmatprep.subr.bf16.mxu0 0
    %8943 = vmatpush1.bf16.msra.mxu0 %v8863
    %8944 = vmatprep.mubr.bf16.mxu0 %v8652
    %8945 = vmatmul.mubr.bf16.gmra.mrb[0].mxu0 %v8651
    %v8946 = vpop.f32.mrb[0].mxu0
    %v8947 = vadd.f32 0.0, %v8946
    %v8948 = vpop.f32.mrb[0].mxu0
    %v8949 = vpop.f32.mrb[0].mxu0
    %v8950 = vpop.f32.mrb[0].mxu0
    %8951 = vdwg.mxu0
    %8952 = vmatprep.subr.bf16.mxu0 0
    %8953 = vmatpush1.bf16.msra.mxu0 %v8864
    %8954 = vmatprep.subr.bf16.mxu0 0
    %8955 = vmatpush1.bf16.msra.mxu0 %v8865
    %8956 = vmatprep.subr.bf16.mxu0 0
    %8957 = vmatpush1.bf16.msra.mxu0 %v8866
    %8958 = vmatprep.subr.bf16.mxu0 0
    %8959 = vmatpush1.bf16.msra.mxu0 %v8867
    %8960 = vmatprep.subr.bf16.mxu0 0
    %8961 = vmatpush1.bf16.msra.mxu0 %v8868
    %8962 = vmatprep.subr.bf16.mxu0 0
    %8963 = vmatpush1.bf16.msra.mxu0 %v8869
    %8964 = vmatprep.subr.bf16.mxu0 0
    %8965 = vmatpush1.bf16.msra.mxu0 %v8870
    %8966 = vmatprep.subr.bf16.mxu0 0
    %8967 = vmatpush1.bf16.msra.mxu0 %v8871
    %8968 = vmatprep.subr.bf16.mxu0 0
    %8969 = vmatpush1.bf16.msra.mxu0 %v8872
    %8970 = vmatprep.subr.bf16.mxu0 0
    %8971 = vmatpush1.bf16.msra.mxu0 %v8873
    %8972 = vmatprep.subr.bf16.mxu0 0
    %8973 = vmatpush1.bf16.msra.mxu0 %v8874
    %8974 = vmatprep.subr.bf16.mxu0 0
    %8975 = vmatpush1.bf16.msra.mxu0 %v8875
    %8976 = vmatprep.subr.bf16.mxu0 0
    %8977 = vmatpush1.bf16.msra.mxu0 %v8876
    %8978 = vmatprep.subr.bf16.mxu0 0
    %8979 = vmatpush1.bf16.msra.mxu0 %v8877
    %8980 = vmatprep.subr.bf16.mxu0 0
    %8981 = vmatpush1.bf16.msra.mxu0 %v8878
    %8982 = vmatprep.subr.bf16.mxu0 0
    %8983 = vmatpush1.bf16.msra.mxu0 %v8879
    %8984 = vmatprep.mubr.bf16.mxu0 %v8654
    %8985 = vmatmul.mubr.bf16.gmra.mrb[0].mxu0 %v8653
    %v8986 = vpop.f32.mrb[0].mxu0
    %v8987 = vadd.f32 %v8947, %v8986
    %v8988 = vpop.f32.mrb[0].mxu0
    %v8989 = vpop.f32.mrb[0].mxu0
    %v8990 = vpop.f32.mrb[0].mxu0
    %8991 = vdwg.mxu0
    %v8992 = vadd.f32 %v8650, %v8987
    %v8993 = vpack.c.bf16 %v7957, %v7957
    %v8994 = vpack.c.bf16 %v7958, %v7958
    %v8995 = vpack.c.bf16 %v7959, %v7959
    %v8996 = vpack.c.bf16 %v7960, %v7960
    %s8997 = scalar_lea.vmem %s8, 768
    %v8998 = vld [vmem:[%s8997] sm:$0xf]
    %v8999 = vld [vmem:[%s8997 + $0x4] sm:$0xf]
    %v9000 = vld [vmem:[%s8997 + $0x8] sm:$0xf]
    %v9001 = vld [vmem:[%s8997 + $0xc] sm:$0xf]
    %v9002 = vld [vmem:[%s8997 + $0x10] sm:$0xf]
    %v9003 = vld [vmem:[%s8997 + $0x14] sm:$0xf]
    %v9004 = vld [vmem:[%s8997 + $0x18] sm:$0xf]
    %v9005 = vld [vmem:[%s8997 + $0x1c] sm:$0xf]
    %v9006 = vld [vmem:[%s8997 + $0x20] sm:$0xf]
    %v9007 = vld [vmem:[%s8997 + $0x24] sm:$0xf]
    %v9008 = vld [vmem:[%s8997 + $0x28] sm:$0xf]
    %v9009 = vld [vmem:[%s8997 + $0x2c] sm:$0xf]
    %v9010 = vld [vmem:[%s8997 + $0x30] sm:$0xf]
    %v9011 = vld [vmem:[%s8997 + $0x34] sm:$0xf]
    %v9012 = vld [vmem:[%s8997 + $0x38] sm:$0xf]
    %v9013 = vld [vmem:[%s8997 + $0x3c] sm:$0xf]
    %v9014 = vld [vmem:[%s8997 + $0x40] sm:$0xf]
    %v9015 = vld [vmem:[%s8997 + $0x44] sm:$0xf]
    %v9016 = vld [vmem:[%s8997 + $0x48] sm:$0xf]
    %v9017 = vld [vmem:[%s8997 + $0x4c] sm:$0xf]
    %v9018 = vld [vmem:[%s8997 + $0x50] sm:$0xf]
    %v9019 = vld [vmem:[%s8997 + $0x54] sm:$0xf]
    %v9020 = vld [vmem:[%s8997 + $0x58] sm:$0xf]
    %v9021 = vld [vmem:[%s8997 + $0x5c] sm:$0xf]
    %v9022 = vld [vmem:[%s8997 + $0x60] sm:$0xf]
    %v9023 = vld [vmem:[%s8997 + $0x64] sm:$0xf]
    %v9024 = vld [vmem:[%s8997 + $0x68] sm:$0xf]
    %v9025 = vld [vmem:[%s8997 + $0x6c] sm:$0xf]
    %v9026 = vld [vmem:[%s8997 + $0x70] sm:$0xf]
    %v9027 = vld [vmem:[%s8997 + $0x74] sm:$0xf]
    %v9028 = vld [vmem:[%s8997 + $0x78] sm:$0xf]
    %v9029 = vld [vmem:[%s8997 + $0x7c] sm:$0xf]
    %v9030 = vld [vmem:[%s8997 + $0x80] sm:$0xf]
    %v9031 = vld [vmem:[%s8997 + $0x84] sm:$0xf]
    %v9032 = vld [vmem:[%s8997 + $0x88] sm:$0xf]
    %v9033 = vld [vmem:[%s8997 + $0x8c] sm:$0xf]
    %v9034 = vld [vmem:[%s8997 + $0x90] sm:$0xf]
    %v9035 = vld [vmem:[%s8997 + $0x94] sm:$0xf]
    %v9036 = vld [vmem:[%s8997 + $0x98] sm:$0xf]
    %v9037 = vld [vmem:[%s8997 + $0x9c] sm:$0xf]
    %v9038 = vld [vmem:[%s8997 + $0xa0] sm:$0xf]
    %v9039 = vld [vmem:[%s8997 + $0xa4] sm:$0xf]
    %v9040 = vld [vmem:[%s8997 + $0xa8] sm:$0xf]
    %v9041 = vld [vmem:[%s8997 + $0xac] sm:$0xf]
    %v9042 = vld [vmem:[%s8997 + $0xb0] sm:$0xf]
    %v9043 = vld [vmem:[%s8997 + $0xb4] sm:$0xf]
    %v9044 = vld [vmem:[%s8997 + $0xb8] sm:$0xf]
    %v9045 = vld [vmem:[%s8997 + $0xbc] sm:$0xf]
    %v9046 = vld [vmem:[%s8997 + $0xc0] sm:$0xf]
    %v9047 = vld [vmem:[%s8997 + $0xc4] sm:$0xf]
    %v9048 = vld [vmem:[%s8997 + $0xc8] sm:$0xf]
    %v9049 = vld [vmem:[%s8997 + $0xcc] sm:$0xf]
    %v9050 = vld [vmem:[%s8997 + $0xd0] sm:$0xf]
    %v9051 = vld [vmem:[%s8997 + $0xd4] sm:$0xf]
    %v9052 = vld [vmem:[%s8997 + $0xd8] sm:$0xf]
    %v9053 = vld [vmem:[%s8997 + $0xdc] sm:$0xf]
    %v9054 = vld [vmem:[%s8997 + $0xe0] sm:$0xf]
    %v9055 = vld [vmem:[%s8997 + $0xe4] sm:$0xf]
    %v9056 = vld [vmem:[%s8997 + $0xe8] sm:$0xf]
    %v9057 = vld [vmem:[%s8997 + $0xec] sm:$0xf]
    %v9058 = vld [vmem:[%s8997 + $0xf0] sm:$0xf]
    %v9059 = vld [vmem:[%s8997 + $0xf4] sm:$0xf]
    %v9060 = vld [vmem:[%s8997 + $0xf8] sm:$0xf]
    %v9061 = vld [vmem:[%s8997 + $0xfc] sm:$0xf]
    %v9126 = vunpack.c.l.b16 %v8998
    %v9127 = vunpack.c.l.b16 %v8999
    %v9128 = vunpack.c.l.b16 %v9000
    %v9129 = vunpack.c.l.b16 %v9001
    %v9130 = vunpack.c.l.b16 %v9002
    %v9131 = vunpack.c.l.b16 %v9003
    %v9132 = vunpack.c.l.b16 %v9004
    %v9133 = vunpack.c.l.b16 %v9005
    %v9134 = vunpack.c.l.b16 %v9006
    %v9135 = vunpack.c.l.b16 %v9007
    %v9136 = vunpack.c.l.b16 %v9008
    %v9137 = vunpack.c.l.b16 %v9009
    %v9138 = vunpack.c.l.b16 %v9010
    %v9139 = vunpack.c.l.b16 %v9011
    %v9140 = vunpack.c.l.b16 %v9012
    %v9141 = vunpack.c.l.b16 %v9013
    %v9142 = vunpack.c.l.b16 %v9014
    %v9143 = vunpack.c.l.b16 %v9015
    %v9144 = vunpack.c.l.b16 %v9016
    %v9145 = vunpack.c.l.b16 %v9017
    %v9146 = vunpack.c.l.b16 %v9018
    %v9147 = vunpack.c.l.b16 %v9019
    %v9148 = vunpack.c.l.b16 %v9020
    %v9149 = vunpack.c.l.b16 %v9021
    %v9150 = vunpack.c.l.b16 %v9022
    %v9151 = vunpack.c.l.b16 %v9023
    %v9152 = vunpack.c.l.b16 %v9024
    %v9153 = vunpack.c.l.b16 %v9025
    %v9154 = vunpack.c.l.b16 %v9026
    %v9155 = vunpack.c.l.b16 %v9027
    %v9156 = vunpack.c.l.b16 %v9028
    %v9157 = vunpack.c.l.b16 %v9029
    %v9158 = vunpack.c.l.b16 %v9030
    %v9159 = vunpack.c.l.b16 %v9031
    %v9160 = vunpack.c.l.b16 %v9032
    %v9161 = vunpack.c.l.b16 %v9033
    %v9162 = vunpack.c.l.b16 %v9034
    %v9163 = vunpack.c.l.b16 %v9035
    %v9164 = vunpack.c.l.b16 %v9036
    %v9165 = vunpack.c.l.b16 %v9037
    %v9166 = vunpack.c.l.b16 %v9038
    %v9167 = vunpack.c.l.b16 %v9039
    %v9168 = vunpack.c.l.b16 %v9040
    %v9169 = vunpack.c.l.b16 %v9041
    %v9170 = vunpack.c.l.b16 %v9042
    %v9171 = vunpack.c.l.b16 %v9043
    %v9172 = vunpack.c.l.b16 %v9044
    %v9173 = vunpack.c.l.b16 %v9045
    %v9174 = vunpack.c.l.b16 %v9046
    %v9175 = vunpack.c.l.b16 %v9047
    %v9176 = vunpack.c.l.b16 %v9048
    %v9177 = vunpack.c.l.b16 %v9049
    %v9178 = vunpack.c.l.b16 %v9050
    %v9179 = vunpack.c.l.b16 %v9051
    %v9180 = vunpack.c.l.b16 %v9052
    %v9181 = vunpack.c.l.b16 %v9053
    %v9182 = vunpack.c.l.b16 %v9054
    %v9183 = vunpack.c.l.b16 %v9055
    %v9184 = vunpack.c.l.b16 %v9056
    %v9185 = vunpack.c.l.b16 %v9057
    %v9186 = vunpack.c.l.b16 %v9058
    %v9187 = vunpack.c.l.b16 %v9059
    %v9188 = vunpack.c.l.b16 %v9060
    %v9189 = vunpack.c.l.b16 %v9061
    %v9190 = vpack.c.b16 %v9127, %v9126
    %v9191 = vpack.c.b16 %v9129, %v9128
    %v9192 = vpack.c.b16 %v9131, %v9130
    %v9193 = vpack.c.b16 %v9133, %v9132
    %v9194 = vpack.c.b16 %v9135, %v9134
    %v9195 = vpack.c.b16 %v9137, %v9136
    %v9196 = vpack.c.b16 %v9139, %v9138
    %v9197 = vpack.c.b16 %v9141, %v9140
    %v9198 = vpack.c.b16 %v9143, %v9142
    %v9199 = vpack.c.b16 %v9145, %v9144
    %v9200 = vpack.c.b16 %v9147, %v9146
    %v9201 = vpack.c.b16 %v9149, %v9148
    %v9202 = vpack.c.b16 %v9151, %v9150
    %v9203 = vpack.c.b16 %v9153, %v9152
    %v9204 = vpack.c.b16 %v9155, %v9154
    %v9205 = vpack.c.b16 %v9157, %v9156
    %v9206 = vpack.c.b16 %v9159, %v9158
    %v9207 = vpack.c.b16 %v9161, %v9160
    %v9208 = vpack.c.b16 %v9163, %v9162
    %v9209 = vpack.c.b16 %v9165, %v9164
    %v9210 = vpack.c.b16 %v9167, %v9166
    %v9211 = vpack.c.b16 %v9169, %v9168
    %v9212 = vpack.c.b16 %v9171, %v9170
    %v9213 = vpack.c.b16 %v9173, %v9172
    %v9214 = vpack.c.b16 %v9175, %v9174
    %v9215 = vpack.c.b16 %v9177, %v9176
    %v9216 = vpack.c.b16 %v9179, %v9178
    %v9217 = vpack.c.b16 %v9181, %v9180
    %v9218 = vpack.c.b16 %v9183, %v9182
    %v9219 = vpack.c.b16 %v9185, %v9184
    %v9220 = vpack.c.b16 %v9187, %v9186
    %v9221 = vpack.c.b16 %v9189, %v9188
    %9254 = vmatprep.subr.bf16.mxu0 0
    %9255 = vmatpush1.bf16.msra.mxu0 %v9190
    %9256 = vmatprep.subr.bf16.mxu0 0
    %9257 = vmatpush1.bf16.msra.mxu0 %v9191
    %9258 = vmatprep.subr.bf16.mxu0 0
    %9259 = vmatpush1.bf16.msra.mxu0 %v9192
    %9260 = vmatprep.subr.bf16.mxu0 0
    %9261 = vmatpush1.bf16.msra.mxu0 %v9193
    %9262 = vmatprep.subr.bf16.mxu0 0
    %9263 = vmatpush1.bf16.msra.mxu0 %v9194
    %9264 = vmatprep.subr.bf16.mxu0 0
    %9265 = vmatpush1.bf16.msra.mxu0 %v9195
    %9266 = vmatprep.subr.bf16.mxu0 0
    %9267 = vmatpush1.bf16.msra.mxu0 %v9196
    %9268 = vmatprep.subr.bf16.mxu0 0
    %9269 = vmatpush1.bf16.msra.mxu0 %v9197
    %9270 = vmatprep.subr.bf16.mxu0 0
    %9271 = vmatpush1.bf16.msra.mxu0 %v9198
    %9272 = vmatprep.subr.bf16.mxu0 0
    %9273 = vmatpush1.bf16.msra.mxu0 %v9199
    %9274 = vmatprep.subr.bf16.mxu0 0
    %9275 = vmatpush1.bf16.msra.mxu0 %v9200
    %9276 = vmatprep.subr.bf16.mxu0 0
    %9277 = vmatpush1.bf16.msra.mxu0 %v9201
    %9278 = vmatprep.subr.bf16.mxu0 0
    %9279 = vmatpush1.bf16.msra.mxu0 %v9202
    %9280 = vmatprep.subr.bf16.mxu0 0
    %9281 = vmatpush1.bf16.msra.mxu0 %v9203
    %9282 = vmatprep.subr.bf16.mxu0 0
    %9283 = vmatpush1.bf16.msra.mxu0 %v9204
    %9284 = vmatprep.subr.bf16.mxu0 0
    %9285 = vmatpush1.bf16.msra.mxu0 %v9205
    %9286 = vmatprep.mubr.bf16.mxu0 %v8994
    %9287 = vmatmul.mubr.bf16.gmra.mrb[0].mxu0 %v8993
    %v9288 = vpop.f32.mrb[0].mxu0
    %v9289 = vadd.f32 0.0, %v9288
    %v9290 = vpop.f32.mrb[0].mxu0
    %v9291 = vpop.f32.mrb[0].mxu0
    %v9292 = vpop.f32.mrb[0].mxu0
    %9293 = vdwg.mxu0
    %9294 = vmatprep.subr.bf16.mxu0 0
    %9295 = vmatpush1.bf16.msra.mxu0 %v9206
    %9296 = vmatprep.subr.bf16.mxu0 0
    %9297 = vmatpush1.bf16.msra.mxu0 %v9207
    %9298 = vmatprep.subr.bf16.mxu0 0
    %9299 = vmatpush1.bf16.msra.mxu0 %v9208
    %9300 = vmatprep.subr.bf16.mxu0 0
    %9301 = vmatpush1.bf16.msra.mxu0 %v9209
    %9302 = vmatprep.subr.bf16.mxu0 0
    %9303 = vmatpush1.bf16.msra.mxu0 %v9210
    %9304 = vmatprep.subr.bf16.mxu0 0
    %9305 = vmatpush1.bf16.msra.mxu0 %v9211
    %9306 = vmatprep.subr.bf16.mxu0 0
    %9307 = vmatpush1.bf16.msra.mxu0 %v9212
    %9308 = vmatprep.subr.bf16.mxu0 0
    %9309 = vmatpush1.bf16.msra.mxu0 %v9213
    %9310 = vmatprep.subr.bf16.mxu0 0
    %9311 = vmatpush1.bf16.msra.mxu0 %v9214
    %9312 = vmatprep.subr.bf16.mxu0 0
    %9313 = vmatpush1.bf16.msra.mxu0 %v9215
    %9314 = vmatprep.subr.bf16.mxu0 0
    %9315 = vmatpush1.bf16.msra.mxu0 %v9216
    %9316 = vmatprep.subr.bf16.mxu0 0
    %9317 = vmatpush1.bf16.msra.mxu0 %v9217
    %9318 = vmatprep.subr.bf16.mxu0 0
    %9319 = vmatpush1.bf16.msra.mxu0 %v9218
    %9320 = vmatprep.subr.bf16.mxu0 0
    %9321 = vmatpush1.bf16.msra.mxu0 %v9219
    %9322 = vmatprep.subr.bf16.mxu0 0
    %9323 = vmatpush1.bf16.msra.mxu0 %v9220
    %9324 = vmatprep.subr.bf16.mxu0 0
    %9325 = vmatpush1.bf16.msra.mxu0 %v9221
    %9326 = vmatprep.mubr.bf16.mxu0 %v8996
    %9327 = vmatmul.mubr.bf16.gmra.mrb[0].mxu0 %v8995
    %v9328 = vpop.f32.mrb[0].mxu0
    %v9329 = vadd.f32 %v9289, %v9328
    %v9330 = vpop.f32.mrb[0].mxu0
    %v9331 = vpop.f32.mrb[0].mxu0
    %v9332 = vpop.f32.mrb[0].mxu0
    %9333 = vdwg.mxu0
    %v9334 = vadd.f32 %v8992, %v9329
    %vm9335 = vcmask 15360
    %9336 = vst.msk [vmem:[%s10] sm:$0xff] %vm9335, %v9334
    // Predicated region
    $region70: #{encoder_forward.1} parent=1 // pred_check
      _
    $region71: #{encoder_forward.1} parent=1 // pred_check_branch
      %9338 = sbr.rel (0) target = $region73
    $region72: #{encoder_forward.1} parent=1 // pred_region
      _
    $region73: #{encoder_forward.1} parent=1 // pred_fallthru
      _
    // Predicated region
    $region74: #{encoder_forward.1} parent=1 // pred_check
      _
    $region75: #{encoder_forward.1} parent=1 // pred_check_branch
      %9340 = sbr.rel (0) target = $region77
    $region76: #{encoder_forward.1} parent=1 // pred_region
      _
    $region77: #{encoder_forward.1} parent=1 // pred_fallthru
      _
    %9341 = vsyncpa [#allocation7], 1
    %9342 = vsyncpa [#allocation9], 1
    %9343 = vsyncpa [#allocation12], 1
    %9344 = vsyncpa [#allocation15], 1

</llo_original>
